<compile_context>
chip_gen: v5e
topology: v5e:2x2
jax: 0.10.0
libtpu: 0.0.40
codegen_flags: <defaults>
</compile_context>

<pallas_src>
import functools
import math

import numpy as np
import jax
import jax.numpy as jnp
from jax.experimental import pallas as pl
from jax.experimental.pallas import tpu as pltpu


# ----------------------------------------------------------------------------
# Model-wide constants (synthetic graph)
# ----------------------------------------------------------------------------
NC = 2                     # number of classes (synthetic)
NA = 3                     # anchors per scale
NO = NC + 5
STRIDES = (8, 16, 32)
ANCHORS_PX = (             # pixel-space anchors (m.anchors/stride * stride)
    ((10., 13.), (16., 30.), (33., 23.)),
    ((30., 61.), (62., 45.), (59., 119.)),
    ((116., 90.), (156., 198.), (373., 326.)),
)
CPAD = 128                 # lane-dense channel width carried by every activation


# ----------------------------------------------------------------------------
# Pallas kernels
# ----------------------------------------------------------------------------
def _conv_mm_kernel(a_ref, w_ref, b_ref, o_ref, *, act):
    """One M-tile of out = SiLU(A @ W + b).

    A / W are bf16 (MXU-native on v5e/v6e/v7x); the accumulator, bias add and
    SiLU stay f32 (v5e's VPU/EUP have no bf16 path)."""
    acc = jnp.dot(a_ref[...], w_ref[...], preferred_element_type=jnp.float32)
    acc = acc + b_ref[...]
    if act:
        acc = acc * jax.nn.sigmoid(acc)          # SiLU (fused Conv+BN+SiLU)
    o_ref[...] = acc.astype(o_ref.dtype)


def _detect_head_kernel(a_ref, w_ref, b_ref, meta_ref, o_ref, *,
                        stride, w_dim, hw):
    """Fused YOLO Detect head for one scale.

    1x1-conv matmul + bias + sigmoid + anchor/grid decode in one epilogue.
    Rows are pixels ordered (n, h, w); columns are (anchor, channel) pairs
    padded to 128 lanes.  meta_ref rows: [sel_x, sel_y, sel_wh, anchor_px]."""
    acc = jnp.dot(a_ref[...], w_ref[...], preferred_element_type=jnp.float32)
    acc = acc + b_ref[...]
    y = jax.nn.sigmoid(acc)

    # Rebuild the cell grid from an in-kernel iota (no (M, no) grid tensor).
    tile_m = a_ref.shape[0]
    row = jax.lax.broadcasted_iota(jnp.int32, acc.shape, 0) + pl.program_id(0) * tile_m
    if (hw & (hw - 1)) == 0 and (w_dim & (w_dim - 1)) == 0:   # power-of-2 fast path
        pix = row & (hw - 1)
        gx = (pix & (w_dim - 1)).astype(jnp.float32)
        gy = (pix >> int(round(math.log2(w_dim)))).astype(jnp.float32)
    else:                                                     # not hit at demo shapes
        pix = row % hw
        gx = (pix % w_dim).astype(jnp.float32)
        gy = (pix // w_dim).astype(jnp.float32)

    sel_x = meta_ref[0:1, :]      # 1.0 on the tx column of each anchor
    sel_y = meta_ref[1:2, :]      # 1.0 on the ty column
    sel_wh = meta_ref[2:3, :]     # 1.0 on the tw/th columns
    anch = meta_ref[3:4, :]       # anchor w/h (pixels) on tw/th columns

    gval = gx * sel_x + gy * sel_y
    xy = (y * 2.0 - 0.5 + gval) * stride
    wh = (y * 2.0) ** 2 * anch
    sel_xy = sel_x + sel_y
    out = sel_xy * xy + sel_wh * wh + (1.0 - sel_xy - sel_wh) * y
    o_ref[...] = out.astype(o_ref.dtype)


# ----------------------------------------------------------------------------
# pallas_call wrapper shared by conv and detect-head matmuls
# ----------------------------------------------------------------------------
def _mm_call(kernel_fn, a, w, b, extras, out_dtype):
    """Grid over M only; K and the 128-padded N stay whole, so every store is a
    full 128-lane slab.  Single full-M tile when padded M < 512, else 256-row
    tiles (>= 2 tiles keeps both v7x TensorCores busy via "parallel")."""
    M, K = a.shape
    Npad = w.shape[1]
    m8 = max(8, ((M + 7) // 8) * 8)
    if m8 >= 512:
        tile_m = 256
        m_pad = ((M + tile_m - 1) // tile_m) * tile_m
    else:
        tile_m = m8
        m_pad = m8
    a_pad = a if m_pad == M else jnp.pad(a, ((0, m_pad - M), (0, 0)))
    b2 = b.reshape(1, Npad).astype(jnp.float32)

    in_specs = [
        pl.BlockSpec((tile_m, K), lambda i: (i, 0)),
        pl.BlockSpec((K, Npad), lambda i: (0, 0)),   # constant index -> fetched once
        pl.BlockSpec((1, Npad), lambda i: (0, 0)),
    ]
    args = [a_pad, w, b2]
    for e in extras:
        in_specs.append(pl.BlockSpec(e.shape, lambda i, nd=e.ndim: (0,) * nd))
        args.append(e)

    out = pl.pallas_call(
        kernel_fn,
        out_shape=jax.ShapeDtypeStruct((m_pad, Npad), out_dtype),
        grid=(m_pad // tile_m,),
        in_specs=in_specs,
        out_specs=pl.BlockSpec((tile_m, Npad), lambda i: (i, 0)),
        compiler_params=pltpu.CompilerParams(dimension_semantics=("parallel",)),
    )(*args)
    return out[:M]


# ----------------------------------------------------------------------------
# Layer wrappers (im2col / pooling / upsample glue stays in plain JAX)
# ----------------------------------------------------------------------------
def conv2d(x, w2, b, k, stride, act=True):
    """x: (N,H,W,CPAD) bf16, w2: (k*k*CPAD_in, CPAD) bf16, b: (CPAD,) f32."""
    N, H, W, C = x.shape
    p = k // 2
    Ho = (H + 2 * p - k) // stride + 1
    Wo = (W + 2 * p - k) // stride + 1
    if k == 1 and stride == 1:
        a = x.reshape(N * H * W, C)                  # 1x1 conv: pure matmul
    else:
        # TODO(synk): fuse this im2col into the Pallas kernel (grid axis over
        # k*k taps with a VMEM accumulator) to remove the shifted-copy traffic.
        xp = jnp.pad(x, ((0, 0), (p, p), (p, p), (0, 0)))
        pats = [xp[:, i:i + Ho * stride:stride, j:j + Wo * stride:stride, :]
                for i in range(k) for j in range(k)]
        a = jnp.stack(pats, axis=3).reshape(N * Ho * Wo, k * k * C)  # bf16
    out = _mm_call(functools.partial(_conv_mm_kernel, act=act),
                   a, w2, b, [], jnp.bfloat16)
    return out.reshape(N, Ho, Wo, -1)


def maxpool2x2(x):
    # glue: 2x2/stride-2 max pooling via reshape (cheap relative to conv matmuls)
    N, H, W, C = x.shape
    return x.reshape(N, H // 2, 2, W // 2, 2, C).max(axis=(2, 4))


def upsample2x(x):
    # glue: nearest-neighbor 2x upsample
    return jnp.repeat(jnp.repeat(x, 2, axis=1), 2, axis=2)


def detect_scale(feat, w2, b, meta, stride, na, no):
    """One fused pallas_call: 1x1 head matmul + sigmoid/anchor decode."""
    N, H, W, C = feat.shape
    a = feat.reshape(N * H * W, C)
    kern = functools.partial(_detect_head_kernel, stride=float(stride),
                             w_dim=W, hw=H * W)
    out = _mm_call(kern, a, w2, b, [meta], jnp.float32)      # (N*H*W, 128) lane-dense
    out = out[:, :na * no].reshape(N, H, W, na, no)          # tiny slice/permute after
    out = out.transpose(0, 3, 1, 2, 4).reshape(N, na * H * W, no)
    return out


# ----------------------------------------------------------------------------
# Weight packing into lane-dense (128-padded) layouts
# ----------------------------------------------------------------------------
def pack_conv(w, b, in_segments, cin_pad, cout_pad):
    """w: (k,k,cin_real,cout_real) f32 -> (k*k*cin_pad, cout_pad) bf16 with zero
    rows/cols for padded channels.  in_segments maps consecutive real input
    channels to their offsets inside the padded (possibly concatenated) input."""
    k = w.shape[0]
    cout = w.shape[3]
    wp = jnp.zeros((k, k, cin_pad, cout_pad), jnp.float32)
    r = 0
    for off, cnt in in_segments:
        wp = wp.at[:, :, off:off + cnt, :cout].set(w[:, :, r:r + cnt, :])
        r += cnt
    bp = jnp.zeros((cout_pad,), jnp.float32).at[:cout].set(b)
    return wp.reshape(k * k * cin_pad, cout_pad).astype(jnp.bfloat16), bp


def make_detect_meta(anchors_wh, na, no, npad):
    """Per-column selectors / anchors for the fused Detect kernel, rows:
    [sel_x, sel_y, sel_wh, anchor_px, 0, 0, 0, 0]; shape (8, npad)."""
    meta = np.zeros((8, npad), np.float32)
    for col in range(na * no):
        a, c = divmod(col, no)
        if c == 0:
            meta[0, col] = 1.0
        elif c == 1:
            meta[1, col] = 1.0
        elif c == 2:
            meta[2, col] = 1.0
            meta[3, col] = anchors_wh[a][0]
        elif c == 3:
            meta[2, col] = 1.0
            meta[3, col] = anchors_wh[a][1]
    return jnp.asarray(meta)


# ----------------------------------------------------------------------------
# Synthetic YOLOv7-style model definition (mirrors parse-model + forward loop)
# ----------------------------------------------------------------------------
# (type, f, kwargs) -- `f` routing matches the PyTorch forward loop semantics.
LAYERS = [
    ("conv",     -1, dict(cin=3,   cout=8,   k=3, s=1, cin_pad=CPAD)),  # 0  32x32
    ("conv",     -1, dict(cin=8,   cout=16,  k=3, s=2, cin_pad=CPAD)),  # 1  16x16
    ("conv",     -1, dict(cin=16,  cout=32,  k=3, s=2, cin_pad=CPAD)),  # 2   8x8
    ("conv",     -1, dict(cin=32,  cout=32,  k=3, s=1, cin_pad=CPAD)),  # 3   8x8
    ("conv",     -1, dict(cin=32,  cout=64,  k=3, s=2, cin_pad=CPAD)),  # 4   4x4  P3 (s8)
    ("maxpool",  -1, dict()),                                           # 5   2x2
    ("conv",     -1, dict(cin=64,  cout=64,  k=1, s=1, cin_pad=CPAD)),  # 6   2x2
    ("conv",     -1, dict(cin=64,  cout=128, k=3, s=2, cin_pad=CPAD)),  # 7   1x1  P5 (s32)
    ("conv",     -1, dict(cin=128, cout=64,  k=1, s=1, cin_pad=CPAD)),  # 8   1x1
    ("upsample", -1, dict()),                                           # 9   2x2
    ("concat", [-1, 6], dict()),                                        # 10  2x2, 2*CPAD
    ("conv",     -1, dict(cin=128, cout=64,  k=3, s=1, cin_pad=2 * CPAD,
                          seg=[(0, 64), (CPAD, 64)])),                  # 11  2x2  P4 (s16)
    ("detect", [4, 11, 7], dict(ch=[64, 64, 128])),                     # 12
]
SAVE = {4, 6, 7, 11}


def init_params(key):
    params = []
    for (typ, _, kw) in LAYERS:
        if typ == "conv":
            key, kw_, kb_ = jax.random.split(key, 3)
            k, cin, cout = kw["k"], kw["cin"], kw["cout"]
            scale = 1.0 / math.sqrt(k * k * cin)
            w = jax.random.normal(kw_, (k, k, cin, cout), jnp.float32) * scale
            b = jax.random.normal(kb_, (cout,), jnp.float32) * 0.01
            seg = kw.get("seg", [(0, cin)])
            wp, bp = pack_conv(w, b, seg, kw["cin_pad"], CPAD)
            params.append({"w": wp, "b": bp})
        elif typ == "detect":
            ws, bs, metas = [], [], []
            for s_idx, c in enumerate(kw["ch"]):
                key, kw_, kb_ = jax.random.split(key, 3)
                w = jax.random.normal(kw_, (c, NA * NO), jnp.float32) / math.sqrt(c)
                b = jax.random.normal(kb_, (NA * NO,), jnp.float32) * 0.01
                wp = (jnp.zeros((CPAD, CPAD), jnp.float32)
                      .at[:c, :NA * NO].set(w).astype(jnp.bfloat16))
                bp = jnp.zeros((CPAD,), jnp.float32).at[:NA * NO].set(b)
                ws.append(wp)
                bs.append(bp)
                metas.append(make_detect_meta(ANCHORS_PX[s_idx], NA, NO, CPAD))
            params.append({"ws": ws, "bs": bs, "metas": metas})
        else:
            params.append(None)
    return params


def forward(params, x):
    """Replicates the PyTorch Model.forward routing loop."""
    # TODO(synk): fuse chains of layers into single pallas_calls keeping
    # intermediates in VMEM scratch (activations here all fit in VMEM).
    y = []
    for i, (typ, f, kw) in enumerate(LAYERS):
        if f != -1:
            x = y[f] if isinstance(f, int) else \
                [x if j == -1 else y[j] for j in f]
        if typ == "conv":
            p = params[i]
            x = conv2d(x, p["w"], p["b"], kw["k"], kw["s"], act=True)
        elif typ == "maxpool":
            x = maxpool2x2(x)
        elif typ == "upsample":
            x = upsample2x(x)
        elif typ == "concat":
            x = jnp.concatenate(x, axis=-1)
        elif typ == "detect":
            p = params[i]
            outs = []
            for s_idx, feat in enumerate(x):
                outs.append(detect_scale(feat, p["ws"][s_idx], p["bs"][s_idx],
                                         p["metas"][s_idx], STRIDES[s_idx],
                                         NA, NO))
            x = jnp.concatenate(outs, axis=1)   # (N, sum(na*h*w), no)
        y.append(x if i in SAVE else None)
    return x


# ----------------------------------------------------------------------------
if __name__ == "__main__":
    key = jax.random.PRNGKey(0)
    k_in, k_par = jax.random.split(key)

    # PyTorch-style NCHW image input: batch=2, 3 channels, 32x32 (divisible by 32).
    x_nchw = jax.random.normal(k_in, (2, 3, 32, 32), jnp.float32)
    x_nhwc = jnp.transpose(x_nchw, (0, 2, 3, 1))
    # Pad image channels to the lane-dense CPAD width; activations flow as bf16.
    x = jnp.zeros(x_nhwc.shape[:3] + (CPAD,), jnp.bfloat16)
    x = x.at[..., :3].set(x_nhwc.astype(jnp.bfloat16))

    params = init_params(k_par)

    out = jax.jit(forward)(params, x)
    out = jax.block_until_ready(out)

    expected_rows = NA * (4 * 4 + 2 * 2 + 1 * 1)   # 63 anchors total
    assert out.shape == (2, expected_rows, NO), out.shape
    assert bool(jnp.all(jnp.isfinite(out)))
    # TODO(synk): real YOLOv7 graph (E-ELAN/SPPCSPC, RepConv fusion, checkpoint
    # weights) is config/weight-file driven and not reproducible in-script; this
    # uses an equivalent synthetic layer list with identical routing semantics.
    print("KERNEL_OK")
</pallas_src>

<mosaic_0001>
module attributes {stable_mosaic.version = 11 : i64} {
  func.func @_conv_mm_kernel(%arg0: i32, %arg1: memref<256x1152xbf16, #tpu.memory_space<vmem>>, %arg2: memref<1152x128xbf16, #tpu.memory_space<vmem>>, %arg3: memref<1x128xf32, #tpu.memory_space<vmem>>, %arg4: memref<256x128xbf16, #tpu.memory_space<vmem>>) attributes {dimension_semantics = [#tpu.dimension_semantics<parallel>], iteration_bounds = array<i64: 8>, scalar_prefetch = 0 : i64, scratch_operands = 0 : i64, tpu.core_type = #tpu.core_type<tc>, window_params = [{transform_indices = @transform_0, window_bounds = array<i64: 256, 1152>}, {pipeline_mode = #tpu.pipeline_mode<synchronous>, transform_indices = @transform_1, window_bounds = array<i64: 1152, 128>}, {pipeline_mode = #tpu.pipeline_mode<synchronous>, transform_indices = @transform_2, window_bounds = array<i64: 1, 128>}, {transform_indices = @transform_3, window_bounds = array<i64: 256, 128>}]} {
    %c0 = arith.constant 0 : index
    %c0_0 = arith.constant 0 : index
    %0 = vector.load %arg1[%c0, %c0_0] : memref<256x1152xbf16, #tpu.memory_space<vmem>>, vector<256x1152xbf16>
    %c0_1 = arith.constant 0 : index
    %c0_2 = arith.constant 0 : index
    %1 = vector.load %arg2[%c0_1, %c0_2] : memref<1152x128xbf16, #tpu.memory_space<vmem>>, vector<1152x128xbf16>
    %cst = arith.constant dense<0.000000e+00> : vector<256x128xf32>
    %2 = tpu.matmul %0, %1, %cst {dimension_numbers = #tpu.dot_dimension_numbers<[1], [0], [0], [1], [0, 0, 1, 1], [], []>} : vector<256x1152xbf16>, vector<1152x128xbf16>, vector<256x128xf32> -> vector<256x128xf32>
    %c0_3 = arith.constant 0 : index
    %c0_4 = arith.constant 0 : index
    %3 = vector.load %arg3[%c0_3, %c0_4] : memref<1x128xf32, #tpu.memory_space<vmem>>, vector<1x128xf32>
    %4 = vector.broadcast %3 : vector<1x128xf32> to vector<256x128xf32>
    %5 = arith.addf %2, %4 : vector<256x128xf32>
    %6 = arith.negf %5 : vector<256x128xf32>
    %7 = math.exp %6 : vector<256x128xf32>
    %cst_5 = arith.constant 1.000000e+00 : f32
    %8 = vector.broadcast %cst_5 : f32 to vector<256x128xf32>
    %9 = arith.addf %8, %7 : vector<256x128xf32>
    %10 = arith.divf %8, %9 : vector<256x128xf32>
    %11 = arith.mulf %5, %10 : vector<256x128xf32>
    %12 = arith.truncf %11 : vector<256x128xf32> to vector<256x128xbf16>
    %c0_6 = arith.constant 0 : index
    %c0_7 = arith.constant 0 : index
    %13 = vector.load %arg4[%c0_6, %c0_7] : memref<256x128xbf16, #tpu.memory_space<vmem>>, vector<256x128xbf16>
    tpu.vector_store %arg4[%c0_6, %c0_7], %12 {strides = array<i32>} : memref<256x128xbf16, #tpu.memory_space<vmem>>, vector<256x128xbf16>,
    return
  }
  func.func @transform_0(%arg0: i32) -> (i32, i32) {
    %c0_i32 = arith.constant 0 : i32
    %c0_i32_0 = arith.constant 0 : i32
    return %arg0, %c0_i32 : i32, i32
  }
  func.func @transform_1(%arg0: i32) -> (i32, i32) {
    %c0_i32 = arith.constant 0 : i32
    %c0_i32_0 = arith.constant 0 : i32
    %c0_i32_1 = arith.constant 0 : i32
    return %c0_i32, %c0_i32_0 : i32, i32
  }
  func.func @transform_2(%arg0: i32) -> (i32, i32) {
    %c0_i32 = arith.constant 0 : i32
    %c0_i32_0 = arith.constant 0 : i32
    %c0_i32_1 = arith.constant 0 : i32
    return %c0_i32, %c0_i32_0 : i32, i32
  }
  func.func @transform_3(%arg0: i32) -> (i32, i32) {
    %c0_i32 = arith.constant 0 : i32
    %c0_i32_0 = arith.constant 0 : i32
    return %arg0, %c0_i32 : i32, i32
  }
}

module attributes {stable_mosaic.version = 11 : i64} {
  func.func @_conv_mm_kernel(%arg0: i32, %arg1: memref<256x1152xbf16, #tpu.memory_space<vmem>>, %arg2: memref<1152x128xbf16, #tpu.memory_space<vmem>>, %arg3: memref<1x128xf32, #tpu.memory_space<vmem>>, %arg4: memref<256x128xbf16, #tpu.memory_space<vmem>>) attributes {dimension_semantics = [#tpu.dimension_semantics<parallel>], iteration_bounds = array<i64: 2>, scalar_prefetch = 0 : i64, scratch_operands = 0 : i64, tpu.core_type = #tpu.core_type<tc>, window_params = [{transform_indices = @transform_0, window_bounds = array<i64: 256, 1152>}, {pipeline_mode = #tpu.pipeline_mode<synchronous>, transform_indices = @transform_1, window_bounds = array<i64: 1152, 128>}, {pipeline_mode = #tpu.pipeline_mode<synchronous>, transform_indices = @transform_2, window_bounds = array<i64: 1, 128>}, {transform_indices = @transform_3, window_bounds = array<i64: 256, 128>}]} {
    %c0 = arith.constant 0 : index
    %c0_0 = arith.constant 0 : index
    %0 = vector.load %arg1[%c0, %c0_0] : memref<256x1152xbf16, #tpu.memory_space<vmem>>, vector<256x1152xbf16>
    %c0_1 = arith.constant 0 : index
    %c0_2 = arith.constant 0 : index
    %1 = vector.load %arg2[%c0_1, %c0_2] : memref<1152x128xbf16, #tpu.memory_space<vmem>>, vector<1152x128xbf16>
    %cst = arith.constant dense<0.000000e+00> : vector<256x128xf32>
    %2 = tpu.matmul %0, %1, %cst {dimension_numbers = #tpu.dot_dimension_numbers<[1], [0], [0], [1], [0, 0, 1, 1], [], []>} : vector<256x1152xbf16>, vector<1152x128xbf16>, vector<256x128xf32> -> vector<256x128xf32>
    %c0_3 = arith.constant 0 : index
    %c0_4 = arith.constant 0 : index
    %3 = vector.load %arg3[%c0_3, %c0_4] : memref<1x128xf32, #tpu.memory_space<vmem>>, vector<1x128xf32>
    %4 = vector.broadcast %3 : vector<1x128xf32> to vector<256x128xf32>
    %5 = arith.addf %2, %4 : vector<256x128xf32>
    %6 = arith.negf %5 : vector<256x128xf32>
    %7 = math.exp %6 : vector<256x128xf32>
    %cst_5 = arith.constant 1.000000e+00 : f32
    %8 = vector.broadcast %cst_5 : f32 to vector<256x128xf32>
    %9 = arith.addf %8, %7 : vector<256x128xf32>
    %10 = arith.divf %8, %9 : vector<256x128xf32>
    %11 = arith.mulf %5, %10 : vector<256x128xf32>
    %12 = arith.truncf %11 : vector<256x128xf32> to vector<256x128xbf16>
    %c0_6 = arith.constant 0 : index
    %c0_7 = arith.constant 0 : index
    %13 = vector.load %arg4[%c0_6, %c0_7] : memref<256x128xbf16, #tpu.memory_space<vmem>>, vector<256x128xbf16>
    tpu.vector_store %arg4[%c0_6, %c0_7], %12 {strides = array<i32>} : memref<256x128xbf16, #tpu.memory_space<vmem>>, vector<256x128xbf16>,
    return
  }
  func.func @transform_0(%arg0: i32) -> (i32, i32) {
    %c0_i32 = arith.constant 0 : i32
    %c0_i32_0 = arith.constant 0 : i32
    return %arg0, %c0_i32 : i32, i32
  }
  func.func @transform_1(%arg0: i32) -> (i32, i32) {
    %c0_i32 = arith.constant 0 : i32
    %c0_i32_0 = arith.constant 0 : i32
    %c0_i32_1 = arith.constant 0 : i32
    return %c0_i32, %c0_i32_0 : i32, i32
  }
  func.func @transform_2(%arg0: i32) -> (i32, i32) {
    %c0_i32 = arith.constant 0 : i32
    %c0_i32_0 = arith.constant 0 : i32
    %c0_i32_1 = arith.constant 0 : i32
    return %c0_i32, %c0_i32_0 : i32, i32
  }
  func.func @transform_3(%arg0: i32) -> (i32, i32) {
    %c0_i32 = arith.constant 0 : i32
    %c0_i32_0 = arith.constant 0 : i32
    return %arg0, %c0_i32 : i32, i32
  }
}

module attributes {stable_mosaic.version = 11 : i64} {
  func.func @_conv_mm_kernel(%arg0: i32, %arg1: memref<128x1152xbf16, #tpu.memory_space<vmem>>, %arg2: memref<1152x128xbf16, #tpu.memory_space<vmem>>, %arg3: memref<1x128xf32, #tpu.memory_space<vmem>>, %arg4: memref<128x128xbf16, #tpu.memory_space<vmem>>) attributes {dimension_semantics = [#tpu.dimension_semantics<parallel>], iteration_bounds = array<i64: 1>, scalar_prefetch = 0 : i64, scratch_operands = 0 : i64, tpu.core_type = #tpu.core_type<tc>, window_params = [{transform_indices = @transform_0, window_bounds = array<i64: 128, 1152>}, {pipeline_mode = #tpu.pipeline_mode<synchronous>, transform_indices = @transform_1, window_bounds = array<i64: 1152, 128>}, {pipeline_mode = #tpu.pipeline_mode<synchronous>, transform_indices = @transform_2, window_bounds = array<i64: 1, 128>}, {transform_indices = @transform_3, window_bounds = array<i64: 128, 128>}]} {
    %c0 = arith.constant 0 : index
    %c0_0 = arith.constant 0 : index
    %0 = vector.load %arg1[%c0, %c0_0] : memref<128x1152xbf16, #tpu.memory_space<vmem>>, vector<128x1152xbf16>
    %c0_1 = arith.constant 0 : index
    %c0_2 = arith.constant 0 : index
    %1 = vector.load %arg2[%c0_1, %c0_2] : memref<1152x128xbf16, #tpu.memory_space<vmem>>, vector<1152x128xbf16>
    %cst = arith.constant dense<0.000000e+00> : vector<128x128xf32>
    %2 = tpu.matmul %0, %1, %cst {dimension_numbers = #tpu.dot_dimension_numbers<[1], [0], [0], [1], [0, 0, 1, 1], [], []>} : vector<128x1152xbf16>, vector<1152x128xbf16>, vector<128x128xf32> -> vector<128x128xf32>
    %c0_3 = arith.constant 0 : index
    %c0_4 = arith.constant 0 : index
    %3 = vector.load %arg3[%c0_3, %c0_4] : memref<1x128xf32, #tpu.memory_space<vmem>>, vector<1x128xf32>
    %4 = vector.broadcast %3 : vector<1x128xf32> to vector<128x128xf32>
    %5 = arith.addf %2, %4 : vector<128x128xf32>
    %6 = arith.negf %5 : vector<128x128xf32>
    %7 = math.exp %6 : vector<128x128xf32>
    %cst_5 = arith.constant 1.000000e+00 : f32
    %8 = vector.broadcast %cst_5 : f32 to vector<128x128xf32>
    %9 = arith.addf %8, %7 : vector<128x128xf32>
    %10 = arith.divf %8, %9 : vector<128x128xf32>
    %11 = arith.mulf %5, %10 : vector<128x128xf32>
    %12 = arith.truncf %11 : vector<128x128xf32> to vector<128x128xbf16>
    %c0_6 = arith.constant 0 : index
    %c0_7 = arith.constant 0 : index
    %13 = vector.load %arg4[%c0_6, %c0_7] : memref<128x128xbf16, #tpu.memory_space<vmem>>, vector<128x128xbf16>
    tpu.vector_store %arg4[%c0_6, %c0_7], %12 {strides = array<i32>} : memref<128x128xbf16, #tpu.memory_space<vmem>>, vector<128x128xbf16>,
    return
  }
  func.func @transform_0(%arg0: i32) -> (i32, i32) {
    %c0_i32 = arith.constant 0 : i32
    %c0_i32_0 = arith.constant 0 : i32
    return %arg0, %c0_i32 : i32, i32
  }
  func.func @transform_1(%arg0: i32) -> (i32, i32) {
    %c0_i32 = arith.constant 0 : i32
    %c0_i32_0 = arith.constant 0 : i32
    %c0_i32_1 = arith.constant 0 : i32
    return %c0_i32, %c0_i32_0 : i32, i32
  }
  func.func @transform_2(%arg0: i32) -> (i32, i32) {
    %c0_i32 = arith.constant 0 : i32
    %c0_i32_0 = arith.constant 0 : i32
    %c0_i32_1 = arith.constant 0 : i32
    return %c0_i32, %c0_i32_0 : i32, i32
  }
  func.func @transform_3(%arg0: i32) -> (i32, i32) {
    %c0_i32 = arith.constant 0 : i32
    %c0_i32_0 = arith.constant 0 : i32
    return %arg0, %c0_i32 : i32, i32
  }
}

module attributes {stable_mosaic.version = 11 : i64} {
  func.func @_conv_mm_kernel(%arg0: i32, %arg1: memref<32x1152xbf16, #tpu.memory_space<vmem>>, %arg2: memref<1152x128xbf16, #tpu.memory_space<vmem>>, %arg3: memref<1x128xf32, #tpu.memory_space<vmem>>, %arg4: memref<32x128xbf16, #tpu.memory_space<vmem>>) attributes {dimension_semantics = [#tpu.dimension_semantics<parallel>], iteration_bounds = array<i64: 1>, scalar_prefetch = 0 : i64, scratch_operands = 0 : i64, tpu.core_type = #tpu.core_type<tc>, window_params = [{transform_indices = @transform_0, window_bounds = array<i64: 32, 1152>}, {pipeline_mode = #tpu.pipeline_mode<synchronous>, transform_indices = @transform_1, window_bounds = array<i64: 1152, 128>}, {pipeline_mode = #tpu.pipeline_mode<synchronous>, transform_indices = @transform_2, window_bounds = array<i64: 1, 128>}, {transform_indices = @transform_3, window_bounds = array<i64: 32, 128>}]} {
    %c0 = arith.constant 0 : index
    %c0_0 = arith.constant 0 : index
    %0 = vector.load %arg1[%c0, %c0_0] : memref<32x1152xbf16, #tpu.memory_space<vmem>>, vector<32x1152xbf16>
    %c0_1 = arith.constant 0 : index
    %c0_2 = arith.constant 0 : index
    %1 = vector.load %arg2[%c0_1, %c0_2] : memref<1152x128xbf16, #tpu.memory_space<vmem>>, vector<1152x128xbf16>
    %cst = arith.constant dense<0.000000e+00> : vector<32x128xf32>
    %2 = tpu.matmul %0, %1, %cst {dimension_numbers = #tpu.dot_dimension_numbers<[1], [0], [0], [1], [0, 0, 1, 1], [], []>} : vector<32x1152xbf16>, vector<1152x128xbf16>, vector<32x128xf32> -> vector<32x128xf32>
    %c0_3 = arith.constant 0 : index
    %c0_4 = arith.constant 0 : index
    %3 = vector.load %arg3[%c0_3, %c0_4] : memref<1x128xf32, #tpu.memory_space<vmem>>, vector<1x128xf32>
    %4 = vector.broadcast %3 : vector<1x128xf32> to vector<32x128xf32>
    %5 = arith.addf %2, %4 : vector<32x128xf32>
    %6 = arith.negf %5 : vector<32x128xf32>
    %7 = math.exp %6 : vector<32x128xf32>
    %cst_5 = arith.constant 1.000000e+00 : f32
    %8 = vector.broadcast %cst_5 : f32 to vector<32x128xf32>
    %9 = arith.addf %8, %7 : vector<32x128xf32>
    %10 = arith.divf %8, %9 : vector<32x128xf32>
    %11 = arith.mulf %5, %10 : vector<32x128xf32>
    %12 = arith.truncf %11 : vector<32x128xf32> to vector<32x128xbf16>
    %c0_6 = arith.constant 0 : index
    %c0_7 = arith.constant 0 : index
    %13 = vector.load %arg4[%c0_6, %c0_7] : memref<32x128xbf16, #tpu.memory_space<vmem>>, vector<32x128xbf16>
    tpu.vector_store %arg4[%c0_6, %c0_7], %12 {strides = array<i32>} : memref<32x128xbf16, #tpu.memory_space<vmem>>, vector<32x128xbf16>,
    return
  }
  func.func @transform_0(%arg0: i32) -> (i32, i32) {
    %c0_i32 = arith.constant 0 : i32
    %c0_i32_0 = arith.constant 0 : i32
    return %arg0, %c0_i32 : i32, i32
  }
  func.func @transform_1(%arg0: i32) -> (i32, i32) {
    %c0_i32 = arith.constant 0 : i32
    %c0_i32_0 = arith.constant 0 : i32
    %c0_i32_1 = arith.constant 0 : i32
    return %c0_i32, %c0_i32_0 : i32, i32
  }
  func.func @transform_2(%arg0: i32) -> (i32, i32) {
    %c0_i32 = arith.constant 0 : i32
    %c0_i32_0 = arith.constant 0 : i32
    %c0_i32_1 = arith.constant 0 : i32
    return %c0_i32, %c0_i32_0 : i32, i32
  }
  func.func @transform_3(%arg0: i32) -> (i32, i32) {
    %c0_i32 = arith.constant 0 : i32
    %c0_i32_0 = arith.constant 0 : i32
    return %arg0, %c0_i32 : i32, i32
  }
}

module attributes {stable_mosaic.version = 11 : i64} {
  func.func @_conv_mm_kernel(%arg0: i32, %arg1: memref<8x128xbf16, #tpu.memory_space<vmem>>, %arg2: memref<128x128xbf16, #tpu.memory_space<vmem>>, %arg3: memref<1x128xf32, #tpu.memory_space<vmem>>, %arg4: memref<8x128xbf16, #tpu.memory_space<vmem>>) attributes {dimension_semantics = [#tpu.dimension_semantics<parallel>], iteration_bounds = array<i64: 1>, scalar_prefetch = 0 : i64, scratch_operands = 0 : i64, tpu.core_type = #tpu.core_type<tc>, window_params = [{transform_indices = @transform_0, window_bounds = array<i64: 8, 128>}, {pipeline_mode = #tpu.pipeline_mode<synchronous>, transform_indices = @transform_1, window_bounds = array<i64: 128, 128>}, {pipeline_mode = #tpu.pipeline_mode<synchronous>, transform_indices = @transform_2, window_bounds = array<i64: 1, 128>}, {transform_indices = @transform_3, window_bounds = array<i64: 8, 128>}]} {
    %c0 = arith.constant 0 : index
    %c0_0 = arith.constant 0 : index
    %0 = vector.load %arg1[%c0, %c0_0] : memref<8x128xbf16, #tpu.memory_space<vmem>>, vector<8x128xbf16>
    %c0_1 = arith.constant 0 : index
    %c0_2 = arith.constant 0 : index
    %1 = vector.load %arg2[%c0_1, %c0_2] : memref<128x128xbf16, #tpu.memory_space<vmem>>, vector<128x128xbf16>
    %cst = arith.constant dense<0.000000e+00> : vector<8x128xf32>
    %2 = tpu.matmul %0, %1, %cst {dimension_numbers = #tpu.dot_dimension_numbers<[1], [0], [0], [1], [0, 0, 1, 1], [], []>} : vector<8x128xbf16>, vector<128x128xbf16>, vector<8x128xf32> -> vector<8x128xf32>
    %c0_3 = arith.constant 0 : index
    %c0_4 = arith.constant 0 : index
    %3 = vector.load %arg3[%c0_3, %c0_4] : memref<1x128xf32, #tpu.memory_space<vmem>>, vector<1x128xf32>
    %4 = vector.broadcast %3 : vector<1x128xf32> to vector<8x128xf32>
    %5 = arith.addf %2, %4 : vector<8x128xf32>
    %6 = arith.negf %5 : vector<8x128xf32>
    %7 = math.exp %6 : vector<8x128xf32>
    %cst_5 = arith.constant 1.000000e+00 : f32
    %8 = vector.broadcast %cst_5 : f32 to vector<8x128xf32>
    %9 = arith.addf %8, %7 : vector<8x128xf32>
    %10 = arith.divf %8, %9 : vector<8x128xf32>
    %11 = arith.mulf %5, %10 : vector<8x128xf32>
    %12 = arith.truncf %11 : vector<8x128xf32> to vector<8x128xbf16>
    %c0_6 = arith.constant 0 : index
    %c0_7 = arith.constant 0 : index
    %13 = vector.load %arg4[%c0_6, %c0_7] : memref<8x128xbf16, #tpu.memory_space<vmem>>, vector<8x128xbf16>
    tpu.vector_store %arg4[%c0_6, %c0_7], %12 {strides = array<i32>} : memref<8x128xbf16, #tpu.memory_space<vmem>>, vector<8x128xbf16>,
    return
  }
  func.func @transform_0(%arg0: i32) -> (i32, i32) {
    %c0_i32 = arith.constant 0 : i32
    %c0_i32_0 = arith.constant 0 : i32
    return %arg0, %c0_i32 : i32, i32
  }
  func.func @transform_1(%arg0: i32) -> (i32, i32) {
    %c0_i32 = arith.constant 0 : i32
    %c0_i32_0 = arith.constant 0 : i32
    %c0_i32_1 = arith.constant 0 : i32
    return %c0_i32, %c0_i32_0 : i32, i32
  }
  func.func @transform_2(%arg0: i32) -> (i32, i32) {
    %c0_i32 = arith.constant 0 : i32
    %c0_i32_0 = arith.constant 0 : i32
    %c0_i32_1 = arith.constant 0 : i32
    return %c0_i32, %c0_i32_0 : i32, i32
  }
  func.func @transform_3(%arg0: i32) -> (i32, i32) {
    %c0_i32 = arith.constant 0 : i32
    %c0_i32_0 = arith.constant 0 : i32
    return %arg0, %c0_i32 : i32, i32
  }
}

module attributes {stable_mosaic.version = 11 : i64} {
  func.func @_conv_mm_kernel(%arg0: i32, %arg1: memref<8x1152xbf16, #tpu.memory_space<vmem>>, %arg2: memref<1152x128xbf16, #tpu.memory_space<vmem>>, %arg3: memref<1x128xf32, #tpu.memory_space<vmem>>, %arg4: memref<8x128xbf16, #tpu.memory_space<vmem>>) attributes {dimension_semantics = [#tpu.dimension_semantics<parallel>], iteration_bounds = array<i64: 1>, scalar_prefetch = 0 : i64, scratch_operands = 0 : i64, tpu.core_type = #tpu.core_type<tc>, window_params = [{transform_indices = @transform_0, window_bounds = array<i64: 8, 1152>}, {pipeline_mode = #tpu.pipeline_mode<synchronous>, transform_indices = @transform_1, window_bounds = array<i64: 1152, 128>}, {pipeline_mode = #tpu.pipeline_mode<synchronous>, transform_indices = @transform_2, window_bounds = array<i64: 1, 128>}, {transform_indices = @transform_3, window_bounds = array<i64: 8, 128>}]} {
    %c0 = arith.constant 0 : index
    %c0_0 = arith.constant 0 : index
    %0 = vector.load %arg1[%c0, %c0_0] : memref<8x1152xbf16, #tpu.memory_space<vmem>>, vector<8x1152xbf16>
    %c0_1 = arith.constant 0 : index
    %c0_2 = arith.constant 0 : index
    %1 = vector.load %arg2[%c0_1, %c0_2] : memref<1152x128xbf16, #tpu.memory_space<vmem>>, vector<1152x128xbf16>
    %cst = arith.constant dense<0.000000e+00> : vector<8x128xf32>
    %2 = tpu.matmul %0, %1, %cst {dimension_numbers = #tpu.dot_dimension_numbers<[1], [0], [0], [1], [0, 0, 1, 1], [], []>} : vector<8x1152xbf16>, vector<1152x128xbf16>, vector<8x128xf32> -> vector<8x128xf32>
    %c0_3 = arith.constant 0 : index
    %c0_4 = arith.constant 0 : index
    %3 = vector.load %arg3[%c0_3, %c0_4] : memref<1x128xf32, #tpu.memory_space<vmem>>, vector<1x128xf32>
    %4 = vector.broadcast %3 : vector<1x128xf32> to vector<8x128xf32>
    %5 = arith.addf %2, %4 : vector<8x128xf32>
    %6 = arith.negf %5 : vector<8x128xf32>
    %7 = math.exp %6 : vector<8x128xf32>
    %cst_5 = arith.constant 1.000000e+00 : f32
    %8 = vector.broadcast %cst_5 : f32 to vector<8x128xf32>
    %9 = arith.addf %8, %7 : vector<8x128xf32>
    %10 = arith.divf %8, %9 : vector<8x128xf32>
    %11 = arith.mulf %5, %10 : vector<8x128xf32>
    %12 = arith.truncf %11 : vector<8x128xf32> to vector<8x128xbf16>
    %c0_6 = arith.constant 0 : index
    %c0_7 = arith.constant 0 : index
    %13 = vector.load %arg4[%c0_6, %c0_7] : memref<8x128xbf16, #tpu.memory_space<vmem>>, vector<8x128xbf16>
    tpu.vector_store %arg4[%c0_6, %c0_7], %12 {strides = array<i32>} : memref<8x128xbf16, #tpu.memory_space<vmem>>, vector<8x128xbf16>,
    return
  }
  func.func @transform_0(%arg0: i32) -> (i32, i32) {
    %c0_i32 = arith.constant 0 : i32
    %c0_i32_0 = arith.constant 0 : i32
    return %arg0, %c0_i32 : i32, i32
  }
  func.func @transform_1(%arg0: i32) -> (i32, i32) {
    %c0_i32 = arith.constant 0 : i32
    %c0_i32_0 = arith.constant 0 : i32
    %c0_i32_1 = arith.constant 0 : i32
    return %c0_i32, %c0_i32_0 : i32, i32
  }
  func.func @transform_2(%arg0: i32) -> (i32, i32) {
    %c0_i32 = arith.constant 0 : i32
    %c0_i32_0 = arith.constant 0 : i32
    %c0_i32_1 = arith.constant 0 : i32
    return %c0_i32, %c0_i32_0 : i32, i32
  }
  func.func @transform_3(%arg0: i32) -> (i32, i32) {
    %c0_i32 = arith.constant 0 : i32
    %c0_i32_0 = arith.constant 0 : i32
    return %arg0, %c0_i32 : i32, i32
  }
}

module attributes {stable_mosaic.version = 11 : i64} {
  func.func @_detect_head_kernel(%arg0: i32, %arg1: memref<8x128xbf16, #tpu.memory_space<vmem>>, %arg2: memref<128x128xbf16, #tpu.memory_space<vmem>>, %arg3: memref<1x128xf32, #tpu.memory_space<vmem>>, %arg4: memref<8x128xf32, #tpu.memory_space<vmem>>, %arg5: memref<8x128xf32, #tpu.memory_space<vmem>>) attributes {dimension_semantics = [#tpu.dimension_semantics<parallel>], iteration_bounds = array<i64: 1>, scalar_prefetch = 0 : i64, scratch_operands = 0 : i64, tpu.core_type = #tpu.core_type<tc>, window_params = [{transform_indices = @transform_0, window_bounds = array<i64: 8, 128>}, {pipeline_mode = #tpu.pipeline_mode<synchronous>, transform_indices = @transform_1, window_bounds = array<i64: 128, 128>}, {pipeline_mode = #tpu.pipeline_mode<synchronous>, transform_indices = @transform_2, window_bounds = array<i64: 1, 128>}, {pipeline_mode = #tpu.pipeline_mode<synchronous>, transform_indices = @transform_3, window_bounds = array<i64: 8, 128>}, {transform_indices = @transform_4, window_bounds = array<i64: 8, 128>}]} {
    %c0 = arith.constant 0 : index
    %c0_0 = arith.constant 0 : index
    %0 = vector.load %arg1[%c0, %c0_0] : memref<8x128xbf16, #tpu.memory_space<vmem>>, vector<8x128xbf16>
    %c0_1 = arith.constant 0 : index
    %c0_2 = arith.constant 0 : index
    %1 = vector.load %arg2[%c0_1, %c0_2] : memref<128x128xbf16, #tpu.memory_space<vmem>>, vector<128x128xbf16>
    %cst = arith.constant dense<0.000000e+00> : vector<8x128xf32>
    %2 = tpu.matmul %0, %1, %cst {dimension_numbers = #tpu.dot_dimension_numbers<[1], [0], [0], [1], [0, 0, 1, 1], [], []>} : vector<8x128xbf16>, vector<128x128xbf16>, vector<8x128xf32> -> vector<8x128xf32>
    %c0_3 = arith.constant 0 : index
    %c0_4 = arith.constant 0 : index
    %3 = vector.load %arg3[%c0_3, %c0_4] : memref<1x128xf32, #tpu.memory_space<vmem>>, vector<1x128xf32>
    %4 = vector.broadcast %3 : vector<1x128xf32> to vector<8x128xf32>
    %5 = arith.addf %2, %4 : vector<8x128xf32>
    %6 = arith.negf %5 : vector<8x128xf32>
    %7 = math.exp %6 : vector<8x128xf32>
    %cst_5 = arith.constant 1.000000e+00 : f32
    %8 = vector.broadcast %cst_5 : f32 to vector<8x128xf32>
    %9 = arith.addf %8, %7 : vector<8x128xf32>
    %10 = arith.divf %8, %9 : vector<8x128xf32>
    %11 = tpu.iota {dimensions = array<i32: 0>} : vector<8x128xi32>
    %c8_i32 = arith.constant 8 : i32
    %12 = arith.muli %arg0, %c8_i32 : i32
    %13 = vector.broadcast %12 : i32 to vector<8x128xi32>
    %14 = arith.addi %11, %13 : vector<8x128xi32>
    %c3_i32 = arith.constant 3 : i32
    %15 = vector.broadcast %c3_i32 : i32 to vector<8x128xi32>
    %16 = arith.andi %14, %15 : vector<8x128xi32>
    %c1_i32 = arith.constant 1 : i32
    %17 = vector.broadcast %c1_i32 : i32 to vector<8x128xi32>
    %18 = arith.andi %16, %17 : vector<8x128xi32>
    %19 = arith.sitofp %18 : vector<8x128xi32> to vector<8x128xf32>
    %c1_i32_6 = arith.constant 1 : i32
    %20 = vector.broadcast %c1_i32_6 : i32 to vector<8x128xi32>
    %21 = arith.shrsi %16, %20 : vector<8x128xi32>
    %22 = arith.sitofp %21 : vector<8x128xi32> to vector<8x128xf32>
    %c0_7 = arith.constant 0 : index
    %c0_8 = arith.constant 0 : index
    %23 = vector.load %arg4[%c0_7, %c0_8] : memref<8x128xf32, #tpu.memory_space<vmem>>, vector<1x128xf32>
    %c1 = arith.constant 1 : index
    %c0_9 = arith.constant 0 : index
    %24 = vector.load %arg4[%c1, %c0_9] : memref<8x128xf32, #tpu.memory_space<vmem>>, vector<1x128xf32>
    %c2 = arith.constant 2 : index
    %c0_10 = arith.constant 0 : index
    %25 = vector.load %arg4[%c2, %c0_10] : memref<8x128xf32, #tpu.memory_space<vmem>>, vector<1x128xf32>
    %c3 = arith.constant 3 : index
    %c0_11 = arith.constant 0 : index
    %26 = vector.load %arg4[%c3, %c0_11] : memref<8x128xf32, #tpu.memory_space<vmem>>, vector<1x128xf32>
    %27 = vector.broadcast %23 : vector<1x128xf32> to vector<8x128xf32>
    %28 = arith.mulf %19, %27 : vector<8x128xf32>
    %29 = vector.broadcast %24 : vector<1x128xf32> to vector<8x128xf32>
    %30 = arith.mulf %22, %29 : vector<8x128xf32>
    %31 = arith.addf %28, %30 : vector<8x128xf32>
    %cst_12 = arith.constant 2.000000e+00 : f32
    %32 = vector.broadcast %cst_12 : f32 to vector<8x128xf32>
    %33 = arith.mulf %10, %32 : vector<8x128xf32>
    %cst_13 = arith.constant 5.000000e-01 : f32
    %34 = vector.broadcast %cst_13 : f32 to vector<8x128xf32>
    %35 = arith.subf %33, %34 : vector<8x128xf32>
    %36 = arith.addf %35, %31 : vector<8x128xf32>
    %cst_14 = arith.constant 1.600000e+01 : f32
    %37 = vector.broadcast %cst_14 : f32 to vector<8x128xf32>
    %38 = arith.mulf %36, %37 : vector<8x128xf32>
    %cst_15 = arith.constant 2.000000e+00 : f32
    %39 = vector.broadcast %cst_15 : f32 to vector<8x128xf32>
    %40 = arith.mulf %10, %39 : vector<8x128xf32>
    %41 = arith.mulf %40, %40 : vector<8x128xf32>
    %42 = vector.broadcast %26 : vector<1x128xf32> to vector<8x128xf32>
    %43 = arith.mulf %41, %42 : vector<8x128xf32>
    %44 = arith.addf %23, %24 : vector<1x128xf32>
    %45 = vector.broadcast %44 : vector<1x128xf32> to vector<8x128xf32>
    %46 = arith.mulf %45, %38 : vector<8x128xf32>
    %47 = vector.broadcast %25 : vector<1x128xf32> to vector<8x128xf32>
    %48 = arith.mulf %47, %43 : vector<8x128xf32>
    %49 = arith.addf %46, %48 : vector<8x128xf32>
    %cst_16 = arith.constant 1.000000e+00 : f32
    %50 = vector.broadcast %cst_16 : f32 to vector<1x128xf32>
    %51 = arith.subf %50, %44 : vector<1x128xf32>
    %52 = arith.subf %51, %25 : vector<1x128xf32>
    %53 = vector.broadcast %52 : vector<1x128xf32> to vector<8x128xf32>
    %54 = arith.mulf %53, %10 : vector<8x128xf32>
    %55 = arith.addf %49, %54 : vector<8x128xf32>
    %c0_17 = arith.constant 0 : index
    %c0_18 = arith.constant 0 : index
    %56 = vector.load %arg5[%c0_17, %c0_18] : memref<8x128xf32, #tpu.memory_space<vmem>>, vector<8x128xf32>
    tpu.vector_store %arg5[%c0_17, %c0_18], %55 {strides = array<i32>} : memref<8x128xf32, #tpu.memory_space<vmem>>, vector<8x128xf32>,
    return
  }
  func.func @transform_0(%arg0: i32) -> (i32, i32) {
    %c0_i32 = arith.constant 0 : i32
    %c0_i32_0 = arith.constant 0 : i32
    return %arg0, %c0_i32 : i32, i32
  }
  func.func @transform_1(%arg0: i32) -> (i32, i32) {
    %c0_i32 = arith.constant 0 : i32
    %c0_i32_0 = arith.constant 0 : i32
    %c0_i32_1 = arith.constant 0 : i32
    return %c0_i32, %c0_i32_0 : i32, i32
  }
  func.func @transform_2(%arg0: i32) -> (i32, i32) {
    %c0_i32 = arith.constant 0 : i32
    %c0_i32_0 = arith.constant 0 : i32
    %c0_i32_1 = arith.constant 0 : i32
    return %c0_i32, %c0_i32_0 : i32, i32
  }
  func.func @transform_3(%arg0: i32) -> (i32, i32) {
    %c0_i32 = arith.constant 0 : i32
    %c0_i32_0 = arith.constant 0 : i32
    %c0_i32_1 = arith.constant 0 : i32
    return %c0_i32, %c0_i32_0 : i32, i32
  }
  func.func @transform_4(%arg0: i32) -> (i32, i32) {
    %c0_i32 = arith.constant 0 : i32
    %c0_i32_0 = arith.constant 0 : i32
    return %arg0, %c0_i32 : i32, i32
  }
}

module attributes {stable_mosaic.version = 11 : i64} {
  func.func @_conv_mm_kernel(%arg0: i32, %arg1: memref<8x2304xbf16, #tpu.memory_space<vmem>>, %arg2: memref<2304x128xbf16, #tpu.memory_space<vmem>>, %arg3: memref<1x128xf32, #tpu.memory_space<vmem>>, %arg4: memref<8x128xbf16, #tpu.memory_space<vmem>>) attributes {dimension_semantics = [#tpu.dimension_semantics<parallel>], iteration_bounds = array<i64: 1>, scalar_prefetch = 0 : i64, scratch_operands = 0 : i64, tpu.core_type = #tpu.core_type<tc>, window_params = [{transform_indices = @transform_0, window_bounds = array<i64: 8, 2304>}, {pipeline_mode = #tpu.pipeline_mode<synchronous>, transform_indices = @transform_1, window_bounds = array<i64: 2304, 128>}, {pipeline_mode = #tpu.pipeline_mode<synchronous>, transform_indices = @transform_2, window_bounds = array<i64: 1, 128>}, {transform_indices = @transform_3, window_bounds = array<i64: 8, 128>}]} {
    %c0 = arith.constant 0 : index
    %c0_0 = arith.constant 0 : index
    %0 = vector.load %arg1[%c0, %c0_0] : memref<8x2304xbf16, #tpu.memory_space<vmem>>, vector<8x2304xbf16>
    %c0_1 = arith.constant 0 : index
    %c0_2 = arith.constant 0 : index
    %1 = vector.load %arg2[%c0_1, %c0_2] : memref<2304x128xbf16, #tpu.memory_space<vmem>>, vector<2304x128xbf16>
    %cst = arith.constant dense<0.000000e+00> : vector<8x128xf32>
    %2 = tpu.matmul %0, %1, %cst {dimension_numbers = #tpu.dot_dimension_numbers<[1], [0], [0], [1], [0, 0, 1, 1], [], []>} : vector<8x2304xbf16>, vector<2304x128xbf16>, vector<8x128xf32> -> vector<8x128xf32>
    %c0_3 = arith.constant 0 : index
    %c0_4 = arith.constant 0 : index
    %3 = vector.load %arg3[%c0_3, %c0_4] : memref<1x128xf32, #tpu.memory_space<vmem>>, vector<1x128xf32>
    %4 = vector.broadcast %3 : vector<1x128xf32> to vector<8x128xf32>
    %5 = arith.addf %2, %4 : vector<8x128xf32>
    %6 = arith.negf %5 : vector<8x128xf32>
    %7 = math.exp %6 : vector<8x128xf32>
    %cst_5 = arith.constant 1.000000e+00 : f32
    %8 = vector.broadcast %cst_5 : f32 to vector<8x128xf32>
    %9 = arith.addf %8, %7 : vector<8x128xf32>
    %10 = arith.divf %8, %9 : vector<8x128xf32>
    %11 = arith.mulf %5, %10 : vector<8x128xf32>
    %12 = arith.truncf %11 : vector<8x128xf32> to vector<8x128xbf16>
    %c0_6 = arith.constant 0 : index
    %c0_7 = arith.constant 0 : index
    %13 = vector.load %arg4[%c0_6, %c0_7] : memref<8x128xbf16, #tpu.memory_space<vmem>>, vector<8x128xbf16>
    tpu.vector_store %arg4[%c0_6, %c0_7], %12 {strides = array<i32>} : memref<8x128xbf16, #tpu.memory_space<vmem>>, vector<8x128xbf16>,
    return
  }
  func.func @transform_0(%arg0: i32) -> (i32, i32) {
    %c0_i32 = arith.constant 0 : i32
    %c0_i32_0 = arith.constant 0 : i32
    return %arg0, %c0_i32 : i32, i32
  }
  func.func @transform_1(%arg0: i32) -> (i32, i32) {
    %c0_i32 = arith.constant 0 : i32
    %c0_i32_0 = arith.constant 0 : i32
    %c0_i32_1 = arith.constant 0 : i32
    return %c0_i32, %c0_i32_0 : i32, i32
  }
  func.func @transform_2(%arg0: i32) -> (i32, i32) {
    %c0_i32 = arith.constant 0 : i32
    %c0_i32_0 = arith.constant 0 : i32
    %c0_i32_1 = arith.constant 0 : i32
    return %c0_i32, %c0_i32_0 : i32, i32
  }
  func.func @transform_3(%arg0: i32) -> (i32, i32) {
    %c0_i32 = arith.constant 0 : i32
    %c0_i32_0 = arith.constant 0 : i32
    return %arg0, %c0_i32 : i32, i32
  }
}

module attributes {stable_mosaic.version = 11 : i64} {
  func.func @_detect_head_kernel(%arg0: i32, %arg1: memref<32x128xbf16, #tpu.memory_space<vmem>>, %arg2: memref<128x128xbf16, #tpu.memory_space<vmem>>, %arg3: memref<1x128xf32, #tpu.memory_space<vmem>>, %arg4: memref<8x128xf32, #tpu.memory_space<vmem>>, %arg5: memref<32x128xf32, #tpu.memory_space<vmem>>) attributes {dimension_semantics = [#tpu.dimension_semantics<parallel>], iteration_bounds = array<i64: 1>, scalar_prefetch = 0 : i64, scratch_operands = 0 : i64, tpu.core_type = #tpu.core_type<tc>, window_params = [{transform_indices = @transform_0, window_bounds = array<i64: 32, 128>}, {pipeline_mode = #tpu.pipeline_mode<synchronous>, transform_indices = @transform_1, window_bounds = array<i64: 128, 128>}, {pipeline_mode = #tpu.pipeline_mode<synchronous>, transform_indices = @transform_2, window_bounds = array<i64: 1, 128>}, {pipeline_mode = #tpu.pipeline_mode<synchronous>, transform_indices = @transform_3, window_bounds = array<i64: 8, 128>}, {transform_indices = @transform_4, window_bounds = array<i64: 32, 128>}]} {
    %c0 = arith.constant 0 : index
    %c0_0 = arith.constant 0 : index
    %0 = vector.load %arg1[%c0, %c0_0] : memref<32x128xbf16, #tpu.memory_space<vmem>>, vector<32x128xbf16>
    %c0_1 = arith.constant 0 : index
    %c0_2 = arith.constant 0 : index
    %1 = vector.load %arg2[%c0_1, %c0_2] : memref<128x128xbf16, #tpu.memory_space<vmem>>, vector<128x128xbf16>
    %cst = arith.constant dense<0.000000e+00> : vector<32x128xf32>
    %2 = tpu.matmul %0, %1, %cst {dimension_numbers = #tpu.dot_dimension_numbers<[1], [0], [0], [1], [0, 0, 1, 1], [], []>} : vector<32x128xbf16>, vector<128x128xbf16>, vector<32x128xf32> -> vector<32x128xf32>
    %c0_3 = arith.constant 0 : index
    %c0_4 = arith.constant 0 : index
    %3 = vector.load %arg3[%c0_3, %c0_4] : memref<1x128xf32, #tpu.memory_space<vmem>>, vector<1x128xf32>
    %4 = vector.broadcast %3 : vector<1x128xf32> to vector<32x128xf32>
    %5 = arith.addf %2, %4 : vector<32x128xf32>
    %6 = arith.negf %5 : vector<32x128xf32>
    %7 = math.exp %6 : vector<32x128xf32>
    %cst_5 = arith.constant 1.000000e+00 : f32
    %8 = vector.broadcast %cst_5 : f32 to vector<32x128xf32>
    %9 = arith.addf %8, %7 : vector<32x128xf32>
    %10 = arith.divf %8, %9 : vector<32x128xf32>
    %11 = tpu.iota {dimensions = array<i32: 0>} : vector<32x128xi32>
    %c32_i32 = arith.constant 32 : i32
    %12 = arith.muli %arg0, %c32_i32 : i32
    %13 = vector.broadcast %12 : i32 to vector<32x128xi32>
    %14 = arith.addi %11, %13 : vector<32x128xi32>
    %c15_i32 = arith.constant 15 : i32
    %15 = vector.broadcast %c15_i32 : i32 to vector<32x128xi32>
    %16 = arith.andi %14, %15 : vector<32x128xi32>
    %c3_i32 = arith.constant 3 : i32
    %17 = vector.broadcast %c3_i32 : i32 to vector<32x128xi32>
    %18 = arith.andi %16, %17 : vector<32x128xi32>
    %19 = arith.sitofp %18 : vector<32x128xi32> to vector<32x128xf32>
    %c2_i32 = arith.constant 2 : i32
    %20 = vector.broadcast %c2_i32 : i32 to vector<32x128xi32>
    %21 = arith.shrsi %16, %20 : vector<32x128xi32>
    %22 = arith.sitofp %21 : vector<32x128xi32> to vector<32x128xf32>
    %c0_6 = arith.constant 0 : index
    %c0_7 = arith.constant 0 : index
    %23 = vector.load %arg4[%c0_6, %c0_7] : memref<8x128xf32, #tpu.memory_space<vmem>>, vector<1x128xf32>
    %c1 = arith.constant 1 : index
    %c0_8 = arith.constant 0 : index
    %24 = vector.load %arg4[%c1, %c0_8] : memref<8x128xf32, #tpu.memory_space<vmem>>, vector<1x128xf32>
    %c2 = arith.constant 2 : index
    %c0_9 = arith.constant 0 : index
    %25 = vector.load %arg4[%c2, %c0_9] : memref<8x128xf32, #tpu.memory_space<vmem>>, vector<1x128xf32>
    %c3 = arith.constant 3 : index
    %c0_10 = arith.constant 0 : index
    %26 = vector.load %arg4[%c3, %c0_10] : memref<8x128xf32, #tpu.memory_space<vmem>>, vector<1x128xf32>
    %27 = vector.broadcast %23 : vector<1x128xf32> to vector<32x128xf32>
    %28 = arith.mulf %19, %27 : vector<32x128xf32>
    %29 = vector.broadcast %24 : vector<1x128xf32> to vector<32x128xf32>
    %30 = arith.mulf %22, %29 : vector<32x128xf32>
    %31 = arith.addf %28, %30 : vector<32x128xf32>
    %cst_11 = arith.constant 2.000000e+00 : f32
    %32 = vector.broadcast %cst_11 : f32 to vector<32x128xf32>
    %33 = arith.mulf %10, %32 : vector<32x128xf32>
    %cst_12 = arith.constant 5.000000e-01 : f32
    %34 = vector.broadcast %cst_12 : f32 to vector<32x128xf32>
    %35 = arith.subf %33, %34 : vector<32x128xf32>
    %36 = arith.addf %35, %31 : vector<32x128xf32>
    %cst_13 = arith.constant 8.000000e+00 : f32
    %37 = vector.broadcast %cst_13 : f32 to vector<32x128xf32>
    %38 = arith.mulf %36, %37 : vector<32x128xf32>
    %cst_14 = arith.constant 2.000000e+00 : f32
    %39 = vector.broadcast %cst_14 : f32 to vector<32x128xf32>
    %40 = arith.mulf %10, %39 : vector<32x128xf32>
    %41 = arith.mulf %40, %40 : vector<32x128xf32>
    %42 = vector.broadcast %26 : vector<1x128xf32> to vector<32x128xf32>
    %43 = arith.mulf %41, %42 : vector<32x128xf32>
    %44 = arith.addf %23, %24 : vector<1x128xf32>
    %45 = vector.broadcast %44 : vector<1x128xf32> to vector<32x128xf32>
    %46 = arith.mulf %45, %38 : vector<32x128xf32>
    %47 = vector.broadcast %25 : vector<1x128xf32> to vector<32x128xf32>
    %48 = arith.mulf %47, %43 : vector<32x128xf32>
    %49 = arith.addf %46, %48 : vector<32x128xf32>
    %cst_15 = arith.constant 1.000000e+00 : f32
    %50 = vector.broadcast %cst_15 : f32 to vector<1x128xf32>
    %51 = arith.subf %50, %44 : vector<1x128xf32>
    %52 = arith.subf %51, %25 : vector<1x128xf32>
    %53 = vector.broadcast %52 : vector<1x128xf32> to vector<32x128xf32>
    %54 = arith.mulf %53, %10 : vector<32x128xf32>
    %55 = arith.addf %49, %54 : vector<32x128xf32>
    %c0_16 = arith.constant 0 : index
    %c0_17 = arith.constant 0 : index
    %56 = vector.load %arg5[%c0_16, %c0_17] : memref<32x128xf32, #tpu.memory_space<vmem>>, vector<32x128xf32>
    tpu.vector_store %arg5[%c0_16, %c0_17], %55 {strides = array<i32>} : memref<32x128xf32, #tpu.memory_space<vmem>>, vector<32x128xf32>,
    return
  }
  func.func @transform_0(%arg0: i32) -> (i32, i32) {
    %c0_i32 = arith.constant 0 : i32
    %c0_i32_0 = arith.constant 0 : i32
    return %arg0, %c0_i32 : i32, i32
  }
  func.func @transform_1(%arg0: i32) -> (i32, i32) {
    %c0_i32 = arith.constant 0 : i32
    %c0_i32_0 = arith.constant 0 : i32
    %c0_i32_1 = arith.constant 0 : i32
    return %c0_i32, %c0_i32_0 : i32, i32
  }
  func.func @transform_2(%arg0: i32) -> (i32, i32) {
    %c0_i32 = arith.constant 0 : i32
    %c0_i32_0 = arith.constant 0 : i32
    %c0_i32_1 = arith.constant 0 : i32
    return %c0_i32, %c0_i32_0 : i32, i32
  }
  func.func @transform_3(%arg0: i32) -> (i32, i32) {
    %c0_i32 = arith.constant 0 : i32
    %c0_i32_0 = arith.constant 0 : i32
    %c0_i32_1 = arith.constant 0 : i32
    return %c0_i32, %c0_i32_0 : i32, i32
  }
  func.func @transform_4(%arg0: i32) -> (i32, i32) {
    %c0_i32 = arith.constant 0 : i32
    %c0_i32_0 = arith.constant 0 : i32
    return %arg0, %c0_i32 : i32, i32
  }
}

module attributes {stable_mosaic.version = 11 : i64} {
  func.func @_detect_head_kernel(%arg0: i32, %arg1: memref<8x128xbf16, #tpu.memory_space<vmem>>, %arg2: memref<128x128xbf16, #tpu.memory_space<vmem>>, %arg3: memref<1x128xf32, #tpu.memory_space<vmem>>, %arg4: memref<8x128xf32, #tpu.memory_space<vmem>>, %arg5: memref<8x128xf32, #tpu.memory_space<vmem>>) attributes {dimension_semantics = [#tpu.dimension_semantics<parallel>], iteration_bounds = array<i64: 1>, scalar_prefetch = 0 : i64, scratch_operands = 0 : i64, tpu.core_type = #tpu.core_type<tc>, window_params = [{transform_indices = @transform_0, window_bounds = array<i64: 8, 128>}, {pipeline_mode = #tpu.pipeline_mode<synchronous>, transform_indices = @transform_1, window_bounds = array<i64: 128, 128>}, {pipeline_mode = #tpu.pipeline_mode<synchronous>, transform_indices = @transform_2, window_bounds = array<i64: 1, 128>}, {pipeline_mode = #tpu.pipeline_mode<synchronous>, transform_indices = @transform_3, window_bounds = array<i64: 8, 128>}, {transform_indices = @transform_4, window_bounds = array<i64: 8, 128>}]} {
    %c0 = arith.constant 0 : index
    %c0_0 = arith.constant 0 : index
    %0 = vector.load %arg1[%c0, %c0_0] : memref<8x128xbf16, #tpu.memory_space<vmem>>, vector<8x128xbf16>
    %c0_1 = arith.constant 0 : index
    %c0_2 = arith.constant 0 : index
    %1 = vector.load %arg2[%c0_1, %c0_2] : memref<128x128xbf16, #tpu.memory_space<vmem>>, vector<128x128xbf16>
    %cst = arith.constant dense<0.000000e+00> : vector<8x128xf32>
    %2 = tpu.matmul %0, %1, %cst {dimension_numbers = #tpu.dot_dimension_numbers<[1], [0], [0], [1], [0, 0, 1, 1], [], []>} : vector<8x128xbf16>, vector<128x128xbf16>, vector<8x128xf32> -> vector<8x128xf32>
    %c0_3 = arith.constant 0 : index
    %c0_4 = arith.constant 0 : index
    %3 = vector.load %arg3[%c0_3, %c0_4] : memref<1x128xf32, #tpu.memory_space<vmem>>, vector<1x128xf32>
    %4 = vector.broadcast %3 : vector<1x128xf32> to vector<8x128xf32>
    %5 = arith.addf %2, %4 : vector<8x128xf32>
    %6 = arith.negf %5 : vector<8x128xf32>
    %7 = math.exp %6 : vector<8x128xf32>
    %cst_5 = arith.constant 1.000000e+00 : f32
    %8 = vector.broadcast %cst_5 : f32 to vector<8x128xf32>
    %9 = arith.addf %8, %7 : vector<8x128xf32>
    %10 = arith.divf %8, %9 : vector<8x128xf32>
    %11 = tpu.iota {dimensions = array<i32: 0>} : vector<8x128xi32>
    %c8_i32 = arith.constant 8 : i32
    %12 = arith.muli %arg0, %c8_i32 : i32
    %13 = vector.broadcast %12 : i32 to vector<8x128xi32>
    %14 = arith.addi %11, %13 : vector<8x128xi32>
    %c0_i32 = arith.constant 0 : i32
    %15 = vector.broadcast %c0_i32 : i32 to vector<8x128xi32>
    %16 = arith.andi %14, %15 : vector<8x128xi32>
    %c0_i32_6 = arith.constant 0 : i32
    %17 = vector.broadcast %c0_i32_6 : i32 to vector<8x128xi32>
    %18 = arith.andi %16, %17 : vector<8x128xi32>
    %19 = arith.sitofp %18 : vector<8x128xi32> to vector<8x128xf32>
    %c0_i32_7 = arith.constant 0 : i32
    %20 = vector.broadcast %c0_i32_7 : i32 to vector<8x128xi32>
    %21 = arith.shrsi %16, %20 : vector<8x128xi32>
    %22 = arith.sitofp %21 : vector<8x128xi32> to vector<8x128xf32>
    %c0_8 = arith.constant 0 : index
    %c0_9 = arith.constant 0 : index
    %23 = vector.load %arg4[%c0_8, %c0_9] : memref<8x128xf32, #tpu.memory_space<vmem>>, vector<1x128xf32>
    %c1 = arith.constant 1 : index
    %c0_10 = arith.constant 0 : index
    %24 = vector.load %arg4[%c1, %c0_10] : memref<8x128xf32, #tpu.memory_space<vmem>>, vector<1x128xf32>
    %c2 = arith.constant 2 : index
    %c0_11 = arith.constant 0 : index
    %25 = vector.load %arg4[%c2, %c0_11] : memref<8x128xf32, #tpu.memory_space<vmem>>, vector<1x128xf32>
    %c3 = arith.constant 3 : index
    %c0_12 = arith.constant 0 : index
    %26 = vector.load %arg4[%c3, %c0_12] : memref<8x128xf32, #tpu.memory_space<vmem>>, vector<1x128xf32>
    %27 = vector.broadcast %23 : vector<1x128xf32> to vector<8x128xf32>
    %28 = arith.mulf %19, %27 : vector<8x128xf32>
    %29 = vector.broadcast %24 : vector<1x128xf32> to vector<8x128xf32>
    %30 = arith.mulf %22, %29 : vector<8x128xf32>
    %31 = arith.addf %28, %30 : vector<8x128xf32>
    %cst_13 = arith.constant 2.000000e+00 : f32
    %32 = vector.broadcast %cst_13 : f32 to vector<8x128xf32>
    %33 = arith.mulf %10, %32 : vector<8x128xf32>
    %cst_14 = arith.constant 5.000000e-01 : f32
    %34 = vector.broadcast %cst_14 : f32 to vector<8x128xf32>
    %35 = arith.subf %33, %34 : vector<8x128xf32>
    %36 = arith.addf %35, %31 : vector<8x128xf32>
    %cst_15 = arith.constant 3.200000e+01 : f32
    %37 = vector.broadcast %cst_15 : f32 to vector<8x128xf32>
    %38 = arith.mulf %36, %37 : vector<8x128xf32>
    %cst_16 = arith.constant 2.000000e+00 : f32
    %39 = vector.broadcast %cst_16 : f32 to vector<8x128xf32>
    %40 = arith.mulf %10, %39 : vector<8x128xf32>
    %41 = arith.mulf %40, %40 : vector<8x128xf32>
    %42 = vector.broadcast %26 : vector<1x128xf32> to vector<8x128xf32>
    %43 = arith.mulf %41, %42 : vector<8x128xf32>
    %44 = arith.addf %23, %24 : vector<1x128xf32>
    %45 = vector.broadcast %44 : vector<1x128xf32> to vector<8x128xf32>
    %46 = arith.mulf %45, %38 : vector<8x128xf32>
    %47 = vector.broadcast %25 : vector<1x128xf32> to vector<8x128xf32>
    %48 = arith.mulf %47, %43 : vector<8x128xf32>
    %49 = arith.addf %46, %48 : vector<8x128xf32>
    %cst_17 = arith.constant 1.000000e+00 : f32
    %50 = vector.broadcast %cst_17 : f32 to vector<1x128xf32>
    %51 = arith.subf %50, %44 : vector<1x128xf32>
    %52 = arith.subf %51, %25 : vector<1x128xf32>
    %53 = vector.broadcast %52 : vector<1x128xf32> to vector<8x128xf32>
    %54 = arith.mulf %53, %10 : vector<8x128xf32>
    %55 = arith.addf %49, %54 : vector<8x128xf32>
    %c0_18 = arith.constant 0 : index
    %c0_19 = arith.constant 0 : index
    %56 = vector.load %arg5[%c0_18, %c0_19] : memref<8x128xf32, #tpu.memory_space<vmem>>, vector<8x128xf32>
    tpu.vector_store %arg5[%c0_18, %c0_19], %55 {strides = array<i32>} : memref<8x128xf32, #tpu.memory_space<vmem>>, vector<8x128xf32>,
    return
  }
  func.func @transform_0(%arg0: i32) -> (i32, i32) {
    %c0_i32 = arith.constant 0 : i32
    %c0_i32_0 = arith.constant 0 : i32
    return %arg0, %c0_i32 : i32, i32
  }
  func.func @transform_1(%arg0: i32) -> (i32, i32) {
    %c0_i32 = arith.constant 0 : i32
    %c0_i32_0 = arith.constant 0 : i32
    %c0_i32_1 = arith.constant 0 : i32
    return %c0_i32, %c0_i32_0 : i32, i32
  }
  func.func @transform_2(%arg0: i32) -> (i32, i32) {
    %c0_i32 = arith.constant 0 : i32
    %c0_i32_0 = arith.constant 0 : i32
    %c0_i32_1 = arith.constant 0 : i32
    return %c0_i32, %c0_i32_0 : i32, i32
  }
  func.func @transform_3(%arg0: i32) -> (i32, i32) {
    %c0_i32 = arith.constant 0 : i32
    %c0_i32_0 = arith.constant 0 : i32
    %c0_i32_1 = arith.constant 0 : i32
    return %c0_i32, %c0_i32_0 : i32, i32
  }
  func.func @transform_4(%arg0: i32) -> (i32, i32) {
    %c0_i32 = arith.constant 0 : i32
    %c0_i32_0 = arith.constant 0 : i32
    return %arg0, %c0_i32 : i32, i32
  }
}

</mosaic_0001>

<llo_original>
// kernel: forward.12
$region0: #{forward.12}
  #allocation0 [shape = 'u32[]', space=smem, size = 0x4, offset = 0x4, fixed_abs, tag = 'smem constant byte address 0x4 - core index']
  #allocation1 [shape = 'u32[72,128]{1,0:T(1,128)}', space=vmem, size = 0x9000, scoped, tag = 'internal scratch']
  %s0 = inlined_call_operand.vmem [shape: bf16[2048,1152], index: 0, kind: input, shape index: {}]
  %s1 = inlined_call_operand.vmem [shape: bf16[1152,128], index: 1, kind: input, shape index: {}]
  %s2 = inlined_call_operand.vmem [shape: f32[1,128], index: 2, kind: input, shape index: {}]
  %s3 = inlined_call_operand.vmem [shape: bf16[2048,128], index: 3, kind: output, shape index: {}]
  %s4 = sld [smem:[#allocation0]]
  $region45: #{forward.12} parent=0
    _
  %s6 = ssub.s32 1, %s4
  %s7 = scalar_select 0, %s6, %s4
  loop: start=0, step=1, limit=10
  $region2: #{forward.12} parent=0 // loop_pre_header
    _
  $region3: #{forward.12} parent=0 // loop_header
    %s9 = sphi 0, %s13
    %p10 = scmp.ge.s32.totalorder %s9, 10
    %s19 = sphi 0, %s21
    %s22 = sphi 0, %s19
    %s23 = sphi 0, %s22
    %s39 = sphi 0, %s23
    %s43 = sphi 0, %s43
    %s45 = sphi 0, %s43
    %s46 = sphi 0, %s45
    %s60 = sphi 0, %s46
    %s64 = sphi 0, %s64
    %s66 = sphi 0, %s64
    %s67 = sphi 0, %s66
    %s81 = sphi 0, %s67
    %s87 = sphi 0, %s89
    %s90 = sphi 0, %s87
    %s91 = sphi 0, %s90
    %s107 = sphi 0, %s91
  $region4: #{forward.12} parent=0 // loop_header_branch
    %12 = sbr.rel (%p10) target = $region8
  $region5: #{forward.12} parent=0 // loop_body
    %s14 = ssub.s32 %s9, 1
    %s15 = ssub.s32 %s9, 2
    %s16 = sadd.s32 %s9, 1
    %s17 = ssub.s32 %s9, %s16
    %p18 = scmp.eq.s32.totalorder %s17, 0
    %s20 = sadd.s32 %s19, 1
    %s21 = scalar_select %p18, %s19, %s20
    %p24 = pneg %p18
    %p25 = scmp.eq.s32.totalorder %s9, 7
    %p26 = por %p24, %p25
    %p27 = scmp.ne.s32.totalorder %s19, %s22
    %p28 = scmp.eq.s32.totalorder %s9, 0
    %p29 = por %p27, %p28
    %p30 = scmp.ne.s32.totalorder %s19, %s22
    %p31 = scmp.eq.s32.totalorder %s14, 7
    %p32 = por %p30, %p31
    %p33 = scmp.ne.s32.totalorder %s22, %s23
    %p34 = scmp.eq.s32.totalorder %s14, 0
    %p35 = por %p33, %p34
    %p36 = scmp.ne.s32.totalorder %s22, %s23
    %p37 = scmp.eq.s32.totalorder %s15, 7
    %p38 = por %p36, %p37
    %p40 = scmp.ne.s32.totalorder %s23, %s39
    %p41 = scmp.eq.s32.totalorder %s15, 0
    %p42 = por %p40, %p41
    %s44 = sadd.s32 %s43, 1
    %p47 = scmp.eq.s32.totalorder %s9, 7
    %p48 = scmp.ne.s32.totalorder %s43, %s45
    %p49 = scmp.eq.s32.totalorder %s9, 0
    %p50 = por %p48, %p49
    %p51 = scmp.ne.s32.totalorder %s43, %s45
    %p52 = scmp.eq.s32.totalorder %s14, 7
    %p53 = por %p51, %p52
    %p54 = scmp.ne.s32.totalorder %s45, %s46
    %p55 = scmp.eq.s32.totalorder %s14, 0
    %p56 = por %p54, %p55
    %p57 = scmp.ne.s32.totalorder %s45, %s46
    %p58 = scmp.eq.s32.totalorder %s15, 7
    %p59 = por %p57, %p58
    %p61 = scmp.ne.s32.totalorder %s46, %s60
    %p62 = scmp.eq.s32.totalorder %s15, 0
    %p63 = por %p61, %p62
    %s65 = sadd.s32 %s64, 1
    %p68 = scmp.eq.s32.totalorder %s9, 7
    %p69 = scmp.ne.s32.totalorder %s64, %s66
    %p70 = scmp.eq.s32.totalorder %s9, 0
    %p71 = por %p69, %p70
    %p72 = scmp.ne.s32.totalorder %s64, %s66
    %p73 = scmp.eq.s32.totalorder %s14, 7
    %p74 = por %p72, %p73
    %p75 = scmp.ne.s32.totalorder %s66, %s67
    %p76 = scmp.eq.s32.totalorder %s14, 0
    %p77 = por %p75, %p76
    %p78 = scmp.ne.s32.totalorder %s66, %s67
    %p79 = scmp.eq.s32.totalorder %s15, 7
    %p80 = por %p78, %p79
    %p82 = scmp.ne.s32.totalorder %s67, %s81
    %p83 = scmp.eq.s32.totalorder %s15, 0
    %p84 = por %p82, %p83
    %s85 = ssub.s32 %s9, %s16
    %p86 = scmp.eq.s32.totalorder %s85, 0
    %s88 = sadd.s32 %s87, 1
    %s89 = scalar_select %p86, %s87, %s88
    %p92 = pneg %p86
    %p93 = scmp.eq.s32.totalorder %s9, 7
    %p94 = por %p92, %p93
    %p95 = scmp.ne.s32.totalorder %s87, %s90
    %p96 = scmp.eq.s32.totalorder %s9, 0
    %p97 = por %p95, %p96
    %p98 = scmp.ne.s32.totalorder %s87, %s90
    %p99 = scmp.eq.s32.totalorder %s14, 7
    %p100 = por %p98, %p99
    %p101 = scmp.ne.s32.totalorder %s90, %s91
    %p102 = scmp.eq.s32.totalorder %s14, 0
    %p103 = por %p101, %p102
    %p104 = scmp.ne.s32.totalorder %s90, %s91
    %p105 = scmp.eq.s32.totalorder %s15, 7
    %p106 = por %p104, %p105
    %p108 = scmp.ne.s32.totalorder %s91, %s107
    %p109 = scmp.eq.s32.totalorder %s15, 0
    %p110 = por %p108, %p109
    %p111 = scmp.le.s32.totalorder 1, %s9
    %p112 = scmp.lt.s32.totalorder %s9, 9
    %p113 = pnand %p111, %p112
    %p114 = pneg %p113
    // Predicated region
    $region9: #{forward.12} parent=5 // pred_check
      _
    $region10: #{forward.12} parent=5 // pred_check_branch
      %116 = sbr.rel (%p113) target = $region12
    $region11: #{forward.12} parent=5 // pred_region
      %s117 = ssub.s32 %s9, 1
      // Predicated region
      $region13: #{forward.12} parent=11 // pred_check
        %p118 = pneg %p56
      $region14: #{forward.12} parent=11 // pred_check_branch
        %120 = sbr.rel (%p118) target = $region16
      $region15: #{forward.12} parent=11 // pred_region
        _
      $region16: #{forward.12} parent=11 // pred_fallthru
        _
      // Predicated region
      $region17: #{forward.12} parent=11 // pred_check
        %p121 = pneg %p77
      $region18: #{forward.12} parent=11 // pred_check_branch
        %123 = sbr.rel (%p121) target = $region20
      $region19: #{forward.12} parent=11 // pred_region
        _
      $region20: #{forward.12} parent=11 // pred_fallthru
        _
    $region12: #{forward.12} parent=5 // pred_fallthru
      _
    %p124 = scmp.lt.s32.totalorder %s9, 8
    // Predicated region
    $region21: #{forward.12} parent=5 // pred_check
      %p125 = pneg %p124
    $region22: #{forward.12} parent=5 // pred_check_branch
      %127 = sbr.rel (%p125) target = $region24
    $region23: #{forward.12} parent=5 // pred_region
      // Predicated region
      $region25: #{forward.12} parent=23 // pred_check
        %p128 = pneg %p29
      $region26: #{forward.12} parent=23 // pred_check_branch
        %130 = sbr.rel (%p128) target = $region28
      $region27: #{forward.12} parent=23 // pred_region
        %s131 = smul.u32 32, %s9
        %p132 = scmp.lt.s32.totalorder %s131, 255
        %s133 = scalar_select %p132, %s131, 255
        %s134 = smul.addr %s133, 9
        %s135 = smul.addr %s134, 4
        %s136 = scalar_lea.vmem %s0, %s135
        %s137 = smul.u32 32, %s9
      $region28: #{forward.12} parent=23 // pred_fallthru
        _
    $region24: #{forward.12} parent=5 // pred_fallthru
      _
    %p138 = scmp.le.s32.totalorder 1, %s9
    %p139 = scmp.lt.s32.totalorder %s9, 9
    %p140 = pnand %p138, %p139
    %p141 = pneg %p140
    // Predicated region
    $region29: #{forward.12} parent=5 // pred_check
      _
    $region30: #{forward.12} parent=5 // pred_check_branch
      %143 = sbr.rel (%p140) target = $region32
    $region31: #{forward.12} parent=5 // pred_region
      %s144 = ssub.s32 %s9, 1
      %s145 = smul.u32 32, %s14
      %p146 = scmp.lt.s32.totalorder %s145, 255
      %s147 = scalar_select %p146, %s145, 255
      %s148 = smul.addr %s147, 9
      %s149 = smul.addr %s148, 4
      %s150 = scalar_lea.vmem %s0, %s149
      %p151 = pneg %p35
      %p152 = pneg %p32
      %p153 = pneg %p56
      %p154 = pneg %p53
      %p155 = pneg %p77
      %p156 = pneg %p74
      %p157 = pneg %p103
      %p158 = pneg %p100
      %s159 = smul.u32 32, %s14
      %p160 = scmp.lt.s32.totalorder %s159, 255
      %s161 = scalar_select %p160, %s159, 255
      %s162 = smul.addr %s161, 4
      %s163 = scalar_lea.vmem %s3, %s162
      %s164 = smul.u32 32, %s14
      %p165 = scmp.lt.s32.totalorder %s164, 255
      %s166 = scalar_select %p165, %s164, 255
      %s167 = smul.addr %s166, 9
      %s168 = smul.addr %s167, 4
      %s169 = scalar_lea.vmem %s0, %s168
      %s170 = smul.u32 32, %s14
      %s171 = smul.u32 32, %s14
      %p172 = scmp.lt.s32.totalorder %s171, 255
      %s173 = scalar_select %p172, %s171, 255
      %s174 = smul.addr %s173, 4
      %s175 = scalar_lea.vmem %s3, %s174
      %s176 = smul.u32 32, %s14
      %v177 = vld [vmem:[%s169] sm:$0xff]
      %v178 = vld [vmem:[%s169 + $0x8] sm:$0xff]
      %v179 = vld [vmem:[%s169 + $0x10] sm:$0xff]
      %v180 = vld [vmem:[%s169 + $0x18] sm:$0xff]
      %v181 = vld [vmem:[%s169 + $0x20] sm:$0xf]
      %v182 = vld [vmem:[%s169 + $0x24] sm:$0xff]
      %v183 = vld [vmem:[%s169 + $0x2c] sm:$0xff]
      %v184 = vld [vmem:[%s169 + $0x34] sm:$0xff]
      %v185 = vld [vmem:[%s169 + $0x3c] sm:$0xff]
      %v186 = vld [vmem:[%s169 + $0x44] sm:$0xf]
      %v187 = vld [vmem:[%s169 + $0x48] sm:$0xff]
      %v188 = vld [vmem:[%s169 + $0x50] sm:$0xff]
      %v189 = vld [vmem:[%s169 + $0x58] sm:$0xff]
      %v190 = vld [vmem:[%s169 + $0x60] sm:$0xff]
      %v191 = vld [vmem:[%s169 + $0x68] sm:$0xf]
      %v192 = vld [vmem:[%s169 + $0x6c] sm:$0xff]
      %v193 = vld [vmem:[%s169 + $0x74] sm:$0xff]
      %v194 = vld [vmem:[%s169 + $0x7c] sm:$0xff]
      %v195 = vld [vmem:[%s169 + $0x84] sm:$0xff]
      %v196 = vld [vmem:[%s169 + $0x8c] sm:$0xf]
      %v197 = vld [vmem:[%s169 + $0x90] sm:$0xff]
      %v198 = vld [vmem:[%s169 + $0x98] sm:$0xff]
      %v199 = vld [vmem:[%s169 + $0xa0] sm:$0xff]
      %v200 = vld [vmem:[%s169 + $0xa8] sm:$0xff]
      %v201 = vld [vmem:[%s169 + $0xb0] sm:$0xf]
      %v202 = vld [vmem:[%s169 + $0xb4] sm:$0xff]
      %v203 = vld [vmem:[%s169 + $0xbc] sm:$0xff]
      %v204 = vld [vmem:[%s169 + $0xc4] sm:$0xff]
      %v205 = vld [vmem:[%s169 + $0xcc] sm:$0xff]
      %v206 = vld [vmem:[%s169 + $0xd4] sm:$0xf]
      %v207 = vld [vmem:[%s169 + $0xd8] sm:$0xff]
      %v208 = vld [vmem:[%s169 + $0xe0] sm:$0xff]
      %v209 = vld [vmem:[%s169 + $0xe8] sm:$0xff]
      %v210 = vld [vmem:[%s169 + $0xf0] sm:$0xff]
      %v211 = vld [vmem:[%s169 + $0xf8] sm:$0xf]
      %v212 = vld [vmem:[%s169 + $0xfc] sm:$0xff]
      %v213 = vld [vmem:[%s169 + $0x104] sm:$0xff]
      %v214 = vld [vmem:[%s169 + $0x10c] sm:$0xff]
      %v215 = vld [vmem:[%s169 + $0x114] sm:$0xff]
      %v216 = vld [vmem:[%s169 + $0x11c] sm:$0xf]
      %v217 = vld [vmem:[%s169 + $0x120] sm:$0xff]
      %v218 = vld [vmem:[%s169 + $0x128] sm:$0xff]
      %v219 = vld [vmem:[%s169 + $0x130] sm:$0xff]
      %v220 = vld [vmem:[%s169 + $0x138] sm:$0xff]
      %v221 = vld [vmem:[%s169 + $0x140] sm:$0xf]
      %v222 = vld [vmem:[%s169 + $0x144] sm:$0xff]
      %v223 = vld [vmem:[%s169 + $0x14c] sm:$0xff]
      %v224 = vld [vmem:[%s169 + $0x154] sm:$0xff]
      %v225 = vld [vmem:[%s169 + $0x15c] sm:$0xff]
      %v226 = vld [vmem:[%s169 + $0x164] sm:$0xf]
      %v227 = vld [vmem:[%s169 + $0x168] sm:$0xff]
      %v228 = vld [vmem:[%s169 + $0x170] sm:$0xff]
      %v229 = vld [vmem:[%s169 + $0x178] sm:$0xff]
      %v230 = vld [vmem:[%s169 + $0x180] sm:$0xff]
      %v231 = vld [vmem:[%s169 + $0x188] sm:$0xf]
      %v232 = vld [vmem:[%s169 + $0x18c] sm:$0xff]
      %v233 = vld [vmem:[%s169 + $0x194] sm:$0xff]
      %v234 = vld [vmem:[%s169 + $0x19c] sm:$0xff]
      %v235 = vld [vmem:[%s169 + $0x1a4] sm:$0xff]
      %v236 = vld [vmem:[%s169 + $0x1ac] sm:$0xf]
      %v237 = vld [vmem:[%s169 + $0x1b0] sm:$0xff]
      %v238 = vld [vmem:[%s169 + $0x1b8] sm:$0xff]
      %v239 = vld [vmem:[%s169 + $0x1c0] sm:$0xff]
      %v240 = vld [vmem:[%s169 + $0x1c8] sm:$0xff]
      %v241 = vld [vmem:[%s169 + $0x1d0] sm:$0xf]
      %v242 = vld [vmem:[%s169 + $0x1d4] sm:$0xff]
      %v243 = vld [vmem:[%s169 + $0x1dc] sm:$0xff]
      %v244 = vld [vmem:[%s169 + $0x1e4] sm:$0xff]
      %v245 = vld [vmem:[%s169 + $0x1ec] sm:$0xff]
      %v246 = vld [vmem:[%s169 + $0x1f4] sm:$0xf]
      %v247 = vld [vmem:[%s169 + $0x1f8] sm:$0xff]
      %v248 = vld [vmem:[%s169 + $0x200] sm:$0xff]
      %v249 = vld [vmem:[%s169 + $0x208] sm:$0xff]
      %v250 = vld [vmem:[%s169 + $0x210] sm:$0xff]
      %v251 = vld [vmem:[%s169 + $0x218] sm:$0xf]
      %v252 = vld [vmem:[%s169 + $0x21c] sm:$0xff]
      %v253 = vld [vmem:[%s169 + $0x224] sm:$0xff]
      %v254 = vld [vmem:[%s169 + $0x22c] sm:$0xff]
      %v255 = vld [vmem:[%s169 + $0x234] sm:$0xff]
      %v256 = vld [vmem:[%s169 + $0x23c] sm:$0xf]
      %v257 = vld [vmem:[%s169 + $0x240] sm:$0xff]
      %v258 = vld [vmem:[%s169 + $0x248] sm:$0xff]
      %v259 = vld [vmem:[%s169 + $0x250] sm:$0xff]
      %v260 = vld [vmem:[%s169 + $0x258] sm:$0xff]
      %v261 = vld [vmem:[%s169 + $0x260] sm:$0xf]
      %v262 = vld [vmem:[%s169 + $0x264] sm:$0xff]
      %v263 = vld [vmem:[%s169 + $0x26c] sm:$0xff]
      %v264 = vld [vmem:[%s169 + $0x274] sm:$0xff]
      %v265 = vld [vmem:[%s169 + $0x27c] sm:$0xff]
      %v266 = vld [vmem:[%s169 + $0x284] sm:$0xf]
      %v267 = vld [vmem:[%s169 + $0x288] sm:$0xff]
      %v268 = vld [vmem:[%s169 + $0x290] sm:$0xff]
      %v269 = vld [vmem:[%s169 + $0x298] sm:$0xff]
      %v270 = vld [vmem:[%s169 + $0x2a0] sm:$0xff]
      %v271 = vld [vmem:[%s169 + $0x2a8] sm:$0xf]
      %v272 = vld [vmem:[%s169 + $0x2ac] sm:$0xff]
      %v273 = vld [vmem:[%s169 + $0x2b4] sm:$0xff]
      %v274 = vld [vmem:[%s169 + $0x2bc] sm:$0xff]
      %v275 = vld [vmem:[%s169 + $0x2c4] sm:$0xff]
      %v276 = vld [vmem:[%s169 + $0x2cc] sm:$0xf]
      %v277 = vld [vmem:[%s169 + $0x2d0] sm:$0xff]
      %v278 = vld [vmem:[%s169 + $0x2d8] sm:$0xff]
      %v279 = vld [vmem:[%s169 + $0x2e0] sm:$0xff]
      %v280 = vld [vmem:[%s169 + $0x2e8] sm:$0xff]
      %v281 = vld [vmem:[%s169 + $0x2f0] sm:$0xf]
      %v282 = vld [vmem:[%s169 + $0x2f4] sm:$0xff]
      %v283 = vld [vmem:[%s169 + $0x2fc] sm:$0xff]
      %v284 = vld [vmem:[%s169 + $0x304] sm:$0xff]
      %v285 = vld [vmem:[%s169 + $0x30c] sm:$0xff]
      %v286 = vld [vmem:[%s169 + $0x314] sm:$0xf]
      %v287 = vld [vmem:[%s169 + $0x318] sm:$0xff]
      %v288 = vld [vmem:[%s169 + $0x320] sm:$0xff]
      %v289 = vld [vmem:[%s169 + $0x328] sm:$0xff]
      %v290 = vld [vmem:[%s169 + $0x330] sm:$0xff]
      %v291 = vld [vmem:[%s169 + $0x338] sm:$0xf]
      %v292 = vld [vmem:[%s169 + $0x33c] sm:$0xff]
      %v293 = vld [vmem:[%s169 + $0x344] sm:$0xff]
      %v294 = vld [vmem:[%s169 + $0x34c] sm:$0xff]
      %v295 = vld [vmem:[%s169 + $0x354] sm:$0xff]
      %v296 = vld [vmem:[%s169 + $0x35c] sm:$0xf]
      %v297 = vld [vmem:[%s169 + $0x360] sm:$0xff]
      %v298 = vld [vmem:[%s169 + $0x368] sm:$0xff]
      %v299 = vld [vmem:[%s169 + $0x370] sm:$0xff]
      %v300 = vld [vmem:[%s169 + $0x378] sm:$0xff]
      %v301 = vld [vmem:[%s169 + $0x380] sm:$0xf]
      %v302 = vld [vmem:[%s169 + $0x384] sm:$0xff]
      %v303 = vld [vmem:[%s169 + $0x38c] sm:$0xff]
      %v304 = vld [vmem:[%s169 + $0x394] sm:$0xff]
      %v305 = vld [vmem:[%s169 + $0x39c] sm:$0xff]
      %v306 = vld [vmem:[%s169 + $0x3a4] sm:$0xf]
      %v307 = vld [vmem:[%s169 + $0x3a8] sm:$0xff]
      %v308 = vld [vmem:[%s169 + $0x3b0] sm:$0xff]
      %v309 = vld [vmem:[%s169 + $0x3b8] sm:$0xff]
      %v310 = vld [vmem:[%s169 + $0x3c0] sm:$0xff]
      %v311 = vld [vmem:[%s169 + $0x3c8] sm:$0xf]
      %v312 = vld [vmem:[%s169 + $0x3cc] sm:$0xff]
      %v313 = vld [vmem:[%s169 + $0x3d4] sm:$0xff]
      %v314 = vld [vmem:[%s169 + $0x3dc] sm:$0xff]
      %v315 = vld [vmem:[%s169 + $0x3e4] sm:$0xff]
      %v316 = vld [vmem:[%s169 + $0x3ec] sm:$0xf]
      %v317 = vld [vmem:[%s169 + $0x3f0] sm:$0xff]
      %v318 = vld [vmem:[%s169 + $0x3f8] sm:$0xff]
      %v319 = vld [vmem:[%s169 + $0x400] sm:$0xff]
      %v320 = vld [vmem:[%s169 + $0x408] sm:$0xff]
      %v321 = vld [vmem:[%s169 + $0x410] sm:$0xf]
      %v322 = vld [vmem:[%s169 + $0x414] sm:$0xff]
      %v323 = vld [vmem:[%s169 + $0x41c] sm:$0xff]
      %v324 = vld [vmem:[%s169 + $0x424] sm:$0xff]
      %v325 = vld [vmem:[%s169 + $0x42c] sm:$0xff]
      %v326 = vld [vmem:[%s169 + $0x434] sm:$0xf]
      %v327 = vld [vmem:[%s169 + $0x438] sm:$0xff]
      %v328 = vld [vmem:[%s169 + $0x440] sm:$0xff]
      %v329 = vld [vmem:[%s169 + $0x448] sm:$0xff]
      %v330 = vld [vmem:[%s169 + $0x450] sm:$0xff]
      %v331 = vld [vmem:[%s169 + $0x458] sm:$0xf]
      %v332 = vld [vmem:[%s169 + $0x45c] sm:$0xff]
      %v333 = vld [vmem:[%s169 + $0x464] sm:$0xff]
      %v334 = vld [vmem:[%s169 + $0x46c] sm:$0xff]
      %v335 = vld [vmem:[%s169 + $0x474] sm:$0xff]
      %v336 = vld [vmem:[%s169 + $0x47c] sm:$0xf]
      %v337 = vld [vmem:[%s1] sm:$0xf]
      %v338 = vld [vmem:[%s1 + $0x4] sm:$0xf]
      %v339 = vld [vmem:[%s1 + $0x8] sm:$0xf]
      %v340 = vld [vmem:[%s1 + $0xc] sm:$0xf]
      %v341 = vld [vmem:[%s1 + $0x10] sm:$0xf]
      %v342 = vld [vmem:[%s1 + $0x14] sm:$0xf]
      %v343 = vld [vmem:[%s1 + $0x18] sm:$0xf]
      %v344 = vld [vmem:[%s1 + $0x1c] sm:$0xf]
      %v345 = vld [vmem:[%s1 + $0x20] sm:$0xf]
      %v346 = vld [vmem:[%s1 + $0x24] sm:$0xf]
      %v347 = vld [vmem:[%s1 + $0x28] sm:$0xf]
      %v348 = vld [vmem:[%s1 + $0x2c] sm:$0xf]
      %v349 = vld [vmem:[%s1 + $0x30] sm:$0xf]
      %v350 = vld [vmem:[%s1 + $0x34] sm:$0xf]
      %v351 = vld [vmem:[%s1 + $0x38] sm:$0xf]
      %v352 = vld [vmem:[%s1 + $0x3c] sm:$0xf]
      %v353 = vld [vmem:[%s1 + $0x40] sm:$0xf]
      %v354 = vld [vmem:[%s1 + $0x44] sm:$0xf]
      %v355 = vld [vmem:[%s1 + $0x48] sm:$0xf]
      %v356 = vld [vmem:[%s1 + $0x4c] sm:$0xf]
      %v357 = vld [vmem:[%s1 + $0x50] sm:$0xf]
      %v358 = vld [vmem:[%s1 + $0x54] sm:$0xf]
      %v359 = vld [vmem:[%s1 + $0x58] sm:$0xf]
      %v360 = vld [vmem:[%s1 + $0x5c] sm:$0xf]
      %v361 = vld [vmem:[%s1 + $0x60] sm:$0xf]
      %v362 = vld [vmem:[%s1 + $0x64] sm:$0xf]
      %v363 = vld [vmem:[%s1 + $0x68] sm:$0xf]
      %v364 = vld [vmem:[%s1 + $0x6c] sm:$0xf]
      %v365 = vld [vmem:[%s1 + $0x70] sm:$0xf]
      %v366 = vld [vmem:[%s1 + $0x74] sm:$0xf]
      %v367 = vld [vmem:[%s1 + $0x78] sm:$0xf]
      %v368 = vld [vmem:[%s1 + $0x7c] sm:$0xf]
      %v369 = vld [vmem:[%s1 + $0x80] sm:$0xf]
      %v370 = vld [vmem:[%s1 + $0x84] sm:$0xf]
      %v371 = vld [vmem:[%s1 + $0x88] sm:$0xf]
      %v372 = vld [vmem:[%s1 + $0x8c] sm:$0xf]
      %v373 = vld [vmem:[%s1 + $0x90] sm:$0xf]
      %v374 = vld [vmem:[%s1 + $0x94] sm:$0xf]
      %v375 = vld [vmem:[%s1 + $0x98] sm:$0xf]
      %v376 = vld [vmem:[%s1 + $0x9c] sm:$0xf]
      %v377 = vld [vmem:[%s1 + $0xa0] sm:$0xf]
      %v378 = vld [vmem:[%s1 + $0xa4] sm:$0xf]
      %v379 = vld [vmem:[%s1 + $0xa8] sm:$0xf]
      %v380 = vld [vmem:[%s1 + $0xac] sm:$0xf]
      %v381 = vld [vmem:[%s1 + $0xb0] sm:$0xf]
      %v382 = vld [vmem:[%s1 + $0xb4] sm:$0xf]
      %v383 = vld [vmem:[%s1 + $0xb8] sm:$0xf]
      %v384 = vld [vmem:[%s1 + $0xbc] sm:$0xf]
      %v385 = vld [vmem:[%s1 + $0xc0] sm:$0xf]
      %v386 = vld [vmem:[%s1 + $0xc4] sm:$0xf]
      %v387 = vld [vmem:[%s1 + $0xc8] sm:$0xf]
      %v388 = vld [vmem:[%s1 + $0xcc] sm:$0xf]
      %v389 = vld [vmem:[%s1 + $0xd0] sm:$0xf]
      %v390 = vld [vmem:[%s1 + $0xd4] sm:$0xf]
      %v391 = vld [vmem:[%s1 + $0xd8] sm:$0xf]
      %v392 = vld [vmem:[%s1 + $0xdc] sm:$0xf]
      %v393 = vld [vmem:[%s1 + $0xe0] sm:$0xf]
      %v394 = vld [vmem:[%s1 + $0xe4] sm:$0xf]
      %v395 = vld [vmem:[%s1 + $0xe8] sm:$0xf]
      %v396 = vld [vmem:[%s1 + $0xec] sm:$0xf]
      %v397 = vld [vmem:[%s1 + $0xf0] sm:$0xf]
      %v398 = vld [vmem:[%s1 + $0xf4] sm:$0xf]
      %v399 = vld [vmem:[%s1 + $0xf8] sm:$0xf]
      %v400 = vld [vmem:[%s1 + $0xfc] sm:$0xf]
      %v401 = vld [vmem:[%s1 + $0x100] sm:$0xf]
      %v402 = vld [vmem:[%s1 + $0x104] sm:$0xf]
      %v403 = vld [vmem:[%s1 + $0x108] sm:$0xf]
      %v404 = vld [vmem:[%s1 + $0x10c] sm:$0xf]
      %v405 = vld [vmem:[%s1 + $0x110] sm:$0xf]
      %v406 = vld [vmem:[%s1 + $0x114] sm:$0xf]
      %v407 = vld [vmem:[%s1 + $0x118] sm:$0xf]
      %v408 = vld [vmem:[%s1 + $0x11c] sm:$0xf]
      %v409 = vld [vmem:[%s1 + $0x120] sm:$0xf]
      %v410 = vld [vmem:[%s1 + $0x124] sm:$0xf]
      %v411 = vld [vmem:[%s1 + $0x128] sm:$0xf]
      %v412 = vld [vmem:[%s1 + $0x12c] sm:$0xf]
      %v413 = vld [vmem:[%s1 + $0x130] sm:$0xf]
      %v414 = vld [vmem:[%s1 + $0x134] sm:$0xf]
      %v415 = vld [vmem:[%s1 + $0x138] sm:$0xf]
      %v416 = vld [vmem:[%s1 + $0x13c] sm:$0xf]
      %v417 = vld [vmem:[%s1 + $0x140] sm:$0xf]
      %v418 = vld [vmem:[%s1 + $0x144] sm:$0xf]
      %v419 = vld [vmem:[%s1 + $0x148] sm:$0xf]
      %v420 = vld [vmem:[%s1 + $0x14c] sm:$0xf]
      %v421 = vld [vmem:[%s1 + $0x150] sm:$0xf]
      %v422 = vld [vmem:[%s1 + $0x154] sm:$0xf]
      %v423 = vld [vmem:[%s1 + $0x158] sm:$0xf]
      %v424 = vld [vmem:[%s1 + $0x15c] sm:$0xf]
      %v425 = vld [vmem:[%s1 + $0x160] sm:$0xf]
      %v426 = vld [vmem:[%s1 + $0x164] sm:$0xf]
      %v427 = vld [vmem:[%s1 + $0x168] sm:$0xf]
      %v428 = vld [vmem:[%s1 + $0x16c] sm:$0xf]
      %v429 = vld [vmem:[%s1 + $0x170] sm:$0xf]
      %v430 = vld [vmem:[%s1 + $0x174] sm:$0xf]
      %v431 = vld [vmem:[%s1 + $0x178] sm:$0xf]
      %v432 = vld [vmem:[%s1 + $0x17c] sm:$0xf]
      %v433 = vld [vmem:[%s1 + $0x180] sm:$0xf]
      %v434 = vld [vmem:[%s1 + $0x184] sm:$0xf]
      %v435 = vld [vmem:[%s1 + $0x188] sm:$0xf]
      %v436 = vld [vmem:[%s1 + $0x18c] sm:$0xf]
      %v437 = vld [vmem:[%s1 + $0x190] sm:$0xf]
      %v438 = vld [vmem:[%s1 + $0x194] sm:$0xf]
      %v439 = vld [vmem:[%s1 + $0x198] sm:$0xf]
      %v440 = vld [vmem:[%s1 + $0x19c] sm:$0xf]
      %v441 = vld [vmem:[%s1 + $0x1a0] sm:$0xf]
      %v442 = vld [vmem:[%s1 + $0x1a4] sm:$0xf]
      %v443 = vld [vmem:[%s1 + $0x1a8] sm:$0xf]
      %v444 = vld [vmem:[%s1 + $0x1ac] sm:$0xf]
      %v445 = vld [vmem:[%s1 + $0x1b0] sm:$0xf]
      %v446 = vld [vmem:[%s1 + $0x1b4] sm:$0xf]
      %v447 = vld [vmem:[%s1 + $0x1b8] sm:$0xf]
      %v448 = vld [vmem:[%s1 + $0x1bc] sm:$0xf]
      %v449 = vld [vmem:[%s1 + $0x1c0] sm:$0xf]
      %v450 = vld [vmem:[%s1 + $0x1c4] sm:$0xf]
      %v451 = vld [vmem:[%s1 + $0x1c8] sm:$0xf]
      %v452 = vld [vmem:[%s1 + $0x1cc] sm:$0xf]
      %v453 = vld [vmem:[%s1 + $0x1d0] sm:$0xf]
      %v454 = vld [vmem:[%s1 + $0x1d4] sm:$0xf]
      %v455 = vld [vmem:[%s1 + $0x1d8] sm:$0xf]
      %v456 = vld [vmem:[%s1 + $0x1dc] sm:$0xf]
      %v457 = vld [vmem:[%s1 + $0x1e0] sm:$0xf]
      %v458 = vld [vmem:[%s1 + $0x1e4] sm:$0xf]
      %v459 = vld [vmem:[%s1 + $0x1e8] sm:$0xf]
      %v460 = vld [vmem:[%s1 + $0x1ec] sm:$0xf]
      %v461 = vld [vmem:[%s1 + $0x1f0] sm:$0xf]
      %v462 = vld [vmem:[%s1 + $0x1f4] sm:$0xf]
      %v463 = vld [vmem:[%s1 + $0x1f8] sm:$0xf]
      %v464 = vld [vmem:[%s1 + $0x1fc] sm:$0xf]
      %v465 = vld [vmem:[%s1 + $0x200] sm:$0xf]
      %v466 = vld [vmem:[%s1 + $0x204] sm:$0xf]
      %v467 = vld [vmem:[%s1 + $0x208] sm:$0xf]
      %v468 = vld [vmem:[%s1 + $0x20c] sm:$0xf]
      %v469 = vld [vmem:[%s1 + $0x210] sm:$0xf]
      %v470 = vld [vmem:[%s1 + $0x214] sm:$0xf]
      %v471 = vld [vmem:[%s1 + $0x218] sm:$0xf]
      %v472 = vld [vmem:[%s1 + $0x21c] sm:$0xf]
      %v473 = vld [vmem:[%s1 + $0x220] sm:$0xf]
      %v474 = vld [vmem:[%s1 + $0x224] sm:$0xf]
      %v475 = vld [vmem:[%s1 + $0x228] sm:$0xf]
      %v476 = vld [vmem:[%s1 + $0x22c] sm:$0xf]
      %v477 = vld [vmem:[%s1 + $0x230] sm:$0xf]
      %v478 = vld [vmem:[%s1 + $0x234] sm:$0xf]
      %v479 = vld [vmem:[%s1 + $0x238] sm:$0xf]
      %v480 = vld [vmem:[%s1 + $0x23c] sm:$0xf]
      %v481 = vld [vmem:[%s2] sm:$0x1]
      %v483 = vperm.slane %v481, 0
      %v645 = vunpack.c.l.b16 %v177
      %v646 = vunpack.c.h.b16 %v177
      %v647 = vunpack.c.l.b16 %v178
      %v648 = vunpack.c.h.b16 %v178
      %v649 = vunpack.c.l.b16 %v179
      %v650 = vunpack.c.h.b16 %v179
      %v651 = vunpack.c.l.b16 %v180
      %v652 = vunpack.c.h.b16 %v180
      %v653 = vunpack.c.l.b16 %v181
      %v654 = vunpack.c.l.b16 %v182
      %v655 = vunpack.c.h.b16 %v182
      %v656 = vunpack.c.l.b16 %v183
      %v657 = vunpack.c.h.b16 %v183
      %v658 = vunpack.c.l.b16 %v184
      %v659 = vunpack.c.h.b16 %v184
      %v660 = vunpack.c.l.b16 %v185
      %v661 = vunpack.c.h.b16 %v185
      %v662 = vunpack.c.l.b16 %v186
      %v663 = vunpack.c.l.b16 %v187
      %v664 = vunpack.c.h.b16 %v187
      %v665 = vunpack.c.l.b16 %v188
      %v666 = vunpack.c.h.b16 %v188
      %v667 = vunpack.c.l.b16 %v189
      %v668 = vunpack.c.h.b16 %v189
      %v669 = vunpack.c.l.b16 %v190
      %v670 = vunpack.c.h.b16 %v190
      %v671 = vunpack.c.l.b16 %v191
      %v672 = vunpack.c.l.b16 %v192
      %v673 = vunpack.c.h.b16 %v192
      %v674 = vunpack.c.l.b16 %v193
      %v675 = vunpack.c.h.b16 %v193
      %v676 = vunpack.c.l.b16 %v194
      %v677 = vunpack.c.h.b16 %v194
      %v678 = vunpack.c.l.b16 %v195
      %v679 = vunpack.c.h.b16 %v195
      %v680 = vunpack.c.l.b16 %v196
      %v681 = vunpack.c.l.b16 %v197
      %v682 = vunpack.c.h.b16 %v197
      %v683 = vunpack.c.l.b16 %v198
      %v684 = vunpack.c.h.b16 %v198
      %v685 = vunpack.c.l.b16 %v199
      %v686 = vunpack.c.h.b16 %v199
      %v687 = vunpack.c.l.b16 %v200
      %v688 = vunpack.c.h.b16 %v200
      %v689 = vunpack.c.l.b16 %v201
      %v690 = vunpack.c.l.b16 %v202
      %v691 = vunpack.c.h.b16 %v202
      %v692 = vunpack.c.l.b16 %v203
      %v693 = vunpack.c.h.b16 %v203
      %v694 = vunpack.c.l.b16 %v204
      %v695 = vunpack.c.h.b16 %v204
      %v696 = vunpack.c.l.b16 %v205
      %v697 = vunpack.c.h.b16 %v205
      %v698 = vunpack.c.l.b16 %v206
      %v699 = vunpack.c.l.b16 %v207
      %v700 = vunpack.c.h.b16 %v207
      %v701 = vunpack.c.l.b16 %v208
      %v702 = vunpack.c.h.b16 %v208
      %v703 = vunpack.c.l.b16 %v209
      %v704 = vunpack.c.h.b16 %v209
      %v705 = vunpack.c.l.b16 %v210
      %v706 = vunpack.c.h.b16 %v210
      %v707 = vunpack.c.l.b16 %v211
      %v708 = vunpack.c.l.b16 %v212
      %v709 = vunpack.c.h.b16 %v212
      %v710 = vunpack.c.l.b16 %v213
      %v711 = vunpack.c.h.b16 %v213
      %v712 = vunpack.c.l.b16 %v214
      %v713 = vunpack.c.h.b16 %v214
      %v714 = vunpack.c.l.b16 %v215
      %v715 = vunpack.c.h.b16 %v215
      %v716 = vunpack.c.l.b16 %v216
      %v717 = vunpack.c.l.b16 %v217
      %v718 = vunpack.c.h.b16 %v217
      %v719 = vunpack.c.l.b16 %v218
      %v720 = vunpack.c.h.b16 %v218
      %v721 = vunpack.c.l.b16 %v219
      %v722 = vunpack.c.h.b16 %v219
      %v723 = vunpack.c.l.b16 %v220
      %v724 = vunpack.c.h.b16 %v220
      %v725 = vunpack.c.l.b16 %v221
      %v726 = vunpack.c.l.b16 %v222
      %v727 = vunpack.c.h.b16 %v222
      %v728 = vunpack.c.l.b16 %v223
      %v729 = vunpack.c.h.b16 %v223
      %v730 = vunpack.c.l.b16 %v224
      %v731 = vunpack.c.h.b16 %v224
      %v732 = vunpack.c.l.b16 %v225
      %v733 = vunpack.c.h.b16 %v225
      %v734 = vunpack.c.l.b16 %v226
      %v735 = vunpack.c.l.b16 %v227
      %v736 = vunpack.c.h.b16 %v227
      %v737 = vunpack.c.l.b16 %v228
      %v738 = vunpack.c.h.b16 %v228
      %v739 = vunpack.c.l.b16 %v229
      %v740 = vunpack.c.h.b16 %v229
      %v741 = vunpack.c.l.b16 %v230
      %v742 = vunpack.c.h.b16 %v230
      %v743 = vunpack.c.l.b16 %v231
      %v744 = vunpack.c.l.b16 %v232
      %v745 = vunpack.c.h.b16 %v232
      %v746 = vunpack.c.l.b16 %v233
      %v747 = vunpack.c.h.b16 %v233
      %v748 = vunpack.c.l.b16 %v234
      %v749 = vunpack.c.h.b16 %v234
      %v750 = vunpack.c.l.b16 %v235
      %v751 = vunpack.c.h.b16 %v235
      %v752 = vunpack.c.l.b16 %v236
      %v753 = vunpack.c.l.b16 %v237
      %v754 = vunpack.c.h.b16 %v237
      %v755 = vunpack.c.l.b16 %v238
      %v756 = vunpack.c.h.b16 %v238
      %v757 = vunpack.c.l.b16 %v239
      %v758 = vunpack.c.h.b16 %v239
      %v759 = vunpack.c.l.b16 %v240
      %v760 = vunpack.c.h.b16 %v240
      %v761 = vunpack.c.l.b16 %v241
      %v762 = vunpack.c.l.b16 %v242
      %v763 = vunpack.c.h.b16 %v242
      %v764 = vunpack.c.l.b16 %v243
      %v765 = vunpack.c.h.b16 %v243
      %v766 = vunpack.c.l.b16 %v244
      %v767 = vunpack.c.h.b16 %v244
      %v768 = vunpack.c.l.b16 %v245
      %v769 = vunpack.c.h.b16 %v245
      %v770 = vunpack.c.l.b16 %v246
      %v771 = vunpack.c.l.b16 %v247
      %v772 = vunpack.c.h.b16 %v247
      %v773 = vunpack.c.l.b16 %v248
      %v774 = vunpack.c.h.b16 %v248
      %v775 = vunpack.c.l.b16 %v249
      %v776 = vunpack.c.h.b16 %v249
      %v777 = vunpack.c.l.b16 %v250
      %v778 = vunpack.c.h.b16 %v250
      %v779 = vunpack.c.l.b16 %v251
      %v780 = vunpack.c.l.b16 %v252
      %v781 = vunpack.c.h.b16 %v252
      %v782 = vunpack.c.l.b16 %v253
      %v783 = vunpack.c.h.b16 %v253
      %v784 = vunpack.c.l.b16 %v254
      %v785 = vunpack.c.h.b16 %v254
      %v786 = vunpack.c.l.b16 %v255
      %v787 = vunpack.c.h.b16 %v255
      %v788 = vunpack.c.l.b16 %v256
      %v789 = vunpack.c.l.b16 %v257
      %v790 = vunpack.c.h.b16 %v257
      %v791 = vunpack.c.l.b16 %v258
      %v792 = vunpack.c.h.b16 %v258
      %v793 = vunpack.c.l.b16 %v259
      %v794 = vunpack.c.h.b16 %v259
      %v795 = vunpack.c.l.b16 %v260
      %v796 = vunpack.c.h.b16 %v260
      %v797 = vunpack.c.l.b16 %v261
      %v798 = vunpack.c.l.b16 %v262
      %v799 = vunpack.c.h.b16 %v262
      %v800 = vunpack.c.l.b16 %v263
      %v801 = vunpack.c.h.b16 %v263
      %v802 = vunpack.c.l.b16 %v264
      %v803 = vunpack.c.h.b16 %v264
      %v804 = vunpack.c.l.b16 %v265
      %v805 = vunpack.c.h.b16 %v265
      %v806 = vunpack.c.l.b16 %v266
      %v807 = vunpack.c.l.b16 %v267
      %v808 = vunpack.c.h.b16 %v267
      %v809 = vunpack.c.l.b16 %v268
      %v810 = vunpack.c.h.b16 %v268
      %v811 = vunpack.c.l.b16 %v269
      %v812 = vunpack.c.h.b16 %v269
      %v813 = vunpack.c.l.b16 %v270
      %v814 = vunpack.c.h.b16 %v270
      %v815 = vunpack.c.l.b16 %v271
      %v816 = vunpack.c.l.b16 %v272
      %v817 = vunpack.c.h.b16 %v272
      %v818 = vunpack.c.l.b16 %v273
      %v819 = vunpack.c.h.b16 %v273
      %v820 = vunpack.c.l.b16 %v274
      %v821 = vunpack.c.h.b16 %v274
      %v822 = vunpack.c.l.b16 %v275
      %v823 = vunpack.c.h.b16 %v275
      %v824 = vunpack.c.l.b16 %v276
      %v825 = vunpack.c.l.b16 %v277
      %v826 = vunpack.c.h.b16 %v277
      %v827 = vunpack.c.l.b16 %v278
      %v828 = vunpack.c.h.b16 %v278
      %v829 = vunpack.c.l.b16 %v279
      %v830 = vunpack.c.h.b16 %v279
      %v831 = vunpack.c.l.b16 %v280
      %v832 = vunpack.c.h.b16 %v280
      %v833 = vunpack.c.l.b16 %v281
      %v834 = vunpack.c.l.b16 %v282
      %v835 = vunpack.c.h.b16 %v282
      %v836 = vunpack.c.l.b16 %v283
      %v837 = vunpack.c.h.b16 %v283
      %v838 = vunpack.c.l.b16 %v284
      %v839 = vunpack.c.h.b16 %v284
      %v840 = vunpack.c.l.b16 %v285
      %v841 = vunpack.c.h.b16 %v285
      %v842 = vunpack.c.l.b16 %v286
      %v843 = vunpack.c.l.b16 %v287
      %v844 = vunpack.c.h.b16 %v287
      %v845 = vunpack.c.l.b16 %v288
      %v846 = vunpack.c.h.b16 %v288
      %v847 = vunpack.c.l.b16 %v289
      %v848 = vunpack.c.h.b16 %v289
      %v849 = vunpack.c.l.b16 %v290
      %v850 = vunpack.c.h.b16 %v290
      %v851 = vunpack.c.l.b16 %v291
      %v852 = vunpack.c.l.b16 %v292
      %v853 = vunpack.c.h.b16 %v292
      %v854 = vunpack.c.l.b16 %v293
      %v855 = vunpack.c.h.b16 %v293
      %v856 = vunpack.c.l.b16 %v294
      %v857 = vunpack.c.h.b16 %v294
      %v858 = vunpack.c.l.b16 %v295
      %v859 = vunpack.c.h.b16 %v295
      %v860 = vunpack.c.l.b16 %v296
      %v861 = vunpack.c.l.b16 %v297
      %v862 = vunpack.c.h.b16 %v297
      %v863 = vunpack.c.l.b16 %v298
      %v864 = vunpack.c.h.b16 %v298
      %v865 = vunpack.c.l.b16 %v299
      %v866 = vunpack.c.h.b16 %v299
      %v867 = vunpack.c.l.b16 %v300
      %v868 = vunpack.c.h.b16 %v300
      %v869 = vunpack.c.l.b16 %v301
      %v870 = vunpack.c.l.b16 %v302
      %v871 = vunpack.c.h.b16 %v302
      %v872 = vunpack.c.l.b16 %v303
      %v873 = vunpack.c.h.b16 %v303
      %v874 = vunpack.c.l.b16 %v304
      %v875 = vunpack.c.h.b16 %v304
      %v876 = vunpack.c.l.b16 %v305
      %v877 = vunpack.c.h.b16 %v305
      %v878 = vunpack.c.l.b16 %v306
      %v879 = vunpack.c.l.b16 %v307
      %v880 = vunpack.c.h.b16 %v307
      %v881 = vunpack.c.l.b16 %v308
      %v882 = vunpack.c.h.b16 %v308
      %v883 = vunpack.c.l.b16 %v309
      %v884 = vunpack.c.h.b16 %v309
      %v885 = vunpack.c.l.b16 %v310
      %v886 = vunpack.c.h.b16 %v310
      %v887 = vunpack.c.l.b16 %v311
      %v888 = vunpack.c.l.b16 %v312
      %v889 = vunpack.c.h.b16 %v312
      %v890 = vunpack.c.l.b16 %v313
      %v891 = vunpack.c.h.b16 %v313
      %v892 = vunpack.c.l.b16 %v314
      %v893 = vunpack.c.h.b16 %v314
      %v894 = vunpack.c.l.b16 %v315
      %v895 = vunpack.c.h.b16 %v315
      %v896 = vunpack.c.l.b16 %v316
      %v897 = vunpack.c.l.b16 %v317
      %v898 = vunpack.c.h.b16 %v317
      %v899 = vunpack.c.l.b16 %v318
      %v900 = vunpack.c.h.b16 %v318
      %v901 = vunpack.c.l.b16 %v319
      %v902 = vunpack.c.h.b16 %v319
      %v903 = vunpack.c.l.b16 %v320
      %v904 = vunpack.c.h.b16 %v320
      %v905 = vunpack.c.l.b16 %v321
      %v906 = vunpack.c.l.b16 %v322
      %v907 = vunpack.c.h.b16 %v322
      %v908 = vunpack.c.l.b16 %v323
      %v909 = vunpack.c.h.b16 %v323
      %v910 = vunpack.c.l.b16 %v324
      %v911 = vunpack.c.h.b16 %v324
      %v912 = vunpack.c.l.b16 %v325
      %v913 = vunpack.c.h.b16 %v325
      %v914 = vunpack.c.l.b16 %v326
      %v915 = vunpack.c.l.b16 %v327
      %v916 = vunpack.c.h.b16 %v327
      %v917 = vunpack.c.l.b16 %v328
      %v918 = vunpack.c.h.b16 %v328
      %v919 = vunpack.c.l.b16 %v329
      %v920 = vunpack.c.h.b16 %v329
      %v921 = vunpack.c.l.b16 %v330
      %v922 = vunpack.c.h.b16 %v330
      %v923 = vunpack.c.l.b16 %v331
      %v924 = vunpack.c.l.b16 %v332
      %v925 = vunpack.c.h.b16 %v332
      %v926 = vunpack.c.l.b16 %v333
      %v927 = vunpack.c.h.b16 %v333
      %v928 = vunpack.c.l.b16 %v334
      %v929 = vunpack.c.h.b16 %v334
      %v930 = vunpack.c.l.b16 %v335
      %v931 = vunpack.c.h.b16 %v335
      %v932 = vunpack.c.l.b16 %v336
      %v933 = vpack.c.b16 %v654, %v645
      %v934 = vpack.c.b16 %v655, %v646
      %v935 = vpack.c.b16 %v656, %v647
      %v936 = vpack.c.b16 %v657, %v648
      %v937 = vpack.c.b16 %v658, %v649
      %v938 = vpack.c.b16 %v659, %v650
      %v939 = vpack.c.b16 %v660, %v651
      %v940 = vpack.c.b16 %v661, %v652
      %v941 = vpack.c.b16 %v662, %v653
      %v942 = vpack.c.b16 %v672, %v663
      %v943 = vpack.c.b16 %v673, %v664
      %v944 = vpack.c.b16 %v674, %v665
      %v945 = vpack.c.b16 %v675, %v666
      %v946 = vpack.c.b16 %v676, %v667
      %v947 = vpack.c.b16 %v677, %v668
      %v948 = vpack.c.b16 %v678, %v669
      %v949 = vpack.c.b16 %v679, %v670
      %v950 = vpack.c.b16 %v680, %v671
      %v951 = vpack.c.b16 %v690, %v681
      %v952 = vpack.c.b16 %v691, %v682
      %v953 = vpack.c.b16 %v692, %v683
      %v954 = vpack.c.b16 %v693, %v684
      %v955 = vpack.c.b16 %v694, %v685
      %v956 = vpack.c.b16 %v695, %v686
      %v957 = vpack.c.b16 %v696, %v687
      %v958 = vpack.c.b16 %v697, %v688
      %v959 = vpack.c.b16 %v698, %v689
      %v960 = vpack.c.b16 %v708, %v699
      %v961 = vpack.c.b16 %v709, %v700
      %v962 = vpack.c.b16 %v710, %v701
      %v963 = vpack.c.b16 %v711, %v702
      %v964 = vpack.c.b16 %v712, %v703
      %v965 = vpack.c.b16 %v713, %v704
      %v966 = vpack.c.b16 %v714, %v705
      %v967 = vpack.c.b16 %v715, %v706
      %v968 = vpack.c.b16 %v716, %v707
      %v969 = vpack.c.b16 %v726, %v717
      %v970 = vpack.c.b16 %v727, %v718
      %v971 = vpack.c.b16 %v728, %v719
      %v972 = vpack.c.b16 %v729, %v720
      %v973 = vpack.c.b16 %v730, %v721
      %v974 = vpack.c.b16 %v731, %v722
      %v975 = vpack.c.b16 %v732, %v723
      %v976 = vpack.c.b16 %v733, %v724
      %v977 = vpack.c.b16 %v734, %v725
      %v978 = vpack.c.b16 %v744, %v735
      %v979 = vpack.c.b16 %v745, %v736
      %v980 = vpack.c.b16 %v746, %v737
      %v981 = vpack.c.b16 %v747, %v738
      %v982 = vpack.c.b16 %v748, %v739
      %v983 = vpack.c.b16 %v749, %v740
      %v984 = vpack.c.b16 %v750, %v741
      %v985 = vpack.c.b16 %v751, %v742
      %v986 = vpack.c.b16 %v752, %v743
      %v987 = vpack.c.b16 %v762, %v753
      %v988 = vpack.c.b16 %v763, %v754
      %v989 = vpack.c.b16 %v764, %v755
      %v990 = vpack.c.b16 %v765, %v756
      %v991 = vpack.c.b16 %v766, %v757
      %v992 = vpack.c.b16 %v767, %v758
      %v993 = vpack.c.b16 %v768, %v759
      %v994 = vpack.c.b16 %v769, %v760
      %v995 = vpack.c.b16 %v770, %v761
      %v996 = vpack.c.b16 %v780, %v771
      %v997 = vpack.c.b16 %v781, %v772
      %v998 = vpack.c.b16 %v782, %v773
      %v999 = vpack.c.b16 %v783, %v774
      %v1000 = vpack.c.b16 %v784, %v775
      %v1001 = vpack.c.b16 %v785, %v776
      %v1002 = vpack.c.b16 %v786, %v777
      %v1003 = vpack.c.b16 %v787, %v778
      %v1004 = vpack.c.b16 %v788, %v779
      %v1005 = vpack.c.b16 %v798, %v789
      %v1006 = vpack.c.b16 %v799, %v790
      %v1007 = vpack.c.b16 %v800, %v791
      %v1008 = vpack.c.b16 %v801, %v792
      %v1009 = vpack.c.b16 %v802, %v793
      %v1010 = vpack.c.b16 %v803, %v794
      %v1011 = vpack.c.b16 %v804, %v795
      %v1012 = vpack.c.b16 %v805, %v796
      %v1013 = vpack.c.b16 %v806, %v797
      %v1014 = vpack.c.b16 %v816, %v807
      %v1015 = vpack.c.b16 %v817, %v808
      %v1016 = vpack.c.b16 %v818, %v809
      %v1017 = vpack.c.b16 %v819, %v810
      %v1018 = vpack.c.b16 %v820, %v811
      %v1019 = vpack.c.b16 %v821, %v812
      %v1020 = vpack.c.b16 %v822, %v813
      %v1021 = vpack.c.b16 %v823, %v814
      %v1022 = vpack.c.b16 %v824, %v815
      %v1023 = vpack.c.b16 %v834, %v825
      %v1024 = vpack.c.b16 %v835, %v826
      %v1025 = vpack.c.b16 %v836, %v827
      %v1026 = vpack.c.b16 %v837, %v828
      %v1027 = vpack.c.b16 %v838, %v829
      %v1028 = vpack.c.b16 %v839, %v830
      %v1029 = vpack.c.b16 %v840, %v831
      %v1030 = vpack.c.b16 %v841, %v832
      %v1031 = vpack.c.b16 %v842, %v833
      %v1032 = vpack.c.b16 %v852, %v843
      %v1033 = vpack.c.b16 %v853, %v844
      %v1034 = vpack.c.b16 %v854, %v845
      %v1035 = vpack.c.b16 %v855, %v846
      %v1036 = vpack.c.b16 %v856, %v847
      %v1037 = vpack.c.b16 %v857, %v848
      %v1038 = vpack.c.b16 %v858, %v849
      %v1039 = vpack.c.b16 %v859, %v850
      %v1040 = vpack.c.b16 %v860, %v851
      %v1041 = vpack.c.b16 %v870, %v861
      %v1042 = vpack.c.b16 %v871, %v862
      %v1043 = vpack.c.b16 %v872, %v863
      %v1044 = vpack.c.b16 %v873, %v864
      %v1045 = vpack.c.b16 %v874, %v865
      %v1046 = vpack.c.b16 %v875, %v866
      %v1047 = vpack.c.b16 %v876, %v867
      %v1048 = vpack.c.b16 %v877, %v868
      %v1049 = vpack.c.b16 %v878, %v869
      %v1050 = vpack.c.b16 %v888, %v879
      %v1051 = vpack.c.b16 %v889, %v880
      %v1052 = vpack.c.b16 %v890, %v881
      %v1053 = vpack.c.b16 %v891, %v882
      %v1054 = vpack.c.b16 %v892, %v883
      %v1055 = vpack.c.b16 %v893, %v884
      %v1056 = vpack.c.b16 %v894, %v885
      %v1057 = vpack.c.b16 %v895, %v886
      %v1058 = vpack.c.b16 %v896, %v887
      %v1059 = vpack.c.b16 %v906, %v897
      %v1060 = vpack.c.b16 %v907, %v898
      %v1061 = vpack.c.b16 %v908, %v899
      %v1062 = vpack.c.b16 %v909, %v900
      %v1063 = vpack.c.b16 %v910, %v901
      %v1064 = vpack.c.b16 %v911, %v902
      %v1065 = vpack.c.b16 %v912, %v903
      %v1066 = vpack.c.b16 %v913, %v904
      %v1067 = vpack.c.b16 %v914, %v905
      %v1068 = vpack.c.b16 %v924, %v915
      %v1069 = vpack.c.b16 %v925, %v916
      %v1070 = vpack.c.b16 %v926, %v917
      %v1071 = vpack.c.b16 %v927, %v918
      %v1072 = vpack.c.b16 %v928, %v919
      %v1073 = vpack.c.b16 %v929, %v920
      %v1074 = vpack.c.b16 %v930, %v921
      %v1075 = vpack.c.b16 %v931, %v922
      %v1076 = vpack.c.b16 %v932, %v923
      %v1365 = vunpack.c.l.b16 %v337
      %v1366 = vunpack.c.l.b16 %v338
      %v1367 = vunpack.c.l.b16 %v339
      %v1368 = vunpack.c.l.b16 %v340
      %v1369 = vunpack.c.l.b16 %v341
      %v1370 = vunpack.c.l.b16 %v342
      %v1371 = vunpack.c.l.b16 %v343
      %v1372 = vunpack.c.l.b16 %v344
      %v1373 = vunpack.c.l.b16 %v345
      %v1374 = vunpack.c.l.b16 %v346
      %v1375 = vunpack.c.l.b16 %v347
      %v1376 = vunpack.c.l.b16 %v348
      %v1377 = vunpack.c.l.b16 %v349
      %v1378 = vunpack.c.l.b16 %v350
      %v1379 = vunpack.c.l.b16 %v351
      %v1380 = vunpack.c.l.b16 %v352
      %v1381 = vunpack.c.l.b16 %v353
      %v1382 = vunpack.c.l.b16 %v354
      %v1383 = vunpack.c.l.b16 %v355
      %v1384 = vunpack.c.l.b16 %v356
      %v1385 = vunpack.c.l.b16 %v357
      %v1386 = vunpack.c.l.b16 %v358
      %v1387 = vunpack.c.l.b16 %v359
      %v1388 = vunpack.c.l.b16 %v360
      %v1389 = vunpack.c.l.b16 %v361
      %v1390 = vunpack.c.l.b16 %v362
      %v1391 = vunpack.c.l.b16 %v363
      %v1392 = vunpack.c.l.b16 %v364
      %v1393 = vunpack.c.l.b16 %v365
      %v1394 = vunpack.c.l.b16 %v366
      %v1395 = vunpack.c.l.b16 %v367
      %v1396 = vunpack.c.l.b16 %v368
      %v1397 = vunpack.c.l.b16 %v369
      %v1398 = vunpack.c.l.b16 %v370
      %v1399 = vunpack.c.l.b16 %v371
      %v1400 = vunpack.c.l.b16 %v372
      %v1401 = vunpack.c.l.b16 %v373
      %v1402 = vunpack.c.l.b16 %v374
      %v1403 = vunpack.c.l.b16 %v375
      %v1404 = vunpack.c.l.b16 %v376
      %v1405 = vunpack.c.l.b16 %v377
      %v1406 = vunpack.c.l.b16 %v378
      %v1407 = vunpack.c.l.b16 %v379
      %v1408 = vunpack.c.l.b16 %v380
      %v1409 = vunpack.c.l.b16 %v381
      %v1410 = vunpack.c.l.b16 %v382
      %v1411 = vunpack.c.l.b16 %v383
      %v1412 = vunpack.c.l.b16 %v384
      %v1413 = vunpack.c.l.b16 %v385
      %v1414 = vunpack.c.l.b16 %v386
      %v1415 = vunpack.c.l.b16 %v387
      %v1416 = vunpack.c.l.b16 %v388
      %v1417 = vunpack.c.l.b16 %v389
      %v1418 = vunpack.c.l.b16 %v390
      %v1419 = vunpack.c.l.b16 %v391
      %v1420 = vunpack.c.l.b16 %v392
      %v1421 = vunpack.c.l.b16 %v393
      %v1422 = vunpack.c.l.b16 %v394
      %v1423 = vunpack.c.l.b16 %v395
      %v1424 = vunpack.c.l.b16 %v396
      %v1425 = vunpack.c.l.b16 %v397
      %v1426 = vunpack.c.l.b16 %v398
      %v1427 = vunpack.c.l.b16 %v399
      %v1428 = vunpack.c.l.b16 %v400
      %v1429 = vunpack.c.l.b16 %v401
      %v1430 = vunpack.c.l.b16 %v402
      %v1431 = vunpack.c.l.b16 %v403
      %v1432 = vunpack.c.l.b16 %v404
      %v1433 = vunpack.c.l.b16 %v405
      %v1434 = vunpack.c.l.b16 %v406
      %v1435 = vunpack.c.l.b16 %v407
      %v1436 = vunpack.c.l.b16 %v408
      %v1437 = vunpack.c.l.b16 %v409
      %v1438 = vunpack.c.l.b16 %v410
      %v1439 = vunpack.c.l.b16 %v411
      %v1440 = vunpack.c.l.b16 %v412
      %v1441 = vunpack.c.l.b16 %v413
      %v1442 = vunpack.c.l.b16 %v414
      %v1443 = vunpack.c.l.b16 %v415
      %v1444 = vunpack.c.l.b16 %v416
      %v1445 = vunpack.c.l.b16 %v417
      %v1446 = vunpack.c.l.b16 %v418
      %v1447 = vunpack.c.l.b16 %v419
      %v1448 = vunpack.c.l.b16 %v420
      %v1449 = vunpack.c.l.b16 %v421
      %v1450 = vunpack.c.l.b16 %v422
      %v1451 = vunpack.c.l.b16 %v423
      %v1452 = vunpack.c.l.b16 %v424
      %v1453 = vunpack.c.l.b16 %v425
      %v1454 = vunpack.c.l.b16 %v426
      %v1455 = vunpack.c.l.b16 %v427
      %v1456 = vunpack.c.l.b16 %v428
      %v1457 = vunpack.c.l.b16 %v429
      %v1458 = vunpack.c.l.b16 %v430
      %v1459 = vunpack.c.l.b16 %v431
      %v1460 = vunpack.c.l.b16 %v432
      %v1461 = vunpack.c.l.b16 %v433
      %v1462 = vunpack.c.l.b16 %v434
      %v1463 = vunpack.c.l.b16 %v435
      %v1464 = vunpack.c.l.b16 %v436
      %v1465 = vunpack.c.l.b16 %v437
      %v1466 = vunpack.c.l.b16 %v438
      %v1467 = vunpack.c.l.b16 %v439
      %v1468 = vunpack.c.l.b16 %v440
      %v1469 = vunpack.c.l.b16 %v441
      %v1470 = vunpack.c.l.b16 %v442
      %v1471 = vunpack.c.l.b16 %v443
      %v1472 = vunpack.c.l.b16 %v444
      %v1473 = vunpack.c.l.b16 %v445
      %v1474 = vunpack.c.l.b16 %v446
      %v1475 = vunpack.c.l.b16 %v447
      %v1476 = vunpack.c.l.b16 %v448
      %v1477 = vunpack.c.l.b16 %v449
      %v1478 = vunpack.c.l.b16 %v450
      %v1479 = vunpack.c.l.b16 %v451
      %v1480 = vunpack.c.l.b16 %v452
      %v1481 = vunpack.c.l.b16 %v453
      %v1482 = vunpack.c.l.b16 %v454
      %v1483 = vunpack.c.l.b16 %v455
      %v1484 = vunpack.c.l.b16 %v456
      %v1485 = vunpack.c.l.b16 %v457
      %v1486 = vunpack.c.l.b16 %v458
      %v1487 = vunpack.c.l.b16 %v459
      %v1488 = vunpack.c.l.b16 %v460
      %v1489 = vunpack.c.l.b16 %v461
      %v1490 = vunpack.c.l.b16 %v462
      %v1491 = vunpack.c.l.b16 %v463
      %v1492 = vunpack.c.l.b16 %v464
      %v1493 = vunpack.c.l.b16 %v465
      %v1494 = vunpack.c.l.b16 %v466
      %v1495 = vunpack.c.l.b16 %v467
      %v1496 = vunpack.c.l.b16 %v468
      %v1497 = vunpack.c.l.b16 %v469
      %v1498 = vunpack.c.l.b16 %v470
      %v1499 = vunpack.c.l.b16 %v471
      %v1500 = vunpack.c.l.b16 %v472
      %v1501 = vunpack.c.l.b16 %v473
      %v1502 = vunpack.c.l.b16 %v474
      %v1503 = vunpack.c.l.b16 %v475
      %v1504 = vunpack.c.l.b16 %v476
      %v1505 = vunpack.c.l.b16 %v477
      %v1506 = vunpack.c.l.b16 %v478
      %v1507 = vunpack.c.l.b16 %v479
      %v1508 = vunpack.c.l.b16 %v480
      %v1509 = vpack.c.b16 %v1366, %v1365
      %v1510 = vpack.c.b16 %v1368, %v1367
      %v1511 = vpack.c.b16 %v1370, %v1369
      %v1512 = vpack.c.b16 %v1372, %v1371
      %v1513 = vpack.c.b16 %v1374, %v1373
      %v1514 = vpack.c.b16 %v1376, %v1375
      %v1515 = vpack.c.b16 %v1378, %v1377
      %v1516 = vpack.c.b16 %v1380, %v1379
      %v1517 = vpack.c.b16 %v1382, %v1381
      %v1518 = vpack.c.b16 %v1384, %v1383
      %v1519 = vpack.c.b16 %v1386, %v1385
      %v1520 = vpack.c.b16 %v1388, %v1387
      %v1521 = vpack.c.b16 %v1390, %v1389
      %v1522 = vpack.c.b16 %v1392, %v1391
      %v1523 = vpack.c.b16 %v1394, %v1393
      %v1524 = vpack.c.b16 %v1396, %v1395
      %v1525 = vpack.c.b16 %v1398, %v1397
      %v1526 = vpack.c.b16 %v1400, %v1399
      %v1527 = vpack.c.b16 %v1402, %v1401
      %v1528 = vpack.c.b16 %v1404, %v1403
      %v1529 = vpack.c.b16 %v1406, %v1405
      %v1530 = vpack.c.b16 %v1408, %v1407
      %v1531 = vpack.c.b16 %v1410, %v1409
      %v1532 = vpack.c.b16 %v1412, %v1411
      %v1533 = vpack.c.b16 %v1414, %v1413
      %v1534 = vpack.c.b16 %v1416, %v1415
      %v1535 = vpack.c.b16 %v1418, %v1417
      %v1536 = vpack.c.b16 %v1420, %v1419
      %v1537 = vpack.c.b16 %v1422, %v1421
      %v1538 = vpack.c.b16 %v1424, %v1423
      %v1539 = vpack.c.b16 %v1426, %v1425
      %v1540 = vpack.c.b16 %v1428, %v1427
      %v1541 = vpack.c.b16 %v1430, %v1429
      %v1542 = vpack.c.b16 %v1432, %v1431
      %v1543 = vpack.c.b16 %v1434, %v1433
      %v1544 = vpack.c.b16 %v1436, %v1435
      %v1545 = vpack.c.b16 %v1438, %v1437
      %v1546 = vpack.c.b16 %v1440, %v1439
      %v1547 = vpack.c.b16 %v1442, %v1441
      %v1548 = vpack.c.b16 %v1444, %v1443
      %v1549 = vpack.c.b16 %v1446, %v1445
      %v1550 = vpack.c.b16 %v1448, %v1447
      %v1551 = vpack.c.b16 %v1450, %v1449
      %v1552 = vpack.c.b16 %v1452, %v1451
      %v1553 = vpack.c.b16 %v1454, %v1453
      %v1554 = vpack.c.b16 %v1456, %v1455
      %v1555 = vpack.c.b16 %v1458, %v1457
      %v1556 = vpack.c.b16 %v1460, %v1459
      %v1557 = vpack.c.b16 %v1462, %v1461
      %v1558 = vpack.c.b16 %v1464, %v1463
      %v1559 = vpack.c.b16 %v1466, %v1465
      %v1560 = vpack.c.b16 %v1468, %v1467
      %v1561 = vpack.c.b16 %v1470, %v1469
      %v1562 = vpack.c.b16 %v1472, %v1471
      %v1563 = vpack.c.b16 %v1474, %v1473
      %v1564 = vpack.c.b16 %v1476, %v1475
      %v1565 = vpack.c.b16 %v1478, %v1477
      %v1566 = vpack.c.b16 %v1480, %v1479
      %v1567 = vpack.c.b16 %v1482, %v1481
      %v1568 = vpack.c.b16 %v1484, %v1483
      %v1569 = vpack.c.b16 %v1486, %v1485
      %v1570 = vpack.c.b16 %v1488, %v1487
      %v1571 = vpack.c.b16 %v1490, %v1489
      %v1572 = vpack.c.b16 %v1492, %v1491
      %v1573 = vpack.c.b16 %v1494, %v1493
      %v1574 = vpack.c.b16 %v1496, %v1495
      %v1575 = vpack.c.b16 %v1498, %v1497
      %v1576 = vpack.c.b16 %v1500, %v1499
      %v1577 = vpack.c.b16 %v1502, %v1501
      %v1578 = vpack.c.b16 %v1504, %v1503
      %v1579 = vpack.c.b16 %v1506, %v1505
      %v1580 = vpack.c.b16 %v1508, %v1507
      %1653 = vmatpush.bf16.msra.mxu0 %v1516
      %1654 = vmatpush.bf16.msra.mxu0 %v1515
      %1655 = vmatpush.bf16.msra.mxu0 %v1514
      %1656 = vmatpush.bf16.msra.mxu0 %v1513
      %1657 = vmatpush.bf16.msra.mxu0 %v1512
      %1658 = vmatpush.bf16.msra.mxu0 %v1511
      %1659 = vmatpush.bf16.msra.mxu0 %v1510
      %1660 = vmatpush.bf16.msra.mxu0 %v1509
      %1661 = vmatmul.bf16.gmra.mxu0 %v933
      %v1662 = vpop.f32.mrf.mxu0
      %v1663 = vadd.f32 %v483, %v1662
      %v1664 = vpop.f32.mrf.mxu0
      %v1665 = vadd.f32 %v483, %v1664
      %1666 = vmatmul.bf16.gmra.mxu0 %v942
      %v1667 = vpop.f32.mrf.mxu0
      %v1668 = vadd.f32 %v483, %v1667
      %v1669 = vpop.f32.mrf.mxu0
      %v1670 = vadd.f32 %v483, %v1669
      %1671 = vmatmul.bf16.gmra.mxu0 %v951
      %v1672 = vpop.f32.mrf.mxu0
      %v1673 = vadd.f32 %v483, %v1672
      %v1674 = vpop.f32.mrf.mxu0
      %v1675 = vadd.f32 %v483, %v1674
      %1676 = vmatmul.bf16.gmra.mxu0 %v960
      %v1677 = vpop.f32.mrf.mxu0
      %v1678 = vadd.f32 %v483, %v1677
      %v1679 = vpop.f32.mrf.mxu0
      %v1680 = vadd.f32 %v483, %v1679
      %1681 = vmatmul.bf16.gmra.mxu0 %v969
      %v1682 = vpop.f32.mrf.mxu0
      %v1683 = vadd.f32 %v483, %v1682
      %v1684 = vpop.f32.mrf.mxu0
      %v1685 = vadd.f32 %v483, %v1684
      %1686 = vmatmul.bf16.gmra.mxu0 %v978
      %v1687 = vpop.f32.mrf.mxu0
      %v1688 = vadd.f32 %v483, %v1687
      %v1689 = vpop.f32.mrf.mxu0
      %v1690 = vadd.f32 %v483, %v1689
      %1691 = vmatmul.bf16.gmra.mxu0 %v987
      %v1692 = vpop.f32.mrf.mxu0
      %v1693 = vadd.f32 %v483, %v1692
      %v1694 = vpop.f32.mrf.mxu0
      %v1695 = vadd.f32 %v483, %v1694
      %1696 = vmatmul.bf16.gmra.mxu0 %v996
      %v1697 = vpop.f32.mrf.mxu0
      %v1698 = vadd.f32 %v483, %v1697
      %v1699 = vpop.f32.mrf.mxu0
      %v1700 = vadd.f32 %v483, %v1699
      %1701 = vmatmul.bf16.gmra.mxu0 %v1005
      %v1702 = vpop.f32.mrf.mxu0
      %v1703 = vadd.f32 %v483, %v1702
      %v1704 = vpop.f32.mrf.mxu0
      %v1705 = vadd.f32 %v483, %v1704
      %1706 = vmatmul.bf16.gmra.mxu0 %v1014
      %v1707 = vpop.f32.mrf.mxu0
      %v1708 = vadd.f32 %v483, %v1707
      %v1709 = vpop.f32.mrf.mxu0
      %v1710 = vadd.f32 %v483, %v1709
      %1711 = vmatmul.bf16.gmra.mxu0 %v1023
      %v1712 = vpop.f32.mrf.mxu0
      %v1713 = vadd.f32 %v483, %v1712
      %v1714 = vpop.f32.mrf.mxu0
      %v1715 = vadd.f32 %v483, %v1714
      %1716 = vmatmul.bf16.gmra.mxu0 %v1032
      %v1717 = vpop.f32.mrf.mxu0
      %v1718 = vadd.f32 %v483, %v1717
      %v1719 = vpop.f32.mrf.mxu0
      %v1720 = vadd.f32 %v483, %v1719
      %1721 = vmatmul.bf16.gmra.mxu0 %v1041
      %v1722 = vpop.f32.mrf.mxu0
      %v1723 = vadd.f32 %v483, %v1722
      %v1724 = vpop.f32.mrf.mxu0
      %v1725 = vadd.f32 %v483, %v1724
      %1726 = vmatmul.bf16.gmra.mxu0 %v1050
      %v1727 = vpop.f32.mrf.mxu0
      %v1728 = vadd.f32 %v483, %v1727
      %v1729 = vpop.f32.mrf.mxu0
      %v1730 = vadd.f32 %v483, %v1729
      %1731 = vmatmul.bf16.gmra.mxu0 %v1059
      %v1732 = vpop.f32.mrf.mxu0
      %v1733 = vadd.f32 %v483, %v1732
      %v1734 = vpop.f32.mrf.mxu0
      %v1735 = vadd.f32 %v483, %v1734
      %1736 = vmatmul.bf16.gmra.mxu0 %v1068
      %v1737 = vpop.f32.mrf.mxu0
      %v1738 = vadd.f32 %v483, %v1737
      %v1739 = vpop.f32.mrf.mxu0
      %v1740 = vadd.f32 %v483, %v1739
      %1741 = vdwg.mxu0
      %1742 = vmatpush.bf16.msra.mxu0 %v1524
      %1743 = vmatpush.bf16.msra.mxu0 %v1523
      %1744 = vmatpush.bf16.msra.mxu0 %v1522
      %1745 = vmatpush.bf16.msra.mxu0 %v1521
      %1746 = vmatpush.bf16.msra.mxu0 %v1520
      %1747 = vmatpush.bf16.msra.mxu0 %v1519
      %1748 = vmatpush.bf16.msra.mxu0 %v1518
      %1749 = vmatpush.bf16.msra.mxu0 %v1517
      %1750 = vmatmul.bf16.gmra.mxu0 %v934
      %v1751 = vpop.f32.mrf.mxu0
      %v1752 = vadd.f32 %v1663, %v1751
      %v1753 = vpop.f32.mrf.mxu0
      %v1754 = vadd.f32 %v1665, %v1753
      %1755 = vmatmul.bf16.gmra.mxu0 %v943
      %v1756 = vpop.f32.mrf.mxu0
      %v1757 = vadd.f32 %v1668, %v1756
      %v1758 = vpop.f32.mrf.mxu0
      %v1759 = vadd.f32 %v1670, %v1758
      %1760 = vmatmul.bf16.gmra.mxu0 %v952
      %v1761 = vpop.f32.mrf.mxu0
      %v1762 = vadd.f32 %v1673, %v1761
      %v1763 = vpop.f32.mrf.mxu0
      %v1764 = vadd.f32 %v1675, %v1763
      %1765 = vmatmul.bf16.gmra.mxu0 %v961
      %v1766 = vpop.f32.mrf.mxu0
      %v1767 = vadd.f32 %v1678, %v1766
      %v1768 = vpop.f32.mrf.mxu0
      %v1769 = vadd.f32 %v1680, %v1768
      %1770 = vmatmul.bf16.gmra.mxu0 %v970
      %v1771 = vpop.f32.mrf.mxu0
      %v1772 = vadd.f32 %v1683, %v1771
      %v1773 = vpop.f32.mrf.mxu0
      %v1774 = vadd.f32 %v1685, %v1773
      %1775 = vmatmul.bf16.gmra.mxu0 %v979
      %v1776 = vpop.f32.mrf.mxu0
      %v1777 = vadd.f32 %v1688, %v1776
      %v1778 = vpop.f32.mrf.mxu0
      %v1779 = vadd.f32 %v1690, %v1778
      %1780 = vmatmul.bf16.gmra.mxu0 %v988
      %v1781 = vpop.f32.mrf.mxu0
      %v1782 = vadd.f32 %v1693, %v1781
      %v1783 = vpop.f32.mrf.mxu0
      %v1784 = vadd.f32 %v1695, %v1783
      %1785 = vmatmul.bf16.gmra.mxu0 %v997
      %v1786 = vpop.f32.mrf.mxu0
      %v1787 = vadd.f32 %v1698, %v1786
      %v1788 = vpop.f32.mrf.mxu0
      %v1789 = vadd.f32 %v1700, %v1788
      %1790 = vmatmul.bf16.gmra.mxu0 %v1006
      %v1791 = vpop.f32.mrf.mxu0
      %v1792 = vadd.f32 %v1703, %v1791
      %v1793 = vpop.f32.mrf.mxu0
      %v1794 = vadd.f32 %v1705, %v1793
      %1795 = vmatmul.bf16.gmra.mxu0 %v1015
      %v1796 = vpop.f32.mrf.mxu0
      %v1797 = vadd.f32 %v1708, %v1796
      %v1798 = vpop.f32.mrf.mxu0
      %v1799 = vadd.f32 %v1710, %v1798
      %1800 = vmatmul.bf16.gmra.mxu0 %v1024
      %v1801 = vpop.f32.mrf.mxu0
      %v1802 = vadd.f32 %v1713, %v1801
      %v1803 = vpop.f32.mrf.mxu0
      %v1804 = vadd.f32 %v1715, %v1803
      %1805 = vmatmul.bf16.gmra.mxu0 %v1033
      %v1806 = vpop.f32.mrf.mxu0
      %v1807 = vadd.f32 %v1718, %v1806
      %v1808 = vpop.f32.mrf.mxu0
      %v1809 = vadd.f32 %v1720, %v1808
      %1810 = vmatmul.bf16.gmra.mxu0 %v1042
      %v1811 = vpop.f32.mrf.mxu0
      %v1812 = vadd.f32 %v1723, %v1811
      %v1813 = vpop.f32.mrf.mxu0
      %v1814 = vadd.f32 %v1725, %v1813
      %1815 = vmatmul.bf16.gmra.mxu0 %v1051
      %v1816 = vpop.f32.mrf.mxu0
      %v1817 = vadd.f32 %v1728, %v1816
      %v1818 = vpop.f32.mrf.mxu0
      %v1819 = vadd.f32 %v1730, %v1818
      %1820 = vmatmul.bf16.gmra.mxu0 %v1060
      %v1821 = vpop.f32.mrf.mxu0
      %v1822 = vadd.f32 %v1733, %v1821
      %v1823 = vpop.f32.mrf.mxu0
      %v1824 = vadd.f32 %v1735, %v1823
      %1825 = vmatmul.bf16.gmra.mxu0 %v1069
      %v1826 = vpop.f32.mrf.mxu0
      %v1827 = vadd.f32 %v1738, %v1826
      %v1828 = vpop.f32.mrf.mxu0
      %v1829 = vadd.f32 %v1740, %v1828
      %1830 = vdwg.mxu0
      %1831 = vmatpush.bf16.msra.mxu0 %v1532
      %1832 = vmatpush.bf16.msra.mxu0 %v1531
      %1833 = vmatpush.bf16.msra.mxu0 %v1530
      %1834 = vmatpush.bf16.msra.mxu0 %v1529
      %1835 = vmatpush.bf16.msra.mxu0 %v1528
      %1836 = vmatpush.bf16.msra.mxu0 %v1527
      %1837 = vmatpush.bf16.msra.mxu0 %v1526
      %1838 = vmatpush.bf16.msra.mxu0 %v1525
      %1839 = vmatmul.bf16.gmra.mxu0 %v935
      %v1840 = vpop.f32.mrf.mxu0
      %v1841 = vadd.f32 %v1752, %v1840
      %v1842 = vpop.f32.mrf.mxu0
      %v1843 = vadd.f32 %v1754, %v1842
      %1844 = vmatmul.bf16.gmra.mxu0 %v944
      %v1845 = vpop.f32.mrf.mxu0
      %v1846 = vadd.f32 %v1757, %v1845
      %v1847 = vpop.f32.mrf.mxu0
      %v1848 = vadd.f32 %v1759, %v1847
      %1849 = vmatmul.bf16.gmra.mxu0 %v953
      %v1850 = vpop.f32.mrf.mxu0
      %v1851 = vadd.f32 %v1762, %v1850
      %v1852 = vpop.f32.mrf.mxu0
      %v1853 = vadd.f32 %v1764, %v1852
      %1854 = vmatmul.bf16.gmra.mxu0 %v962
      %v1855 = vpop.f32.mrf.mxu0
      %v1856 = vadd.f32 %v1767, %v1855
      %v1857 = vpop.f32.mrf.mxu0
      %v1858 = vadd.f32 %v1769, %v1857
      %1859 = vmatmul.bf16.gmra.mxu0 %v971
      %v1860 = vpop.f32.mrf.mxu0
      %v1861 = vadd.f32 %v1772, %v1860
      %v1862 = vpop.f32.mrf.mxu0
      %v1863 = vadd.f32 %v1774, %v1862
      %1864 = vmatmul.bf16.gmra.mxu0 %v980
      %v1865 = vpop.f32.mrf.mxu0
      %v1866 = vadd.f32 %v1777, %v1865
      %v1867 = vpop.f32.mrf.mxu0
      %v1868 = vadd.f32 %v1779, %v1867
      %1869 = vmatmul.bf16.gmra.mxu0 %v989
      %v1870 = vpop.f32.mrf.mxu0
      %v1871 = vadd.f32 %v1782, %v1870
      %v1872 = vpop.f32.mrf.mxu0
      %v1873 = vadd.f32 %v1784, %v1872
      %1874 = vmatmul.bf16.gmra.mxu0 %v998
      %v1875 = vpop.f32.mrf.mxu0
      %v1876 = vadd.f32 %v1787, %v1875
      %v1877 = vpop.f32.mrf.mxu0
      %v1878 = vadd.f32 %v1789, %v1877
      %1879 = vmatmul.bf16.gmra.mxu0 %v1007
      %v1880 = vpop.f32.mrf.mxu0
      %v1881 = vadd.f32 %v1792, %v1880
      %v1882 = vpop.f32.mrf.mxu0
      %v1883 = vadd.f32 %v1794, %v1882
      %1884 = vmatmul.bf16.gmra.mxu0 %v1016
      %v1885 = vpop.f32.mrf.mxu0
      %v1886 = vadd.f32 %v1797, %v1885
      %v1887 = vpop.f32.mrf.mxu0
      %v1888 = vadd.f32 %v1799, %v1887
      %1889 = vmatmul.bf16.gmra.mxu0 %v1025
      %v1890 = vpop.f32.mrf.mxu0
      %v1891 = vadd.f32 %v1802, %v1890
      %v1892 = vpop.f32.mrf.mxu0
      %v1893 = vadd.f32 %v1804, %v1892
      %1894 = vmatmul.bf16.gmra.mxu0 %v1034
      %v1895 = vpop.f32.mrf.mxu0
      %v1896 = vadd.f32 %v1807, %v1895
      %v1897 = vpop.f32.mrf.mxu0
      %v1898 = vadd.f32 %v1809, %v1897
      %1899 = vmatmul.bf16.gmra.mxu0 %v1043
      %v1900 = vpop.f32.mrf.mxu0
      %v1901 = vadd.f32 %v1812, %v1900
      %v1902 = vpop.f32.mrf.mxu0
      %v1903 = vadd.f32 %v1814, %v1902
      %1904 = vmatmul.bf16.gmra.mxu0 %v1052
      %v1905 = vpop.f32.mrf.mxu0
      %v1906 = vadd.f32 %v1817, %v1905
      %v1907 = vpop.f32.mrf.mxu0
      %v1908 = vadd.f32 %v1819, %v1907
      %1909 = vmatmul.bf16.gmra.mxu0 %v1061
      %v1910 = vpop.f32.mrf.mxu0
      %v1911 = vadd.f32 %v1822, %v1910
      %v1912 = vpop.f32.mrf.mxu0
      %v1913 = vadd.f32 %v1824, %v1912
      %1914 = vmatmul.bf16.gmra.mxu0 %v1070
      %v1915 = vpop.f32.mrf.mxu0
      %v1916 = vadd.f32 %v1827, %v1915
      %v1917 = vpop.f32.mrf.mxu0
      %v1918 = vadd.f32 %v1829, %v1917
      %1919 = vdwg.mxu0
      %1920 = vmatpush.bf16.msra.mxu0 %v1540
      %1921 = vmatpush.bf16.msra.mxu0 %v1539
      %1922 = vmatpush.bf16.msra.mxu0 %v1538
      %1923 = vmatpush.bf16.msra.mxu0 %v1537
      %1924 = vmatpush.bf16.msra.mxu0 %v1536
      %1925 = vmatpush.bf16.msra.mxu0 %v1535
      %1926 = vmatpush.bf16.msra.mxu0 %v1534
      %1927 = vmatpush.bf16.msra.mxu0 %v1533
      %1928 = vmatmul.bf16.gmra.mxu0 %v936
      %v1929 = vpop.f32.mrf.mxu0
      %v1930 = vadd.f32 %v1841, %v1929
      %v1931 = vpop.f32.mrf.mxu0
      %v1932 = vadd.f32 %v1843, %v1931
      %1933 = vmatmul.bf16.gmra.mxu0 %v945
      %v1934 = vpop.f32.mrf.mxu0
      %v1935 = vadd.f32 %v1846, %v1934
      %v1936 = vpop.f32.mrf.mxu0
      %v1937 = vadd.f32 %v1848, %v1936
      %1938 = vmatmul.bf16.gmra.mxu0 %v954
      %v1939 = vpop.f32.mrf.mxu0
      %v1940 = vadd.f32 %v1851, %v1939
      %v1941 = vpop.f32.mrf.mxu0
      %v1942 = vadd.f32 %v1853, %v1941
      %1943 = vmatmul.bf16.gmra.mxu0 %v963
      %v1944 = vpop.f32.mrf.mxu0
      %v1945 = vadd.f32 %v1856, %v1944
      %v1946 = vpop.f32.mrf.mxu0
      %v1947 = vadd.f32 %v1858, %v1946
      %1948 = vmatmul.bf16.gmra.mxu0 %v972
      %v1949 = vpop.f32.mrf.mxu0
      %v1950 = vadd.f32 %v1861, %v1949
      %v1951 = vpop.f32.mrf.mxu0
      %v1952 = vadd.f32 %v1863, %v1951
      %1953 = vmatmul.bf16.gmra.mxu0 %v981
      %v1954 = vpop.f32.mrf.mxu0
      %v1955 = vadd.f32 %v1866, %v1954
      %v1956 = vpop.f32.mrf.mxu0
      %v1957 = vadd.f32 %v1868, %v1956
      %1958 = vmatmul.bf16.gmra.mxu0 %v990
      %v1959 = vpop.f32.mrf.mxu0
      %v1960 = vadd.f32 %v1871, %v1959
      %v1961 = vpop.f32.mrf.mxu0
      %v1962 = vadd.f32 %v1873, %v1961
      %1963 = vmatmul.bf16.gmra.mxu0 %v999
      %v1964 = vpop.f32.mrf.mxu0
      %v1965 = vadd.f32 %v1876, %v1964
      %v1966 = vpop.f32.mrf.mxu0
      %v1967 = vadd.f32 %v1878, %v1966
      %1968 = vmatmul.bf16.gmra.mxu0 %v1008
      %v1969 = vpop.f32.mrf.mxu0
      %v1970 = vadd.f32 %v1881, %v1969
      %v1971 = vpop.f32.mrf.mxu0
      %v1972 = vadd.f32 %v1883, %v1971
      %1973 = vmatmul.bf16.gmra.mxu0 %v1017
      %v1974 = vpop.f32.mrf.mxu0
      %v1975 = vadd.f32 %v1886, %v1974
      %v1976 = vpop.f32.mrf.mxu0
      %v1977 = vadd.f32 %v1888, %v1976
      %1978 = vmatmul.bf16.gmra.mxu0 %v1026
      %v1979 = vpop.f32.mrf.mxu0
      %v1980 = vadd.f32 %v1891, %v1979
      %v1981 = vpop.f32.mrf.mxu0
      %v1982 = vadd.f32 %v1893, %v1981
      %1983 = vmatmul.bf16.gmra.mxu0 %v1035
      %v1984 = vpop.f32.mrf.mxu0
      %v1985 = vadd.f32 %v1896, %v1984
      %v1986 = vpop.f32.mrf.mxu0
      %v1987 = vadd.f32 %v1898, %v1986
      %1988 = vmatmul.bf16.gmra.mxu0 %v1044
      %v1989 = vpop.f32.mrf.mxu0
      %v1990 = vadd.f32 %v1901, %v1989
      %v1991 = vpop.f32.mrf.mxu0
      %v1992 = vadd.f32 %v1903, %v1991
      %1993 = vmatmul.bf16.gmra.mxu0 %v1053
      %v1994 = vpop.f32.mrf.mxu0
      %v1995 = vadd.f32 %v1906, %v1994
      %v1996 = vpop.f32.mrf.mxu0
      %v1997 = vadd.f32 %v1908, %v1996
      %1998 = vmatmul.bf16.gmra.mxu0 %v1062
      %v1999 = vpop.f32.mrf.mxu0
      %v2000 = vadd.f32 %v1911, %v1999
      %v2001 = vpop.f32.mrf.mxu0
      %v2002 = vadd.f32 %v1913, %v2001
      %2003 = vmatmul.bf16.gmra.mxu0 %v1071
      %v2004 = vpop.f32.mrf.mxu0
      %v2005 = vadd.f32 %v1916, %v2004
      %v2006 = vpop.f32.mrf.mxu0
      %v2007 = vadd.f32 %v1918, %v2006
      %2008 = vdwg.mxu0
      %2009 = vmatpush.bf16.msra.mxu0 %v1548
      %2010 = vmatpush.bf16.msra.mxu0 %v1547
      %2011 = vmatpush.bf16.msra.mxu0 %v1546
      %2012 = vmatpush.bf16.msra.mxu0 %v1545
      %2013 = vmatpush.bf16.msra.mxu0 %v1544
      %2014 = vmatpush.bf16.msra.mxu0 %v1543
      %2015 = vmatpush.bf16.msra.mxu0 %v1542
      %2016 = vmatpush.bf16.msra.mxu0 %v1541
      %2017 = vmatmul.bf16.gmra.mxu0 %v937
      %v2018 = vpop.f32.mrf.mxu0
      %v2019 = vadd.f32 %v1930, %v2018
      %v2020 = vpop.f32.mrf.mxu0
      %v2021 = vadd.f32 %v1932, %v2020
      %2022 = vmatmul.bf16.gmra.mxu0 %v946
      %v2023 = vpop.f32.mrf.mxu0
      %v2024 = vadd.f32 %v1935, %v2023
      %v2025 = vpop.f32.mrf.mxu0
      %v2026 = vadd.f32 %v1937, %v2025
      %2027 = vmatmul.bf16.gmra.mxu0 %v955
      %v2028 = vpop.f32.mrf.mxu0
      %v2029 = vadd.f32 %v1940, %v2028
      %v2030 = vpop.f32.mrf.mxu0
      %v2031 = vadd.f32 %v1942, %v2030
      %2032 = vmatmul.bf16.gmra.mxu0 %v964
      %v2033 = vpop.f32.mrf.mxu0
      %v2034 = vadd.f32 %v1945, %v2033
      %v2035 = vpop.f32.mrf.mxu0
      %v2036 = vadd.f32 %v1947, %v2035
      %2037 = vmatmul.bf16.gmra.mxu0 %v973
      %v2038 = vpop.f32.mrf.mxu0
      %v2039 = vadd.f32 %v1950, %v2038
      %v2040 = vpop.f32.mrf.mxu0
      %v2041 = vadd.f32 %v1952, %v2040
      %2042 = vmatmul.bf16.gmra.mxu0 %v982
      %v2043 = vpop.f32.mrf.mxu0
      %v2044 = vadd.f32 %v1955, %v2043
      %v2045 = vpop.f32.mrf.mxu0
      %v2046 = vadd.f32 %v1957, %v2045
      %2047 = vmatmul.bf16.gmra.mxu0 %v991
      %v2048 = vpop.f32.mrf.mxu0
      %v2049 = vadd.f32 %v1960, %v2048
      %v2050 = vpop.f32.mrf.mxu0
      %v2051 = vadd.f32 %v1962, %v2050
      %2052 = vmatmul.bf16.gmra.mxu0 %v1000
      %v2053 = vpop.f32.mrf.mxu0
      %v2054 = vadd.f32 %v1965, %v2053
      %v2055 = vpop.f32.mrf.mxu0
      %v2056 = vadd.f32 %v1967, %v2055
      %2057 = vmatmul.bf16.gmra.mxu0 %v1009
      %v2058 = vpop.f32.mrf.mxu0
      %v2059 = vadd.f32 %v1970, %v2058
      %v2060 = vpop.f32.mrf.mxu0
      %v2061 = vadd.f32 %v1972, %v2060
      %2062 = vmatmul.bf16.gmra.mxu0 %v1018
      %v2063 = vpop.f32.mrf.mxu0
      %v2064 = vadd.f32 %v1975, %v2063
      %v2065 = vpop.f32.mrf.mxu0
      %v2066 = vadd.f32 %v1977, %v2065
      %2067 = vmatmul.bf16.gmra.mxu0 %v1027
      %v2068 = vpop.f32.mrf.mxu0
      %v2069 = vadd.f32 %v1980, %v2068
      %v2070 = vpop.f32.mrf.mxu0
      %v2071 = vadd.f32 %v1982, %v2070
      %2072 = vmatmul.bf16.gmra.mxu0 %v1036
      %v2073 = vpop.f32.mrf.mxu0
      %v2074 = vadd.f32 %v1985, %v2073
      %v2075 = vpop.f32.mrf.mxu0
      %v2076 = vadd.f32 %v1987, %v2075
      %2077 = vmatmul.bf16.gmra.mxu0 %v1045
      %v2078 = vpop.f32.mrf.mxu0
      %v2079 = vadd.f32 %v1990, %v2078
      %v2080 = vpop.f32.mrf.mxu0
      %v2081 = vadd.f32 %v1992, %v2080
      %2082 = vmatmul.bf16.gmra.mxu0 %v1054
      %v2083 = vpop.f32.mrf.mxu0
      %v2084 = vadd.f32 %v1995, %v2083
      %v2085 = vpop.f32.mrf.mxu0
      %v2086 = vadd.f32 %v1997, %v2085
      %2087 = vmatmul.bf16.gmra.mxu0 %v1063
      %v2088 = vpop.f32.mrf.mxu0
      %v2089 = vadd.f32 %v2000, %v2088
      %v2090 = vpop.f32.mrf.mxu0
      %v2091 = vadd.f32 %v2002, %v2090
      %2092 = vmatmul.bf16.gmra.mxu0 %v1072
      %v2093 = vpop.f32.mrf.mxu0
      %v2094 = vadd.f32 %v2005, %v2093
      %v2095 = vpop.f32.mrf.mxu0
      %v2096 = vadd.f32 %v2007, %v2095
      %2097 = vdwg.mxu0
      %2098 = vmatpush.bf16.msra.mxu0 %v1556
      %2099 = vmatpush.bf16.msra.mxu0 %v1555
      %2100 = vmatpush.bf16.msra.mxu0 %v1554
      %2101 = vmatpush.bf16.msra.mxu0 %v1553
      %2102 = vmatpush.bf16.msra.mxu0 %v1552
      %2103 = vmatpush.bf16.msra.mxu0 %v1551
      %2104 = vmatpush.bf16.msra.mxu0 %v1550
      %2105 = vmatpush.bf16.msra.mxu0 %v1549
      %2106 = vmatmul.bf16.gmra.mxu0 %v938
      %v2107 = vpop.f32.mrf.mxu0
      %v2108 = vadd.f32 %v2019, %v2107
      %v2109 = vpop.f32.mrf.mxu0
      %v2110 = vadd.f32 %v2021, %v2109
      %2111 = vmatmul.bf16.gmra.mxu0 %v947
      %v2112 = vpop.f32.mrf.mxu0
      %v2113 = vadd.f32 %v2024, %v2112
      %v2114 = vpop.f32.mrf.mxu0
      %v2115 = vadd.f32 %v2026, %v2114
      %2116 = vmatmul.bf16.gmra.mxu0 %v956
      %v2117 = vpop.f32.mrf.mxu0
      %v2118 = vadd.f32 %v2029, %v2117
      %v2119 = vpop.f32.mrf.mxu0
      %v2120 = vadd.f32 %v2031, %v2119
      %2121 = vmatmul.bf16.gmra.mxu0 %v965
      %v2122 = vpop.f32.mrf.mxu0
      %v2123 = vadd.f32 %v2034, %v2122
      %v2124 = vpop.f32.mrf.mxu0
      %v2125 = vadd.f32 %v2036, %v2124
      %2126 = vmatmul.bf16.gmra.mxu0 %v974
      %v2127 = vpop.f32.mrf.mxu0
      %v2128 = vadd.f32 %v2039, %v2127
      %v2129 = vpop.f32.mrf.mxu0
      %v2130 = vadd.f32 %v2041, %v2129
      %2131 = vmatmul.bf16.gmra.mxu0 %v983
      %v2132 = vpop.f32.mrf.mxu0
      %v2133 = vadd.f32 %v2044, %v2132
      %v2134 = vpop.f32.mrf.mxu0
      %v2135 = vadd.f32 %v2046, %v2134
      %2136 = vmatmul.bf16.gmra.mxu0 %v992
      %v2137 = vpop.f32.mrf.mxu0
      %v2138 = vadd.f32 %v2049, %v2137
      %v2139 = vpop.f32.mrf.mxu0
      %v2140 = vadd.f32 %v2051, %v2139
      %2141 = vmatmul.bf16.gmra.mxu0 %v1001
      %v2142 = vpop.f32.mrf.mxu0
      %v2143 = vadd.f32 %v2054, %v2142
      %v2144 = vpop.f32.mrf.mxu0
      %v2145 = vadd.f32 %v2056, %v2144
      %2146 = vmatmul.bf16.gmra.mxu0 %v1010
      %v2147 = vpop.f32.mrf.mxu0
      %v2148 = vadd.f32 %v2059, %v2147
      %v2149 = vpop.f32.mrf.mxu0
      %v2150 = vadd.f32 %v2061, %v2149
      %2151 = vmatmul.bf16.gmra.mxu0 %v1019
      %v2152 = vpop.f32.mrf.mxu0
      %v2153 = vadd.f32 %v2064, %v2152
      %v2154 = vpop.f32.mrf.mxu0
      %v2155 = vadd.f32 %v2066, %v2154
      %2156 = vmatmul.bf16.gmra.mxu0 %v1028
      %v2157 = vpop.f32.mrf.mxu0
      %v2158 = vadd.f32 %v2069, %v2157
      %v2159 = vpop.f32.mrf.mxu0
      %v2160 = vadd.f32 %v2071, %v2159
      %2161 = vmatmul.bf16.gmra.mxu0 %v1037
      %v2162 = vpop.f32.mrf.mxu0
      %v2163 = vadd.f32 %v2074, %v2162
      %v2164 = vpop.f32.mrf.mxu0
      %v2165 = vadd.f32 %v2076, %v2164
      %2166 = vmatmul.bf16.gmra.mxu0 %v1046
      %v2167 = vpop.f32.mrf.mxu0
      %v2168 = vadd.f32 %v2079, %v2167
      %v2169 = vpop.f32.mrf.mxu0
      %v2170 = vadd.f32 %v2081, %v2169
      %2171 = vmatmul.bf16.gmra.mxu0 %v1055
      %v2172 = vpop.f32.mrf.mxu0
      %v2173 = vadd.f32 %v2084, %v2172
      %v2174 = vpop.f32.mrf.mxu0
      %v2175 = vadd.f32 %v2086, %v2174
      %2176 = vmatmul.bf16.gmra.mxu0 %v1064
      %v2177 = vpop.f32.mrf.mxu0
      %v2178 = vadd.f32 %v2089, %v2177
      %v2179 = vpop.f32.mrf.mxu0
      %v2180 = vadd.f32 %v2091, %v2179
      %2181 = vmatmul.bf16.gmra.mxu0 %v1073
      %v2182 = vpop.f32.mrf.mxu0
      %v2183 = vadd.f32 %v2094, %v2182
      %v2184 = vpop.f32.mrf.mxu0
      %v2185 = vadd.f32 %v2096, %v2184
      %2186 = vdwg.mxu0
      %2187 = vmatpush.bf16.msra.mxu0 %v1564
      %2188 = vmatpush.bf16.msra.mxu0 %v1563
      %2189 = vmatpush.bf16.msra.mxu0 %v1562
      %2190 = vmatpush.bf16.msra.mxu0 %v1561
      %2191 = vmatpush.bf16.msra.mxu0 %v1560
      %2192 = vmatpush.bf16.msra.mxu0 %v1559
      %2193 = vmatpush.bf16.msra.mxu0 %v1558
      %2194 = vmatpush.bf16.msra.mxu0 %v1557
      %2195 = vmatmul.bf16.gmra.mxu0 %v939
      %v2196 = vpop.f32.mrf.mxu0
      %v2197 = vadd.f32 %v2108, %v2196
      %v2198 = vpop.f32.mrf.mxu0
      %v2199 = vadd.f32 %v2110, %v2198
      %2200 = vmatmul.bf16.gmra.mxu0 %v948
      %v2201 = vpop.f32.mrf.mxu0
      %v2202 = vadd.f32 %v2113, %v2201
      %v2203 = vpop.f32.mrf.mxu0
      %v2204 = vadd.f32 %v2115, %v2203
      %2205 = vmatmul.bf16.gmra.mxu0 %v957
      %v2206 = vpop.f32.mrf.mxu0
      %v2207 = vadd.f32 %v2118, %v2206
      %v2208 = vpop.f32.mrf.mxu0
      %v2209 = vadd.f32 %v2120, %v2208
      %2210 = vmatmul.bf16.gmra.mxu0 %v966
      %v2211 = vpop.f32.mrf.mxu0
      %v2212 = vadd.f32 %v2123, %v2211
      %v2213 = vpop.f32.mrf.mxu0
      %v2214 = vadd.f32 %v2125, %v2213
      %2215 = vmatmul.bf16.gmra.mxu0 %v975
      %v2216 = vpop.f32.mrf.mxu0
      %v2217 = vadd.f32 %v2128, %v2216
      %v2218 = vpop.f32.mrf.mxu0
      %v2219 = vadd.f32 %v2130, %v2218
      %2220 = vmatmul.bf16.gmra.mxu0 %v984
      %v2221 = vpop.f32.mrf.mxu0
      %v2222 = vadd.f32 %v2133, %v2221
      %v2223 = vpop.f32.mrf.mxu0
      %v2224 = vadd.f32 %v2135, %v2223
      %2225 = vmatmul.bf16.gmra.mxu0 %v993
      %v2226 = vpop.f32.mrf.mxu0
      %v2227 = vadd.f32 %v2138, %v2226
      %v2228 = vpop.f32.mrf.mxu0
      %v2229 = vadd.f32 %v2140, %v2228
      %2230 = vmatmul.bf16.gmra.mxu0 %v1002
      %v2231 = vpop.f32.mrf.mxu0
      %v2232 = vadd.f32 %v2143, %v2231
      %v2233 = vpop.f32.mrf.mxu0
      %v2234 = vadd.f32 %v2145, %v2233
      %2235 = vmatmul.bf16.gmra.mxu0 %v1011
      %v2236 = vpop.f32.mrf.mxu0
      %v2237 = vadd.f32 %v2148, %v2236
      %v2238 = vpop.f32.mrf.mxu0
      %v2239 = vadd.f32 %v2150, %v2238
      %2240 = vmatmul.bf16.gmra.mxu0 %v1020
      %v2241 = vpop.f32.mrf.mxu0
      %v2242 = vadd.f32 %v2153, %v2241
      %v2243 = vpop.f32.mrf.mxu0
      %v2244 = vadd.f32 %v2155, %v2243
      %2245 = vmatmul.bf16.gmra.mxu0 %v1029
      %v2246 = vpop.f32.mrf.mxu0
      %v2247 = vadd.f32 %v2158, %v2246
      %v2248 = vpop.f32.mrf.mxu0
      %v2249 = vadd.f32 %v2160, %v2248
      %2250 = vmatmul.bf16.gmra.mxu0 %v1038
      %v2251 = vpop.f32.mrf.mxu0
      %v2252 = vadd.f32 %v2163, %v2251
      %v2253 = vpop.f32.mrf.mxu0
      %v2254 = vadd.f32 %v2165, %v2253
      %2255 = vmatmul.bf16.gmra.mxu0 %v1047
      %v2256 = vpop.f32.mrf.mxu0
      %v2257 = vadd.f32 %v2168, %v2256
      %v2258 = vpop.f32.mrf.mxu0
      %v2259 = vadd.f32 %v2170, %v2258
      %2260 = vmatmul.bf16.gmra.mxu0 %v1056
      %v2261 = vpop.f32.mrf.mxu0
      %v2262 = vadd.f32 %v2173, %v2261
      %v2263 = vpop.f32.mrf.mxu0
      %v2264 = vadd.f32 %v2175, %v2263
      %2265 = vmatmul.bf16.gmra.mxu0 %v1065
      %v2266 = vpop.f32.mrf.mxu0
      %v2267 = vadd.f32 %v2178, %v2266
      %v2268 = vpop.f32.mrf.mxu0
      %v2269 = vadd.f32 %v2180, %v2268
      %2270 = vmatmul.bf16.gmra.mxu0 %v1074
      %v2271 = vpop.f32.mrf.mxu0
      %v2272 = vadd.f32 %v2183, %v2271
      %v2273 = vpop.f32.mrf.mxu0
      %v2274 = vadd.f32 %v2185, %v2273
      %2275 = vdwg.mxu0
      %2276 = vmatpush.bf16.msra.mxu0 %v1572
      %2277 = vmatpush.bf16.msra.mxu0 %v1571
      %2278 = vmatpush.bf16.msra.mxu0 %v1570
      %2279 = vmatpush.bf16.msra.mxu0 %v1569
      %2280 = vmatpush.bf16.msra.mxu0 %v1568
      %2281 = vmatpush.bf16.msra.mxu0 %v1567
      %2282 = vmatpush.bf16.msra.mxu0 %v1566
      %2283 = vmatpush.bf16.msra.mxu0 %v1565
      %2284 = vmatmul.bf16.gmra.mxu0 %v940
      %v2285 = vpop.f32.mrf.mxu0
      %v2286 = vadd.f32 %v2197, %v2285
      %v2287 = vpop.f32.mrf.mxu0
      %v2288 = vadd.f32 %v2199, %v2287
      %2289 = vmatmul.bf16.gmra.mxu0 %v949
      %v2290 = vpop.f32.mrf.mxu0
      %v2291 = vadd.f32 %v2202, %v2290
      %v2292 = vpop.f32.mrf.mxu0
      %v2293 = vadd.f32 %v2204, %v2292
      %2294 = vmatmul.bf16.gmra.mxu0 %v958
      %v2295 = vpop.f32.mrf.mxu0
      %v2296 = vadd.f32 %v2207, %v2295
      %v2297 = vpop.f32.mrf.mxu0
      %v2298 = vadd.f32 %v2209, %v2297
      %2299 = vmatmul.bf16.gmra.mxu0 %v967
      %v2300 = vpop.f32.mrf.mxu0
      %v2301 = vadd.f32 %v2212, %v2300
      %v2302 = vpop.f32.mrf.mxu0
      %v2303 = vadd.f32 %v2214, %v2302
      %2304 = vmatmul.bf16.gmra.mxu0 %v976
      %v2305 = vpop.f32.mrf.mxu0
      %v2306 = vadd.f32 %v2217, %v2305
      %v2307 = vpop.f32.mrf.mxu0
      %v2308 = vadd.f32 %v2219, %v2307
      %2309 = vmatmul.bf16.gmra.mxu0 %v985
      %v2310 = vpop.f32.mrf.mxu0
      %v2311 = vadd.f32 %v2222, %v2310
      %v2312 = vpop.f32.mrf.mxu0
      %v2313 = vadd.f32 %v2224, %v2312
      %2314 = vmatmul.bf16.gmra.mxu0 %v994
      %v2315 = vpop.f32.mrf.mxu0
      %v2316 = vadd.f32 %v2227, %v2315
      %v2317 = vpop.f32.mrf.mxu0
      %v2318 = vadd.f32 %v2229, %v2317
      %2319 = vmatmul.bf16.gmra.mxu0 %v1003
      %v2320 = vpop.f32.mrf.mxu0
      %v2321 = vadd.f32 %v2232, %v2320
      %v2322 = vpop.f32.mrf.mxu0
      %v2323 = vadd.f32 %v2234, %v2322
      %2324 = vmatmul.bf16.gmra.mxu0 %v1012
      %v2325 = vpop.f32.mrf.mxu0
      %v2326 = vadd.f32 %v2237, %v2325
      %v2327 = vpop.f32.mrf.mxu0
      %v2328 = vadd.f32 %v2239, %v2327
      %2329 = vmatmul.bf16.gmra.mxu0 %v1021
      %v2330 = vpop.f32.mrf.mxu0
      %v2331 = vadd.f32 %v2242, %v2330
      %v2332 = vpop.f32.mrf.mxu0
      %v2333 = vadd.f32 %v2244, %v2332
      %2334 = vmatmul.bf16.gmra.mxu0 %v1030
      %v2335 = vpop.f32.mrf.mxu0
      %v2336 = vadd.f32 %v2247, %v2335
      %v2337 = vpop.f32.mrf.mxu0
      %v2338 = vadd.f32 %v2249, %v2337
      %2339 = vmatmul.bf16.gmra.mxu0 %v1039
      %v2340 = vpop.f32.mrf.mxu0
      %v2341 = vadd.f32 %v2252, %v2340
      %v2342 = vpop.f32.mrf.mxu0
      %v2343 = vadd.f32 %v2254, %v2342
      %2344 = vmatmul.bf16.gmra.mxu0 %v1048
      %v2345 = vpop.f32.mrf.mxu0
      %v2346 = vadd.f32 %v2257, %v2345
      %v2347 = vpop.f32.mrf.mxu0
      %v2348 = vadd.f32 %v2259, %v2347
      %2349 = vmatmul.bf16.gmra.mxu0 %v1057
      %v2350 = vpop.f32.mrf.mxu0
      %v2351 = vadd.f32 %v2262, %v2350
      %v2352 = vpop.f32.mrf.mxu0
      %v2353 = vadd.f32 %v2264, %v2352
      %2354 = vmatmul.bf16.gmra.mxu0 %v1066
      %v2355 = vpop.f32.mrf.mxu0
      %v2356 = vadd.f32 %v2267, %v2355
      %v2357 = vpop.f32.mrf.mxu0
      %v2358 = vadd.f32 %v2269, %v2357
      %2359 = vmatmul.bf16.gmra.mxu0 %v1075
      %v2360 = vpop.f32.mrf.mxu0
      %v2361 = vadd.f32 %v2272, %v2360
      %v2362 = vpop.f32.mrf.mxu0
      %v2363 = vadd.f32 %v2274, %v2362
      %2364 = vdwg.mxu0
      %2365 = vmatpush.bf16.msra.mxu0 %v1580
      %2366 = vmatpush.bf16.msra.mxu0 %v1579
      %2367 = vmatpush.bf16.msra.mxu0 %v1578
      %2368 = vmatpush.bf16.msra.mxu0 %v1577
      %2369 = vmatpush.bf16.msra.mxu0 %v1576
      %2370 = vmatpush.bf16.msra.mxu0 %v1575
      %2371 = vmatpush.bf16.msra.mxu0 %v1574
      %2372 = vmatpush.bf16.msra.mxu0 %v1573
      %2373 = vmatmul.bf16.gmra.mxu0 %v941
      %v2374 = vpop.f32.mrf.mxu0
      %v2375 = vadd.f32 %v2286, %v2374
      %v2376 = vpop.f32.mrf.mxu0
      %v2377 = vadd.f32 %v2288, %v2376
      %2378 = vmatmul.bf16.gmra.mxu0 %v950
      %v2379 = vpop.f32.mrf.mxu0
      %v2380 = vadd.f32 %v2291, %v2379
      %v2381 = vpop.f32.mrf.mxu0
      %v2382 = vadd.f32 %v2293, %v2381
      %2383 = vmatmul.bf16.gmra.mxu0 %v959
      %v2384 = vpop.f32.mrf.mxu0
      %v2385 = vadd.f32 %v2296, %v2384
      %v2386 = vpop.f32.mrf.mxu0
      %v2387 = vadd.f32 %v2298, %v2386
      %2388 = vmatmul.bf16.gmra.mxu0 %v968
      %v2389 = vpop.f32.mrf.mxu0
      %v2390 = vadd.f32 %v2301, %v2389
      %v2391 = vpop.f32.mrf.mxu0
      %v2392 = vadd.f32 %v2303, %v2391
      %2393 = vmatmul.bf16.gmra.mxu0 %v977
      %v2394 = vpop.f32.mrf.mxu0
      %v2395 = vadd.f32 %v2306, %v2394
      %v2396 = vpop.f32.mrf.mxu0
      %v2397 = vadd.f32 %v2308, %v2396
      %2398 = vmatmul.bf16.gmra.mxu0 %v986
      %v2399 = vpop.f32.mrf.mxu0
      %v2400 = vadd.f32 %v2311, %v2399
      %v2401 = vpop.f32.mrf.mxu0
      %v2402 = vadd.f32 %v2313, %v2401
      %2403 = vmatmul.bf16.gmra.mxu0 %v995
      %v2404 = vpop.f32.mrf.mxu0
      %v2405 = vadd.f32 %v2316, %v2404
      %v2406 = vpop.f32.mrf.mxu0
      %v2407 = vadd.f32 %v2318, %v2406
      %2408 = vmatmul.bf16.gmra.mxu0 %v1004
      %v2409 = vpop.f32.mrf.mxu0
      %v2410 = vadd.f32 %v2321, %v2409
      %v2411 = vpop.f32.mrf.mxu0
      %v2412 = vadd.f32 %v2323, %v2411
      %2413 = vmatmul.bf16.gmra.mxu0 %v1013
      %v2414 = vpop.f32.mrf.mxu0
      %v2415 = vadd.f32 %v2326, %v2414
      %v2416 = vpop.f32.mrf.mxu0
      %v2417 = vadd.f32 %v2328, %v2416
      %2418 = vmatmul.bf16.gmra.mxu0 %v1022
      %v2419 = vpop.f32.mrf.mxu0
      %v2420 = vadd.f32 %v2331, %v2419
      %v2421 = vpop.f32.mrf.mxu0
      %v2422 = vadd.f32 %v2333, %v2421
      %2423 = vmatmul.bf16.gmra.mxu0 %v1031
      %v2424 = vpop.f32.mrf.mxu0
      %v2425 = vadd.f32 %v2336, %v2424
      %v2426 = vpop.f32.mrf.mxu0
      %v2427 = vadd.f32 %v2338, %v2426
      %2428 = vmatmul.bf16.gmra.mxu0 %v1040
      %v2429 = vpop.f32.mrf.mxu0
      %v2430 = vadd.f32 %v2341, %v2429
      %v2431 = vpop.f32.mrf.mxu0
      %v2432 = vadd.f32 %v2343, %v2431
      %2433 = vmatmul.bf16.gmra.mxu0 %v1049
      %v2434 = vpop.f32.mrf.mxu0
      %v2435 = vadd.f32 %v2346, %v2434
      %v2436 = vpop.f32.mrf.mxu0
      %v2437 = vadd.f32 %v2348, %v2436
      %2438 = vmatmul.bf16.gmra.mxu0 %v1058
      %v2439 = vpop.f32.mrf.mxu0
      %v2440 = vadd.f32 %v2351, %v2439
      %v2441 = vpop.f32.mrf.mxu0
      %v2442 = vadd.f32 %v2353, %v2441
      %2443 = vmatmul.bf16.gmra.mxu0 %v1067
      %v2444 = vpop.f32.mrf.mxu0
      %v2445 = vadd.f32 %v2356, %v2444
      %v2446 = vpop.f32.mrf.mxu0
      %v2447 = vadd.f32 %v2358, %v2446
      %2448 = vmatmul.bf16.gmra.mxu0 %v1076
      %v2449 = vpop.f32.mrf.mxu0
      %v2450 = vadd.f32 %v2361, %v2449
      %v2451 = vpop.f32.mrf.mxu0
      %v2452 = vadd.f32 %v2363, %v2451
      %2453 = vdwg.mxu0
      %v2454 = vxor.u32 %v2375, 2147483648
      %v2455 = vxor.u32 %v2377, 2147483648
      %v2456 = vxor.u32 %v2380, 2147483648
      %v2457 = vxor.u32 %v2382, 2147483648
      %v2458 = vxor.u32 %v2385, 2147483648
      %v2459 = vxor.u32 %v2387, 2147483648
      %v2460 = vxor.u32 %v2390, 2147483648
      %v2461 = vxor.u32 %v2392, 2147483648
      %v2462 = vxor.u32 %v2395, 2147483648
      %v2463 = vxor.u32 %v2397, 2147483648
      %v2464 = vxor.u32 %v2400, 2147483648
      %v2465 = vxor.u32 %v2402, 2147483648
      %v2466 = vxor.u32 %v2405, 2147483648
      %v2467 = vxor.u32 %v2407, 2147483648
      %v2468 = vxor.u32 %v2410, 2147483648
      %v2469 = vxor.u32 %v2412, 2147483648
      %v2470 = vxor.u32 %v2415, 2147483648
      %v2471 = vxor.u32 %v2417, 2147483648
      %v2472 = vxor.u32 %v2420, 2147483648
      %v2473 = vxor.u32 %v2422, 2147483648
      %v2474 = vxor.u32 %v2425, 2147483648
      %v2475 = vxor.u32 %v2427, 2147483648
      %v2476 = vxor.u32 %v2430, 2147483648
      %v2477 = vxor.u32 %v2432, 2147483648
      %v2478 = vxor.u32 %v2435, 2147483648
      %v2479 = vxor.u32 %v2437, 2147483648
      %v2480 = vxor.u32 %v2440, 2147483648
      %v2481 = vxor.u32 %v2442, 2147483648
      %v2482 = vxor.u32 %v2445, 2147483648
      %v2483 = vxor.u32 %v2447, 2147483648
      %v2484 = vxor.u32 %v2450, 2147483648
      %v2485 = vxor.u32 %v2452, 2147483648
      %v2486 = vmul.f32 %v2454, 1.442695
      %v2487 = vpow.pop %v2486
      %v2488 = vmul.f32 %v2455, 1.442695
      %v2489 = vpow.pop %v2488
      %v2490 = vmul.f32 %v2456, 1.442695
      %v2491 = vpow.pop %v2490
      %v2492 = vmul.f32 %v2457, 1.442695
      %v2493 = vpow.pop %v2492
      %v2494 = vmul.f32 %v2458, 1.442695
      %v2495 = vpow.pop %v2494
      %v2496 = vmul.f32 %v2459, 1.442695
      %v2497 = vpow.pop %v2496
      %v2498 = vmul.f32 %v2460, 1.442695
      %v2499 = vpow.pop %v2498
      %v2500 = vmul.f32 %v2461, 1.442695
      %v2501 = vpow.pop %v2500
      %v2502 = vmul.f32 %v2462, 1.442695
      %v2503 = vpow.pop %v2502
      %v2504 = vmul.f32 %v2463, 1.442695
      %v2505 = vpow.pop %v2504
      %v2506 = vmul.f32 %v2464, 1.442695
      %v2507 = vpow.pop %v2506
      %v2508 = vmul.f32 %v2465, 1.442695
      %v2509 = vpow.pop %v2508
      %v2510 = vmul.f32 %v2466, 1.442695
      %v2511 = vpow.pop %v2510
      %v2512 = vmul.f32 %v2467, 1.442695
      %v2513 = vpow.pop %v2512
      %v2514 = vmul.f32 %v2468, 1.442695
      %v2515 = vpow.pop %v2514
      %v2516 = vmul.f32 %v2469, 1.442695
      %v2517 = vpow.pop %v2516
      %v2518 = vmul.f32 %v2470, 1.442695
      %v2519 = vpow.pop %v2518
      %v2520 = vmul.f32 %v2471, 1.442695
      %v2521 = vpow.pop %v2520
      %v2522 = vmul.f32 %v2472, 1.442695
      %v2523 = vpow.pop %v2522
      %v2524 = vmul.f32 %v2473, 1.442695
      %v2525 = vpow.pop %v2524
      %v2526 = vmul.f32 %v2474, 1.442695
      %v2527 = vpow.pop %v2526
      %v2528 = vmul.f32 %v2475, 1.442695
      %v2529 = vpow.pop %v2528
      %v2530 = vmul.f32 %v2476, 1.442695
      %v2531 = vpow.pop %v2530
      %v2532 = vmul.f32 %v2477, 1.442695
      %v2533 = vpow.pop %v2532
      %v2534 = vmul.f32 %v2478, 1.442695
      %v2535 = vpow.pop %v2534
      %v2536 = vmul.f32 %v2479, 1.442695
      %v2537 = vpow.pop %v2536
      %v2538 = vmul.f32 %v2480, 1.442695
      %v2539 = vpow.pop %v2538
      %v2540 = vmul.f32 %v2481, 1.442695
      %v2541 = vpow.pop %v2540
      %v2542 = vmul.f32 %v2482, 1.442695
      %v2543 = vpow.pop %v2542
      %v2544 = vmul.f32 %v2483, 1.442695
      %v2545 = vpow.pop %v2544
      %v2546 = vmul.f32 %v2484, 1.442695
      %v2547 = vpow.pop %v2546
      %v2548 = vmul.f32 %v2485, 1.442695
      %v2549 = vpow.pop %v2548
      %v2550 = vadd.f32 %v2487, 1.0
      %v2551 = vadd.f32 %v2489, 1.0
      %v2552 = vadd.f32 %v2491, 1.0
      %v2553 = vadd.f32 %v2493, 1.0
      %v2554 = vadd.f32 %v2495, 1.0
      %v2555 = vadd.f32 %v2497, 1.0
      %v2556 = vadd.f32 %v2499, 1.0
      %v2557 = vadd.f32 %v2501, 1.0
      %v2558 = vadd.f32 %v2503, 1.0
      %v2559 = vadd.f32 %v2505, 1.0
      %v2560 = vadd.f32 %v2507, 1.0
      %v2561 = vadd.f32 %v2509, 1.0
      %v2562 = vadd.f32 %v2511, 1.0
      %v2563 = vadd.f32 %v2513, 1.0
      %v2564 = vadd.f32 %v2515, 1.0
      %v2565 = vadd.f32 %v2517, 1.0
      %v2566 = vadd.f32 %v2519, 1.0
      %v2567 = vadd.f32 %v2521, 1.0
      %v2568 = vadd.f32 %v2523, 1.0
      %v2569 = vadd.f32 %v2525, 1.0
      %v2570 = vadd.f32 %v2527, 1.0
      %v2571 = vadd.f32 %v2529, 1.0
      %v2572 = vadd.f32 %v2531, 1.0
      %v2573 = vadd.f32 %v2533, 1.0
      %v2574 = vadd.f32 %v2535, 1.0
      %v2575 = vadd.f32 %v2537, 1.0
      %v2576 = vadd.f32 %v2539, 1.0
      %v2577 = vadd.f32 %v2541, 1.0
      %v2578 = vadd.f32 %v2543, 1.0
      %v2579 = vadd.f32 %v2545, 1.0
      %v2580 = vadd.f32 %v2547, 1.0
      %v2581 = vadd.f32 %v2549, 1.0
      %v2582 = vrcp.pop %v2550
      %v2583 = vmul.f32 %v2550, %v2582
      %v2584 = vsub.f32 1.0, %v2583
      %v2585 = vmul.f32 %v2582, %v2584
      %v2586 = vadd.f32 %v2582, %v2585
      %vm2587 = vweird.f32 %v2550
      %vm2588 = vweird.f32 %v2582
      %vm2589 = vmor %vm2587, %vm2588
      %v2590 = vsel %vm2589, %v2582, %v2586
      %v2591 = vand.u32 2147483647, %v2550
      %vm2592 = vcmp.eq.f32.partialorder %v2591, 8.507059e+37
      %v2593 = vand.u32 %v2550, 2147483648
      %v2594 = vor.u32 1.1754944e-38, %v2593
      %v2595 = vsel %vm2592, %v2594, %v2590
      %v2596 = vmul.f32 1.0, %v2595
      %v2597 = vrcp.pop %v2551
      %v2598 = vmul.f32 %v2551, %v2597
      %v2599 = vsub.f32 1.0, %v2598
      %v2600 = vmul.f32 %v2597, %v2599
      %v2601 = vadd.f32 %v2597, %v2600
      %vm2602 = vweird.f32 %v2551
      %vm2603 = vweird.f32 %v2597
      %vm2604 = vmor %vm2602, %vm2603
      %v2605 = vsel %vm2604, %v2597, %v2601
      %v2606 = vand.u32 2147483647, %v2551
      %vm2607 = vcmp.eq.f32.partialorder %v2606, 8.507059e+37
      %v2608 = vand.u32 %v2551, 2147483648
      %v2609 = vor.u32 1.1754944e-38, %v2608
      %v2610 = vsel %vm2607, %v2609, %v2605
      %v2611 = vmul.f32 1.0, %v2610
      %v2612 = vrcp.pop %v2552
      %v2613 = vmul.f32 %v2552, %v2612
      %v2614 = vsub.f32 1.0, %v2613
      %v2615 = vmul.f32 %v2612, %v2614
      %v2616 = vadd.f32 %v2612, %v2615
      %vm2617 = vweird.f32 %v2552
      %vm2618 = vweird.f32 %v2612
      %vm2619 = vmor %vm2617, %vm2618
      %v2620 = vsel %vm2619, %v2612, %v2616
      %v2621 = vand.u32 2147483647, %v2552
      %vm2622 = vcmp.eq.f32.partialorder %v2621, 8.507059e+37
      %v2623 = vand.u32 %v2552, 2147483648
      %v2624 = vor.u32 1.1754944e-38, %v2623
      %v2625 = vsel %vm2622, %v2624, %v2620
      %v2626 = vmul.f32 1.0, %v2625
      %v2627 = vrcp.pop %v2553
      %v2628 = vmul.f32 %v2553, %v2627
      %v2629 = vsub.f32 1.0, %v2628
      %v2630 = vmul.f32 %v2627, %v2629
      %v2631 = vadd.f32 %v2627, %v2630
      %vm2632 = vweird.f32 %v2553
      %vm2633 = vweird.f32 %v2627
      %vm2634 = vmor %vm2632, %vm2633
      %v2635 = vsel %vm2634, %v2627, %v2631
      %v2636 = vand.u32 2147483647, %v2553
      %vm2637 = vcmp.eq.f32.partialorder %v2636, 8.507059e+37
      %v2638 = vand.u32 %v2553, 2147483648
      %v2639 = vor.u32 1.1754944e-38, %v2638
      %v2640 = vsel %vm2637, %v2639, %v2635
      %v2641 = vmul.f32 1.0, %v2640
      %v2642 = vrcp.pop %v2554
      %v2643 = vmul.f32 %v2554, %v2642
      %v2644 = vsub.f32 1.0, %v2643
      %v2645 = vmul.f32 %v2642, %v2644
      %v2646 = vadd.f32 %v2642, %v2645
      %vm2647 = vweird.f32 %v2554
      %vm2648 = vweird.f32 %v2642
      %vm2649 = vmor %vm2647, %vm2648
      %v2650 = vsel %vm2649, %v2642, %v2646
      %v2651 = vand.u32 2147483647, %v2554
      %vm2652 = vcmp.eq.f32.partialorder %v2651, 8.507059e+37
      %v2653 = vand.u32 %v2554, 2147483648
      %v2654 = vor.u32 1.1754944e-38, %v2653
      %v2655 = vsel %vm2652, %v2654, %v2650
      %v2656 = vmul.f32 1.0, %v2655
      %v2657 = vrcp.pop %v2555
      %v2658 = vmul.f32 %v2555, %v2657
      %v2659 = vsub.f32 1.0, %v2658
      %v2660 = vmul.f32 %v2657, %v2659
      %v2661 = vadd.f32 %v2657, %v2660
      %vm2662 = vweird.f32 %v2555
      %vm2663 = vweird.f32 %v2657
      %vm2664 = vmor %vm2662, %vm2663
      %v2665 = vsel %vm2664, %v2657, %v2661
      %v2666 = vand.u32 2147483647, %v2555
      %vm2667 = vcmp.eq.f32.partialorder %v2666, 8.507059e+37
      %v2668 = vand.u32 %v2555, 2147483648
      %v2669 = vor.u32 1.1754944e-38, %v2668
      %v2670 = vsel %vm2667, %v2669, %v2665
      %v2671 = vmul.f32 1.0, %v2670
      %v2672 = vrcp.pop %v2556
      %v2673 = vmul.f32 %v2556, %v2672
      %v2674 = vsub.f32 1.0, %v2673
      %v2675 = vmul.f32 %v2672, %v2674
      %v2676 = vadd.f32 %v2672, %v2675
      %vm2677 = vweird.f32 %v2556
      %vm2678 = vweird.f32 %v2672
      %vm2679 = vmor %vm2677, %vm2678
      %v2680 = vsel %vm2679, %v2672, %v2676
      %v2681 = vand.u32 2147483647, %v2556
      %vm2682 = vcmp.eq.f32.partialorder %v2681, 8.507059e+37
      %v2683 = vand.u32 %v2556, 2147483648
      %v2684 = vor.u32 1.1754944e-38, %v2683
      %v2685 = vsel %vm2682, %v2684, %v2680
      %v2686 = vmul.f32 1.0, %v2685
      %v2687 = vrcp.pop %v2557
      %v2688 = vmul.f32 %v2557, %v2687
      %v2689 = vsub.f32 1.0, %v2688
      %v2690 = vmul.f32 %v2687, %v2689
      %v2691 = vadd.f32 %v2687, %v2690
      %vm2692 = vweird.f32 %v2557
      %vm2693 = vweird.f32 %v2687
      %vm2694 = vmor %vm2692, %vm2693
      %v2695 = vsel %vm2694, %v2687, %v2691
      %v2696 = vand.u32 2147483647, %v2557
      %vm2697 = vcmp.eq.f32.partialorder %v2696, 8.507059e+37
      %v2698 = vand.u32 %v2557, 2147483648
      %v2699 = vor.u32 1.1754944e-38, %v2698
      %v2700 = vsel %vm2697, %v2699, %v2695
      %v2701 = vmul.f32 1.0, %v2700
      %v2702 = vrcp.pop %v2558
      %v2703 = vmul.f32 %v2558, %v2702
      %v2704 = vsub.f32 1.0, %v2703
      %v2705 = vmul.f32 %v2702, %v2704
      %v2706 = vadd.f32 %v2702, %v2705
      %vm2707 = vweird.f32 %v2558
      %vm2708 = vweird.f32 %v2702
      %vm2709 = vmor %vm2707, %vm2708
      %v2710 = vsel %vm2709, %v2702, %v2706
      %v2711 = vand.u32 2147483647, %v2558
      %vm2712 = vcmp.eq.f32.partialorder %v2711, 8.507059e+37
      %v2713 = vand.u32 %v2558, 2147483648
      %v2714 = vor.u32 1.1754944e-38, %v2713
      %v2715 = vsel %vm2712, %v2714, %v2710
      %v2716 = vmul.f32 1.0, %v2715
      %v2717 = vrcp.pop %v2559
      %v2718 = vmul.f32 %v2559, %v2717
      %v2719 = vsub.f32 1.0, %v2718
      %v2720 = vmul.f32 %v2717, %v2719
      %v2721 = vadd.f32 %v2717, %v2720
      %vm2722 = vweird.f32 %v2559
      %vm2723 = vweird.f32 %v2717
      %vm2724 = vmor %vm2722, %vm2723
      %v2725 = vsel %vm2724, %v2717, %v2721
      %v2726 = vand.u32 2147483647, %v2559
      %vm2727 = vcmp.eq.f32.partialorder %v2726, 8.507059e+37
      %v2728 = vand.u32 %v2559, 2147483648
      %v2729 = vor.u32 1.1754944e-38, %v2728
      %v2730 = vsel %vm2727, %v2729, %v2725
      %v2731 = vmul.f32 1.0, %v2730
      %v2732 = vrcp.pop %v2560
      %v2733 = vmul.f32 %v2560, %v2732
      %v2734 = vsub.f32 1.0, %v2733
      %v2735 = vmul.f32 %v2732, %v2734
      %v2736 = vadd.f32 %v2732, %v2735
      %vm2737 = vweird.f32 %v2560
      %vm2738 = vweird.f32 %v2732
      %vm2739 = vmor %vm2737, %vm2738
      %v2740 = vsel %vm2739, %v2732, %v2736
      %v2741 = vand.u32 2147483647, %v2560
      %vm2742 = vcmp.eq.f32.partialorder %v2741, 8.507059e+37
      %v2743 = vand.u32 %v2560, 2147483648
      %v2744 = vor.u32 1.1754944e-38, %v2743
      %v2745 = vsel %vm2742, %v2744, %v2740
      %v2746 = vmul.f32 1.0, %v2745
      %v2747 = vrcp.pop %v2561
      %v2748 = vmul.f32 %v2561, %v2747
      %v2749 = vsub.f32 1.0, %v2748
      %v2750 = vmul.f32 %v2747, %v2749
      %v2751 = vadd.f32 %v2747, %v2750
      %vm2752 = vweird.f32 %v2561
      %vm2753 = vweird.f32 %v2747
      %vm2754 = vmor %vm2752, %vm2753
      %v2755 = vsel %vm2754, %v2747, %v2751
      %v2756 = vand.u32 2147483647, %v2561
      %vm2757 = vcmp.eq.f32.partialorder %v2756, 8.507059e+37
      %v2758 = vand.u32 %v2561, 2147483648
      %v2759 = vor.u32 1.1754944e-38, %v2758
      %v2760 = vsel %vm2757, %v2759, %v2755
      %v2761 = vmul.f32 1.0, %v2760
      %v2762 = vrcp.pop %v2562
      %v2763 = vmul.f32 %v2562, %v2762
      %v2764 = vsub.f32 1.0, %v2763
      %v2765 = vmul.f32 %v2762, %v2764
      %v2766 = vadd.f32 %v2762, %v2765
      %vm2767 = vweird.f32 %v2562
      %vm2768 = vweird.f32 %v2762
      %vm2769 = vmor %vm2767, %vm2768
      %v2770 = vsel %vm2769, %v2762, %v2766
      %v2771 = vand.u32 2147483647, %v2562
      %vm2772 = vcmp.eq.f32.partialorder %v2771, 8.507059e+37
      %v2773 = vand.u32 %v2562, 2147483648
      %v2774 = vor.u32 1.1754944e-38, %v2773
      %v2775 = vsel %vm2772, %v2774, %v2770
      %v2776 = vmul.f32 1.0, %v2775
      %v2777 = vrcp.pop %v2563
      %v2778 = vmul.f32 %v2563, %v2777
      %v2779 = vsub.f32 1.0, %v2778
      %v2780 = vmul.f32 %v2777, %v2779
      %v2781 = vadd.f32 %v2777, %v2780
      %vm2782 = vweird.f32 %v2563
      %vm2783 = vweird.f32 %v2777
      %vm2784 = vmor %vm2782, %vm2783
      %v2785 = vsel %vm2784, %v2777, %v2781
      %v2786 = vand.u32 2147483647, %v2563
      %vm2787 = vcmp.eq.f32.partialorder %v2786, 8.507059e+37
      %v2788 = vand.u32 %v2563, 2147483648
      %v2789 = vor.u32 1.1754944e-38, %v2788
      %v2790 = vsel %vm2787, %v2789, %v2785
      %v2791 = vmul.f32 1.0, %v2790
      %v2792 = vrcp.pop %v2564
      %v2793 = vmul.f32 %v2564, %v2792
      %v2794 = vsub.f32 1.0, %v2793
      %v2795 = vmul.f32 %v2792, %v2794
      %v2796 = vadd.f32 %v2792, %v2795
      %vm2797 = vweird.f32 %v2564
      %vm2798 = vweird.f32 %v2792
      %vm2799 = vmor %vm2797, %vm2798
      %v2800 = vsel %vm2799, %v2792, %v2796
      %v2801 = vand.u32 2147483647, %v2564
      %vm2802 = vcmp.eq.f32.partialorder %v2801, 8.507059e+37
      %v2803 = vand.u32 %v2564, 2147483648
      %v2804 = vor.u32 1.1754944e-38, %v2803
      %v2805 = vsel %vm2802, %v2804, %v2800
      %v2806 = vmul.f32 1.0, %v2805
      %v2807 = vrcp.pop %v2565
      %v2808 = vmul.f32 %v2565, %v2807
      %v2809 = vsub.f32 1.0, %v2808
      %v2810 = vmul.f32 %v2807, %v2809
      %v2811 = vadd.f32 %v2807, %v2810
      %vm2812 = vweird.f32 %v2565
      %vm2813 = vweird.f32 %v2807
      %vm2814 = vmor %vm2812, %vm2813
      %v2815 = vsel %vm2814, %v2807, %v2811
      %v2816 = vand.u32 2147483647, %v2565
      %vm2817 = vcmp.eq.f32.partialorder %v2816, 8.507059e+37
      %v2818 = vand.u32 %v2565, 2147483648
      %v2819 = vor.u32 1.1754944e-38, %v2818
      %v2820 = vsel %vm2817, %v2819, %v2815
      %v2821 = vmul.f32 1.0, %v2820
      %v2822 = vrcp.pop %v2566
      %v2823 = vmul.f32 %v2566, %v2822
      %v2824 = vsub.f32 1.0, %v2823
      %v2825 = vmul.f32 %v2822, %v2824
      %v2826 = vadd.f32 %v2822, %v2825
      %vm2827 = vweird.f32 %v2566
      %vm2828 = vweird.f32 %v2822
      %vm2829 = vmor %vm2827, %vm2828
      %v2830 = vsel %vm2829, %v2822, %v2826
      %v2831 = vand.u32 2147483647, %v2566
      %vm2832 = vcmp.eq.f32.partialorder %v2831, 8.507059e+37
      %v2833 = vand.u32 %v2566, 2147483648
      %v2834 = vor.u32 1.1754944e-38, %v2833
      %v2835 = vsel %vm2832, %v2834, %v2830
      %v2836 = vmul.f32 1.0, %v2835
      %v2837 = vrcp.pop %v2567
      %v2838 = vmul.f32 %v2567, %v2837
      %v2839 = vsub.f32 1.0, %v2838
      %v2840 = vmul.f32 %v2837, %v2839
      %v2841 = vadd.f32 %v2837, %v2840
      %vm2842 = vweird.f32 %v2567
      %vm2843 = vweird.f32 %v2837
      %vm2844 = vmor %vm2842, %vm2843
      %v2845 = vsel %vm2844, %v2837, %v2841
      %v2846 = vand.u32 2147483647, %v2567
      %vm2847 = vcmp.eq.f32.partialorder %v2846, 8.507059e+37
      %v2848 = vand.u32 %v2567, 2147483648
      %v2849 = vor.u32 1.1754944e-38, %v2848
      %v2850 = vsel %vm2847, %v2849, %v2845
      %v2851 = vmul.f32 1.0, %v2850
      %v2852 = vrcp.pop %v2568
      %v2853 = vmul.f32 %v2568, %v2852
      %v2854 = vsub.f32 1.0, %v2853
      %v2855 = vmul.f32 %v2852, %v2854
      %v2856 = vadd.f32 %v2852, %v2855
      %vm2857 = vweird.f32 %v2568
      %vm2858 = vweird.f32 %v2852
      %vm2859 = vmor %vm2857, %vm2858
      %v2860 = vsel %vm2859, %v2852, %v2856
      %v2861 = vand.u32 2147483647, %v2568
      %vm2862 = vcmp.eq.f32.partialorder %v2861, 8.507059e+37
      %v2863 = vand.u32 %v2568, 2147483648
      %v2864 = vor.u32 1.1754944e-38, %v2863
      %v2865 = vsel %vm2862, %v2864, %v2860
      %v2866 = vmul.f32 1.0, %v2865
      %v2867 = vrcp.pop %v2569
      %v2868 = vmul.f32 %v2569, %v2867
      %v2869 = vsub.f32 1.0, %v2868
      %v2870 = vmul.f32 %v2867, %v2869
      %v2871 = vadd.f32 %v2867, %v2870
      %vm2872 = vweird.f32 %v2569
      %vm2873 = vweird.f32 %v2867
      %vm2874 = vmor %vm2872, %vm2873
      %v2875 = vsel %vm2874, %v2867, %v2871
      %v2876 = vand.u32 2147483647, %v2569
      %vm2877 = vcmp.eq.f32.partialorder %v2876, 8.507059e+37
      %v2878 = vand.u32 %v2569, 2147483648
      %v2879 = vor.u32 1.1754944e-38, %v2878
      %v2880 = vsel %vm2877, %v2879, %v2875
      %v2881 = vmul.f32 1.0, %v2880
      %v2882 = vrcp.pop %v2570
      %v2883 = vmul.f32 %v2570, %v2882
      %v2884 = vsub.f32 1.0, %v2883
      %v2885 = vmul.f32 %v2882, %v2884
      %v2886 = vadd.f32 %v2882, %v2885
      %vm2887 = vweird.f32 %v2570
      %vm2888 = vweird.f32 %v2882
      %vm2889 = vmor %vm2887, %vm2888
      %v2890 = vsel %vm2889, %v2882, %v2886
      %v2891 = vand.u32 2147483647, %v2570
      %vm2892 = vcmp.eq.f32.partialorder %v2891, 8.507059e+37
      %v2893 = vand.u32 %v2570, 2147483648
      %v2894 = vor.u32 1.1754944e-38, %v2893
      %v2895 = vsel %vm2892, %v2894, %v2890
      %v2896 = vmul.f32 1.0, %v2895
      %v2897 = vrcp.pop %v2571
      %v2898 = vmul.f32 %v2571, %v2897
      %v2899 = vsub.f32 1.0, %v2898
      %v2900 = vmul.f32 %v2897, %v2899
      %v2901 = vadd.f32 %v2897, %v2900
      %vm2902 = vweird.f32 %v2571
      %vm2903 = vweird.f32 %v2897
      %vm2904 = vmor %vm2902, %vm2903
      %v2905 = vsel %vm2904, %v2897, %v2901
      %v2906 = vand.u32 2147483647, %v2571
      %vm2907 = vcmp.eq.f32.partialorder %v2906, 8.507059e+37
      %v2908 = vand.u32 %v2571, 2147483648
      %v2909 = vor.u32 1.1754944e-38, %v2908
      %v2910 = vsel %vm2907, %v2909, %v2905
      %v2911 = vmul.f32 1.0, %v2910
      %v2912 = vrcp.pop %v2572
      %v2913 = vmul.f32 %v2572, %v2912
      %v2914 = vsub.f32 1.0, %v2913
      %v2915 = vmul.f32 %v2912, %v2914
      %v2916 = vadd.f32 %v2912, %v2915
      %vm2917 = vweird.f32 %v2572
      %vm2918 = vweird.f32 %v2912
      %vm2919 = vmor %vm2917, %vm2918
      %v2920 = vsel %vm2919, %v2912, %v2916
      %v2921 = vand.u32 2147483647, %v2572
      %vm2922 = vcmp.eq.f32.partialorder %v2921, 8.507059e+37
      %v2923 = vand.u32 %v2572, 2147483648
      %v2924 = vor.u32 1.1754944e-38, %v2923
      %v2925 = vsel %vm2922, %v2924, %v2920
      %v2926 = vmul.f32 1.0, %v2925
      %v2927 = vrcp.pop %v2573
      %v2928 = vmul.f32 %v2573, %v2927
      %v2929 = vsub.f32 1.0, %v2928
      %v2930 = vmul.f32 %v2927, %v2929
      %v2931 = vadd.f32 %v2927, %v2930
      %vm2932 = vweird.f32 %v2573
      %vm2933 = vweird.f32 %v2927
      %vm2934 = vmor %vm2932, %vm2933
      %v2935 = vsel %vm2934, %v2927, %v2931
      %v2936 = vand.u32 2147483647, %v2573
      %vm2937 = vcmp.eq.f32.partialorder %v2936, 8.507059e+37
      %v2938 = vand.u32 %v2573, 2147483648
      %v2939 = vor.u32 1.1754944e-38, %v2938
      %v2940 = vsel %vm2937, %v2939, %v2935
      %v2941 = vmul.f32 1.0, %v2940
      %v2942 = vrcp.pop %v2574
      %v2943 = vmul.f32 %v2574, %v2942
      %v2944 = vsub.f32 1.0, %v2943
      %v2945 = vmul.f32 %v2942, %v2944
      %v2946 = vadd.f32 %v2942, %v2945
      %vm2947 = vweird.f32 %v2574
      %vm2948 = vweird.f32 %v2942
      %vm2949 = vmor %vm2947, %vm2948
      %v2950 = vsel %vm2949, %v2942, %v2946
      %v2951 = vand.u32 2147483647, %v2574
      %vm2952 = vcmp.eq.f32.partialorder %v2951, 8.507059e+37
      %v2953 = vand.u32 %v2574, 2147483648
      %v2954 = vor.u32 1.1754944e-38, %v2953
      %v2955 = vsel %vm2952, %v2954, %v2950
      %v2956 = vmul.f32 1.0, %v2955
      %v2957 = vrcp.pop %v2575
      %v2958 = vmul.f32 %v2575, %v2957
      %v2959 = vsub.f32 1.0, %v2958
      %v2960 = vmul.f32 %v2957, %v2959
      %v2961 = vadd.f32 %v2957, %v2960
      %vm2962 = vweird.f32 %v2575
      %vm2963 = vweird.f32 %v2957
      %vm2964 = vmor %vm2962, %vm2963
      %v2965 = vsel %vm2964, %v2957, %v2961
      %v2966 = vand.u32 2147483647, %v2575
      %vm2967 = vcmp.eq.f32.partialorder %v2966, 8.507059e+37
      %v2968 = vand.u32 %v2575, 2147483648
      %v2969 = vor.u32 1.1754944e-38, %v2968
      %v2970 = vsel %vm2967, %v2969, %v2965
      %v2971 = vmul.f32 1.0, %v2970
      %v2972 = vrcp.pop %v2576
      %v2973 = vmul.f32 %v2576, %v2972
      %v2974 = vsub.f32 1.0, %v2973
      %v2975 = vmul.f32 %v2972, %v2974
      %v2976 = vadd.f32 %v2972, %v2975
      %vm2977 = vweird.f32 %v2576
      %vm2978 = vweird.f32 %v2972
      %vm2979 = vmor %vm2977, %vm2978
      %v2980 = vsel %vm2979, %v2972, %v2976
      %v2981 = vand.u32 2147483647, %v2576
      %vm2982 = vcmp.eq.f32.partialorder %v2981, 8.507059e+37
      %v2983 = vand.u32 %v2576, 2147483648
      %v2984 = vor.u32 1.1754944e-38, %v2983
      %v2985 = vsel %vm2982, %v2984, %v2980
      %v2986 = vmul.f32 1.0, %v2985
      %v2987 = vrcp.pop %v2577
      %v2988 = vmul.f32 %v2577, %v2987
      %v2989 = vsub.f32 1.0, %v2988
      %v2990 = vmul.f32 %v2987, %v2989
      %v2991 = vadd.f32 %v2987, %v2990
      %vm2992 = vweird.f32 %v2577
      %vm2993 = vweird.f32 %v2987
      %vm2994 = vmor %vm2992, %vm2993
      %v2995 = vsel %vm2994, %v2987, %v2991
      %v2996 = vand.u32 2147483647, %v2577
      %vm2997 = vcmp.eq.f32.partialorder %v2996, 8.507059e+37
      %v2998 = vand.u32 %v2577, 2147483648
      %v2999 = vor.u32 1.1754944e-38, %v2998
      %v3000 = vsel %vm2997, %v2999, %v2995
      %v3001 = vmul.f32 1.0, %v3000
      %v3002 = vrcp.pop %v2578
      %v3003 = vmul.f32 %v2578, %v3002
      %v3004 = vsub.f32 1.0, %v3003
      %v3005 = vmul.f32 %v3002, %v3004
      %v3006 = vadd.f32 %v3002, %v3005
      %vm3007 = vweird.f32 %v2578
      %vm3008 = vweird.f32 %v3002
      %vm3009 = vmor %vm3007, %vm3008
      %v3010 = vsel %vm3009, %v3002, %v3006
      %v3011 = vand.u32 2147483647, %v2578
      %vm3012 = vcmp.eq.f32.partialorder %v3011, 8.507059e+37
      %v3013 = vand.u32 %v2578, 2147483648
      %v3014 = vor.u32 1.1754944e-38, %v3013
      %v3015 = vsel %vm3012, %v3014, %v3010
      %v3016 = vmul.f32 1.0, %v3015
      %v3017 = vrcp.pop %v2579
      %v3018 = vmul.f32 %v2579, %v3017
      %v3019 = vsub.f32 1.0, %v3018
      %v3020 = vmul.f32 %v3017, %v3019
      %v3021 = vadd.f32 %v3017, %v3020
      %vm3022 = vweird.f32 %v2579
      %vm3023 = vweird.f32 %v3017
      %vm3024 = vmor %vm3022, %vm3023
      %v3025 = vsel %vm3024, %v3017, %v3021
      %v3026 = vand.u32 2147483647, %v2579
      %vm3027 = vcmp.eq.f32.partialorder %v3026, 8.507059e+37
      %v3028 = vand.u32 %v2579, 2147483648
      %v3029 = vor.u32 1.1754944e-38, %v3028
      %v3030 = vsel %vm3027, %v3029, %v3025
      %v3031 = vmul.f32 1.0, %v3030
      %v3032 = vrcp.pop %v2580
      %v3033 = vmul.f32 %v2580, %v3032
      %v3034 = vsub.f32 1.0, %v3033
      %v3035 = vmul.f32 %v3032, %v3034
      %v3036 = vadd.f32 %v3032, %v3035
      %vm3037 = vweird.f32 %v2580
      %vm3038 = vweird.f32 %v3032
      %vm3039 = vmor %vm3037, %vm3038
      %v3040 = vsel %vm3039, %v3032, %v3036
      %v3041 = vand.u32 2147483647, %v2580
      %vm3042 = vcmp.eq.f32.partialorder %v3041, 8.507059e+37
      %v3043 = vand.u32 %v2580, 2147483648
      %v3044 = vor.u32 1.1754944e-38, %v3043
      %v3045 = vsel %vm3042, %v3044, %v3040
      %v3046 = vmul.f32 1.0, %v3045
      %v3047 = vrcp.pop %v2581
      %v3048 = vmul.f32 %v2581, %v3047
      %v3049 = vsub.f32 1.0, %v3048
      %v3050 = vmul.f32 %v3047, %v3049
      %v3051 = vadd.f32 %v3047, %v3050
      %vm3052 = vweird.f32 %v2581
      %vm3053 = vweird.f32 %v3047
      %vm3054 = vmor %vm3052, %vm3053
      %v3055 = vsel %vm3054, %v3047, %v3051
      %v3056 = vand.u32 2147483647, %v2581
      %vm3057 = vcmp.eq.f32.partialorder %v3056, 8.507059e+37
      %v3058 = vand.u32 %v2581, 2147483648
      %v3059 = vor.u32 1.1754944e-38, %v3058
      %v3060 = vsel %vm3057, %v3059, %v3055
      %v3061 = vmul.f32 1.0, %v3060
      %v3062 = vmul.f32 %v2375, %v2596
      %v3063 = vmul.f32 %v2377, %v2611
      %v3064 = vmul.f32 %v2380, %v2626
      %v3065 = vmul.f32 %v2382, %v2641
      %v3066 = vmul.f32 %v2385, %v2656
      %v3067 = vmul.f32 %v2387, %v2671
      %v3068 = vmul.f32 %v2390, %v2686
      %v3069 = vmul.f32 %v2392, %v2701
      %v3070 = vmul.f32 %v2395, %v2716
      %v3071 = vmul.f32 %v2397, %v2731
      %v3072 = vmul.f32 %v2400, %v2746
      %v3073 = vmul.f32 %v2402, %v2761
      %v3074 = vmul.f32 %v2405, %v2776
      %v3075 = vmul.f32 %v2407, %v2791
      %v3076 = vmul.f32 %v2410, %v2806
      %v3077 = vmul.f32 %v2412, %v2821
      %v3078 = vmul.f32 %v2415, %v2836
      %v3079 = vmul.f32 %v2417, %v2851
      %v3080 = vmul.f32 %v2420, %v2866
      %v3081 = vmul.f32 %v2422, %v2881
      %v3082 = vmul.f32 %v2425, %v2896
      %v3083 = vmul.f32 %v2427, %v2911
      %v3084 = vmul.f32 %v2430, %v2926
      %v3085 = vmul.f32 %v2432, %v2941
      %v3086 = vmul.f32 %v2435, %v2956
      %v3087 = vmul.f32 %v2437, %v2971
      %v3088 = vmul.f32 %v2440, %v2986
      %v3089 = vmul.f32 %v2442, %v3001
      %v3090 = vmul.f32 %v2445, %v3016
      %v3091 = vmul.f32 %v2447, %v3031
      %v3092 = vmul.f32 %v2450, %v3046
      %v3093 = vmul.f32 %v2452, %v3061
      %v3094 = vpack.c.bf16 %v3062, %v3062
      %v3095 = vpack.c.bf16 %v3063, %v3063
      %v3096 = vpack.c.bf16 %v3064, %v3064
      %v3097 = vpack.c.bf16 %v3065, %v3065
      %v3098 = vpack.c.bf16 %v3066, %v3066
      %v3099 = vpack.c.bf16 %v3067, %v3067
      %v3100 = vpack.c.bf16 %v3068, %v3068
      %v3101 = vpack.c.bf16 %v3069, %v3069
      %v3102 = vpack.c.bf16 %v3070, %v3070
      %v3103 = vpack.c.bf16 %v3071, %v3071
      %v3104 = vpack.c.bf16 %v3072, %v3072
      %v3105 = vpack.c.bf16 %v3073, %v3073
      %v3106 = vpack.c.bf16 %v3074, %v3074
      %v3107 = vpack.c.bf16 %v3075, %v3075
      %v3108 = vpack.c.bf16 %v3076, %v3076
      %v3109 = vpack.c.bf16 %v3077, %v3077
      %v3110 = vpack.c.bf16 %v3078, %v3078
      %v3111 = vpack.c.bf16 %v3079, %v3079
      %v3112 = vpack.c.bf16 %v3080, %v3080
      %v3113 = vpack.c.bf16 %v3081, %v3081
      %v3114 = vpack.c.bf16 %v3082, %v3082
      %v3115 = vpack.c.bf16 %v3083, %v3083
      %v3116 = vpack.c.bf16 %v3084, %v3084
      %v3117 = vpack.c.bf16 %v3085, %v3085
      %v3118 = vpack.c.bf16 %v3086, %v3086
      %v3119 = vpack.c.bf16 %v3087, %v3087
      %v3120 = vpack.c.bf16 %v3088, %v3088
      %v3121 = vpack.c.bf16 %v3089, %v3089
      %v3122 = vpack.c.bf16 %v3090, %v3090
      %v3123 = vpack.c.bf16 %v3091, %v3091
      %v3124 = vpack.c.bf16 %v3092, %v3092
      %v3125 = vpack.c.bf16 %v3093, %v3093
      %3126 = vst [vmem:[%s175] sm:$0xf] %v3094
      %3127 = vst [vmem:[%s175 + $0x4] sm:$0xf] %v3095
      %3128 = vst [vmem:[%s175 + $0x8] sm:$0xf] %v3096
      %3129 = vst [vmem:[%s175 + $0xc] sm:$0xf] %v3097
      %3130 = vst [vmem:[%s175 + $0x10] sm:$0xf] %v3098
      %3131 = vst [vmem:[%s175 + $0x14] sm:$0xf] %v3099
      %3132 = vst [vmem:[%s175 + $0x18] sm:$0xf] %v3100
      %3133 = vst [vmem:[%s175 + $0x1c] sm:$0xf] %v3101
      %3134 = vst [vmem:[%s175 + $0x20] sm:$0xf] %v3102
      %3135 = vst [vmem:[%s175 + $0x24] sm:$0xf] %v3103
      %3136 = vst [vmem:[%s175 + $0x28] sm:$0xf] %v3104
      %3137 = vst [vmem:[%s175 + $0x2c] sm:$0xf] %v3105
      %3138 = vst [vmem:[%s175 + $0x30] sm:$0xf] %v3106
      %3139 = vst [vmem:[%s175 + $0x34] sm:$0xf] %v3107
      %3140 = vst [vmem:[%s175 + $0x38] sm:$0xf] %v3108
      %3141 = vst [vmem:[%s175 + $0x3c] sm:$0xf] %v3109
      %3142 = vst [vmem:[%s175 + $0x40] sm:$0xf] %v3110
      %3143 = vst [vmem:[%s175 + $0x44] sm:$0xf] %v3111
      %3144 = vst [vmem:[%s175 + $0x48] sm:$0xf] %v3112
      %3145 = vst [vmem:[%s175 + $0x4c] sm:$0xf] %v3113
      %3146 = vst [vmem:[%s175 + $0x50] sm:$0xf] %v3114
      %3147 = vst [vmem:[%s175 + $0x54] sm:$0xf] %v3115
      %3148 = vst [vmem:[%s175 + $0x58] sm:$0xf] %v3116
      %3149 = vst [vmem:[%s175 + $0x5c] sm:$0xf] %v3117
      %3150 = vst [vmem:[%s175 + $0x60] sm:$0xf] %v3118
      %3151 = vst [vmem:[%s175 + $0x64] sm:$0xf] %v3119
      %3152 = vst [vmem:[%s175 + $0x68] sm:$0xf] %v3120
      %3153 = vst [vmem:[%s175 + $0x6c] sm:$0xf] %v3121
      %3154 = vst [vmem:[%s175 + $0x70] sm:$0xf] %v3122
      %3155 = vst [vmem:[%s175 + $0x74] sm:$0xf] %v3123
      %3156 = vst [vmem:[%s175 + $0x78] sm:$0xf] %v3124
      %3157 = vst [vmem:[%s175 + $0x7c] sm:$0xf] %v3125
      %s3158 = smul.u32 32, %s14
      %p3159 = scmp.lt.s32.totalorder %s3158, 255
      %s3160 = scalar_select %p3159, %s3158, 255
      %s3161 = smul.addr %s3160, 4
      %s3162 = scalar_lea.vmem %s3, %s3161
      // Predicated region
      $region33: #{forward.12} parent=31 // pred_check
        %p3163 = pneg %p100
      $region34: #{forward.12} parent=31 // pred_check_branch
        %3165 = sbr.rel (%p3163) target = $region36
      $region35: #{forward.12} parent=31 // pred_region
        %s3166 = smul.u32 32, %s14
      $region36: #{forward.12} parent=31 // pred_fallthru
        _
    $region32: #{forward.12} parent=5 // pred_fallthru
      _
    %p3167 = scmp.le.s32.totalorder 2, %s9
    // Predicated region
    $region37: #{forward.12} parent=5 // pred_check
      %p3168 = pneg %p3167
    $region38: #{forward.12} parent=5 // pred_check_branch
      %3170 = sbr.rel (%p3168) target = $region40
    $region39: #{forward.12} parent=5 // pred_region
      %s3171 = ssub.s32 %s9, 2
      // Predicated region
      $region41: #{forward.12} parent=39 // pred_check
        %p3172 = pneg %p106
      $region42: #{forward.12} parent=39 // pred_check_branch
        %3174 = sbr.rel (%p3172) target = $region44
      $region43: #{forward.12} parent=39 // pred_region
        %s3175 = smul.u32 32, %s15
        %p3176 = scmp.lt.s32.totalorder %s3175, 255
        %s3177 = scalar_select %p3176, %s3175, 255
        %s3178 = smul.addr %s3177, 4
        %s3179 = scalar_lea.vmem %s3, %s3178
      $region44: #{forward.12} parent=39 // pred_fallthru
        _
    $region40: #{forward.12} parent=5 // pred_fallthru
      _
  $region6: #{forward.12} parent=0 // loop_footer
    %s13 = sadd.s32 1, %s9
  $region7: #{forward.12} parent=0 // loop_footer_branch
    %8 = sbr.rel target = $region3
  $region8: #{forward.12} parent=0 // loop_exit
    _

// kernel: forward.13
$region0: #{forward.13}
  #allocation0 [shape = 'u32[]', space=smem, size = 0x4, offset = 0x4, fixed_abs, tag = 'smem constant byte address 0x4 - core index']
  #allocation1 [shape = 'u32[72,128]{1,0:T(1,128)}', space=vmem, size = 0x9000, scoped, tag = 'internal scratch']
  %s0 = inlined_call_operand.vmem [shape: bf16[512,1152], index: 0, kind: input, shape index: {}]
  %s1 = inlined_call_operand.vmem [shape: bf16[1152,128], index: 1, kind: input, shape index: {}]
  %s2 = inlined_call_operand.vmem [shape: f32[1,128], index: 2, kind: input, shape index: {}]
  %s3 = inlined_call_operand.vmem [shape: bf16[512,128], index: 3, kind: output, shape index: {}]
  %s4 = sld [smem:[#allocation0]]
  $region45: #{forward.13} parent=0
    _
  %s6 = ssub.s32 1, %s4
  %s7 = scalar_select 0, %s6, %s4
  loop: start=0, step=1, limit=4
  $region2: #{forward.13} parent=0 // loop_pre_header
    _
  $region3: #{forward.13} parent=0 // loop_header
    %s9 = sphi 0, %s13
    %p10 = scmp.ge.s32.totalorder %s9, 4
    %s19 = sphi 0, %s21
    %s22 = sphi 0, %s19
    %s23 = sphi 0, %s22
    %s39 = sphi 0, %s23
    %s43 = sphi 0, %s43
    %s45 = sphi 0, %s43
    %s46 = sphi 0, %s45
    %s60 = sphi 0, %s46
    %s64 = sphi 0, %s64
    %s66 = sphi 0, %s64
    %s67 = sphi 0, %s66
    %s81 = sphi 0, %s67
    %s87 = sphi 0, %s89
    %s90 = sphi 0, %s87
    %s91 = sphi 0, %s90
    %s107 = sphi 0, %s91
  $region4: #{forward.13} parent=0 // loop_header_branch
    %12 = sbr.rel (%p10) target = $region8
  $region5: #{forward.13} parent=0 // loop_body
    %s14 = ssub.s32 %s9, 1
    %s15 = ssub.s32 %s9, 2
    %s16 = sadd.s32 %s9, 1
    %s17 = ssub.s32 %s9, %s16
    %p18 = scmp.eq.s32.totalorder %s17, 0
    %s20 = sadd.s32 %s19, 1
    %s21 = scalar_select %p18, %s19, %s20
    %p24 = pneg %p18
    %p25 = scmp.eq.s32.totalorder %s9, 1
    %p26 = por %p24, %p25
    %p27 = scmp.ne.s32.totalorder %s19, %s22
    %p28 = scmp.eq.s32.totalorder %s9, 0
    %p29 = por %p27, %p28
    %p30 = scmp.ne.s32.totalorder %s19, %s22
    %p31 = scmp.eq.s32.totalorder %s14, 1
    %p32 = por %p30, %p31
    %p33 = scmp.ne.s32.totalorder %s22, %s23
    %p34 = scmp.eq.s32.totalorder %s14, 0
    %p35 = por %p33, %p34
    %p36 = scmp.ne.s32.totalorder %s22, %s23
    %p37 = scmp.eq.s32.totalorder %s15, 1
    %p38 = por %p36, %p37
    %p40 = scmp.ne.s32.totalorder %s23, %s39
    %p41 = scmp.eq.s32.totalorder %s15, 0
    %p42 = por %p40, %p41
    %s44 = sadd.s32 %s43, 1
    %p47 = scmp.eq.s32.totalorder %s9, 1
    %p48 = scmp.ne.s32.totalorder %s43, %s45
    %p49 = scmp.eq.s32.totalorder %s9, 0
    %p50 = por %p48, %p49
    %p51 = scmp.ne.s32.totalorder %s43, %s45
    %p52 = scmp.eq.s32.totalorder %s14, 1
    %p53 = por %p51, %p52
    %p54 = scmp.ne.s32.totalorder %s45, %s46
    %p55 = scmp.eq.s32.totalorder %s14, 0
    %p56 = por %p54, %p55
    %p57 = scmp.ne.s32.totalorder %s45, %s46
    %p58 = scmp.eq.s32.totalorder %s15, 1
    %p59 = por %p57, %p58
    %p61 = scmp.ne.s32.totalorder %s46, %s60
    %p62 = scmp.eq.s32.totalorder %s15, 0
    %p63 = por %p61, %p62
    %s65 = sadd.s32 %s64, 1
    %p68 = scmp.eq.s32.totalorder %s9, 1
    %p69 = scmp.ne.s32.totalorder %s64, %s66
    %p70 = scmp.eq.s32.totalorder %s9, 0
    %p71 = por %p69, %p70
    %p72 = scmp.ne.s32.totalorder %s64, %s66
    %p73 = scmp.eq.s32.totalorder %s14, 1
    %p74 = por %p72, %p73
    %p75 = scmp.ne.s32.totalorder %s66, %s67
    %p76 = scmp.eq.s32.totalorder %s14, 0
    %p77 = por %p75, %p76
    %p78 = scmp.ne.s32.totalorder %s66, %s67
    %p79 = scmp.eq.s32.totalorder %s15, 1
    %p80 = por %p78, %p79
    %p82 = scmp.ne.s32.totalorder %s67, %s81
    %p83 = scmp.eq.s32.totalorder %s15, 0
    %p84 = por %p82, %p83
    %s85 = ssub.s32 %s9, %s16
    %p86 = scmp.eq.s32.totalorder %s85, 0
    %s88 = sadd.s32 %s87, 1
    %s89 = scalar_select %p86, %s87, %s88
    %p92 = pneg %p86
    %p93 = scmp.eq.s32.totalorder %s9, 1
    %p94 = por %p92, %p93
    %p95 = scmp.ne.s32.totalorder %s87, %s90
    %p96 = scmp.eq.s32.totalorder %s9, 0
    %p97 = por %p95, %p96
    %p98 = scmp.ne.s32.totalorder %s87, %s90
    %p99 = scmp.eq.s32.totalorder %s14, 1
    %p100 = por %p98, %p99
    %p101 = scmp.ne.s32.totalorder %s90, %s91
    %p102 = scmp.eq.s32.totalorder %s14, 0
    %p103 = por %p101, %p102
    %p104 = scmp.ne.s32.totalorder %s90, %s91
    %p105 = scmp.eq.s32.totalorder %s15, 1
    %p106 = por %p104, %p105
    %p108 = scmp.ne.s32.totalorder %s91, %s107
    %p109 = scmp.eq.s32.totalorder %s15, 0
    %p110 = por %p108, %p109
    %p111 = scmp.le.s32.totalorder 1, %s9
    %p112 = scmp.lt.s32.totalorder %s9, 3
    %p113 = pnand %p111, %p112
    %p114 = pneg %p113
    // Predicated region
    $region9: #{forward.13} parent=5 // pred_check
      _
    $region10: #{forward.13} parent=5 // pred_check_branch
      %116 = sbr.rel (%p113) target = $region12
    $region11: #{forward.13} parent=5 // pred_region
      %s117 = ssub.s32 %s9, 1
      // Predicated region
      $region13: #{forward.13} parent=11 // pred_check
        %p118 = pneg %p56
      $region14: #{forward.13} parent=11 // pred_check_branch
        %120 = sbr.rel (%p118) target = $region16
      $region15: #{forward.13} parent=11 // pred_region
        _
      $region16: #{forward.13} parent=11 // pred_fallthru
        _
      // Predicated region
      $region17: #{forward.13} parent=11 // pred_check
        %p121 = pneg %p77
      $region18: #{forward.13} parent=11 // pred_check_branch
        %123 = sbr.rel (%p121) target = $region20
      $region19: #{forward.13} parent=11 // pred_region
        _
      $region20: #{forward.13} parent=11 // pred_fallthru
        _
    $region12: #{forward.13} parent=5 // pred_fallthru
      _
    %p124 = scmp.lt.s32.totalorder %s9, 2
    // Predicated region
    $region21: #{forward.13} parent=5 // pred_check
      %p125 = pneg %p124
    $region22: #{forward.13} parent=5 // pred_check_branch
      %127 = sbr.rel (%p125) target = $region24
    $region23: #{forward.13} parent=5 // pred_region
      // Predicated region
      $region25: #{forward.13} parent=23 // pred_check
        %p128 = pneg %p29
      $region26: #{forward.13} parent=23 // pred_check_branch
        %130 = sbr.rel (%p128) target = $region28
      $region27: #{forward.13} parent=23 // pred_region
        %s131 = smul.u32 32, %s9
        %p132 = scmp.lt.s32.totalorder %s131, 63
        %s133 = scalar_select %p132, %s131, 63
        %s134 = smul.addr %s133, 9
        %s135 = smul.addr %s134, 4
        %s136 = scalar_lea.vmem %s0, %s135
        %s137 = smul.u32 32, %s9
      $region28: #{forward.13} parent=23 // pred_fallthru
        _
    $region24: #{forward.13} parent=5 // pred_fallthru
      _
    %p138 = scmp.le.s32.totalorder 1, %s9
    %p139 = scmp.lt.s32.totalorder %s9, 3
    %p140 = pnand %p138, %p139
    %p141 = pneg %p140
    // Predicated region
    $region29: #{forward.13} parent=5 // pred_check
      _
    $region30: #{forward.13} parent=5 // pred_check_branch
      %143 = sbr.rel (%p140) target = $region32
    $region31: #{forward.13} parent=5 // pred_region
      %s144 = ssub.s32 %s9, 1
      %s145 = smul.u32 32, %s14
      %p146 = scmp.lt.s32.totalorder %s145, 63
      %s147 = scalar_select %p146, %s145, 63
      %s148 = smul.addr %s147, 9
      %s149 = smul.addr %s148, 4
      %s150 = scalar_lea.vmem %s0, %s149
      %p151 = pneg %p35
      %p152 = pneg %p32
      %p153 = pneg %p56
      %p154 = pneg %p53
      %p155 = pneg %p77
      %p156 = pneg %p74
      %p157 = pneg %p103
      %p158 = pneg %p100
      %s159 = smul.u32 32, %s14
      %p160 = scmp.lt.s32.totalorder %s159, 63
      %s161 = scalar_select %p160, %s159, 63
      %s162 = smul.addr %s161, 4
      %s163 = scalar_lea.vmem %s3, %s162
      %s164 = smul.u32 32, %s14
      %p165 = scmp.lt.s32.totalorder %s164, 63
      %s166 = scalar_select %p165, %s164, 63
      %s167 = smul.addr %s166, 9
      %s168 = smul.addr %s167, 4
      %s169 = scalar_lea.vmem %s0, %s168
      %s170 = smul.u32 32, %s14
      %s171 = smul.u32 32, %s14
      %p172 = scmp.lt.s32.totalorder %s171, 63
      %s173 = scalar_select %p172, %s171, 63
      %s174 = smul.addr %s173, 4
      %s175 = scalar_lea.vmem %s3, %s174
      %s176 = smul.u32 32, %s14
      %v177 = vld [vmem:[%s169] sm:$0xff]
      %v178 = vld [vmem:[%s169 + $0x8] sm:$0xff]
      %v179 = vld [vmem:[%s169 + $0x10] sm:$0xff]
      %v180 = vld [vmem:[%s169 + $0x18] sm:$0xff]
      %v181 = vld [vmem:[%s169 + $0x20] sm:$0xf]
      %v182 = vld [vmem:[%s169 + $0x24] sm:$0xff]
      %v183 = vld [vmem:[%s169 + $0x2c] sm:$0xff]
      %v184 = vld [vmem:[%s169 + $0x34] sm:$0xff]
      %v185 = vld [vmem:[%s169 + $0x3c] sm:$0xff]
      %v186 = vld [vmem:[%s169 + $0x44] sm:$0xf]
      %v187 = vld [vmem:[%s169 + $0x48] sm:$0xff]
      %v188 = vld [vmem:[%s169 + $0x50] sm:$0xff]
      %v189 = vld [vmem:[%s169 + $0x58] sm:$0xff]
      %v190 = vld [vmem:[%s169 + $0x60] sm:$0xff]
      %v191 = vld [vmem:[%s169 + $0x68] sm:$0xf]
      %v192 = vld [vmem:[%s169 + $0x6c] sm:$0xff]
      %v193 = vld [vmem:[%s169 + $0x74] sm:$0xff]
      %v194 = vld [vmem:[%s169 + $0x7c] sm:$0xff]
      %v195 = vld [vmem:[%s169 + $0x84] sm:$0xff]
      %v196 = vld [vmem:[%s169 + $0x8c] sm:$0xf]
      %v197 = vld [vmem:[%s169 + $0x90] sm:$0xff]
      %v198 = vld [vmem:[%s169 + $0x98] sm:$0xff]
      %v199 = vld [vmem:[%s169 + $0xa0] sm:$0xff]
      %v200 = vld [vmem:[%s169 + $0xa8] sm:$0xff]
      %v201 = vld [vmem:[%s169 + $0xb0] sm:$0xf]
      %v202 = vld [vmem:[%s169 + $0xb4] sm:$0xff]
      %v203 = vld [vmem:[%s169 + $0xbc] sm:$0xff]
      %v204 = vld [vmem:[%s169 + $0xc4] sm:$0xff]
      %v205 = vld [vmem:[%s169 + $0xcc] sm:$0xff]
      %v206 = vld [vmem:[%s169 + $0xd4] sm:$0xf]
      %v207 = vld [vmem:[%s169 + $0xd8] sm:$0xff]
      %v208 = vld [vmem:[%s169 + $0xe0] sm:$0xff]
      %v209 = vld [vmem:[%s169 + $0xe8] sm:$0xff]
      %v210 = vld [vmem:[%s169 + $0xf0] sm:$0xff]
      %v211 = vld [vmem:[%s169 + $0xf8] sm:$0xf]
      %v212 = vld [vmem:[%s169 + $0xfc] sm:$0xff]
      %v213 = vld [vmem:[%s169 + $0x104] sm:$0xff]
      %v214 = vld [vmem:[%s169 + $0x10c] sm:$0xff]
      %v215 = vld [vmem:[%s169 + $0x114] sm:$0xff]
      %v216 = vld [vmem:[%s169 + $0x11c] sm:$0xf]
      %v217 = vld [vmem:[%s169 + $0x120] sm:$0xff]
      %v218 = vld [vmem:[%s169 + $0x128] sm:$0xff]
      %v219 = vld [vmem:[%s169 + $0x130] sm:$0xff]
      %v220 = vld [vmem:[%s169 + $0x138] sm:$0xff]
      %v221 = vld [vmem:[%s169 + $0x140] sm:$0xf]
      %v222 = vld [vmem:[%s169 + $0x144] sm:$0xff]
      %v223 = vld [vmem:[%s169 + $0x14c] sm:$0xff]
      %v224 = vld [vmem:[%s169 + $0x154] sm:$0xff]
      %v225 = vld [vmem:[%s169 + $0x15c] sm:$0xff]
      %v226 = vld [vmem:[%s169 + $0x164] sm:$0xf]
      %v227 = vld [vmem:[%s169 + $0x168] sm:$0xff]
      %v228 = vld [vmem:[%s169 + $0x170] sm:$0xff]
      %v229 = vld [vmem:[%s169 + $0x178] sm:$0xff]
      %v230 = vld [vmem:[%s169 + $0x180] sm:$0xff]
      %v231 = vld [vmem:[%s169 + $0x188] sm:$0xf]
      %v232 = vld [vmem:[%s169 + $0x18c] sm:$0xff]
      %v233 = vld [vmem:[%s169 + $0x194] sm:$0xff]
      %v234 = vld [vmem:[%s169 + $0x19c] sm:$0xff]
      %v235 = vld [vmem:[%s169 + $0x1a4] sm:$0xff]
      %v236 = vld [vmem:[%s169 + $0x1ac] sm:$0xf]
      %v237 = vld [vmem:[%s169 + $0x1b0] sm:$0xff]
      %v238 = vld [vmem:[%s169 + $0x1b8] sm:$0xff]
      %v239 = vld [vmem:[%s169 + $0x1c0] sm:$0xff]
      %v240 = vld [vmem:[%s169 + $0x1c8] sm:$0xff]
      %v241 = vld [vmem:[%s169 + $0x1d0] sm:$0xf]
      %v242 = vld [vmem:[%s169 + $0x1d4] sm:$0xff]
      %v243 = vld [vmem:[%s169 + $0x1dc] sm:$0xff]
      %v244 = vld [vmem:[%s169 + $0x1e4] sm:$0xff]
      %v245 = vld [vmem:[%s169 + $0x1ec] sm:$0xff]
      %v246 = vld [vmem:[%s169 + $0x1f4] sm:$0xf]
      %v247 = vld [vmem:[%s169 + $0x1f8] sm:$0xff]
      %v248 = vld [vmem:[%s169 + $0x200] sm:$0xff]
      %v249 = vld [vmem:[%s169 + $0x208] sm:$0xff]
      %v250 = vld [vmem:[%s169 + $0x210] sm:$0xff]
      %v251 = vld [vmem:[%s169 + $0x218] sm:$0xf]
      %v252 = vld [vmem:[%s169 + $0x21c] sm:$0xff]
      %v253 = vld [vmem:[%s169 + $0x224] sm:$0xff]
      %v254 = vld [vmem:[%s169 + $0x22c] sm:$0xff]
      %v255 = vld [vmem:[%s169 + $0x234] sm:$0xff]
      %v256 = vld [vmem:[%s169 + $0x23c] sm:$0xf]
      %v257 = vld [vmem:[%s169 + $0x240] sm:$0xff]
      %v258 = vld [vmem:[%s169 + $0x248] sm:$0xff]
      %v259 = vld [vmem:[%s169 + $0x250] sm:$0xff]
      %v260 = vld [vmem:[%s169 + $0x258] sm:$0xff]
      %v261 = vld [vmem:[%s169 + $0x260] sm:$0xf]
      %v262 = vld [vmem:[%s169 + $0x264] sm:$0xff]
      %v263 = vld [vmem:[%s169 + $0x26c] sm:$0xff]
      %v264 = vld [vmem:[%s169 + $0x274] sm:$0xff]
      %v265 = vld [vmem:[%s169 + $0x27c] sm:$0xff]
      %v266 = vld [vmem:[%s169 + $0x284] sm:$0xf]
      %v267 = vld [vmem:[%s169 + $0x288] sm:$0xff]
      %v268 = vld [vmem:[%s169 + $0x290] sm:$0xff]
      %v269 = vld [vmem:[%s169 + $0x298] sm:$0xff]
      %v270 = vld [vmem:[%s169 + $0x2a0] sm:$0xff]
      %v271 = vld [vmem:[%s169 + $0x2a8] sm:$0xf]
      %v272 = vld [vmem:[%s169 + $0x2ac] sm:$0xff]
      %v273 = vld [vmem:[%s169 + $0x2b4] sm:$0xff]
      %v274 = vld [vmem:[%s169 + $0x2bc] sm:$0xff]
      %v275 = vld [vmem:[%s169 + $0x2c4] sm:$0xff]
      %v276 = vld [vmem:[%s169 + $0x2cc] sm:$0xf]
      %v277 = vld [vmem:[%s169 + $0x2d0] sm:$0xff]
      %v278 = vld [vmem:[%s169 + $0x2d8] sm:$0xff]
      %v279 = vld [vmem:[%s169 + $0x2e0] sm:$0xff]
      %v280 = vld [vmem:[%s169 + $0x2e8] sm:$0xff]
      %v281 = vld [vmem:[%s169 + $0x2f0] sm:$0xf]
      %v282 = vld [vmem:[%s169 + $0x2f4] sm:$0xff]
      %v283 = vld [vmem:[%s169 + $0x2fc] sm:$0xff]
      %v284 = vld [vmem:[%s169 + $0x304] sm:$0xff]
      %v285 = vld [vmem:[%s169 + $0x30c] sm:$0xff]
      %v286 = vld [vmem:[%s169 + $0x314] sm:$0xf]
      %v287 = vld [vmem:[%s169 + $0x318] sm:$0xff]
      %v288 = vld [vmem:[%s169 + $0x320] sm:$0xff]
      %v289 = vld [vmem:[%s169 + $0x328] sm:$0xff]
      %v290 = vld [vmem:[%s169 + $0x330] sm:$0xff]
      %v291 = vld [vmem:[%s169 + $0x338] sm:$0xf]
      %v292 = vld [vmem:[%s169 + $0x33c] sm:$0xff]
      %v293 = vld [vmem:[%s169 + $0x344] sm:$0xff]
      %v294 = vld [vmem:[%s169 + $0x34c] sm:$0xff]
      %v295 = vld [vmem:[%s169 + $0x354] sm:$0xff]
      %v296 = vld [vmem:[%s169 + $0x35c] sm:$0xf]
      %v297 = vld [vmem:[%s169 + $0x360] sm:$0xff]
      %v298 = vld [vmem:[%s169 + $0x368] sm:$0xff]
      %v299 = vld [vmem:[%s169 + $0x370] sm:$0xff]
      %v300 = vld [vmem:[%s169 + $0x378] sm:$0xff]
      %v301 = vld [vmem:[%s169 + $0x380] sm:$0xf]
      %v302 = vld [vmem:[%s169 + $0x384] sm:$0xff]
      %v303 = vld [vmem:[%s169 + $0x38c] sm:$0xff]
      %v304 = vld [vmem:[%s169 + $0x394] sm:$0xff]
      %v305 = vld [vmem:[%s169 + $0x39c] sm:$0xff]
      %v306 = vld [vmem:[%s169 + $0x3a4] sm:$0xf]
      %v307 = vld [vmem:[%s169 + $0x3a8] sm:$0xff]
      %v308 = vld [vmem:[%s169 + $0x3b0] sm:$0xff]
      %v309 = vld [vmem:[%s169 + $0x3b8] sm:$0xff]
      %v310 = vld [vmem:[%s169 + $0x3c0] sm:$0xff]
      %v311 = vld [vmem:[%s169 + $0x3c8] sm:$0xf]
      %v312 = vld [vmem:[%s169 + $0x3cc] sm:$0xff]
      %v313 = vld [vmem:[%s169 + $0x3d4] sm:$0xff]
      %v314 = vld [vmem:[%s169 + $0x3dc] sm:$0xff]
      %v315 = vld [vmem:[%s169 + $0x3e4] sm:$0xff]
      %v316 = vld [vmem:[%s169 + $0x3ec] sm:$0xf]
      %v317 = vld [vmem:[%s169 + $0x3f0] sm:$0xff]
      %v318 = vld [vmem:[%s169 + $0x3f8] sm:$0xff]
      %v319 = vld [vmem:[%s169 + $0x400] sm:$0xff]
      %v320 = vld [vmem:[%s169 + $0x408] sm:$0xff]
      %v321 = vld [vmem:[%s169 + $0x410] sm:$0xf]
      %v322 = vld [vmem:[%s169 + $0x414] sm:$0xff]
      %v323 = vld [vmem:[%s169 + $0x41c] sm:$0xff]
      %v324 = vld [vmem:[%s169 + $0x424] sm:$0xff]
      %v325 = vld [vmem:[%s169 + $0x42c] sm:$0xff]
      %v326 = vld [vmem:[%s169 + $0x434] sm:$0xf]
      %v327 = vld [vmem:[%s169 + $0x438] sm:$0xff]
      %v328 = vld [vmem:[%s169 + $0x440] sm:$0xff]
      %v329 = vld [vmem:[%s169 + $0x448] sm:$0xff]
      %v330 = vld [vmem:[%s169 + $0x450] sm:$0xff]
      %v331 = vld [vmem:[%s169 + $0x458] sm:$0xf]
      %v332 = vld [vmem:[%s169 + $0x45c] sm:$0xff]
      %v333 = vld [vmem:[%s169 + $0x464] sm:$0xff]
      %v334 = vld [vmem:[%s169 + $0x46c] sm:$0xff]
      %v335 = vld [vmem:[%s169 + $0x474] sm:$0xff]
      %v336 = vld [vmem:[%s169 + $0x47c] sm:$0xf]
      %v337 = vld [vmem:[%s1] sm:$0xf]
      %v338 = vld [vmem:[%s1 + $0x4] sm:$0xf]
      %v339 = vld [vmem:[%s1 + $0x8] sm:$0xf]
      %v340 = vld [vmem:[%s1 + $0xc] sm:$0xf]
      %v341 = vld [vmem:[%s1 + $0x10] sm:$0xf]
      %v342 = vld [vmem:[%s1 + $0x14] sm:$0xf]
      %v343 = vld [vmem:[%s1 + $0x18] sm:$0xf]
      %v344 = vld [vmem:[%s1 + $0x1c] sm:$0xf]
      %v345 = vld [vmem:[%s1 + $0x20] sm:$0xf]
      %v346 = vld [vmem:[%s1 + $0x24] sm:$0xf]
      %v347 = vld [vmem:[%s1 + $0x28] sm:$0xf]
      %v348 = vld [vmem:[%s1 + $0x2c] sm:$0xf]
      %v349 = vld [vmem:[%s1 + $0x30] sm:$0xf]
      %v350 = vld [vmem:[%s1 + $0x34] sm:$0xf]
      %v351 = vld [vmem:[%s1 + $0x38] sm:$0xf]
      %v352 = vld [vmem:[%s1 + $0x3c] sm:$0xf]
      %v353 = vld [vmem:[%s1 + $0x40] sm:$0xf]
      %v354 = vld [vmem:[%s1 + $0x44] sm:$0xf]
      %v355 = vld [vmem:[%s1 + $0x48] sm:$0xf]
      %v356 = vld [vmem:[%s1 + $0x4c] sm:$0xf]
      %v357 = vld [vmem:[%s1 + $0x50] sm:$0xf]
      %v358 = vld [vmem:[%s1 + $0x54] sm:$0xf]
      %v359 = vld [vmem:[%s1 + $0x58] sm:$0xf]
      %v360 = vld [vmem:[%s1 + $0x5c] sm:$0xf]
      %v361 = vld [vmem:[%s1 + $0x60] sm:$0xf]
      %v362 = vld [vmem:[%s1 + $0x64] sm:$0xf]
      %v363 = vld [vmem:[%s1 + $0x68] sm:$0xf]
      %v364 = vld [vmem:[%s1 + $0x6c] sm:$0xf]
      %v365 = vld [vmem:[%s1 + $0x70] sm:$0xf]
      %v366 = vld [vmem:[%s1 + $0x74] sm:$0xf]
      %v367 = vld [vmem:[%s1 + $0x78] sm:$0xf]
      %v368 = vld [vmem:[%s1 + $0x7c] sm:$0xf]
      %v369 = vld [vmem:[%s1 + $0x80] sm:$0xf]
      %v370 = vld [vmem:[%s1 + $0x84] sm:$0xf]
      %v371 = vld [vmem:[%s1 + $0x88] sm:$0xf]
      %v372 = vld [vmem:[%s1 + $0x8c] sm:$0xf]
      %v373 = vld [vmem:[%s1 + $0x90] sm:$0xf]
      %v374 = vld [vmem:[%s1 + $0x94] sm:$0xf]
      %v375 = vld [vmem:[%s1 + $0x98] sm:$0xf]
      %v376 = vld [vmem:[%s1 + $0x9c] sm:$0xf]
      %v377 = vld [vmem:[%s1 + $0xa0] sm:$0xf]
      %v378 = vld [vmem:[%s1 + $0xa4] sm:$0xf]
      %v379 = vld [vmem:[%s1 + $0xa8] sm:$0xf]
      %v380 = vld [vmem:[%s1 + $0xac] sm:$0xf]
      %v381 = vld [vmem:[%s1 + $0xb0] sm:$0xf]
      %v382 = vld [vmem:[%s1 + $0xb4] sm:$0xf]
      %v383 = vld [vmem:[%s1 + $0xb8] sm:$0xf]
      %v384 = vld [vmem:[%s1 + $0xbc] sm:$0xf]
      %v385 = vld [vmem:[%s1 + $0xc0] sm:$0xf]
      %v386 = vld [vmem:[%s1 + $0xc4] sm:$0xf]
      %v387 = vld [vmem:[%s1 + $0xc8] sm:$0xf]
      %v388 = vld [vmem:[%s1 + $0xcc] sm:$0xf]
      %v389 = vld [vmem:[%s1 + $0xd0] sm:$0xf]
      %v390 = vld [vmem:[%s1 + $0xd4] sm:$0xf]
      %v391 = vld [vmem:[%s1 + $0xd8] sm:$0xf]
      %v392 = vld [vmem:[%s1 + $0xdc] sm:$0xf]
      %v393 = vld [vmem:[%s1 + $0xe0] sm:$0xf]
      %v394 = vld [vmem:[%s1 + $0xe4] sm:$0xf]
      %v395 = vld [vmem:[%s1 + $0xe8] sm:$0xf]
      %v396 = vld [vmem:[%s1 + $0xec] sm:$0xf]
      %v397 = vld [vmem:[%s1 + $0xf0] sm:$0xf]
      %v398 = vld [vmem:[%s1 + $0xf4] sm:$0xf]
      %v399 = vld [vmem:[%s1 + $0xf8] sm:$0xf]
      %v400 = vld [vmem:[%s1 + $0xfc] sm:$0xf]
      %v401 = vld [vmem:[%s1 + $0x100] sm:$0xf]
      %v402 = vld [vmem:[%s1 + $0x104] sm:$0xf]
      %v403 = vld [vmem:[%s1 + $0x108] sm:$0xf]
      %v404 = vld [vmem:[%s1 + $0x10c] sm:$0xf]
      %v405 = vld [vmem:[%s1 + $0x110] sm:$0xf]
      %v406 = vld [vmem:[%s1 + $0x114] sm:$0xf]
      %v407 = vld [vmem:[%s1 + $0x118] sm:$0xf]
      %v408 = vld [vmem:[%s1 + $0x11c] sm:$0xf]
      %v409 = vld [vmem:[%s1 + $0x120] sm:$0xf]
      %v410 = vld [vmem:[%s1 + $0x124] sm:$0xf]
      %v411 = vld [vmem:[%s1 + $0x128] sm:$0xf]
      %v412 = vld [vmem:[%s1 + $0x12c] sm:$0xf]
      %v413 = vld [vmem:[%s1 + $0x130] sm:$0xf]
      %v414 = vld [vmem:[%s1 + $0x134] sm:$0xf]
      %v415 = vld [vmem:[%s1 + $0x138] sm:$0xf]
      %v416 = vld [vmem:[%s1 + $0x13c] sm:$0xf]
      %v417 = vld [vmem:[%s1 + $0x140] sm:$0xf]
      %v418 = vld [vmem:[%s1 + $0x144] sm:$0xf]
      %v419 = vld [vmem:[%s1 + $0x148] sm:$0xf]
      %v420 = vld [vmem:[%s1 + $0x14c] sm:$0xf]
      %v421 = vld [vmem:[%s1 + $0x150] sm:$0xf]
      %v422 = vld [vmem:[%s1 + $0x154] sm:$0xf]
      %v423 = vld [vmem:[%s1 + $0x158] sm:$0xf]
      %v424 = vld [vmem:[%s1 + $0x15c] sm:$0xf]
      %v425 = vld [vmem:[%s1 + $0x160] sm:$0xf]
      %v426 = vld [vmem:[%s1 + $0x164] sm:$0xf]
      %v427 = vld [vmem:[%s1 + $0x168] sm:$0xf]
      %v428 = vld [vmem:[%s1 + $0x16c] sm:$0xf]
      %v429 = vld [vmem:[%s1 + $0x170] sm:$0xf]
      %v430 = vld [vmem:[%s1 + $0x174] sm:$0xf]
      %v431 = vld [vmem:[%s1 + $0x178] sm:$0xf]
      %v432 = vld [vmem:[%s1 + $0x17c] sm:$0xf]
      %v433 = vld [vmem:[%s1 + $0x180] sm:$0xf]
      %v434 = vld [vmem:[%s1 + $0x184] sm:$0xf]
      %v435 = vld [vmem:[%s1 + $0x188] sm:$0xf]
      %v436 = vld [vmem:[%s1 + $0x18c] sm:$0xf]
      %v437 = vld [vmem:[%s1 + $0x190] sm:$0xf]
      %v438 = vld [vmem:[%s1 + $0x194] sm:$0xf]
      %v439 = vld [vmem:[%s1 + $0x198] sm:$0xf]
      %v440 = vld [vmem:[%s1 + $0x19c] sm:$0xf]
      %v441 = vld [vmem:[%s1 + $0x1a0] sm:$0xf]
      %v442 = vld [vmem:[%s1 + $0x1a4] sm:$0xf]
      %v443 = vld [vmem:[%s1 + $0x1a8] sm:$0xf]
      %v444 = vld [vmem:[%s1 + $0x1ac] sm:$0xf]
      %v445 = vld [vmem:[%s1 + $0x1b0] sm:$0xf]
      %v446 = vld [vmem:[%s1 + $0x1b4] sm:$0xf]
      %v447 = vld [vmem:[%s1 + $0x1b8] sm:$0xf]
      %v448 = vld [vmem:[%s1 + $0x1bc] sm:$0xf]
      %v449 = vld [vmem:[%s1 + $0x1c0] sm:$0xf]
      %v450 = vld [vmem:[%s1 + $0x1c4] sm:$0xf]
      %v451 = vld [vmem:[%s1 + $0x1c8] sm:$0xf]
      %v452 = vld [vmem:[%s1 + $0x1cc] sm:$0xf]
      %v453 = vld [vmem:[%s1 + $0x1d0] sm:$0xf]
      %v454 = vld [vmem:[%s1 + $0x1d4] sm:$0xf]
      %v455 = vld [vmem:[%s1 + $0x1d8] sm:$0xf]
      %v456 = vld [vmem:[%s1 + $0x1dc] sm:$0xf]
      %v457 = vld [vmem:[%s1 + $0x1e0] sm:$0xf]
      %v458 = vld [vmem:[%s1 + $0x1e4] sm:$0xf]
      %v459 = vld [vmem:[%s1 + $0x1e8] sm:$0xf]
      %v460 = vld [vmem:[%s1 + $0x1ec] sm:$0xf]
      %v461 = vld [vmem:[%s1 + $0x1f0] sm:$0xf]
      %v462 = vld [vmem:[%s1 + $0x1f4] sm:$0xf]
      %v463 = vld [vmem:[%s1 + $0x1f8] sm:$0xf]
      %v464 = vld [vmem:[%s1 + $0x1fc] sm:$0xf]
      %v465 = vld [vmem:[%s1 + $0x200] sm:$0xf]
      %v466 = vld [vmem:[%s1 + $0x204] sm:$0xf]
      %v467 = vld [vmem:[%s1 + $0x208] sm:$0xf]
      %v468 = vld [vmem:[%s1 + $0x20c] sm:$0xf]
      %v469 = vld [vmem:[%s1 + $0x210] sm:$0xf]
      %v470 = vld [vmem:[%s1 + $0x214] sm:$0xf]
      %v471 = vld [vmem:[%s1 + $0x218] sm:$0xf]
      %v472 = vld [vmem:[%s1 + $0x21c] sm:$0xf]
      %v473 = vld [vmem:[%s1 + $0x220] sm:$0xf]
      %v474 = vld [vmem:[%s1 + $0x224] sm:$0xf]
      %v475 = vld [vmem:[%s1 + $0x228] sm:$0xf]
      %v476 = vld [vmem:[%s1 + $0x22c] sm:$0xf]
      %v477 = vld [vmem:[%s1 + $0x230] sm:$0xf]
      %v478 = vld [vmem:[%s1 + $0x234] sm:$0xf]
      %v479 = vld [vmem:[%s1 + $0x238] sm:$0xf]
      %v480 = vld [vmem:[%s1 + $0x23c] sm:$0xf]
      %v481 = vld [vmem:[%s2] sm:$0x1]
      %v483 = vperm.slane %v481, 0
      %v645 = vunpack.c.l.b16 %v177
      %v646 = vunpack.c.h.b16 %v177
      %v647 = vunpack.c.l.b16 %v178
      %v648 = vunpack.c.h.b16 %v178
      %v649 = vunpack.c.l.b16 %v179
      %v650 = vunpack.c.h.b16 %v179
      %v651 = vunpack.c.l.b16 %v180
      %v652 = vunpack.c.h.b16 %v180
      %v653 = vunpack.c.l.b16 %v181
      %v654 = vunpack.c.l.b16 %v182
      %v655 = vunpack.c.h.b16 %v182
      %v656 = vunpack.c.l.b16 %v183
      %v657 = vunpack.c.h.b16 %v183
      %v658 = vunpack.c.l.b16 %v184
      %v659 = vunpack.c.h.b16 %v184
      %v660 = vunpack.c.l.b16 %v185
      %v661 = vunpack.c.h.b16 %v185
      %v662 = vunpack.c.l.b16 %v186
      %v663 = vunpack.c.l.b16 %v187
      %v664 = vunpack.c.h.b16 %v187
      %v665 = vunpack.c.l.b16 %v188
      %v666 = vunpack.c.h.b16 %v188
      %v667 = vunpack.c.l.b16 %v189
      %v668 = vunpack.c.h.b16 %v189
      %v669 = vunpack.c.l.b16 %v190
      %v670 = vunpack.c.h.b16 %v190
      %v671 = vunpack.c.l.b16 %v191
      %v672 = vunpack.c.l.b16 %v192
      %v673 = vunpack.c.h.b16 %v192
      %v674 = vunpack.c.l.b16 %v193
      %v675 = vunpack.c.h.b16 %v193
      %v676 = vunpack.c.l.b16 %v194
      %v677 = vunpack.c.h.b16 %v194
      %v678 = vunpack.c.l.b16 %v195
      %v679 = vunpack.c.h.b16 %v195
      %v680 = vunpack.c.l.b16 %v196
      %v681 = vunpack.c.l.b16 %v197
      %v682 = vunpack.c.h.b16 %v197
      %v683 = vunpack.c.l.b16 %v198
      %v684 = vunpack.c.h.b16 %v198
      %v685 = vunpack.c.l.b16 %v199
      %v686 = vunpack.c.h.b16 %v199
      %v687 = vunpack.c.l.b16 %v200
      %v688 = vunpack.c.h.b16 %v200
      %v689 = vunpack.c.l.b16 %v201
      %v690 = vunpack.c.l.b16 %v202
      %v691 = vunpack.c.h.b16 %v202
      %v692 = vunpack.c.l.b16 %v203
      %v693 = vunpack.c.h.b16 %v203
      %v694 = vunpack.c.l.b16 %v204
      %v695 = vunpack.c.h.b16 %v204
      %v696 = vunpack.c.l.b16 %v205
      %v697 = vunpack.c.h.b16 %v205
      %v698 = vunpack.c.l.b16 %v206
      %v699 = vunpack.c.l.b16 %v207
      %v700 = vunpack.c.h.b16 %v207
      %v701 = vunpack.c.l.b16 %v208
      %v702 = vunpack.c.h.b16 %v208
      %v703 = vunpack.c.l.b16 %v209
      %v704 = vunpack.c.h.b16 %v209
      %v705 = vunpack.c.l.b16 %v210
      %v706 = vunpack.c.h.b16 %v210
      %v707 = vunpack.c.l.b16 %v211
      %v708 = vunpack.c.l.b16 %v212
      %v709 = vunpack.c.h.b16 %v212
      %v710 = vunpack.c.l.b16 %v213
      %v711 = vunpack.c.h.b16 %v213
      %v712 = vunpack.c.l.b16 %v214
      %v713 = vunpack.c.h.b16 %v214
      %v714 = vunpack.c.l.b16 %v215
      %v715 = vunpack.c.h.b16 %v215
      %v716 = vunpack.c.l.b16 %v216
      %v717 = vunpack.c.l.b16 %v217
      %v718 = vunpack.c.h.b16 %v217
      %v719 = vunpack.c.l.b16 %v218
      %v720 = vunpack.c.h.b16 %v218
      %v721 = vunpack.c.l.b16 %v219
      %v722 = vunpack.c.h.b16 %v219
      %v723 = vunpack.c.l.b16 %v220
      %v724 = vunpack.c.h.b16 %v220
      %v725 = vunpack.c.l.b16 %v221
      %v726 = vunpack.c.l.b16 %v222
      %v727 = vunpack.c.h.b16 %v222
      %v728 = vunpack.c.l.b16 %v223
      %v729 = vunpack.c.h.b16 %v223
      %v730 = vunpack.c.l.b16 %v224
      %v731 = vunpack.c.h.b16 %v224
      %v732 = vunpack.c.l.b16 %v225
      %v733 = vunpack.c.h.b16 %v225
      %v734 = vunpack.c.l.b16 %v226
      %v735 = vunpack.c.l.b16 %v227
      %v736 = vunpack.c.h.b16 %v227
      %v737 = vunpack.c.l.b16 %v228
      %v738 = vunpack.c.h.b16 %v228
      %v739 = vunpack.c.l.b16 %v229
      %v740 = vunpack.c.h.b16 %v229
      %v741 = vunpack.c.l.b16 %v230
      %v742 = vunpack.c.h.b16 %v230
      %v743 = vunpack.c.l.b16 %v231
      %v744 = vunpack.c.l.b16 %v232
      %v745 = vunpack.c.h.b16 %v232
      %v746 = vunpack.c.l.b16 %v233
      %v747 = vunpack.c.h.b16 %v233
      %v748 = vunpack.c.l.b16 %v234
      %v749 = vunpack.c.h.b16 %v234
      %v750 = vunpack.c.l.b16 %v235
      %v751 = vunpack.c.h.b16 %v235
      %v752 = vunpack.c.l.b16 %v236
      %v753 = vunpack.c.l.b16 %v237
      %v754 = vunpack.c.h.b16 %v237
      %v755 = vunpack.c.l.b16 %v238
      %v756 = vunpack.c.h.b16 %v238
      %v757 = vunpack.c.l.b16 %v239
      %v758 = vunpack.c.h.b16 %v239
      %v759 = vunpack.c.l.b16 %v240
      %v760 = vunpack.c.h.b16 %v240
      %v761 = vunpack.c.l.b16 %v241
      %v762 = vunpack.c.l.b16 %v242
      %v763 = vunpack.c.h.b16 %v242
      %v764 = vunpack.c.l.b16 %v243
      %v765 = vunpack.c.h.b16 %v243
      %v766 = vunpack.c.l.b16 %v244
      %v767 = vunpack.c.h.b16 %v244
      %v768 = vunpack.c.l.b16 %v245
      %v769 = vunpack.c.h.b16 %v245
      %v770 = vunpack.c.l.b16 %v246
      %v771 = vunpack.c.l.b16 %v247
      %v772 = vunpack.c.h.b16 %v247
      %v773 = vunpack.c.l.b16 %v248
      %v774 = vunpack.c.h.b16 %v248
      %v775 = vunpack.c.l.b16 %v249
      %v776 = vunpack.c.h.b16 %v249
      %v777 = vunpack.c.l.b16 %v250
      %v778 = vunpack.c.h.b16 %v250
      %v779 = vunpack.c.l.b16 %v251
      %v780 = vunpack.c.l.b16 %v252
      %v781 = vunpack.c.h.b16 %v252
      %v782 = vunpack.c.l.b16 %v253
      %v783 = vunpack.c.h.b16 %v253
      %v784 = vunpack.c.l.b16 %v254
      %v785 = vunpack.c.h.b16 %v254
      %v786 = vunpack.c.l.b16 %v255
      %v787 = vunpack.c.h.b16 %v255
      %v788 = vunpack.c.l.b16 %v256
      %v789 = vunpack.c.l.b16 %v257
      %v790 = vunpack.c.h.b16 %v257
      %v791 = vunpack.c.l.b16 %v258
      %v792 = vunpack.c.h.b16 %v258
      %v793 = vunpack.c.l.b16 %v259
      %v794 = vunpack.c.h.b16 %v259
      %v795 = vunpack.c.l.b16 %v260
      %v796 = vunpack.c.h.b16 %v260
      %v797 = vunpack.c.l.b16 %v261
      %v798 = vunpack.c.l.b16 %v262
      %v799 = vunpack.c.h.b16 %v262
      %v800 = vunpack.c.l.b16 %v263
      %v801 = vunpack.c.h.b16 %v263
      %v802 = vunpack.c.l.b16 %v264
      %v803 = vunpack.c.h.b16 %v264
      %v804 = vunpack.c.l.b16 %v265
      %v805 = vunpack.c.h.b16 %v265
      %v806 = vunpack.c.l.b16 %v266
      %v807 = vunpack.c.l.b16 %v267
      %v808 = vunpack.c.h.b16 %v267
      %v809 = vunpack.c.l.b16 %v268
      %v810 = vunpack.c.h.b16 %v268
      %v811 = vunpack.c.l.b16 %v269
      %v812 = vunpack.c.h.b16 %v269
      %v813 = vunpack.c.l.b16 %v270
      %v814 = vunpack.c.h.b16 %v270
      %v815 = vunpack.c.l.b16 %v271
      %v816 = vunpack.c.l.b16 %v272
      %v817 = vunpack.c.h.b16 %v272
      %v818 = vunpack.c.l.b16 %v273
      %v819 = vunpack.c.h.b16 %v273
      %v820 = vunpack.c.l.b16 %v274
      %v821 = vunpack.c.h.b16 %v274
      %v822 = vunpack.c.l.b16 %v275
      %v823 = vunpack.c.h.b16 %v275
      %v824 = vunpack.c.l.b16 %v276
      %v825 = vunpack.c.l.b16 %v277
      %v826 = vunpack.c.h.b16 %v277
      %v827 = vunpack.c.l.b16 %v278
      %v828 = vunpack.c.h.b16 %v278
      %v829 = vunpack.c.l.b16 %v279
      %v830 = vunpack.c.h.b16 %v279
      %v831 = vunpack.c.l.b16 %v280
      %v832 = vunpack.c.h.b16 %v280
      %v833 = vunpack.c.l.b16 %v281
      %v834 = vunpack.c.l.b16 %v282
      %v835 = vunpack.c.h.b16 %v282
      %v836 = vunpack.c.l.b16 %v283
      %v837 = vunpack.c.h.b16 %v283
      %v838 = vunpack.c.l.b16 %v284
      %v839 = vunpack.c.h.b16 %v284
      %v840 = vunpack.c.l.b16 %v285
      %v841 = vunpack.c.h.b16 %v285
      %v842 = vunpack.c.l.b16 %v286
      %v843 = vunpack.c.l.b16 %v287
      %v844 = vunpack.c.h.b16 %v287
      %v845 = vunpack.c.l.b16 %v288
      %v846 = vunpack.c.h.b16 %v288
      %v847 = vunpack.c.l.b16 %v289
      %v848 = vunpack.c.h.b16 %v289
      %v849 = vunpack.c.l.b16 %v290
      %v850 = vunpack.c.h.b16 %v290
      %v851 = vunpack.c.l.b16 %v291
      %v852 = vunpack.c.l.b16 %v292
      %v853 = vunpack.c.h.b16 %v292
      %v854 = vunpack.c.l.b16 %v293
      %v855 = vunpack.c.h.b16 %v293
      %v856 = vunpack.c.l.b16 %v294
      %v857 = vunpack.c.h.b16 %v294
      %v858 = vunpack.c.l.b16 %v295
      %v859 = vunpack.c.h.b16 %v295
      %v860 = vunpack.c.l.b16 %v296
      %v861 = vunpack.c.l.b16 %v297
      %v862 = vunpack.c.h.b16 %v297
      %v863 = vunpack.c.l.b16 %v298
      %v864 = vunpack.c.h.b16 %v298
      %v865 = vunpack.c.l.b16 %v299
      %v866 = vunpack.c.h.b16 %v299
      %v867 = vunpack.c.l.b16 %v300
      %v868 = vunpack.c.h.b16 %v300
      %v869 = vunpack.c.l.b16 %v301
      %v870 = vunpack.c.l.b16 %v302
      %v871 = vunpack.c.h.b16 %v302
      %v872 = vunpack.c.l.b16 %v303
      %v873 = vunpack.c.h.b16 %v303
      %v874 = vunpack.c.l.b16 %v304
      %v875 = vunpack.c.h.b16 %v304
      %v876 = vunpack.c.l.b16 %v305
      %v877 = vunpack.c.h.b16 %v305
      %v878 = vunpack.c.l.b16 %v306
      %v879 = vunpack.c.l.b16 %v307
      %v880 = vunpack.c.h.b16 %v307
      %v881 = vunpack.c.l.b16 %v308
      %v882 = vunpack.c.h.b16 %v308
      %v883 = vunpack.c.l.b16 %v309
      %v884 = vunpack.c.h.b16 %v309
      %v885 = vunpack.c.l.b16 %v310
      %v886 = vunpack.c.h.b16 %v310
      %v887 = vunpack.c.l.b16 %v311
      %v888 = vunpack.c.l.b16 %v312
      %v889 = vunpack.c.h.b16 %v312
      %v890 = vunpack.c.l.b16 %v313
      %v891 = vunpack.c.h.b16 %v313
      %v892 = vunpack.c.l.b16 %v314
      %v893 = vunpack.c.h.b16 %v314
      %v894 = vunpack.c.l.b16 %v315
      %v895 = vunpack.c.h.b16 %v315
      %v896 = vunpack.c.l.b16 %v316
      %v897 = vunpack.c.l.b16 %v317
      %v898 = vunpack.c.h.b16 %v317
      %v899 = vunpack.c.l.b16 %v318
      %v900 = vunpack.c.h.b16 %v318
      %v901 = vunpack.c.l.b16 %v319
      %v902 = vunpack.c.h.b16 %v319
      %v903 = vunpack.c.l.b16 %v320
      %v904 = vunpack.c.h.b16 %v320
      %v905 = vunpack.c.l.b16 %v321
      %v906 = vunpack.c.l.b16 %v322
      %v907 = vunpack.c.h.b16 %v322
      %v908 = vunpack.c.l.b16 %v323
      %v909 = vunpack.c.h.b16 %v323
      %v910 = vunpack.c.l.b16 %v324
      %v911 = vunpack.c.h.b16 %v324
      %v912 = vunpack.c.l.b16 %v325
      %v913 = vunpack.c.h.b16 %v325
      %v914 = vunpack.c.l.b16 %v326
      %v915 = vunpack.c.l.b16 %v327
      %v916 = vunpack.c.h.b16 %v327
      %v917 = vunpack.c.l.b16 %v328
      %v918 = vunpack.c.h.b16 %v328
      %v919 = vunpack.c.l.b16 %v329
      %v920 = vunpack.c.h.b16 %v329
      %v921 = vunpack.c.l.b16 %v330
      %v922 = vunpack.c.h.b16 %v330
      %v923 = vunpack.c.l.b16 %v331
      %v924 = vunpack.c.l.b16 %v332
      %v925 = vunpack.c.h.b16 %v332
      %v926 = vunpack.c.l.b16 %v333
      %v927 = vunpack.c.h.b16 %v333
      %v928 = vunpack.c.l.b16 %v334
      %v929 = vunpack.c.h.b16 %v334
      %v930 = vunpack.c.l.b16 %v335
      %v931 = vunpack.c.h.b16 %v335
      %v932 = vunpack.c.l.b16 %v336
      %v933 = vpack.c.b16 %v654, %v645
      %v934 = vpack.c.b16 %v655, %v646
      %v935 = vpack.c.b16 %v656, %v647
      %v936 = vpack.c.b16 %v657, %v648
      %v937 = vpack.c.b16 %v658, %v649
      %v938 = vpack.c.b16 %v659, %v650
      %v939 = vpack.c.b16 %v660, %v651
      %v940 = vpack.c.b16 %v661, %v652
      %v941 = vpack.c.b16 %v662, %v653
      %v942 = vpack.c.b16 %v672, %v663
      %v943 = vpack.c.b16 %v673, %v664
      %v944 = vpack.c.b16 %v674, %v665
      %v945 = vpack.c.b16 %v675, %v666
      %v946 = vpack.c.b16 %v676, %v667
      %v947 = vpack.c.b16 %v677, %v668
      %v948 = vpack.c.b16 %v678, %v669
      %v949 = vpack.c.b16 %v679, %v670
      %v950 = vpack.c.b16 %v680, %v671
      %v951 = vpack.c.b16 %v690, %v681
      %v952 = vpack.c.b16 %v691, %v682
      %v953 = vpack.c.b16 %v692, %v683
      %v954 = vpack.c.b16 %v693, %v684
      %v955 = vpack.c.b16 %v694, %v685
      %v956 = vpack.c.b16 %v695, %v686
      %v957 = vpack.c.b16 %v696, %v687
      %v958 = vpack.c.b16 %v697, %v688
      %v959 = vpack.c.b16 %v698, %v689
      %v960 = vpack.c.b16 %v708, %v699
      %v961 = vpack.c.b16 %v709, %v700
      %v962 = vpack.c.b16 %v710, %v701
      %v963 = vpack.c.b16 %v711, %v702
      %v964 = vpack.c.b16 %v712, %v703
      %v965 = vpack.c.b16 %v713, %v704
      %v966 = vpack.c.b16 %v714, %v705
      %v967 = vpack.c.b16 %v715, %v706
      %v968 = vpack.c.b16 %v716, %v707
      %v969 = vpack.c.b16 %v726, %v717
      %v970 = vpack.c.b16 %v727, %v718
      %v971 = vpack.c.b16 %v728, %v719
      %v972 = vpack.c.b16 %v729, %v720
      %v973 = vpack.c.b16 %v730, %v721
      %v974 = vpack.c.b16 %v731, %v722
      %v975 = vpack.c.b16 %v732, %v723
      %v976 = vpack.c.b16 %v733, %v724
      %v977 = vpack.c.b16 %v734, %v725
      %v978 = vpack.c.b16 %v744, %v735
      %v979 = vpack.c.b16 %v745, %v736
      %v980 = vpack.c.b16 %v746, %v737
      %v981 = vpack.c.b16 %v747, %v738
      %v982 = vpack.c.b16 %v748, %v739
      %v983 = vpack.c.b16 %v749, %v740
      %v984 = vpack.c.b16 %v750, %v741
      %v985 = vpack.c.b16 %v751, %v742
      %v986 = vpack.c.b16 %v752, %v743
      %v987 = vpack.c.b16 %v762, %v753
      %v988 = vpack.c.b16 %v763, %v754
      %v989 = vpack.c.b16 %v764, %v755
      %v990 = vpack.c.b16 %v765, %v756
      %v991 = vpack.c.b16 %v766, %v757
      %v992 = vpack.c.b16 %v767, %v758
      %v993 = vpack.c.b16 %v768, %v759
      %v994 = vpack.c.b16 %v769, %v760
      %v995 = vpack.c.b16 %v770, %v761
      %v996 = vpack.c.b16 %v780, %v771
      %v997 = vpack.c.b16 %v781, %v772
      %v998 = vpack.c.b16 %v782, %v773
      %v999 = vpack.c.b16 %v783, %v774
      %v1000 = vpack.c.b16 %v784, %v775
      %v1001 = vpack.c.b16 %v785, %v776
      %v1002 = vpack.c.b16 %v786, %v777
      %v1003 = vpack.c.b16 %v787, %v778
      %v1004 = vpack.c.b16 %v788, %v779
      %v1005 = vpack.c.b16 %v798, %v789
      %v1006 = vpack.c.b16 %v799, %v790
      %v1007 = vpack.c.b16 %v800, %v791
      %v1008 = vpack.c.b16 %v801, %v792
      %v1009 = vpack.c.b16 %v802, %v793
      %v1010 = vpack.c.b16 %v803, %v794
      %v1011 = vpack.c.b16 %v804, %v795
      %v1012 = vpack.c.b16 %v805, %v796
      %v1013 = vpack.c.b16 %v806, %v797
      %v1014 = vpack.c.b16 %v816, %v807
      %v1015 = vpack.c.b16 %v817, %v808
      %v1016 = vpack.c.b16 %v818, %v809
      %v1017 = vpack.c.b16 %v819, %v810
      %v1018 = vpack.c.b16 %v820, %v811
      %v1019 = vpack.c.b16 %v821, %v812
      %v1020 = vpack.c.b16 %v822, %v813
      %v1021 = vpack.c.b16 %v823, %v814
      %v1022 = vpack.c.b16 %v824, %v815
      %v1023 = vpack.c.b16 %v834, %v825
      %v1024 = vpack.c.b16 %v835, %v826
      %v1025 = vpack.c.b16 %v836, %v827
      %v1026 = vpack.c.b16 %v837, %v828
      %v1027 = vpack.c.b16 %v838, %v829
      %v1028 = vpack.c.b16 %v839, %v830
      %v1029 = vpack.c.b16 %v840, %v831
      %v1030 = vpack.c.b16 %v841, %v832
      %v1031 = vpack.c.b16 %v842, %v833
      %v1032 = vpack.c.b16 %v852, %v843
      %v1033 = vpack.c.b16 %v853, %v844
      %v1034 = vpack.c.b16 %v854, %v845
      %v1035 = vpack.c.b16 %v855, %v846
      %v1036 = vpack.c.b16 %v856, %v847
      %v1037 = vpack.c.b16 %v857, %v848
      %v1038 = vpack.c.b16 %v858, %v849
      %v1039 = vpack.c.b16 %v859, %v850
      %v1040 = vpack.c.b16 %v860, %v851
      %v1041 = vpack.c.b16 %v870, %v861
      %v1042 = vpack.c.b16 %v871, %v862
      %v1043 = vpack.c.b16 %v872, %v863
      %v1044 = vpack.c.b16 %v873, %v864
      %v1045 = vpack.c.b16 %v874, %v865
      %v1046 = vpack.c.b16 %v875, %v866
      %v1047 = vpack.c.b16 %v876, %v867
      %v1048 = vpack.c.b16 %v877, %v868
      %v1049 = vpack.c.b16 %v878, %v869
      %v1050 = vpack.c.b16 %v888, %v879
      %v1051 = vpack.c.b16 %v889, %v880
      %v1052 = vpack.c.b16 %v890, %v881
      %v1053 = vpack.c.b16 %v891, %v882
      %v1054 = vpack.c.b16 %v892, %v883
      %v1055 = vpack.c.b16 %v893, %v884
      %v1056 = vpack.c.b16 %v894, %v885
      %v1057 = vpack.c.b16 %v895, %v886
      %v1058 = vpack.c.b16 %v896, %v887
      %v1059 = vpack.c.b16 %v906, %v897
      %v1060 = vpack.c.b16 %v907, %v898
      %v1061 = vpack.c.b16 %v908, %v899
      %v1062 = vpack.c.b16 %v909, %v900
      %v1063 = vpack.c.b16 %v910, %v901
      %v1064 = vpack.c.b16 %v911, %v902
      %v1065 = vpack.c.b16 %v912, %v903
      %v1066 = vpack.c.b16 %v913, %v904
      %v1067 = vpack.c.b16 %v914, %v905
      %v1068 = vpack.c.b16 %v924, %v915
      %v1069 = vpack.c.b16 %v925, %v916
      %v1070 = vpack.c.b16 %v926, %v917
      %v1071 = vpack.c.b16 %v927, %v918
      %v1072 = vpack.c.b16 %v928, %v919
      %v1073 = vpack.c.b16 %v929, %v920
      %v1074 = vpack.c.b16 %v930, %v921
      %v1075 = vpack.c.b16 %v931, %v922
      %v1076 = vpack.c.b16 %v932, %v923
      %v1365 = vunpack.c.l.b16 %v337
      %v1366 = vunpack.c.l.b16 %v338
      %v1367 = vunpack.c.l.b16 %v339
      %v1368 = vunpack.c.l.b16 %v340
      %v1369 = vunpack.c.l.b16 %v341
      %v1370 = vunpack.c.l.b16 %v342
      %v1371 = vunpack.c.l.b16 %v343
      %v1372 = vunpack.c.l.b16 %v344
      %v1373 = vunpack.c.l.b16 %v345
      %v1374 = vunpack.c.l.b16 %v346
      %v1375 = vunpack.c.l.b16 %v347
      %v1376 = vunpack.c.l.b16 %v348
      %v1377 = vunpack.c.l.b16 %v349
      %v1378 = vunpack.c.l.b16 %v350
      %v1379 = vunpack.c.l.b16 %v351
      %v1380 = vunpack.c.l.b16 %v352
      %v1381 = vunpack.c.l.b16 %v353
      %v1382 = vunpack.c.l.b16 %v354
      %v1383 = vunpack.c.l.b16 %v355
      %v1384 = vunpack.c.l.b16 %v356
      %v1385 = vunpack.c.l.b16 %v357
      %v1386 = vunpack.c.l.b16 %v358
      %v1387 = vunpack.c.l.b16 %v359
      %v1388 = vunpack.c.l.b16 %v360
      %v1389 = vunpack.c.l.b16 %v361
      %v1390 = vunpack.c.l.b16 %v362
      %v1391 = vunpack.c.l.b16 %v363
      %v1392 = vunpack.c.l.b16 %v364
      %v1393 = vunpack.c.l.b16 %v365
      %v1394 = vunpack.c.l.b16 %v366
      %v1395 = vunpack.c.l.b16 %v367
      %v1396 = vunpack.c.l.b16 %v368
      %v1397 = vunpack.c.l.b16 %v369
      %v1398 = vunpack.c.l.b16 %v370
      %v1399 = vunpack.c.l.b16 %v371
      %v1400 = vunpack.c.l.b16 %v372
      %v1401 = vunpack.c.l.b16 %v373
      %v1402 = vunpack.c.l.b16 %v374
      %v1403 = vunpack.c.l.b16 %v375
      %v1404 = vunpack.c.l.b16 %v376
      %v1405 = vunpack.c.l.b16 %v377
      %v1406 = vunpack.c.l.b16 %v378
      %v1407 = vunpack.c.l.b16 %v379
      %v1408 = vunpack.c.l.b16 %v380
      %v1409 = vunpack.c.l.b16 %v381
      %v1410 = vunpack.c.l.b16 %v382
      %v1411 = vunpack.c.l.b16 %v383
      %v1412 = vunpack.c.l.b16 %v384
      %v1413 = vunpack.c.l.b16 %v385
      %v1414 = vunpack.c.l.b16 %v386
      %v1415 = vunpack.c.l.b16 %v387
      %v1416 = vunpack.c.l.b16 %v388
      %v1417 = vunpack.c.l.b16 %v389
      %v1418 = vunpack.c.l.b16 %v390
      %v1419 = vunpack.c.l.b16 %v391
      %v1420 = vunpack.c.l.b16 %v392
      %v1421 = vunpack.c.l.b16 %v393
      %v1422 = vunpack.c.l.b16 %v394
      %v1423 = vunpack.c.l.b16 %v395
      %v1424 = vunpack.c.l.b16 %v396
      %v1425 = vunpack.c.l.b16 %v397
      %v1426 = vunpack.c.l.b16 %v398
      %v1427 = vunpack.c.l.b16 %v399
      %v1428 = vunpack.c.l.b16 %v400
      %v1429 = vunpack.c.l.b16 %v401
      %v1430 = vunpack.c.l.b16 %v402
      %v1431 = vunpack.c.l.b16 %v403
      %v1432 = vunpack.c.l.b16 %v404
      %v1433 = vunpack.c.l.b16 %v405
      %v1434 = vunpack.c.l.b16 %v406
      %v1435 = vunpack.c.l.b16 %v407
      %v1436 = vunpack.c.l.b16 %v408
      %v1437 = vunpack.c.l.b16 %v409
      %v1438 = vunpack.c.l.b16 %v410
      %v1439 = vunpack.c.l.b16 %v411
      %v1440 = vunpack.c.l.b16 %v412
      %v1441 = vunpack.c.l.b16 %v413
      %v1442 = vunpack.c.l.b16 %v414
      %v1443 = vunpack.c.l.b16 %v415
      %v1444 = vunpack.c.l.b16 %v416
      %v1445 = vunpack.c.l.b16 %v417
      %v1446 = vunpack.c.l.b16 %v418
      %v1447 = vunpack.c.l.b16 %v419
      %v1448 = vunpack.c.l.b16 %v420
      %v1449 = vunpack.c.l.b16 %v421
      %v1450 = vunpack.c.l.b16 %v422
      %v1451 = vunpack.c.l.b16 %v423
      %v1452 = vunpack.c.l.b16 %v424
      %v1453 = vunpack.c.l.b16 %v425
      %v1454 = vunpack.c.l.b16 %v426
      %v1455 = vunpack.c.l.b16 %v427
      %v1456 = vunpack.c.l.b16 %v428
      %v1457 = vunpack.c.l.b16 %v429
      %v1458 = vunpack.c.l.b16 %v430
      %v1459 = vunpack.c.l.b16 %v431
      %v1460 = vunpack.c.l.b16 %v432
      %v1461 = vunpack.c.l.b16 %v433
      %v1462 = vunpack.c.l.b16 %v434
      %v1463 = vunpack.c.l.b16 %v435
      %v1464 = vunpack.c.l.b16 %v436
      %v1465 = vunpack.c.l.b16 %v437
      %v1466 = vunpack.c.l.b16 %v438
      %v1467 = vunpack.c.l.b16 %v439
      %v1468 = vunpack.c.l.b16 %v440
      %v1469 = vunpack.c.l.b16 %v441
      %v1470 = vunpack.c.l.b16 %v442
      %v1471 = vunpack.c.l.b16 %v443
      %v1472 = vunpack.c.l.b16 %v444
      %v1473 = vunpack.c.l.b16 %v445
      %v1474 = vunpack.c.l.b16 %v446
      %v1475 = vunpack.c.l.b16 %v447
      %v1476 = vunpack.c.l.b16 %v448
      %v1477 = vunpack.c.l.b16 %v449
      %v1478 = vunpack.c.l.b16 %v450
      %v1479 = vunpack.c.l.b16 %v451
      %v1480 = vunpack.c.l.b16 %v452
      %v1481 = vunpack.c.l.b16 %v453
      %v1482 = vunpack.c.l.b16 %v454
      %v1483 = vunpack.c.l.b16 %v455
      %v1484 = vunpack.c.l.b16 %v456
      %v1485 = vunpack.c.l.b16 %v457
      %v1486 = vunpack.c.l.b16 %v458
      %v1487 = vunpack.c.l.b16 %v459
      %v1488 = vunpack.c.l.b16 %v460
      %v1489 = vunpack.c.l.b16 %v461
      %v1490 = vunpack.c.l.b16 %v462
      %v1491 = vunpack.c.l.b16 %v463
      %v1492 = vunpack.c.l.b16 %v464
      %v1493 = vunpack.c.l.b16 %v465
      %v1494 = vunpack.c.l.b16 %v466
      %v1495 = vunpack.c.l.b16 %v467
      %v1496 = vunpack.c.l.b16 %v468
      %v1497 = vunpack.c.l.b16 %v469
      %v1498 = vunpack.c.l.b16 %v470
      %v1499 = vunpack.c.l.b16 %v471
      %v1500 = vunpack.c.l.b16 %v472
      %v1501 = vunpack.c.l.b16 %v473
      %v1502 = vunpack.c.l.b16 %v474
      %v1503 = vunpack.c.l.b16 %v475
      %v1504 = vunpack.c.l.b16 %v476
      %v1505 = vunpack.c.l.b16 %v477
      %v1506 = vunpack.c.l.b16 %v478
      %v1507 = vunpack.c.l.b16 %v479
      %v1508 = vunpack.c.l.b16 %v480
      %v1509 = vpack.c.b16 %v1366, %v1365
      %v1510 = vpack.c.b16 %v1368, %v1367
      %v1511 = vpack.c.b16 %v1370, %v1369
      %v1512 = vpack.c.b16 %v1372, %v1371
      %v1513 = vpack.c.b16 %v1374, %v1373
      %v1514 = vpack.c.b16 %v1376, %v1375
      %v1515 = vpack.c.b16 %v1378, %v1377
      %v1516 = vpack.c.b16 %v1380, %v1379
      %v1517 = vpack.c.b16 %v1382, %v1381
      %v1518 = vpack.c.b16 %v1384, %v1383
      %v1519 = vpack.c.b16 %v1386, %v1385
      %v1520 = vpack.c.b16 %v1388, %v1387
      %v1521 = vpack.c.b16 %v1390, %v1389
      %v1522 = vpack.c.b16 %v1392, %v1391
      %v1523 = vpack.c.b16 %v1394, %v1393
      %v1524 = vpack.c.b16 %v1396, %v1395
      %v1525 = vpack.c.b16 %v1398, %v1397
      %v1526 = vpack.c.b16 %v1400, %v1399
      %v1527 = vpack.c.b16 %v1402, %v1401
      %v1528 = vpack.c.b16 %v1404, %v1403
      %v1529 = vpack.c.b16 %v1406, %v1405
      %v1530 = vpack.c.b16 %v1408, %v1407
      %v1531 = vpack.c.b16 %v1410, %v1409
      %v1532 = vpack.c.b16 %v1412, %v1411
      %v1533 = vpack.c.b16 %v1414, %v1413
      %v1534 = vpack.c.b16 %v1416, %v1415
      %v1535 = vpack.c.b16 %v1418, %v1417
      %v1536 = vpack.c.b16 %v1420, %v1419
      %v1537 = vpack.c.b16 %v1422, %v1421
      %v1538 = vpack.c.b16 %v1424, %v1423
      %v1539 = vpack.c.b16 %v1426, %v1425
      %v1540 = vpack.c.b16 %v1428, %v1427
      %v1541 = vpack.c.b16 %v1430, %v1429
      %v1542 = vpack.c.b16 %v1432, %v1431
      %v1543 = vpack.c.b16 %v1434, %v1433
      %v1544 = vpack.c.b16 %v1436, %v1435
      %v1545 = vpack.c.b16 %v1438, %v1437
      %v1546 = vpack.c.b16 %v1440, %v1439
      %v1547 = vpack.c.b16 %v1442, %v1441
      %v1548 = vpack.c.b16 %v1444, %v1443
      %v1549 = vpack.c.b16 %v1446, %v1445
      %v1550 = vpack.c.b16 %v1448, %v1447
      %v1551 = vpack.c.b16 %v1450, %v1449
      %v1552 = vpack.c.b16 %v1452, %v1451
      %v1553 = vpack.c.b16 %v1454, %v1453
      %v1554 = vpack.c.b16 %v1456, %v1455
      %v1555 = vpack.c.b16 %v1458, %v1457
      %v1556 = vpack.c.b16 %v1460, %v1459
      %v1557 = vpack.c.b16 %v1462, %v1461
      %v1558 = vpack.c.b16 %v1464, %v1463
      %v1559 = vpack.c.b16 %v1466, %v1465
      %v1560 = vpack.c.b16 %v1468, %v1467
      %v1561 = vpack.c.b16 %v1470, %v1469
      %v1562 = vpack.c.b16 %v1472, %v1471
      %v1563 = vpack.c.b16 %v1474, %v1473
      %v1564 = vpack.c.b16 %v1476, %v1475
      %v1565 = vpack.c.b16 %v1478, %v1477
      %v1566 = vpack.c.b16 %v1480, %v1479
      %v1567 = vpack.c.b16 %v1482, %v1481
      %v1568 = vpack.c.b16 %v1484, %v1483
      %v1569 = vpack.c.b16 %v1486, %v1485
      %v1570 = vpack.c.b16 %v1488, %v1487
      %v1571 = vpack.c.b16 %v1490, %v1489
      %v1572 = vpack.c.b16 %v1492, %v1491
      %v1573 = vpack.c.b16 %v1494, %v1493
      %v1574 = vpack.c.b16 %v1496, %v1495
      %v1575 = vpack.c.b16 %v1498, %v1497
      %v1576 = vpack.c.b16 %v1500, %v1499
      %v1577 = vpack.c.b16 %v1502, %v1501
      %v1578 = vpack.c.b16 %v1504, %v1503
      %v1579 = vpack.c.b16 %v1506, %v1505
      %v1580 = vpack.c.b16 %v1508, %v1507
      %1653 = vmatpush.bf16.msra.mxu0 %v1516
      %1654 = vmatpush.bf16.msra.mxu0 %v1515
      %1655 = vmatpush.bf16.msra.mxu0 %v1514
      %1656 = vmatpush.bf16.msra.mxu0 %v1513
      %1657 = vmatpush.bf16.msra.mxu0 %v1512
      %1658 = vmatpush.bf16.msra.mxu0 %v1511
      %1659 = vmatpush.bf16.msra.mxu0 %v1510
      %1660 = vmatpush.bf16.msra.mxu0 %v1509
      %1661 = vmatmul.bf16.gmra.mxu0 %v933
      %v1662 = vpop.f32.mrf.mxu0
      %v1663 = vadd.f32 %v483, %v1662
      %v1664 = vpop.f32.mrf.mxu0
      %v1665 = vadd.f32 %v483, %v1664
      %1666 = vmatmul.bf16.gmra.mxu0 %v942
      %v1667 = vpop.f32.mrf.mxu0
      %v1668 = vadd.f32 %v483, %v1667
      %v1669 = vpop.f32.mrf.mxu0
      %v1670 = vadd.f32 %v483, %v1669
      %1671 = vmatmul.bf16.gmra.mxu0 %v951
      %v1672 = vpop.f32.mrf.mxu0
      %v1673 = vadd.f32 %v483, %v1672
      %v1674 = vpop.f32.mrf.mxu0
      %v1675 = vadd.f32 %v483, %v1674
      %1676 = vmatmul.bf16.gmra.mxu0 %v960
      %v1677 = vpop.f32.mrf.mxu0
      %v1678 = vadd.f32 %v483, %v1677
      %v1679 = vpop.f32.mrf.mxu0
      %v1680 = vadd.f32 %v483, %v1679
      %1681 = vmatmul.bf16.gmra.mxu0 %v969
      %v1682 = vpop.f32.mrf.mxu0
      %v1683 = vadd.f32 %v483, %v1682
      %v1684 = vpop.f32.mrf.mxu0
      %v1685 = vadd.f32 %v483, %v1684
      %1686 = vmatmul.bf16.gmra.mxu0 %v978
      %v1687 = vpop.f32.mrf.mxu0
      %v1688 = vadd.f32 %v483, %v1687
      %v1689 = vpop.f32.mrf.mxu0
      %v1690 = vadd.f32 %v483, %v1689
      %1691 = vmatmul.bf16.gmra.mxu0 %v987
      %v1692 = vpop.f32.mrf.mxu0
      %v1693 = vadd.f32 %v483, %v1692
      %v1694 = vpop.f32.mrf.mxu0
      %v1695 = vadd.f32 %v483, %v1694
      %1696 = vmatmul.bf16.gmra.mxu0 %v996
      %v1697 = vpop.f32.mrf.mxu0
      %v1698 = vadd.f32 %v483, %v1697
      %v1699 = vpop.f32.mrf.mxu0
      %v1700 = vadd.f32 %v483, %v1699
      %1701 = vmatmul.bf16.gmra.mxu0 %v1005
      %v1702 = vpop.f32.mrf.mxu0
      %v1703 = vadd.f32 %v483, %v1702
      %v1704 = vpop.f32.mrf.mxu0
      %v1705 = vadd.f32 %v483, %v1704
      %1706 = vmatmul.bf16.gmra.mxu0 %v1014
      %v1707 = vpop.f32.mrf.mxu0
      %v1708 = vadd.f32 %v483, %v1707
      %v1709 = vpop.f32.mrf.mxu0
      %v1710 = vadd.f32 %v483, %v1709
      %1711 = vmatmul.bf16.gmra.mxu0 %v1023
      %v1712 = vpop.f32.mrf.mxu0
      %v1713 = vadd.f32 %v483, %v1712
      %v1714 = vpop.f32.mrf.mxu0
      %v1715 = vadd.f32 %v483, %v1714
      %1716 = vmatmul.bf16.gmra.mxu0 %v1032
      %v1717 = vpop.f32.mrf.mxu0
      %v1718 = vadd.f32 %v483, %v1717
      %v1719 = vpop.f32.mrf.mxu0
      %v1720 = vadd.f32 %v483, %v1719
      %1721 = vmatmul.bf16.gmra.mxu0 %v1041
      %v1722 = vpop.f32.mrf.mxu0
      %v1723 = vadd.f32 %v483, %v1722
      %v1724 = vpop.f32.mrf.mxu0
      %v1725 = vadd.f32 %v483, %v1724
      %1726 = vmatmul.bf16.gmra.mxu0 %v1050
      %v1727 = vpop.f32.mrf.mxu0
      %v1728 = vadd.f32 %v483, %v1727
      %v1729 = vpop.f32.mrf.mxu0
      %v1730 = vadd.f32 %v483, %v1729
      %1731 = vmatmul.bf16.gmra.mxu0 %v1059
      %v1732 = vpop.f32.mrf.mxu0
      %v1733 = vadd.f32 %v483, %v1732
      %v1734 = vpop.f32.mrf.mxu0
      %v1735 = vadd.f32 %v483, %v1734
      %1736 = vmatmul.bf16.gmra.mxu0 %v1068
      %v1737 = vpop.f32.mrf.mxu0
      %v1738 = vadd.f32 %v483, %v1737
      %v1739 = vpop.f32.mrf.mxu0
      %v1740 = vadd.f32 %v483, %v1739
      %1741 = vdwg.mxu0
      %1742 = vmatpush.bf16.msra.mxu0 %v1524
      %1743 = vmatpush.bf16.msra.mxu0 %v1523
      %1744 = vmatpush.bf16.msra.mxu0 %v1522
      %1745 = vmatpush.bf16.msra.mxu0 %v1521
      %1746 = vmatpush.bf16.msra.mxu0 %v1520
      %1747 = vmatpush.bf16.msra.mxu0 %v1519
      %1748 = vmatpush.bf16.msra.mxu0 %v1518
      %1749 = vmatpush.bf16.msra.mxu0 %v1517
      %1750 = vmatmul.bf16.gmra.mxu0 %v934
      %v1751 = vpop.f32.mrf.mxu0
      %v1752 = vadd.f32 %v1663, %v1751
      %v1753 = vpop.f32.mrf.mxu0
      %v1754 = vadd.f32 %v1665, %v1753
      %1755 = vmatmul.bf16.gmra.mxu0 %v943
      %v1756 = vpop.f32.mrf.mxu0
      %v1757 = vadd.f32 %v1668, %v1756
      %v1758 = vpop.f32.mrf.mxu0
      %v1759 = vadd.f32 %v1670, %v1758
      %1760 = vmatmul.bf16.gmra.mxu0 %v952
      %v1761 = vpop.f32.mrf.mxu0
      %v1762 = vadd.f32 %v1673, %v1761
      %v1763 = vpop.f32.mrf.mxu0
      %v1764 = vadd.f32 %v1675, %v1763
      %1765 = vmatmul.bf16.gmra.mxu0 %v961
      %v1766 = vpop.f32.mrf.mxu0
      %v1767 = vadd.f32 %v1678, %v1766
      %v1768 = vpop.f32.mrf.mxu0
      %v1769 = vadd.f32 %v1680, %v1768
      %1770 = vmatmul.bf16.gmra.mxu0 %v970
      %v1771 = vpop.f32.mrf.mxu0
      %v1772 = vadd.f32 %v1683, %v1771
      %v1773 = vpop.f32.mrf.mxu0
      %v1774 = vadd.f32 %v1685, %v1773
      %1775 = vmatmul.bf16.gmra.mxu0 %v979
      %v1776 = vpop.f32.mrf.mxu0
      %v1777 = vadd.f32 %v1688, %v1776
      %v1778 = vpop.f32.mrf.mxu0
      %v1779 = vadd.f32 %v1690, %v1778
      %1780 = vmatmul.bf16.gmra.mxu0 %v988
      %v1781 = vpop.f32.mrf.mxu0
      %v1782 = vadd.f32 %v1693, %v1781
      %v1783 = vpop.f32.mrf.mxu0
      %v1784 = vadd.f32 %v1695, %v1783
      %1785 = vmatmul.bf16.gmra.mxu0 %v997
      %v1786 = vpop.f32.mrf.mxu0
      %v1787 = vadd.f32 %v1698, %v1786
      %v1788 = vpop.f32.mrf.mxu0
      %v1789 = vadd.f32 %v1700, %v1788
      %1790 = vmatmul.bf16.gmra.mxu0 %v1006
      %v1791 = vpop.f32.mrf.mxu0
      %v1792 = vadd.f32 %v1703, %v1791
      %v1793 = vpop.f32.mrf.mxu0
      %v1794 = vadd.f32 %v1705, %v1793
      %1795 = vmatmul.bf16.gmra.mxu0 %v1015
      %v1796 = vpop.f32.mrf.mxu0
      %v1797 = vadd.f32 %v1708, %v1796
      %v1798 = vpop.f32.mrf.mxu0
      %v1799 = vadd.f32 %v1710, %v1798
      %1800 = vmatmul.bf16.gmra.mxu0 %v1024
      %v1801 = vpop.f32.mrf.mxu0
      %v1802 = vadd.f32 %v1713, %v1801
      %v1803 = vpop.f32.mrf.mxu0
      %v1804 = vadd.f32 %v1715, %v1803
      %1805 = vmatmul.bf16.gmra.mxu0 %v1033
      %v1806 = vpop.f32.mrf.mxu0
      %v1807 = vadd.f32 %v1718, %v1806
      %v1808 = vpop.f32.mrf.mxu0
      %v1809 = vadd.f32 %v1720, %v1808
      %1810 = vmatmul.bf16.gmra.mxu0 %v1042
      %v1811 = vpop.f32.mrf.mxu0
      %v1812 = vadd.f32 %v1723, %v1811
      %v1813 = vpop.f32.mrf.mxu0
      %v1814 = vadd.f32 %v1725, %v1813
      %1815 = vmatmul.bf16.gmra.mxu0 %v1051
      %v1816 = vpop.f32.mrf.mxu0
      %v1817 = vadd.f32 %v1728, %v1816
      %v1818 = vpop.f32.mrf.mxu0
      %v1819 = vadd.f32 %v1730, %v1818
      %1820 = vmatmul.bf16.gmra.mxu0 %v1060
      %v1821 = vpop.f32.mrf.mxu0
      %v1822 = vadd.f32 %v1733, %v1821
      %v1823 = vpop.f32.mrf.mxu0
      %v1824 = vadd.f32 %v1735, %v1823
      %1825 = vmatmul.bf16.gmra.mxu0 %v1069
      %v1826 = vpop.f32.mrf.mxu0
      %v1827 = vadd.f32 %v1738, %v1826
      %v1828 = vpop.f32.mrf.mxu0
      %v1829 = vadd.f32 %v1740, %v1828
      %1830 = vdwg.mxu0
      %1831 = vmatpush.bf16.msra.mxu0 %v1532
      %1832 = vmatpush.bf16.msra.mxu0 %v1531
      %1833 = vmatpush.bf16.msra.mxu0 %v1530
      %1834 = vmatpush.bf16.msra.mxu0 %v1529
      %1835 = vmatpush.bf16.msra.mxu0 %v1528
      %1836 = vmatpush.bf16.msra.mxu0 %v1527
      %1837 = vmatpush.bf16.msra.mxu0 %v1526
      %1838 = vmatpush.bf16.msra.mxu0 %v1525
      %1839 = vmatmul.bf16.gmra.mxu0 %v935
      %v1840 = vpop.f32.mrf.mxu0
      %v1841 = vadd.f32 %v1752, %v1840
      %v1842 = vpop.f32.mrf.mxu0
      %v1843 = vadd.f32 %v1754, %v1842
      %1844 = vmatmul.bf16.gmra.mxu0 %v944
      %v1845 = vpop.f32.mrf.mxu0
      %v1846 = vadd.f32 %v1757, %v1845
      %v1847 = vpop.f32.mrf.mxu0
      %v1848 = vadd.f32 %v1759, %v1847
      %1849 = vmatmul.bf16.gmra.mxu0 %v953
      %v1850 = vpop.f32.mrf.mxu0
      %v1851 = vadd.f32 %v1762, %v1850
      %v1852 = vpop.f32.mrf.mxu0
      %v1853 = vadd.f32 %v1764, %v1852
      %1854 = vmatmul.bf16.gmra.mxu0 %v962
      %v1855 = vpop.f32.mrf.mxu0
      %v1856 = vadd.f32 %v1767, %v1855
      %v1857 = vpop.f32.mrf.mxu0
      %v1858 = vadd.f32 %v1769, %v1857
      %1859 = vmatmul.bf16.gmra.mxu0 %v971
      %v1860 = vpop.f32.mrf.mxu0
      %v1861 = vadd.f32 %v1772, %v1860
      %v1862 = vpop.f32.mrf.mxu0
      %v1863 = vadd.f32 %v1774, %v1862
      %1864 = vmatmul.bf16.gmra.mxu0 %v980
      %v1865 = vpop.f32.mrf.mxu0
      %v1866 = vadd.f32 %v1777, %v1865
      %v1867 = vpop.f32.mrf.mxu0
      %v1868 = vadd.f32 %v1779, %v1867
      %1869 = vmatmul.bf16.gmra.mxu0 %v989
      %v1870 = vpop.f32.mrf.mxu0
      %v1871 = vadd.f32 %v1782, %v1870
      %v1872 = vpop.f32.mrf.mxu0
      %v1873 = vadd.f32 %v1784, %v1872
      %1874 = vmatmul.bf16.gmra.mxu0 %v998
      %v1875 = vpop.f32.mrf.mxu0
      %v1876 = vadd.f32 %v1787, %v1875
      %v1877 = vpop.f32.mrf.mxu0
      %v1878 = vadd.f32 %v1789, %v1877
      %1879 = vmatmul.bf16.gmra.mxu0 %v1007
      %v1880 = vpop.f32.mrf.mxu0
      %v1881 = vadd.f32 %v1792, %v1880
      %v1882 = vpop.f32.mrf.mxu0
      %v1883 = vadd.f32 %v1794, %v1882
      %1884 = vmatmul.bf16.gmra.mxu0 %v1016
      %v1885 = vpop.f32.mrf.mxu0
      %v1886 = vadd.f32 %v1797, %v1885
      %v1887 = vpop.f32.mrf.mxu0
      %v1888 = vadd.f32 %v1799, %v1887
      %1889 = vmatmul.bf16.gmra.mxu0 %v1025
      %v1890 = vpop.f32.mrf.mxu0
      %v1891 = vadd.f32 %v1802, %v1890
      %v1892 = vpop.f32.mrf.mxu0
      %v1893 = vadd.f32 %v1804, %v1892
      %1894 = vmatmul.bf16.gmra.mxu0 %v1034
      %v1895 = vpop.f32.mrf.mxu0
      %v1896 = vadd.f32 %v1807, %v1895
      %v1897 = vpop.f32.mrf.mxu0
      %v1898 = vadd.f32 %v1809, %v1897
      %1899 = vmatmul.bf16.gmra.mxu0 %v1043
      %v1900 = vpop.f32.mrf.mxu0
      %v1901 = vadd.f32 %v1812, %v1900
      %v1902 = vpop.f32.mrf.mxu0
      %v1903 = vadd.f32 %v1814, %v1902
      %1904 = vmatmul.bf16.gmra.mxu0 %v1052
      %v1905 = vpop.f32.mrf.mxu0
      %v1906 = vadd.f32 %v1817, %v1905
      %v1907 = vpop.f32.mrf.mxu0
      %v1908 = vadd.f32 %v1819, %v1907
      %1909 = vmatmul.bf16.gmra.mxu0 %v1061
      %v1910 = vpop.f32.mrf.mxu0
      %v1911 = vadd.f32 %v1822, %v1910
      %v1912 = vpop.f32.mrf.mxu0
      %v1913 = vadd.f32 %v1824, %v1912
      %1914 = vmatmul.bf16.gmra.mxu0 %v1070
      %v1915 = vpop.f32.mrf.mxu0
      %v1916 = vadd.f32 %v1827, %v1915
      %v1917 = vpop.f32.mrf.mxu0
      %v1918 = vadd.f32 %v1829, %v1917
      %1919 = vdwg.mxu0
      %1920 = vmatpush.bf16.msra.mxu0 %v1540
      %1921 = vmatpush.bf16.msra.mxu0 %v1539
      %1922 = vmatpush.bf16.msra.mxu0 %v1538
      %1923 = vmatpush.bf16.msra.mxu0 %v1537
      %1924 = vmatpush.bf16.msra.mxu0 %v1536
      %1925 = vmatpush.bf16.msra.mxu0 %v1535
      %1926 = vmatpush.bf16.msra.mxu0 %v1534
      %1927 = vmatpush.bf16.msra.mxu0 %v1533
      %1928 = vmatmul.bf16.gmra.mxu0 %v936
      %v1929 = vpop.f32.mrf.mxu0
      %v1930 = vadd.f32 %v1841, %v1929
      %v1931 = vpop.f32.mrf.mxu0
      %v1932 = vadd.f32 %v1843, %v1931
      %1933 = vmatmul.bf16.gmra.mxu0 %v945
      %v1934 = vpop.f32.mrf.mxu0
      %v1935 = vadd.f32 %v1846, %v1934
      %v1936 = vpop.f32.mrf.mxu0
      %v1937 = vadd.f32 %v1848, %v1936
      %1938 = vmatmul.bf16.gmra.mxu0 %v954
      %v1939 = vpop.f32.mrf.mxu0
      %v1940 = vadd.f32 %v1851, %v1939
      %v1941 = vpop.f32.mrf.mxu0
      %v1942 = vadd.f32 %v1853, %v1941
      %1943 = vmatmul.bf16.gmra.mxu0 %v963
      %v1944 = vpop.f32.mrf.mxu0
      %v1945 = vadd.f32 %v1856, %v1944
      %v1946 = vpop.f32.mrf.mxu0
      %v1947 = vadd.f32 %v1858, %v1946
      %1948 = vmatmul.bf16.gmra.mxu0 %v972
      %v1949 = vpop.f32.mrf.mxu0
      %v1950 = vadd.f32 %v1861, %v1949
      %v1951 = vpop.f32.mrf.mxu0
      %v1952 = vadd.f32 %v1863, %v1951
      %1953 = vmatmul.bf16.gmra.mxu0 %v981
      %v1954 = vpop.f32.mrf.mxu0
      %v1955 = vadd.f32 %v1866, %v1954
      %v1956 = vpop.f32.mrf.mxu0
      %v1957 = vadd.f32 %v1868, %v1956
      %1958 = vmatmul.bf16.gmra.mxu0 %v990
      %v1959 = vpop.f32.mrf.mxu0
      %v1960 = vadd.f32 %v1871, %v1959
      %v1961 = vpop.f32.mrf.mxu0
      %v1962 = vadd.f32 %v1873, %v1961
      %1963 = vmatmul.bf16.gmra.mxu0 %v999
      %v1964 = vpop.f32.mrf.mxu0
      %v1965 = vadd.f32 %v1876, %v1964
      %v1966 = vpop.f32.mrf.mxu0
      %v1967 = vadd.f32 %v1878, %v1966
      %1968 = vmatmul.bf16.gmra.mxu0 %v1008
      %v1969 = vpop.f32.mrf.mxu0
      %v1970 = vadd.f32 %v1881, %v1969
      %v1971 = vpop.f32.mrf.mxu0
      %v1972 = vadd.f32 %v1883, %v1971
      %1973 = vmatmul.bf16.gmra.mxu0 %v1017
      %v1974 = vpop.f32.mrf.mxu0
      %v1975 = vadd.f32 %v1886, %v1974
      %v1976 = vpop.f32.mrf.mxu0
      %v1977 = vadd.f32 %v1888, %v1976
      %1978 = vmatmul.bf16.gmra.mxu0 %v1026
      %v1979 = vpop.f32.mrf.mxu0
      %v1980 = vadd.f32 %v1891, %v1979
      %v1981 = vpop.f32.mrf.mxu0
      %v1982 = vadd.f32 %v1893, %v1981
      %1983 = vmatmul.bf16.gmra.mxu0 %v1035
      %v1984 = vpop.f32.mrf.mxu0
      %v1985 = vadd.f32 %v1896, %v1984
      %v1986 = vpop.f32.mrf.mxu0
      %v1987 = vadd.f32 %v1898, %v1986
      %1988 = vmatmul.bf16.gmra.mxu0 %v1044
      %v1989 = vpop.f32.mrf.mxu0
      %v1990 = vadd.f32 %v1901, %v1989
      %v1991 = vpop.f32.mrf.mxu0
      %v1992 = vadd.f32 %v1903, %v1991
      %1993 = vmatmul.bf16.gmra.mxu0 %v1053
      %v1994 = vpop.f32.mrf.mxu0
      %v1995 = vadd.f32 %v1906, %v1994
      %v1996 = vpop.f32.mrf.mxu0
      %v1997 = vadd.f32 %v1908, %v1996
      %1998 = vmatmul.bf16.gmra.mxu0 %v1062
      %v1999 = vpop.f32.mrf.mxu0
      %v2000 = vadd.f32 %v1911, %v1999
      %v2001 = vpop.f32.mrf.mxu0
      %v2002 = vadd.f32 %v1913, %v2001
      %2003 = vmatmul.bf16.gmra.mxu0 %v1071
      %v2004 = vpop.f32.mrf.mxu0
      %v2005 = vadd.f32 %v1916, %v2004
      %v2006 = vpop.f32.mrf.mxu0
      %v2007 = vadd.f32 %v1918, %v2006
      %2008 = vdwg.mxu0
      %2009 = vmatpush.bf16.msra.mxu0 %v1548
      %2010 = vmatpush.bf16.msra.mxu0 %v1547
      %2011 = vmatpush.bf16.msra.mxu0 %v1546
      %2012 = vmatpush.bf16.msra.mxu0 %v1545
      %2013 = vmatpush.bf16.msra.mxu0 %v1544
      %2014 = vmatpush.bf16.msra.mxu0 %v1543
      %2015 = vmatpush.bf16.msra.mxu0 %v1542
      %2016 = vmatpush.bf16.msra.mxu0 %v1541
      %2017 = vmatmul.bf16.gmra.mxu0 %v937
      %v2018 = vpop.f32.mrf.mxu0
      %v2019 = vadd.f32 %v1930, %v2018
      %v2020 = vpop.f32.mrf.mxu0
      %v2021 = vadd.f32 %v1932, %v2020
      %2022 = vmatmul.bf16.gmra.mxu0 %v946
      %v2023 = vpop.f32.mrf.mxu0
      %v2024 = vadd.f32 %v1935, %v2023
      %v2025 = vpop.f32.mrf.mxu0
      %v2026 = vadd.f32 %v1937, %v2025
      %2027 = vmatmul.bf16.gmra.mxu0 %v955
      %v2028 = vpop.f32.mrf.mxu0
      %v2029 = vadd.f32 %v1940, %v2028
      %v2030 = vpop.f32.mrf.mxu0
      %v2031 = vadd.f32 %v1942, %v2030
      %2032 = vmatmul.bf16.gmra.mxu0 %v964
      %v2033 = vpop.f32.mrf.mxu0
      %v2034 = vadd.f32 %v1945, %v2033
      %v2035 = vpop.f32.mrf.mxu0
      %v2036 = vadd.f32 %v1947, %v2035
      %2037 = vmatmul.bf16.gmra.mxu0 %v973
      %v2038 = vpop.f32.mrf.mxu0
      %v2039 = vadd.f32 %v1950, %v2038
      %v2040 = vpop.f32.mrf.mxu0
      %v2041 = vadd.f32 %v1952, %v2040
      %2042 = vmatmul.bf16.gmra.mxu0 %v982
      %v2043 = vpop.f32.mrf.mxu0
      %v2044 = vadd.f32 %v1955, %v2043
      %v2045 = vpop.f32.mrf.mxu0
      %v2046 = vadd.f32 %v1957, %v2045
      %2047 = vmatmul.bf16.gmra.mxu0 %v991
      %v2048 = vpop.f32.mrf.mxu0
      %v2049 = vadd.f32 %v1960, %v2048
      %v2050 = vpop.f32.mrf.mxu0
      %v2051 = vadd.f32 %v1962, %v2050
      %2052 = vmatmul.bf16.gmra.mxu0 %v1000
      %v2053 = vpop.f32.mrf.mxu0
      %v2054 = vadd.f32 %v1965, %v2053
      %v2055 = vpop.f32.mrf.mxu0
      %v2056 = vadd.f32 %v1967, %v2055
      %2057 = vmatmul.bf16.gmra.mxu0 %v1009
      %v2058 = vpop.f32.mrf.mxu0
      %v2059 = vadd.f32 %v1970, %v2058
      %v2060 = vpop.f32.mrf.mxu0
      %v2061 = vadd.f32 %v1972, %v2060
      %2062 = vmatmul.bf16.gmra.mxu0 %v1018
      %v2063 = vpop.f32.mrf.mxu0
      %v2064 = vadd.f32 %v1975, %v2063
      %v2065 = vpop.f32.mrf.mxu0
      %v2066 = vadd.f32 %v1977, %v2065
      %2067 = vmatmul.bf16.gmra.mxu0 %v1027
      %v2068 = vpop.f32.mrf.mxu0
      %v2069 = vadd.f32 %v1980, %v2068
      %v2070 = vpop.f32.mrf.mxu0
      %v2071 = vadd.f32 %v1982, %v2070
      %2072 = vmatmul.bf16.gmra.mxu0 %v1036
      %v2073 = vpop.f32.mrf.mxu0
      %v2074 = vadd.f32 %v1985, %v2073
      %v2075 = vpop.f32.mrf.mxu0
      %v2076 = vadd.f32 %v1987, %v2075
      %2077 = vmatmul.bf16.gmra.mxu0 %v1045
      %v2078 = vpop.f32.mrf.mxu0
      %v2079 = vadd.f32 %v1990, %v2078
      %v2080 = vpop.f32.mrf.mxu0
      %v2081 = vadd.f32 %v1992, %v2080
      %2082 = vmatmul.bf16.gmra.mxu0 %v1054
      %v2083 = vpop.f32.mrf.mxu0
      %v2084 = vadd.f32 %v1995, %v2083
      %v2085 = vpop.f32.mrf.mxu0
      %v2086 = vadd.f32 %v1997, %v2085
      %2087 = vmatmul.bf16.gmra.mxu0 %v1063
      %v2088 = vpop.f32.mrf.mxu0
      %v2089 = vadd.f32 %v2000, %v2088
      %v2090 = vpop.f32.mrf.mxu0
      %v2091 = vadd.f32 %v2002, %v2090
      %2092 = vmatmul.bf16.gmra.mxu0 %v1072
      %v2093 = vpop.f32.mrf.mxu0
      %v2094 = vadd.f32 %v2005, %v2093
      %v2095 = vpop.f32.mrf.mxu0
      %v2096 = vadd.f32 %v2007, %v2095
      %2097 = vdwg.mxu0
      %2098 = vmatpush.bf16.msra.mxu0 %v1556
      %2099 = vmatpush.bf16.msra.mxu0 %v1555
      %2100 = vmatpush.bf16.msra.mxu0 %v1554
      %2101 = vmatpush.bf16.msra.mxu0 %v1553
      %2102 = vmatpush.bf16.msra.mxu0 %v1552
      %2103 = vmatpush.bf16.msra.mxu0 %v1551
      %2104 = vmatpush.bf16.msra.mxu0 %v1550
      %2105 = vmatpush.bf16.msra.mxu0 %v1549
      %2106 = vmatmul.bf16.gmra.mxu0 %v938
      %v2107 = vpop.f32.mrf.mxu0
      %v2108 = vadd.f32 %v2019, %v2107
      %v2109 = vpop.f32.mrf.mxu0
      %v2110 = vadd.f32 %v2021, %v2109
      %2111 = vmatmul.bf16.gmra.mxu0 %v947
      %v2112 = vpop.f32.mrf.mxu0
      %v2113 = vadd.f32 %v2024, %v2112
      %v2114 = vpop.f32.mrf.mxu0
      %v2115 = vadd.f32 %v2026, %v2114
      %2116 = vmatmul.bf16.gmra.mxu0 %v956
      %v2117 = vpop.f32.mrf.mxu0
      %v2118 = vadd.f32 %v2029, %v2117
      %v2119 = vpop.f32.mrf.mxu0
      %v2120 = vadd.f32 %v2031, %v2119
      %2121 = vmatmul.bf16.gmra.mxu0 %v965
      %v2122 = vpop.f32.mrf.mxu0
      %v2123 = vadd.f32 %v2034, %v2122
      %v2124 = vpop.f32.mrf.mxu0
      %v2125 = vadd.f32 %v2036, %v2124
      %2126 = vmatmul.bf16.gmra.mxu0 %v974
      %v2127 = vpop.f32.mrf.mxu0
      %v2128 = vadd.f32 %v2039, %v2127
      %v2129 = vpop.f32.mrf.mxu0
      %v2130 = vadd.f32 %v2041, %v2129
      %2131 = vmatmul.bf16.gmra.mxu0 %v983
      %v2132 = vpop.f32.mrf.mxu0
      %v2133 = vadd.f32 %v2044, %v2132
      %v2134 = vpop.f32.mrf.mxu0
      %v2135 = vadd.f32 %v2046, %v2134
      %2136 = vmatmul.bf16.gmra.mxu0 %v992
      %v2137 = vpop.f32.mrf.mxu0
      %v2138 = vadd.f32 %v2049, %v2137
      %v2139 = vpop.f32.mrf.mxu0
      %v2140 = vadd.f32 %v2051, %v2139
      %2141 = vmatmul.bf16.gmra.mxu0 %v1001
      %v2142 = vpop.f32.mrf.mxu0
      %v2143 = vadd.f32 %v2054, %v2142
      %v2144 = vpop.f32.mrf.mxu0
      %v2145 = vadd.f32 %v2056, %v2144
      %2146 = vmatmul.bf16.gmra.mxu0 %v1010
      %v2147 = vpop.f32.mrf.mxu0
      %v2148 = vadd.f32 %v2059, %v2147
      %v2149 = vpop.f32.mrf.mxu0
      %v2150 = vadd.f32 %v2061, %v2149
      %2151 = vmatmul.bf16.gmra.mxu0 %v1019
      %v2152 = vpop.f32.mrf.mxu0
      %v2153 = vadd.f32 %v2064, %v2152
      %v2154 = vpop.f32.mrf.mxu0
      %v2155 = vadd.f32 %v2066, %v2154
      %2156 = vmatmul.bf16.gmra.mxu0 %v1028
      %v2157 = vpop.f32.mrf.mxu0
      %v2158 = vadd.f32 %v2069, %v2157
      %v2159 = vpop.f32.mrf.mxu0
      %v2160 = vadd.f32 %v2071, %v2159
      %2161 = vmatmul.bf16.gmra.mxu0 %v1037
      %v2162 = vpop.f32.mrf.mxu0
      %v2163 = vadd.f32 %v2074, %v2162
      %v2164 = vpop.f32.mrf.mxu0
      %v2165 = vadd.f32 %v2076, %v2164
      %2166 = vmatmul.bf16.gmra.mxu0 %v1046
      %v2167 = vpop.f32.mrf.mxu0
      %v2168 = vadd.f32 %v2079, %v2167
      %v2169 = vpop.f32.mrf.mxu0
      %v2170 = vadd.f32 %v2081, %v2169
      %2171 = vmatmul.bf16.gmra.mxu0 %v1055
      %v2172 = vpop.f32.mrf.mxu0
      %v2173 = vadd.f32 %v2084, %v2172
      %v2174 = vpop.f32.mrf.mxu0
      %v2175 = vadd.f32 %v2086, %v2174
      %2176 = vmatmul.bf16.gmra.mxu0 %v1064
      %v2177 = vpop.f32.mrf.mxu0
      %v2178 = vadd.f32 %v2089, %v2177
      %v2179 = vpop.f32.mrf.mxu0
      %v2180 = vadd.f32 %v2091, %v2179
      %2181 = vmatmul.bf16.gmra.mxu0 %v1073
      %v2182 = vpop.f32.mrf.mxu0
      %v2183 = vadd.f32 %v2094, %v2182
      %v2184 = vpop.f32.mrf.mxu0
      %v2185 = vadd.f32 %v2096, %v2184
      %2186 = vdwg.mxu0
      %2187 = vmatpush.bf16.msra.mxu0 %v1564
      %2188 = vmatpush.bf16.msra.mxu0 %v1563
      %2189 = vmatpush.bf16.msra.mxu0 %v1562
      %2190 = vmatpush.bf16.msra.mxu0 %v1561
      %2191 = vmatpush.bf16.msra.mxu0 %v1560
      %2192 = vmatpush.bf16.msra.mxu0 %v1559
      %2193 = vmatpush.bf16.msra.mxu0 %v1558
      %2194 = vmatpush.bf16.msra.mxu0 %v1557
      %2195 = vmatmul.bf16.gmra.mxu0 %v939
      %v2196 = vpop.f32.mrf.mxu0
      %v2197 = vadd.f32 %v2108, %v2196
      %v2198 = vpop.f32.mrf.mxu0
      %v2199 = vadd.f32 %v2110, %v2198
      %2200 = vmatmul.bf16.gmra.mxu0 %v948
      %v2201 = vpop.f32.mrf.mxu0
      %v2202 = vadd.f32 %v2113, %v2201
      %v2203 = vpop.f32.mrf.mxu0
      %v2204 = vadd.f32 %v2115, %v2203
      %2205 = vmatmul.bf16.gmra.mxu0 %v957
      %v2206 = vpop.f32.mrf.mxu0
      %v2207 = vadd.f32 %v2118, %v2206
      %v2208 = vpop.f32.mrf.mxu0
      %v2209 = vadd.f32 %v2120, %v2208
      %2210 = vmatmul.bf16.gmra.mxu0 %v966
      %v2211 = vpop.f32.mrf.mxu0
      %v2212 = vadd.f32 %v2123, %v2211
      %v2213 = vpop.f32.mrf.mxu0
      %v2214 = vadd.f32 %v2125, %v2213
      %2215 = vmatmul.bf16.gmra.mxu0 %v975
      %v2216 = vpop.f32.mrf.mxu0
      %v2217 = vadd.f32 %v2128, %v2216
      %v2218 = vpop.f32.mrf.mxu0
      %v2219 = vadd.f32 %v2130, %v2218
      %2220 = vmatmul.bf16.gmra.mxu0 %v984
      %v2221 = vpop.f32.mrf.mxu0
      %v2222 = vadd.f32 %v2133, %v2221
      %v2223 = vpop.f32.mrf.mxu0
      %v2224 = vadd.f32 %v2135, %v2223
      %2225 = vmatmul.bf16.gmra.mxu0 %v993
      %v2226 = vpop.f32.mrf.mxu0
      %v2227 = vadd.f32 %v2138, %v2226
      %v2228 = vpop.f32.mrf.mxu0
      %v2229 = vadd.f32 %v2140, %v2228
      %2230 = vmatmul.bf16.gmra.mxu0 %v1002
      %v2231 = vpop.f32.mrf.mxu0
      %v2232 = vadd.f32 %v2143, %v2231
      %v2233 = vpop.f32.mrf.mxu0
      %v2234 = vadd.f32 %v2145, %v2233
      %2235 = vmatmul.bf16.gmra.mxu0 %v1011
      %v2236 = vpop.f32.mrf.mxu0
      %v2237 = vadd.f32 %v2148, %v2236
      %v2238 = vpop.f32.mrf.mxu0
      %v2239 = vadd.f32 %v2150, %v2238
      %2240 = vmatmul.bf16.gmra.mxu0 %v1020
      %v2241 = vpop.f32.mrf.mxu0
      %v2242 = vadd.f32 %v2153, %v2241
      %v2243 = vpop.f32.mrf.mxu0
      %v2244 = vadd.f32 %v2155, %v2243
      %2245 = vmatmul.bf16.gmra.mxu0 %v1029
      %v2246 = vpop.f32.mrf.mxu0
      %v2247 = vadd.f32 %v2158, %v2246
      %v2248 = vpop.f32.mrf.mxu0
      %v2249 = vadd.f32 %v2160, %v2248
      %2250 = vmatmul.bf16.gmra.mxu0 %v1038
      %v2251 = vpop.f32.mrf.mxu0
      %v2252 = vadd.f32 %v2163, %v2251
      %v2253 = vpop.f32.mrf.mxu0
      %v2254 = vadd.f32 %v2165, %v2253
      %2255 = vmatmul.bf16.gmra.mxu0 %v1047
      %v2256 = vpop.f32.mrf.mxu0
      %v2257 = vadd.f32 %v2168, %v2256
      %v2258 = vpop.f32.mrf.mxu0
      %v2259 = vadd.f32 %v2170, %v2258
      %2260 = vmatmul.bf16.gmra.mxu0 %v1056
      %v2261 = vpop.f32.mrf.mxu0
      %v2262 = vadd.f32 %v2173, %v2261
      %v2263 = vpop.f32.mrf.mxu0
      %v2264 = vadd.f32 %v2175, %v2263
      %2265 = vmatmul.bf16.gmra.mxu0 %v1065
      %v2266 = vpop.f32.mrf.mxu0
      %v2267 = vadd.f32 %v2178, %v2266
      %v2268 = vpop.f32.mrf.mxu0
      %v2269 = vadd.f32 %v2180, %v2268
      %2270 = vmatmul.bf16.gmra.mxu0 %v1074
      %v2271 = vpop.f32.mrf.mxu0
      %v2272 = vadd.f32 %v2183, %v2271
      %v2273 = vpop.f32.mrf.mxu0
      %v2274 = vadd.f32 %v2185, %v2273
      %2275 = vdwg.mxu0
      %2276 = vmatpush.bf16.msra.mxu0 %v1572
      %2277 = vmatpush.bf16.msra.mxu0 %v1571
      %2278 = vmatpush.bf16.msra.mxu0 %v1570
      %2279 = vmatpush.bf16.msra.mxu0 %v1569
      %2280 = vmatpush.bf16.msra.mxu0 %v1568
      %2281 = vmatpush.bf16.msra.mxu0 %v1567
      %2282 = vmatpush.bf16.msra.mxu0 %v1566
      %2283 = vmatpush.bf16.msra.mxu0 %v1565
      %2284 = vmatmul.bf16.gmra.mxu0 %v940
      %v2285 = vpop.f32.mrf.mxu0
      %v2286 = vadd.f32 %v2197, %v2285
      %v2287 = vpop.f32.mrf.mxu0
      %v2288 = vadd.f32 %v2199, %v2287
      %2289 = vmatmul.bf16.gmra.mxu0 %v949
      %v2290 = vpop.f32.mrf.mxu0
      %v2291 = vadd.f32 %v2202, %v2290
      %v2292 = vpop.f32.mrf.mxu0
      %v2293 = vadd.f32 %v2204, %v2292
      %2294 = vmatmul.bf16.gmra.mxu0 %v958
      %v2295 = vpop.f32.mrf.mxu0
      %v2296 = vadd.f32 %v2207, %v2295
      %v2297 = vpop.f32.mrf.mxu0
      %v2298 = vadd.f32 %v2209, %v2297
      %2299 = vmatmul.bf16.gmra.mxu0 %v967
      %v2300 = vpop.f32.mrf.mxu0
      %v2301 = vadd.f32 %v2212, %v2300
      %v2302 = vpop.f32.mrf.mxu0
      %v2303 = vadd.f32 %v2214, %v2302
      %2304 = vmatmul.bf16.gmra.mxu0 %v976
      %v2305 = vpop.f32.mrf.mxu0
      %v2306 = vadd.f32 %v2217, %v2305
      %v2307 = vpop.f32.mrf.mxu0
      %v2308 = vadd.f32 %v2219, %v2307
      %2309 = vmatmul.bf16.gmra.mxu0 %v985
      %v2310 = vpop.f32.mrf.mxu0
      %v2311 = vadd.f32 %v2222, %v2310
      %v2312 = vpop.f32.mrf.mxu0
      %v2313 = vadd.f32 %v2224, %v2312
      %2314 = vmatmul.bf16.gmra.mxu0 %v994
      %v2315 = vpop.f32.mrf.mxu0
      %v2316 = vadd.f32 %v2227, %v2315
      %v2317 = vpop.f32.mrf.mxu0
      %v2318 = vadd.f32 %v2229, %v2317
      %2319 = vmatmul.bf16.gmra.mxu0 %v1003
      %v2320 = vpop.f32.mrf.mxu0
      %v2321 = vadd.f32 %v2232, %v2320
      %v2322 = vpop.f32.mrf.mxu0
      %v2323 = vadd.f32 %v2234, %v2322
      %2324 = vmatmul.bf16.gmra.mxu0 %v1012
      %v2325 = vpop.f32.mrf.mxu0
      %v2326 = vadd.f32 %v2237, %v2325
      %v2327 = vpop.f32.mrf.mxu0
      %v2328 = vadd.f32 %v2239, %v2327
      %2329 = vmatmul.bf16.gmra.mxu0 %v1021
      %v2330 = vpop.f32.mrf.mxu0
      %v2331 = vadd.f32 %v2242, %v2330
      %v2332 = vpop.f32.mrf.mxu0
      %v2333 = vadd.f32 %v2244, %v2332
      %2334 = vmatmul.bf16.gmra.mxu0 %v1030
      %v2335 = vpop.f32.mrf.mxu0
      %v2336 = vadd.f32 %v2247, %v2335
      %v2337 = vpop.f32.mrf.mxu0
      %v2338 = vadd.f32 %v2249, %v2337
      %2339 = vmatmul.bf16.gmra.mxu0 %v1039
      %v2340 = vpop.f32.mrf.mxu0
      %v2341 = vadd.f32 %v2252, %v2340
      %v2342 = vpop.f32.mrf.mxu0
      %v2343 = vadd.f32 %v2254, %v2342
      %2344 = vmatmul.bf16.gmra.mxu0 %v1048
      %v2345 = vpop.f32.mrf.mxu0
      %v2346 = vadd.f32 %v2257, %v2345
      %v2347 = vpop.f32.mrf.mxu0
      %v2348 = vadd.f32 %v2259, %v2347
      %2349 = vmatmul.bf16.gmra.mxu0 %v1057
      %v2350 = vpop.f32.mrf.mxu0
      %v2351 = vadd.f32 %v2262, %v2350
      %v2352 = vpop.f32.mrf.mxu0
      %v2353 = vadd.f32 %v2264, %v2352
      %2354 = vmatmul.bf16.gmra.mxu0 %v1066
      %v2355 = vpop.f32.mrf.mxu0
      %v2356 = vadd.f32 %v2267, %v2355
      %v2357 = vpop.f32.mrf.mxu0
      %v2358 = vadd.f32 %v2269, %v2357
      %2359 = vmatmul.bf16.gmra.mxu0 %v1075
      %v2360 = vpop.f32.mrf.mxu0
      %v2361 = vadd.f32 %v2272, %v2360
      %v2362 = vpop.f32.mrf.mxu0
      %v2363 = vadd.f32 %v2274, %v2362
      %2364 = vdwg.mxu0
      %2365 = vmatpush.bf16.msra.mxu0 %v1580
      %2366 = vmatpush.bf16.msra.mxu0 %v1579
      %2367 = vmatpush.bf16.msra.mxu0 %v1578
      %2368 = vmatpush.bf16.msra.mxu0 %v1577
      %2369 = vmatpush.bf16.msra.mxu0 %v1576
      %2370 = vmatpush.bf16.msra.mxu0 %v1575
      %2371 = vmatpush.bf16.msra.mxu0 %v1574
      %2372 = vmatpush.bf16.msra.mxu0 %v1573
      %2373 = vmatmul.bf16.gmra.mxu0 %v941
      %v2374 = vpop.f32.mrf.mxu0
      %v2375 = vadd.f32 %v2286, %v2374
      %v2376 = vpop.f32.mrf.mxu0
      %v2377 = vadd.f32 %v2288, %v2376
      %2378 = vmatmul.bf16.gmra.mxu0 %v950
      %v2379 = vpop.f32.mrf.mxu0
      %v2380 = vadd.f32 %v2291, %v2379
      %v2381 = vpop.f32.mrf.mxu0
      %v2382 = vadd.f32 %v2293, %v2381
      %2383 = vmatmul.bf16.gmra.mxu0 %v959
      %v2384 = vpop.f32.mrf.mxu0
      %v2385 = vadd.f32 %v2296, %v2384
      %v2386 = vpop.f32.mrf.mxu0
      %v2387 = vadd.f32 %v2298, %v2386
      %2388 = vmatmul.bf16.gmra.mxu0 %v968
      %v2389 = vpop.f32.mrf.mxu0
      %v2390 = vadd.f32 %v2301, %v2389
      %v2391 = vpop.f32.mrf.mxu0
      %v2392 = vadd.f32 %v2303, %v2391
      %2393 = vmatmul.bf16.gmra.mxu0 %v977
      %v2394 = vpop.f32.mrf.mxu0
      %v2395 = vadd.f32 %v2306, %v2394
      %v2396 = vpop.f32.mrf.mxu0
      %v2397 = vadd.f32 %v2308, %v2396
      %2398 = vmatmul.bf16.gmra.mxu0 %v986
      %v2399 = vpop.f32.mrf.mxu0
      %v2400 = vadd.f32 %v2311, %v2399
      %v2401 = vpop.f32.mrf.mxu0
      %v2402 = vadd.f32 %v2313, %v2401
      %2403 = vmatmul.bf16.gmra.mxu0 %v995
      %v2404 = vpop.f32.mrf.mxu0
      %v2405 = vadd.f32 %v2316, %v2404
      %v2406 = vpop.f32.mrf.mxu0
      %v2407 = vadd.f32 %v2318, %v2406
      %2408 = vmatmul.bf16.gmra.mxu0 %v1004
      %v2409 = vpop.f32.mrf.mxu0
      %v2410 = vadd.f32 %v2321, %v2409
      %v2411 = vpop.f32.mrf.mxu0
      %v2412 = vadd.f32 %v2323, %v2411
      %2413 = vmatmul.bf16.gmra.mxu0 %v1013
      %v2414 = vpop.f32.mrf.mxu0
      %v2415 = vadd.f32 %v2326, %v2414
      %v2416 = vpop.f32.mrf.mxu0
      %v2417 = vadd.f32 %v2328, %v2416
      %2418 = vmatmul.bf16.gmra.mxu0 %v1022
      %v2419 = vpop.f32.mrf.mxu0
      %v2420 = vadd.f32 %v2331, %v2419
      %v2421 = vpop.f32.mrf.mxu0
      %v2422 = vadd.f32 %v2333, %v2421
      %2423 = vmatmul.bf16.gmra.mxu0 %v1031
      %v2424 = vpop.f32.mrf.mxu0
      %v2425 = vadd.f32 %v2336, %v2424
      %v2426 = vpop.f32.mrf.mxu0
      %v2427 = vadd.f32 %v2338, %v2426
      %2428 = vmatmul.bf16.gmra.mxu0 %v1040
      %v2429 = vpop.f32.mrf.mxu0
      %v2430 = vadd.f32 %v2341, %v2429
      %v2431 = vpop.f32.mrf.mxu0
      %v2432 = vadd.f32 %v2343, %v2431
      %2433 = vmatmul.bf16.gmra.mxu0 %v1049
      %v2434 = vpop.f32.mrf.mxu0
      %v2435 = vadd.f32 %v2346, %v2434
      %v2436 = vpop.f32.mrf.mxu0
      %v2437 = vadd.f32 %v2348, %v2436
      %2438 = vmatmul.bf16.gmra.mxu0 %v1058
      %v2439 = vpop.f32.mrf.mxu0
      %v2440 = vadd.f32 %v2351, %v2439
      %v2441 = vpop.f32.mrf.mxu0
      %v2442 = vadd.f32 %v2353, %v2441
      %2443 = vmatmul.bf16.gmra.mxu0 %v1067
      %v2444 = vpop.f32.mrf.mxu0
      %v2445 = vadd.f32 %v2356, %v2444
      %v2446 = vpop.f32.mrf.mxu0
      %v2447 = vadd.f32 %v2358, %v2446
      %2448 = vmatmul.bf16.gmra.mxu0 %v1076
      %v2449 = vpop.f32.mrf.mxu0
      %v2450 = vadd.f32 %v2361, %v2449
      %v2451 = vpop.f32.mrf.mxu0
      %v2452 = vadd.f32 %v2363, %v2451
      %2453 = vdwg.mxu0
      %v2454 = vxor.u32 %v2375, 2147483648
      %v2455 = vxor.u32 %v2377, 2147483648
      %v2456 = vxor.u32 %v2380, 2147483648
      %v2457 = vxor.u32 %v2382, 2147483648
      %v2458 = vxor.u32 %v2385, 2147483648
      %v2459 = vxor.u32 %v2387, 2147483648
      %v2460 = vxor.u32 %v2390, 2147483648
      %v2461 = vxor.u32 %v2392, 2147483648
      %v2462 = vxor.u32 %v2395, 2147483648
      %v2463 = vxor.u32 %v2397, 2147483648
      %v2464 = vxor.u32 %v2400, 2147483648
      %v2465 = vxor.u32 %v2402, 2147483648
      %v2466 = vxor.u32 %v2405, 2147483648
      %v2467 = vxor.u32 %v2407, 2147483648
      %v2468 = vxor.u32 %v2410, 2147483648
      %v2469 = vxor.u32 %v2412, 2147483648
      %v2470 = vxor.u32 %v2415, 2147483648
      %v2471 = vxor.u32 %v2417, 2147483648
      %v2472 = vxor.u32 %v2420, 2147483648
      %v2473 = vxor.u32 %v2422, 2147483648
      %v2474 = vxor.u32 %v2425, 2147483648
      %v2475 = vxor.u32 %v2427, 2147483648
      %v2476 = vxor.u32 %v2430, 2147483648
      %v2477 = vxor.u32 %v2432, 2147483648
      %v2478 = vxor.u32 %v2435, 2147483648
      %v2479 = vxor.u32 %v2437, 2147483648
      %v2480 = vxor.u32 %v2440, 2147483648
      %v2481 = vxor.u32 %v2442, 2147483648
      %v2482 = vxor.u32 %v2445, 2147483648
      %v2483 = vxor.u32 %v2447, 2147483648
      %v2484 = vxor.u32 %v2450, 2147483648
      %v2485 = vxor.u32 %v2452, 2147483648
      %v2486 = vmul.f32 %v2454, 1.442695
      %v2487 = vpow.pop %v2486
      %v2488 = vmul.f32 %v2455, 1.442695
      %v2489 = vpow.pop %v2488
      %v2490 = vmul.f32 %v2456, 1.442695
      %v2491 = vpow.pop %v2490
      %v2492 = vmul.f32 %v2457, 1.442695
      %v2493 = vpow.pop %v2492
      %v2494 = vmul.f32 %v2458, 1.442695
      %v2495 = vpow.pop %v2494
      %v2496 = vmul.f32 %v2459, 1.442695
      %v2497 = vpow.pop %v2496
      %v2498 = vmul.f32 %v2460, 1.442695
      %v2499 = vpow.pop %v2498
      %v2500 = vmul.f32 %v2461, 1.442695
      %v2501 = vpow.pop %v2500
      %v2502 = vmul.f32 %v2462, 1.442695
      %v2503 = vpow.pop %v2502
      %v2504 = vmul.f32 %v2463, 1.442695
      %v2505 = vpow.pop %v2504
      %v2506 = vmul.f32 %v2464, 1.442695
      %v2507 = vpow.pop %v2506
      %v2508 = vmul.f32 %v2465, 1.442695
      %v2509 = vpow.pop %v2508
      %v2510 = vmul.f32 %v2466, 1.442695
      %v2511 = vpow.pop %v2510
      %v2512 = vmul.f32 %v2467, 1.442695
      %v2513 = vpow.pop %v2512
      %v2514 = vmul.f32 %v2468, 1.442695
      %v2515 = vpow.pop %v2514
      %v2516 = vmul.f32 %v2469, 1.442695
      %v2517 = vpow.pop %v2516
      %v2518 = vmul.f32 %v2470, 1.442695
      %v2519 = vpow.pop %v2518
      %v2520 = vmul.f32 %v2471, 1.442695
      %v2521 = vpow.pop %v2520
      %v2522 = vmul.f32 %v2472, 1.442695
      %v2523 = vpow.pop %v2522
      %v2524 = vmul.f32 %v2473, 1.442695
      %v2525 = vpow.pop %v2524
      %v2526 = vmul.f32 %v2474, 1.442695
      %v2527 = vpow.pop %v2526
      %v2528 = vmul.f32 %v2475, 1.442695
      %v2529 = vpow.pop %v2528
      %v2530 = vmul.f32 %v2476, 1.442695
      %v2531 = vpow.pop %v2530
      %v2532 = vmul.f32 %v2477, 1.442695
      %v2533 = vpow.pop %v2532
      %v2534 = vmul.f32 %v2478, 1.442695
      %v2535 = vpow.pop %v2534
      %v2536 = vmul.f32 %v2479, 1.442695
      %v2537 = vpow.pop %v2536
      %v2538 = vmul.f32 %v2480, 1.442695
      %v2539 = vpow.pop %v2538
      %v2540 = vmul.f32 %v2481, 1.442695
      %v2541 = vpow.pop %v2540
      %v2542 = vmul.f32 %v2482, 1.442695
      %v2543 = vpow.pop %v2542
      %v2544 = vmul.f32 %v2483, 1.442695
      %v2545 = vpow.pop %v2544
      %v2546 = vmul.f32 %v2484, 1.442695
      %v2547 = vpow.pop %v2546
      %v2548 = vmul.f32 %v2485, 1.442695
      %v2549 = vpow.pop %v2548
      %v2550 = vadd.f32 %v2487, 1.0
      %v2551 = vadd.f32 %v2489, 1.0
      %v2552 = vadd.f32 %v2491, 1.0
      %v2553 = vadd.f32 %v2493, 1.0
      %v2554 = vadd.f32 %v2495, 1.0
      %v2555 = vadd.f32 %v2497, 1.0
      %v2556 = vadd.f32 %v2499, 1.0
      %v2557 = vadd.f32 %v2501, 1.0
      %v2558 = vadd.f32 %v2503, 1.0
      %v2559 = vadd.f32 %v2505, 1.0
      %v2560 = vadd.f32 %v2507, 1.0
      %v2561 = vadd.f32 %v2509, 1.0
      %v2562 = vadd.f32 %v2511, 1.0
      %v2563 = vadd.f32 %v2513, 1.0
      %v2564 = vadd.f32 %v2515, 1.0
      %v2565 = vadd.f32 %v2517, 1.0
      %v2566 = vadd.f32 %v2519, 1.0
      %v2567 = vadd.f32 %v2521, 1.0
      %v2568 = vadd.f32 %v2523, 1.0
      %v2569 = vadd.f32 %v2525, 1.0
      %v2570 = vadd.f32 %v2527, 1.0
      %v2571 = vadd.f32 %v2529, 1.0
      %v2572 = vadd.f32 %v2531, 1.0
      %v2573 = vadd.f32 %v2533, 1.0
      %v2574 = vadd.f32 %v2535, 1.0
      %v2575 = vadd.f32 %v2537, 1.0
      %v2576 = vadd.f32 %v2539, 1.0
      %v2577 = vadd.f32 %v2541, 1.0
      %v2578 = vadd.f32 %v2543, 1.0
      %v2579 = vadd.f32 %v2545, 1.0
      %v2580 = vadd.f32 %v2547, 1.0
      %v2581 = vadd.f32 %v2549, 1.0
      %v2582 = vrcp.pop %v2550
      %v2583 = vmul.f32 %v2550, %v2582
      %v2584 = vsub.f32 1.0, %v2583
      %v2585 = vmul.f32 %v2582, %v2584
      %v2586 = vadd.f32 %v2582, %v2585
      %vm2587 = vweird.f32 %v2550
      %vm2588 = vweird.f32 %v2582
      %vm2589 = vmor %vm2587, %vm2588
      %v2590 = vsel %vm2589, %v2582, %v2586
      %v2591 = vand.u32 2147483647, %v2550
      %vm2592 = vcmp.eq.f32.partialorder %v2591, 8.507059e+37
      %v2593 = vand.u32 %v2550, 2147483648
      %v2594 = vor.u32 1.1754944e-38, %v2593
      %v2595 = vsel %vm2592, %v2594, %v2590
      %v2596 = vmul.f32 1.0, %v2595
      %v2597 = vrcp.pop %v2551
      %v2598 = vmul.f32 %v2551, %v2597
      %v2599 = vsub.f32 1.0, %v2598
      %v2600 = vmul.f32 %v2597, %v2599
      %v2601 = vadd.f32 %v2597, %v2600
      %vm2602 = vweird.f32 %v2551
      %vm2603 = vweird.f32 %v2597
      %vm2604 = vmor %vm2602, %vm2603
      %v2605 = vsel %vm2604, %v2597, %v2601
      %v2606 = vand.u32 2147483647, %v2551
      %vm2607 = vcmp.eq.f32.partialorder %v2606, 8.507059e+37
      %v2608 = vand.u32 %v2551, 2147483648
      %v2609 = vor.u32 1.1754944e-38, %v2608
      %v2610 = vsel %vm2607, %v2609, %v2605
      %v2611 = vmul.f32 1.0, %v2610
      %v2612 = vrcp.pop %v2552
      %v2613 = vmul.f32 %v2552, %v2612
      %v2614 = vsub.f32 1.0, %v2613
      %v2615 = vmul.f32 %v2612, %v2614
      %v2616 = vadd.f32 %v2612, %v2615
      %vm2617 = vweird.f32 %v2552
      %vm2618 = vweird.f32 %v2612
      %vm2619 = vmor %vm2617, %vm2618
      %v2620 = vsel %vm2619, %v2612, %v2616
      %v2621 = vand.u32 2147483647, %v2552
      %vm2622 = vcmp.eq.f32.partialorder %v2621, 8.507059e+37
      %v2623 = vand.u32 %v2552, 2147483648
      %v2624 = vor.u32 1.1754944e-38, %v2623
      %v2625 = vsel %vm2622, %v2624, %v2620
      %v2626 = vmul.f32 1.0, %v2625
      %v2627 = vrcp.pop %v2553
      %v2628 = vmul.f32 %v2553, %v2627
      %v2629 = vsub.f32 1.0, %v2628
      %v2630 = vmul.f32 %v2627, %v2629
      %v2631 = vadd.f32 %v2627, %v2630
      %vm2632 = vweird.f32 %v2553
      %vm2633 = vweird.f32 %v2627
      %vm2634 = vmor %vm2632, %vm2633
      %v2635 = vsel %vm2634, %v2627, %v2631
      %v2636 = vand.u32 2147483647, %v2553
      %vm2637 = vcmp.eq.f32.partialorder %v2636, 8.507059e+37
      %v2638 = vand.u32 %v2553, 2147483648
      %v2639 = vor.u32 1.1754944e-38, %v2638
      %v2640 = vsel %vm2637, %v2639, %v2635
      %v2641 = vmul.f32 1.0, %v2640
      %v2642 = vrcp.pop %v2554
      %v2643 = vmul.f32 %v2554, %v2642
      %v2644 = vsub.f32 1.0, %v2643
      %v2645 = vmul.f32 %v2642, %v2644
      %v2646 = vadd.f32 %v2642, %v2645
      %vm2647 = vweird.f32 %v2554
      %vm2648 = vweird.f32 %v2642
      %vm2649 = vmor %vm2647, %vm2648
      %v2650 = vsel %vm2649, %v2642, %v2646
      %v2651 = vand.u32 2147483647, %v2554
      %vm2652 = vcmp.eq.f32.partialorder %v2651, 8.507059e+37
      %v2653 = vand.u32 %v2554, 2147483648
      %v2654 = vor.u32 1.1754944e-38, %v2653
      %v2655 = vsel %vm2652, %v2654, %v2650
      %v2656 = vmul.f32 1.0, %v2655
      %v2657 = vrcp.pop %v2555
      %v2658 = vmul.f32 %v2555, %v2657
      %v2659 = vsub.f32 1.0, %v2658
      %v2660 = vmul.f32 %v2657, %v2659
      %v2661 = vadd.f32 %v2657, %v2660
      %vm2662 = vweird.f32 %v2555
      %vm2663 = vweird.f32 %v2657
      %vm2664 = vmor %vm2662, %vm2663
      %v2665 = vsel %vm2664, %v2657, %v2661
      %v2666 = vand.u32 2147483647, %v2555
      %vm2667 = vcmp.eq.f32.partialorder %v2666, 8.507059e+37
      %v2668 = vand.u32 %v2555, 2147483648
      %v2669 = vor.u32 1.1754944e-38, %v2668
      %v2670 = vsel %vm2667, %v2669, %v2665
      %v2671 = vmul.f32 1.0, %v2670
      %v2672 = vrcp.pop %v2556
      %v2673 = vmul.f32 %v2556, %v2672
      %v2674 = vsub.f32 1.0, %v2673
      %v2675 = vmul.f32 %v2672, %v2674
      %v2676 = vadd.f32 %v2672, %v2675
      %vm2677 = vweird.f32 %v2556
      %vm2678 = vweird.f32 %v2672
      %vm2679 = vmor %vm2677, %vm2678
      %v2680 = vsel %vm2679, %v2672, %v2676
      %v2681 = vand.u32 2147483647, %v2556
      %vm2682 = vcmp.eq.f32.partialorder %v2681, 8.507059e+37
      %v2683 = vand.u32 %v2556, 2147483648
      %v2684 = vor.u32 1.1754944e-38, %v2683
      %v2685 = vsel %vm2682, %v2684, %v2680
      %v2686 = vmul.f32 1.0, %v2685
      %v2687 = vrcp.pop %v2557
      %v2688 = vmul.f32 %v2557, %v2687
      %v2689 = vsub.f32 1.0, %v2688
      %v2690 = vmul.f32 %v2687, %v2689
      %v2691 = vadd.f32 %v2687, %v2690
      %vm2692 = vweird.f32 %v2557
      %vm2693 = vweird.f32 %v2687
      %vm2694 = vmor %vm2692, %vm2693
      %v2695 = vsel %vm2694, %v2687, %v2691
      %v2696 = vand.u32 2147483647, %v2557
      %vm2697 = vcmp.eq.f32.partialorder %v2696, 8.507059e+37
      %v2698 = vand.u32 %v2557, 2147483648
      %v2699 = vor.u32 1.1754944e-38, %v2698
      %v2700 = vsel %vm2697, %v2699, %v2695
      %v2701 = vmul.f32 1.0, %v2700
      %v2702 = vrcp.pop %v2558
      %v2703 = vmul.f32 %v2558, %v2702
      %v2704 = vsub.f32 1.0, %v2703
      %v2705 = vmul.f32 %v2702, %v2704
      %v2706 = vadd.f32 %v2702, %v2705
      %vm2707 = vweird.f32 %v2558
      %vm2708 = vweird.f32 %v2702
      %vm2709 = vmor %vm2707, %vm2708
      %v2710 = vsel %vm2709, %v2702, %v2706
      %v2711 = vand.u32 2147483647, %v2558
      %vm2712 = vcmp.eq.f32.partialorder %v2711, 8.507059e+37
      %v2713 = vand.u32 %v2558, 2147483648
      %v2714 = vor.u32 1.1754944e-38, %v2713
      %v2715 = vsel %vm2712, %v2714, %v2710
      %v2716 = vmul.f32 1.0, %v2715
      %v2717 = vrcp.pop %v2559
      %v2718 = vmul.f32 %v2559, %v2717
      %v2719 = vsub.f32 1.0, %v2718
      %v2720 = vmul.f32 %v2717, %v2719
      %v2721 = vadd.f32 %v2717, %v2720
      %vm2722 = vweird.f32 %v2559
      %vm2723 = vweird.f32 %v2717
      %vm2724 = vmor %vm2722, %vm2723
      %v2725 = vsel %vm2724, %v2717, %v2721
      %v2726 = vand.u32 2147483647, %v2559
      %vm2727 = vcmp.eq.f32.partialorder %v2726, 8.507059e+37
      %v2728 = vand.u32 %v2559, 2147483648
      %v2729 = vor.u32 1.1754944e-38, %v2728
      %v2730 = vsel %vm2727, %v2729, %v2725
      %v2731 = vmul.f32 1.0, %v2730
      %v2732 = vrcp.pop %v2560
      %v2733 = vmul.f32 %v2560, %v2732
      %v2734 = vsub.f32 1.0, %v2733
      %v2735 = vmul.f32 %v2732, %v2734
      %v2736 = vadd.f32 %v2732, %v2735
      %vm2737 = vweird.f32 %v2560
      %vm2738 = vweird.f32 %v2732
      %vm2739 = vmor %vm2737, %vm2738
      %v2740 = vsel %vm2739, %v2732, %v2736
      %v2741 = vand.u32 2147483647, %v2560
      %vm2742 = vcmp.eq.f32.partialorder %v2741, 8.507059e+37
      %v2743 = vand.u32 %v2560, 2147483648
      %v2744 = vor.u32 1.1754944e-38, %v2743
      %v2745 = vsel %vm2742, %v2744, %v2740
      %v2746 = vmul.f32 1.0, %v2745
      %v2747 = vrcp.pop %v2561
      %v2748 = vmul.f32 %v2561, %v2747
      %v2749 = vsub.f32 1.0, %v2748
      %v2750 = vmul.f32 %v2747, %v2749
      %v2751 = vadd.f32 %v2747, %v2750
      %vm2752 = vweird.f32 %v2561
      %vm2753 = vweird.f32 %v2747
      %vm2754 = vmor %vm2752, %vm2753
      %v2755 = vsel %vm2754, %v2747, %v2751
      %v2756 = vand.u32 2147483647, %v2561
      %vm2757 = vcmp.eq.f32.partialorder %v2756, 8.507059e+37
      %v2758 = vand.u32 %v2561, 2147483648
      %v2759 = vor.u32 1.1754944e-38, %v2758
      %v2760 = vsel %vm2757, %v2759, %v2755
      %v2761 = vmul.f32 1.0, %v2760
      %v2762 = vrcp.pop %v2562
      %v2763 = vmul.f32 %v2562, %v2762
      %v2764 = vsub.f32 1.0, %v2763
      %v2765 = vmul.f32 %v2762, %v2764
      %v2766 = vadd.f32 %v2762, %v2765
      %vm2767 = vweird.f32 %v2562
      %vm2768 = vweird.f32 %v2762
      %vm2769 = vmor %vm2767, %vm2768
      %v2770 = vsel %vm2769, %v2762, %v2766
      %v2771 = vand.u32 2147483647, %v2562
      %vm2772 = vcmp.eq.f32.partialorder %v2771, 8.507059e+37
      %v2773 = vand.u32 %v2562, 2147483648
      %v2774 = vor.u32 1.1754944e-38, %v2773
      %v2775 = vsel %vm2772, %v2774, %v2770
      %v2776 = vmul.f32 1.0, %v2775
      %v2777 = vrcp.pop %v2563
      %v2778 = vmul.f32 %v2563, %v2777
      %v2779 = vsub.f32 1.0, %v2778
      %v2780 = vmul.f32 %v2777, %v2779
      %v2781 = vadd.f32 %v2777, %v2780
      %vm2782 = vweird.f32 %v2563
      %vm2783 = vweird.f32 %v2777
      %vm2784 = vmor %vm2782, %vm2783
      %v2785 = vsel %vm2784, %v2777, %v2781
      %v2786 = vand.u32 2147483647, %v2563
      %vm2787 = vcmp.eq.f32.partialorder %v2786, 8.507059e+37
      %v2788 = vand.u32 %v2563, 2147483648
      %v2789 = vor.u32 1.1754944e-38, %v2788
      %v2790 = vsel %vm2787, %v2789, %v2785
      %v2791 = vmul.f32 1.0, %v2790
      %v2792 = vrcp.pop %v2564
      %v2793 = vmul.f32 %v2564, %v2792
      %v2794 = vsub.f32 1.0, %v2793
      %v2795 = vmul.f32 %v2792, %v2794
      %v2796 = vadd.f32 %v2792, %v2795
      %vm2797 = vweird.f32 %v2564
      %vm2798 = vweird.f32 %v2792
      %vm2799 = vmor %vm2797, %vm2798
      %v2800 = vsel %vm2799, %v2792, %v2796
      %v2801 = vand.u32 2147483647, %v2564
      %vm2802 = vcmp.eq.f32.partialorder %v2801, 8.507059e+37
      %v2803 = vand.u32 %v2564, 2147483648
      %v2804 = vor.u32 1.1754944e-38, %v2803
      %v2805 = vsel %vm2802, %v2804, %v2800
      %v2806 = vmul.f32 1.0, %v2805
      %v2807 = vrcp.pop %v2565
      %v2808 = vmul.f32 %v2565, %v2807
      %v2809 = vsub.f32 1.0, %v2808
      %v2810 = vmul.f32 %v2807, %v2809
      %v2811 = vadd.f32 %v2807, %v2810
      %vm2812 = vweird.f32 %v2565
      %vm2813 = vweird.f32 %v2807
      %vm2814 = vmor %vm2812, %vm2813
      %v2815 = vsel %vm2814, %v2807, %v2811
      %v2816 = vand.u32 2147483647, %v2565
      %vm2817 = vcmp.eq.f32.partialorder %v2816, 8.507059e+37
      %v2818 = vand.u32 %v2565, 2147483648
      %v2819 = vor.u32 1.1754944e-38, %v2818
      %v2820 = vsel %vm2817, %v2819, %v2815
      %v2821 = vmul.f32 1.0, %v2820
      %v2822 = vrcp.pop %v2566
      %v2823 = vmul.f32 %v2566, %v2822
      %v2824 = vsub.f32 1.0, %v2823
      %v2825 = vmul.f32 %v2822, %v2824
      %v2826 = vadd.f32 %v2822, %v2825
      %vm2827 = vweird.f32 %v2566
      %vm2828 = vweird.f32 %v2822
      %vm2829 = vmor %vm2827, %vm2828
      %v2830 = vsel %vm2829, %v2822, %v2826
      %v2831 = vand.u32 2147483647, %v2566
      %vm2832 = vcmp.eq.f32.partialorder %v2831, 8.507059e+37
      %v2833 = vand.u32 %v2566, 2147483648
      %v2834 = vor.u32 1.1754944e-38, %v2833
      %v2835 = vsel %vm2832, %v2834, %v2830
      %v2836 = vmul.f32 1.0, %v2835
      %v2837 = vrcp.pop %v2567
      %v2838 = vmul.f32 %v2567, %v2837
      %v2839 = vsub.f32 1.0, %v2838
      %v2840 = vmul.f32 %v2837, %v2839
      %v2841 = vadd.f32 %v2837, %v2840
      %vm2842 = vweird.f32 %v2567
      %vm2843 = vweird.f32 %v2837
      %vm2844 = vmor %vm2842, %vm2843
      %v2845 = vsel %vm2844, %v2837, %v2841
      %v2846 = vand.u32 2147483647, %v2567
      %vm2847 = vcmp.eq.f32.partialorder %v2846, 8.507059e+37
      %v2848 = vand.u32 %v2567, 2147483648
      %v2849 = vor.u32 1.1754944e-38, %v2848
      %v2850 = vsel %vm2847, %v2849, %v2845
      %v2851 = vmul.f32 1.0, %v2850
      %v2852 = vrcp.pop %v2568
      %v2853 = vmul.f32 %v2568, %v2852
      %v2854 = vsub.f32 1.0, %v2853
      %v2855 = vmul.f32 %v2852, %v2854
      %v2856 = vadd.f32 %v2852, %v2855
      %vm2857 = vweird.f32 %v2568
      %vm2858 = vweird.f32 %v2852
      %vm2859 = vmor %vm2857, %vm2858
      %v2860 = vsel %vm2859, %v2852, %v2856
      %v2861 = vand.u32 2147483647, %v2568
      %vm2862 = vcmp.eq.f32.partialorder %v2861, 8.507059e+37
      %v2863 = vand.u32 %v2568, 2147483648
      %v2864 = vor.u32 1.1754944e-38, %v2863
      %v2865 = vsel %vm2862, %v2864, %v2860
      %v2866 = vmul.f32 1.0, %v2865
      %v2867 = vrcp.pop %v2569
      %v2868 = vmul.f32 %v2569, %v2867
      %v2869 = vsub.f32 1.0, %v2868
      %v2870 = vmul.f32 %v2867, %v2869
      %v2871 = vadd.f32 %v2867, %v2870
      %vm2872 = vweird.f32 %v2569
      %vm2873 = vweird.f32 %v2867
      %vm2874 = vmor %vm2872, %vm2873
      %v2875 = vsel %vm2874, %v2867, %v2871
      %v2876 = vand.u32 2147483647, %v2569
      %vm2877 = vcmp.eq.f32.partialorder %v2876, 8.507059e+37
      %v2878 = vand.u32 %v2569, 2147483648
      %v2879 = vor.u32 1.1754944e-38, %v2878
      %v2880 = vsel %vm2877, %v2879, %v2875
      %v2881 = vmul.f32 1.0, %v2880
      %v2882 = vrcp.pop %v2570
      %v2883 = vmul.f32 %v2570, %v2882
      %v2884 = vsub.f32 1.0, %v2883
      %v2885 = vmul.f32 %v2882, %v2884
      %v2886 = vadd.f32 %v2882, %v2885
      %vm2887 = vweird.f32 %v2570
      %vm2888 = vweird.f32 %v2882
      %vm2889 = vmor %vm2887, %vm2888
      %v2890 = vsel %vm2889, %v2882, %v2886
      %v2891 = vand.u32 2147483647, %v2570
      %vm2892 = vcmp.eq.f32.partialorder %v2891, 8.507059e+37
      %v2893 = vand.u32 %v2570, 2147483648
      %v2894 = vor.u32 1.1754944e-38, %v2893
      %v2895 = vsel %vm2892, %v2894, %v2890
      %v2896 = vmul.f32 1.0, %v2895
      %v2897 = vrcp.pop %v2571
      %v2898 = vmul.f32 %v2571, %v2897
      %v2899 = vsub.f32 1.0, %v2898
      %v2900 = vmul.f32 %v2897, %v2899
      %v2901 = vadd.f32 %v2897, %v2900
      %vm2902 = vweird.f32 %v2571
      %vm2903 = vweird.f32 %v2897
      %vm2904 = vmor %vm2902, %vm2903
      %v2905 = vsel %vm2904, %v2897, %v2901
      %v2906 = vand.u32 2147483647, %v2571
      %vm2907 = vcmp.eq.f32.partialorder %v2906, 8.507059e+37
      %v2908 = vand.u32 %v2571, 2147483648
      %v2909 = vor.u32 1.1754944e-38, %v2908
      %v2910 = vsel %vm2907, %v2909, %v2905
      %v2911 = vmul.f32 1.0, %v2910
      %v2912 = vrcp.pop %v2572
      %v2913 = vmul.f32 %v2572, %v2912
      %v2914 = vsub.f32 1.0, %v2913
      %v2915 = vmul.f32 %v2912, %v2914
      %v2916 = vadd.f32 %v2912, %v2915
      %vm2917 = vweird.f32 %v2572
      %vm2918 = vweird.f32 %v2912
      %vm2919 = vmor %vm2917, %vm2918
      %v2920 = vsel %vm2919, %v2912, %v2916
      %v2921 = vand.u32 2147483647, %v2572
      %vm2922 = vcmp.eq.f32.partialorder %v2921, 8.507059e+37
      %v2923 = vand.u32 %v2572, 2147483648
      %v2924 = vor.u32 1.1754944e-38, %v2923
      %v2925 = vsel %vm2922, %v2924, %v2920
      %v2926 = vmul.f32 1.0, %v2925
      %v2927 = vrcp.pop %v2573
      %v2928 = vmul.f32 %v2573, %v2927
      %v2929 = vsub.f32 1.0, %v2928
      %v2930 = vmul.f32 %v2927, %v2929
      %v2931 = vadd.f32 %v2927, %v2930
      %vm2932 = vweird.f32 %v2573
      %vm2933 = vweird.f32 %v2927
      %vm2934 = vmor %vm2932, %vm2933
      %v2935 = vsel %vm2934, %v2927, %v2931
      %v2936 = vand.u32 2147483647, %v2573
      %vm2937 = vcmp.eq.f32.partialorder %v2936, 8.507059e+37
      %v2938 = vand.u32 %v2573, 2147483648
      %v2939 = vor.u32 1.1754944e-38, %v2938
      %v2940 = vsel %vm2937, %v2939, %v2935
      %v2941 = vmul.f32 1.0, %v2940
      %v2942 = vrcp.pop %v2574
      %v2943 = vmul.f32 %v2574, %v2942
      %v2944 = vsub.f32 1.0, %v2943
      %v2945 = vmul.f32 %v2942, %v2944
      %v2946 = vadd.f32 %v2942, %v2945
      %vm2947 = vweird.f32 %v2574
      %vm2948 = vweird.f32 %v2942
      %vm2949 = vmor %vm2947, %vm2948
      %v2950 = vsel %vm2949, %v2942, %v2946
      %v2951 = vand.u32 2147483647, %v2574
      %vm2952 = vcmp.eq.f32.partialorder %v2951, 8.507059e+37
      %v2953 = vand.u32 %v2574, 2147483648
      %v2954 = vor.u32 1.1754944e-38, %v2953
      %v2955 = vsel %vm2952, %v2954, %v2950
      %v2956 = vmul.f32 1.0, %v2955
      %v2957 = vrcp.pop %v2575
      %v2958 = vmul.f32 %v2575, %v2957
      %v2959 = vsub.f32 1.0, %v2958
      %v2960 = vmul.f32 %v2957, %v2959
      %v2961 = vadd.f32 %v2957, %v2960
      %vm2962 = vweird.f32 %v2575
      %vm2963 = vweird.f32 %v2957
      %vm2964 = vmor %vm2962, %vm2963
      %v2965 = vsel %vm2964, %v2957, %v2961
      %v2966 = vand.u32 2147483647, %v2575
      %vm2967 = vcmp.eq.f32.partialorder %v2966, 8.507059e+37
      %v2968 = vand.u32 %v2575, 2147483648
      %v2969 = vor.u32 1.1754944e-38, %v2968
      %v2970 = vsel %vm2967, %v2969, %v2965
      %v2971 = vmul.f32 1.0, %v2970
      %v2972 = vrcp.pop %v2576
      %v2973 = vmul.f32 %v2576, %v2972
      %v2974 = vsub.f32 1.0, %v2973
      %v2975 = vmul.f32 %v2972, %v2974
      %v2976 = vadd.f32 %v2972, %v2975
      %vm2977 = vweird.f32 %v2576
      %vm2978 = vweird.f32 %v2972
      %vm2979 = vmor %vm2977, %vm2978
      %v2980 = vsel %vm2979, %v2972, %v2976
      %v2981 = vand.u32 2147483647, %v2576
      %vm2982 = vcmp.eq.f32.partialorder %v2981, 8.507059e+37
      %v2983 = vand.u32 %v2576, 2147483648
      %v2984 = vor.u32 1.1754944e-38, %v2983
      %v2985 = vsel %vm2982, %v2984, %v2980
      %v2986 = vmul.f32 1.0, %v2985
      %v2987 = vrcp.pop %v2577
      %v2988 = vmul.f32 %v2577, %v2987
      %v2989 = vsub.f32 1.0, %v2988
      %v2990 = vmul.f32 %v2987, %v2989
      %v2991 = vadd.f32 %v2987, %v2990
      %vm2992 = vweird.f32 %v2577
      %vm2993 = vweird.f32 %v2987
      %vm2994 = vmor %vm2992, %vm2993
      %v2995 = vsel %vm2994, %v2987, %v2991
      %v2996 = vand.u32 2147483647, %v2577
      %vm2997 = vcmp.eq.f32.partialorder %v2996, 8.507059e+37
      %v2998 = vand.u32 %v2577, 2147483648
      %v2999 = vor.u32 1.1754944e-38, %v2998
      %v3000 = vsel %vm2997, %v2999, %v2995
      %v3001 = vmul.f32 1.0, %v3000
      %v3002 = vrcp.pop %v2578
      %v3003 = vmul.f32 %v2578, %v3002
      %v3004 = vsub.f32 1.0, %v3003
      %v3005 = vmul.f32 %v3002, %v3004
      %v3006 = vadd.f32 %v3002, %v3005
      %vm3007 = vweird.f32 %v2578
      %vm3008 = vweird.f32 %v3002
      %vm3009 = vmor %vm3007, %vm3008
      %v3010 = vsel %vm3009, %v3002, %v3006
      %v3011 = vand.u32 2147483647, %v2578
      %vm3012 = vcmp.eq.f32.partialorder %v3011, 8.507059e+37
      %v3013 = vand.u32 %v2578, 2147483648
      %v3014 = vor.u32 1.1754944e-38, %v3013
      %v3015 = vsel %vm3012, %v3014, %v3010
      %v3016 = vmul.f32 1.0, %v3015
      %v3017 = vrcp.pop %v2579
      %v3018 = vmul.f32 %v2579, %v3017
      %v3019 = vsub.f32 1.0, %v3018
      %v3020 = vmul.f32 %v3017, %v3019
      %v3021 = vadd.f32 %v3017, %v3020
      %vm3022 = vweird.f32 %v2579
      %vm3023 = vweird.f32 %v3017
      %vm3024 = vmor %vm3022, %vm3023
      %v3025 = vsel %vm3024, %v3017, %v3021
      %v3026 = vand.u32 2147483647, %v2579
      %vm3027 = vcmp.eq.f32.partialorder %v3026, 8.507059e+37
      %v3028 = vand.u32 %v2579, 2147483648
      %v3029 = vor.u32 1.1754944e-38, %v3028
      %v3030 = vsel %vm3027, %v3029, %v3025
      %v3031 = vmul.f32 1.0, %v3030
      %v3032 = vrcp.pop %v2580
      %v3033 = vmul.f32 %v2580, %v3032
      %v3034 = vsub.f32 1.0, %v3033
      %v3035 = vmul.f32 %v3032, %v3034
      %v3036 = vadd.f32 %v3032, %v3035
      %vm3037 = vweird.f32 %v2580
      %vm3038 = vweird.f32 %v3032
      %vm3039 = vmor %vm3037, %vm3038
      %v3040 = vsel %vm3039, %v3032, %v3036
      %v3041 = vand.u32 2147483647, %v2580
      %vm3042 = vcmp.eq.f32.partialorder %v3041, 8.507059e+37
      %v3043 = vand.u32 %v2580, 2147483648
      %v3044 = vor.u32 1.1754944e-38, %v3043
      %v3045 = vsel %vm3042, %v3044, %v3040
      %v3046 = vmul.f32 1.0, %v3045
      %v3047 = vrcp.pop %v2581
      %v3048 = vmul.f32 %v2581, %v3047
      %v3049 = vsub.f32 1.0, %v3048
      %v3050 = vmul.f32 %v3047, %v3049
      %v3051 = vadd.f32 %v3047, %v3050
      %vm3052 = vweird.f32 %v2581
      %vm3053 = vweird.f32 %v3047
      %vm3054 = vmor %vm3052, %vm3053
      %v3055 = vsel %vm3054, %v3047, %v3051
      %v3056 = vand.u32 2147483647, %v2581
      %vm3057 = vcmp.eq.f32.partialorder %v3056, 8.507059e+37
      %v3058 = vand.u32 %v2581, 2147483648
      %v3059 = vor.u32 1.1754944e-38, %v3058
      %v3060 = vsel %vm3057, %v3059, %v3055
      %v3061 = vmul.f32 1.0, %v3060
      %v3062 = vmul.f32 %v2375, %v2596
      %v3063 = vmul.f32 %v2377, %v2611
      %v3064 = vmul.f32 %v2380, %v2626
      %v3065 = vmul.f32 %v2382, %v2641
      %v3066 = vmul.f32 %v2385, %v2656
      %v3067 = vmul.f32 %v2387, %v2671
      %v3068 = vmul.f32 %v2390, %v2686
      %v3069 = vmul.f32 %v2392, %v2701
      %v3070 = vmul.f32 %v2395, %v2716
      %v3071 = vmul.f32 %v2397, %v2731
      %v3072 = vmul.f32 %v2400, %v2746
      %v3073 = vmul.f32 %v2402, %v2761
      %v3074 = vmul.f32 %v2405, %v2776
      %v3075 = vmul.f32 %v2407, %v2791
      %v3076 = vmul.f32 %v2410, %v2806
      %v3077 = vmul.f32 %v2412, %v2821
      %v3078 = vmul.f32 %v2415, %v2836
      %v3079 = vmul.f32 %v2417, %v2851
      %v3080 = vmul.f32 %v2420, %v2866
      %v3081 = vmul.f32 %v2422, %v2881
      %v3082 = vmul.f32 %v2425, %v2896
      %v3083 = vmul.f32 %v2427, %v2911
      %v3084 = vmul.f32 %v2430, %v2926
      %v3085 = vmul.f32 %v2432, %v2941
      %v3086 = vmul.f32 %v2435, %v2956
      %v3087 = vmul.f32 %v2437, %v2971
      %v3088 = vmul.f32 %v2440, %v2986
      %v3089 = vmul.f32 %v2442, %v3001
      %v3090 = vmul.f32 %v2445, %v3016
      %v3091 = vmul.f32 %v2447, %v3031
      %v3092 = vmul.f32 %v2450, %v3046
      %v3093 = vmul.f32 %v2452, %v3061
      %v3094 = vpack.c.bf16 %v3062, %v3062
      %v3095 = vpack.c.bf16 %v3063, %v3063
      %v3096 = vpack.c.bf16 %v3064, %v3064
      %v3097 = vpack.c.bf16 %v3065, %v3065
      %v3098 = vpack.c.bf16 %v3066, %v3066
      %v3099 = vpack.c.bf16 %v3067, %v3067
      %v3100 = vpack.c.bf16 %v3068, %v3068
      %v3101 = vpack.c.bf16 %v3069, %v3069
      %v3102 = vpack.c.bf16 %v3070, %v3070
      %v3103 = vpack.c.bf16 %v3071, %v3071
      %v3104 = vpack.c.bf16 %v3072, %v3072
      %v3105 = vpack.c.bf16 %v3073, %v3073
      %v3106 = vpack.c.bf16 %v3074, %v3074
      %v3107 = vpack.c.bf16 %v3075, %v3075
      %v3108 = vpack.c.bf16 %v3076, %v3076
      %v3109 = vpack.c.bf16 %v3077, %v3077
      %v3110 = vpack.c.bf16 %v3078, %v3078
      %v3111 = vpack.c.bf16 %v3079, %v3079
      %v3112 = vpack.c.bf16 %v3080, %v3080
      %v3113 = vpack.c.bf16 %v3081, %v3081
      %v3114 = vpack.c.bf16 %v3082, %v3082
      %v3115 = vpack.c.bf16 %v3083, %v3083
      %v3116 = vpack.c.bf16 %v3084, %v3084
      %v3117 = vpack.c.bf16 %v3085, %v3085
      %v3118 = vpack.c.bf16 %v3086, %v3086
      %v3119 = vpack.c.bf16 %v3087, %v3087
      %v3120 = vpack.c.bf16 %v3088, %v3088
      %v3121 = vpack.c.bf16 %v3089, %v3089
      %v3122 = vpack.c.bf16 %v3090, %v3090
      %v3123 = vpack.c.bf16 %v3091, %v3091
      %v3124 = vpack.c.bf16 %v3092, %v3092
      %v3125 = vpack.c.bf16 %v3093, %v3093
      %3126 = vst [vmem:[%s175] sm:$0xf] %v3094
      %3127 = vst [vmem:[%s175 + $0x4] sm:$0xf] %v3095
      %3128 = vst [vmem:[%s175 + $0x8] sm:$0xf] %v3096
      %3129 = vst [vmem:[%s175 + $0xc] sm:$0xf] %v3097
      %3130 = vst [vmem:[%s175 + $0x10] sm:$0xf] %v3098
      %3131 = vst [vmem:[%s175 + $0x14] sm:$0xf] %v3099
      %3132 = vst [vmem:[%s175 + $0x18] sm:$0xf] %v3100
      %3133 = vst [vmem:[%s175 + $0x1c] sm:$0xf] %v3101
      %3134 = vst [vmem:[%s175 + $0x20] sm:$0xf] %v3102
      %3135 = vst [vmem:[%s175 + $0x24] sm:$0xf] %v3103
      %3136 = vst [vmem:[%s175 + $0x28] sm:$0xf] %v3104
      %3137 = vst [vmem:[%s175 + $0x2c] sm:$0xf] %v3105
      %3138 = vst [vmem:[%s175 + $0x30] sm:$0xf] %v3106
      %3139 = vst [vmem:[%s175 + $0x34] sm:$0xf] %v3107
      %3140 = vst [vmem:[%s175 + $0x38] sm:$0xf] %v3108
      %3141 = vst [vmem:[%s175 + $0x3c] sm:$0xf] %v3109
      %3142 = vst [vmem:[%s175 + $0x40] sm:$0xf] %v3110
      %3143 = vst [vmem:[%s175 + $0x44] sm:$0xf] %v3111
      %3144 = vst [vmem:[%s175 + $0x48] sm:$0xf] %v3112
      %3145 = vst [vmem:[%s175 + $0x4c] sm:$0xf] %v3113
      %3146 = vst [vmem:[%s175 + $0x50] sm:$0xf] %v3114
      %3147 = vst [vmem:[%s175 + $0x54] sm:$0xf] %v3115
      %3148 = vst [vmem:[%s175 + $0x58] sm:$0xf] %v3116
      %3149 = vst [vmem:[%s175 + $0x5c] sm:$0xf] %v3117
      %3150 = vst [vmem:[%s175 + $0x60] sm:$0xf] %v3118
      %3151 = vst [vmem:[%s175 + $0x64] sm:$0xf] %v3119
      %3152 = vst [vmem:[%s175 + $0x68] sm:$0xf] %v3120
      %3153 = vst [vmem:[%s175 + $0x6c] sm:$0xf] %v3121
      %3154 = vst [vmem:[%s175 + $0x70] sm:$0xf] %v3122
      %3155 = vst [vmem:[%s175 + $0x74] sm:$0xf] %v3123
      %3156 = vst [vmem:[%s175 + $0x78] sm:$0xf] %v3124
      %3157 = vst [vmem:[%s175 + $0x7c] sm:$0xf] %v3125
      %s3158 = smul.u32 32, %s14
      %p3159 = scmp.lt.s32.totalorder %s3158, 63
      %s3160 = scalar_select %p3159, %s3158, 63
      %s3161 = smul.addr %s3160, 4
      %s3162 = scalar_lea.vmem %s3, %s3161
      // Predicated region
      $region33: #{forward.13} parent=31 // pred_check
        %p3163 = pneg %p100
      $region34: #{forward.13} parent=31 // pred_check_branch
        %3165 = sbr.rel (%p3163) target = $region36
      $region35: #{forward.13} parent=31 // pred_region
        %s3166 = smul.u32 32, %s14
      $region36: #{forward.13} parent=31 // pred_fallthru
        _
    $region32: #{forward.13} parent=5 // pred_fallthru
      _
    %p3167 = scmp.le.s32.totalorder 2, %s9
    // Predicated region
    $region37: #{forward.13} parent=5 // pred_check
      %p3168 = pneg %p3167
    $region38: #{forward.13} parent=5 // pred_check_branch
      %3170 = sbr.rel (%p3168) target = $region40
    $region39: #{forward.13} parent=5 // pred_region
      %s3171 = ssub.s32 %s9, 2
      // Predicated region
      $region41: #{forward.13} parent=39 // pred_check
        %p3172 = pneg %p106
      $region42: #{forward.13} parent=39 // pred_check_branch
        %3174 = sbr.rel (%p3172) target = $region44
      $region43: #{forward.13} parent=39 // pred_region
        %s3175 = smul.u32 32, %s15
        %p3176 = scmp.lt.s32.totalorder %s3175, 63
        %s3177 = scalar_select %p3176, %s3175, 63
        %s3178 = smul.addr %s3177, 4
        %s3179 = scalar_lea.vmem %s3, %s3178
      $region44: #{forward.13} parent=39 // pred_fallthru
        _
    $region40: #{forward.13} parent=5 // pred_fallthru
      _
  $region6: #{forward.13} parent=0 // loop_footer
    %s13 = sadd.s32 1, %s9
  $region7: #{forward.13} parent=0 // loop_footer_branch
    %8 = sbr.rel target = $region3
  $region8: #{forward.13} parent=0 // loop_exit
    _

// kernel: forward.14
$region0: #{forward.14}
  #allocation0 [shape = 'u32[]', space=smem, size = 0x4, offset = 0x4, fixed_abs, tag = 'smem constant byte address 0x4 - core index']
  #allocation1 [shape = 'u32[72,128]{1,0:T(1,128)}', space=vmem, size = 0x9000, scoped, tag = 'internal scratch']
  %s0 = inlined_call_operand.vmem [shape: bf16[128,1152], index: 0, kind: input, shape index: {}]
  %s1 = inlined_call_operand.vmem [shape: bf16[1152,128], index: 1, kind: input, shape index: {}]
  %s2 = inlined_call_operand.vmem [shape: f32[1,128], index: 2, kind: input, shape index: {}]
  %s3 = inlined_call_operand.vmem [shape: bf16[128,128], index: 3, kind: output, shape index: {}]
  %s4 = sld [smem:[#allocation0]]
  $region22: #{forward.14} parent=0
    _
  %s6 = ssub.s32 1, %s4
  %s7 = scalar_select 0, %s6, %s4
  // Predicated region
  $region2: #{forward.14} parent=0 // pred_check
    _
  $region3: #{forward.14} parent=0 // pred_check_branch
    %9 = sbr.rel (0) target = $region5
  $region4: #{forward.14} parent=0 // pred_region
    _
  $region5: #{forward.14} parent=0 // pred_fallthru
    _
  // Predicated region
  $region6: #{forward.14} parent=0 // pred_check
    _
  $region7: #{forward.14} parent=0 // pred_check_branch
    %11 = sbr.rel (0) target = $region9
  $region8: #{forward.14} parent=0 // pred_region
    _
  $region9: #{forward.14} parent=0 // pred_fallthru
    _
  // Predicated region
  $region10: #{forward.14} parent=0 // pred_check
    _
  $region11: #{forward.14} parent=0 // pred_check_branch
    %13 = sbr.rel (0) target = $region13
  $region12: #{forward.14} parent=0 // pred_region
    _
  $region13: #{forward.14} parent=0 // pred_fallthru
    _
  %v14 = vld [vmem:[%s0] sm:$0xff]
  %v15 = vld [vmem:[%s0 + $0x8] sm:$0xff]
  %v16 = vld [vmem:[%s0 + $0x10] sm:$0xff]
  %v17 = vld [vmem:[%s0 + $0x18] sm:$0xff]
  %v18 = vld [vmem:[%s0 + $0x20] sm:$0xf]
  %v19 = vld [vmem:[%s0 + $0x24] sm:$0xff]
  %v20 = vld [vmem:[%s0 + $0x2c] sm:$0xff]
  %v21 = vld [vmem:[%s0 + $0x34] sm:$0xff]
  %v22 = vld [vmem:[%s0 + $0x3c] sm:$0xff]
  %v23 = vld [vmem:[%s0 + $0x44] sm:$0xf]
  %v24 = vld [vmem:[%s0 + $0x48] sm:$0xff]
  %v25 = vld [vmem:[%s0 + $0x50] sm:$0xff]
  %v26 = vld [vmem:[%s0 + $0x58] sm:$0xff]
  %v27 = vld [vmem:[%s0 + $0x60] sm:$0xff]
  %v28 = vld [vmem:[%s0 + $0x68] sm:$0xf]
  %v29 = vld [vmem:[%s0 + $0x6c] sm:$0xff]
  %v30 = vld [vmem:[%s0 + $0x74] sm:$0xff]
  %v31 = vld [vmem:[%s0 + $0x7c] sm:$0xff]
  %v32 = vld [vmem:[%s0 + $0x84] sm:$0xff]
  %v33 = vld [vmem:[%s0 + $0x8c] sm:$0xf]
  %v34 = vld [vmem:[%s0 + $0x90] sm:$0xff]
  %v35 = vld [vmem:[%s0 + $0x98] sm:$0xff]
  %v36 = vld [vmem:[%s0 + $0xa0] sm:$0xff]
  %v37 = vld [vmem:[%s0 + $0xa8] sm:$0xff]
  %v38 = vld [vmem:[%s0 + $0xb0] sm:$0xf]
  %v39 = vld [vmem:[%s0 + $0xb4] sm:$0xff]
  %v40 = vld [vmem:[%s0 + $0xbc] sm:$0xff]
  %v41 = vld [vmem:[%s0 + $0xc4] sm:$0xff]
  %v42 = vld [vmem:[%s0 + $0xcc] sm:$0xff]
  %v43 = vld [vmem:[%s0 + $0xd4] sm:$0xf]
  %v44 = vld [vmem:[%s0 + $0xd8] sm:$0xff]
  %v45 = vld [vmem:[%s0 + $0xe0] sm:$0xff]
  %v46 = vld [vmem:[%s0 + $0xe8] sm:$0xff]
  %v47 = vld [vmem:[%s0 + $0xf0] sm:$0xff]
  %v48 = vld [vmem:[%s0 + $0xf8] sm:$0xf]
  %v49 = vld [vmem:[%s0 + $0xfc] sm:$0xff]
  %v50 = vld [vmem:[%s0 + $0x104] sm:$0xff]
  %v51 = vld [vmem:[%s0 + $0x10c] sm:$0xff]
  %v52 = vld [vmem:[%s0 + $0x114] sm:$0xff]
  %v53 = vld [vmem:[%s0 + $0x11c] sm:$0xf]
  %v54 = vld [vmem:[%s0 + $0x120] sm:$0xff]
  %v55 = vld [vmem:[%s0 + $0x128] sm:$0xff]
  %v56 = vld [vmem:[%s0 + $0x130] sm:$0xff]
  %v57 = vld [vmem:[%s0 + $0x138] sm:$0xff]
  %v58 = vld [vmem:[%s0 + $0x140] sm:$0xf]
  %v59 = vld [vmem:[%s0 + $0x144] sm:$0xff]
  %v60 = vld [vmem:[%s0 + $0x14c] sm:$0xff]
  %v61 = vld [vmem:[%s0 + $0x154] sm:$0xff]
  %v62 = vld [vmem:[%s0 + $0x15c] sm:$0xff]
  %v63 = vld [vmem:[%s0 + $0x164] sm:$0xf]
  %v64 = vld [vmem:[%s0 + $0x168] sm:$0xff]
  %v65 = vld [vmem:[%s0 + $0x170] sm:$0xff]
  %v66 = vld [vmem:[%s0 + $0x178] sm:$0xff]
  %v67 = vld [vmem:[%s0 + $0x180] sm:$0xff]
  %v68 = vld [vmem:[%s0 + $0x188] sm:$0xf]
  %v69 = vld [vmem:[%s0 + $0x18c] sm:$0xff]
  %v70 = vld [vmem:[%s0 + $0x194] sm:$0xff]
  %v71 = vld [vmem:[%s0 + $0x19c] sm:$0xff]
  %v72 = vld [vmem:[%s0 + $0x1a4] sm:$0xff]
  %v73 = vld [vmem:[%s0 + $0x1ac] sm:$0xf]
  %v74 = vld [vmem:[%s0 + $0x1b0] sm:$0xff]
  %v75 = vld [vmem:[%s0 + $0x1b8] sm:$0xff]
  %v76 = vld [vmem:[%s0 + $0x1c0] sm:$0xff]
  %v77 = vld [vmem:[%s0 + $0x1c8] sm:$0xff]
  %v78 = vld [vmem:[%s0 + $0x1d0] sm:$0xf]
  %v79 = vld [vmem:[%s0 + $0x1d4] sm:$0xff]
  %v80 = vld [vmem:[%s0 + $0x1dc] sm:$0xff]
  %v81 = vld [vmem:[%s0 + $0x1e4] sm:$0xff]
  %v82 = vld [vmem:[%s0 + $0x1ec] sm:$0xff]
  %v83 = vld [vmem:[%s0 + $0x1f4] sm:$0xf]
  %v84 = vld [vmem:[%s0 + $0x1f8] sm:$0xff]
  %v85 = vld [vmem:[%s0 + $0x200] sm:$0xff]
  %v86 = vld [vmem:[%s0 + $0x208] sm:$0xff]
  %v87 = vld [vmem:[%s0 + $0x210] sm:$0xff]
  %v88 = vld [vmem:[%s0 + $0x218] sm:$0xf]
  %v89 = vld [vmem:[%s0 + $0x21c] sm:$0xff]
  %v90 = vld [vmem:[%s0 + $0x224] sm:$0xff]
  %v91 = vld [vmem:[%s0 + $0x22c] sm:$0xff]
  %v92 = vld [vmem:[%s0 + $0x234] sm:$0xff]
  %v93 = vld [vmem:[%s0 + $0x23c] sm:$0xf]
  %v94 = vld [vmem:[%s1] sm:$0xf]
  %v95 = vld [vmem:[%s1 + $0x4] sm:$0xf]
  %v96 = vld [vmem:[%s1 + $0x8] sm:$0xf]
  %v97 = vld [vmem:[%s1 + $0xc] sm:$0xf]
  %v98 = vld [vmem:[%s1 + $0x10] sm:$0xf]
  %v99 = vld [vmem:[%s1 + $0x14] sm:$0xf]
  %v100 = vld [vmem:[%s1 + $0x18] sm:$0xf]
  %v101 = vld [vmem:[%s1 + $0x1c] sm:$0xf]
  %v102 = vld [vmem:[%s1 + $0x20] sm:$0xf]
  %v103 = vld [vmem:[%s1 + $0x24] sm:$0xf]
  %v104 = vld [vmem:[%s1 + $0x28] sm:$0xf]
  %v105 = vld [vmem:[%s1 + $0x2c] sm:$0xf]
  %v106 = vld [vmem:[%s1 + $0x30] sm:$0xf]
  %v107 = vld [vmem:[%s1 + $0x34] sm:$0xf]
  %v108 = vld [vmem:[%s1 + $0x38] sm:$0xf]
  %v109 = vld [vmem:[%s1 + $0x3c] sm:$0xf]
  %v110 = vld [vmem:[%s1 + $0x40] sm:$0xf]
  %v111 = vld [vmem:[%s1 + $0x44] sm:$0xf]
  %v112 = vld [vmem:[%s1 + $0x48] sm:$0xf]
  %v113 = vld [vmem:[%s1 + $0x4c] sm:$0xf]
  %v114 = vld [vmem:[%s1 + $0x50] sm:$0xf]
  %v115 = vld [vmem:[%s1 + $0x54] sm:$0xf]
  %v116 = vld [vmem:[%s1 + $0x58] sm:$0xf]
  %v117 = vld [vmem:[%s1 + $0x5c] sm:$0xf]
  %v118 = vld [vmem:[%s1 + $0x60] sm:$0xf]
  %v119 = vld [vmem:[%s1 + $0x64] sm:$0xf]
  %v120 = vld [vmem:[%s1 + $0x68] sm:$0xf]
  %v121 = vld [vmem:[%s1 + $0x6c] sm:$0xf]
  %v122 = vld [vmem:[%s1 + $0x70] sm:$0xf]
  %v123 = vld [vmem:[%s1 + $0x74] sm:$0xf]
  %v124 = vld [vmem:[%s1 + $0x78] sm:$0xf]
  %v125 = vld [vmem:[%s1 + $0x7c] sm:$0xf]
  %v126 = vld [vmem:[%s1 + $0x80] sm:$0xf]
  %v127 = vld [vmem:[%s1 + $0x84] sm:$0xf]
  %v128 = vld [vmem:[%s1 + $0x88] sm:$0xf]
  %v129 = vld [vmem:[%s1 + $0x8c] sm:$0xf]
  %v130 = vld [vmem:[%s1 + $0x90] sm:$0xf]
  %v131 = vld [vmem:[%s1 + $0x94] sm:$0xf]
  %v132 = vld [vmem:[%s1 + $0x98] sm:$0xf]
  %v133 = vld [vmem:[%s1 + $0x9c] sm:$0xf]
  %v134 = vld [vmem:[%s1 + $0xa0] sm:$0xf]
  %v135 = vld [vmem:[%s1 + $0xa4] sm:$0xf]
  %v136 = vld [vmem:[%s1 + $0xa8] sm:$0xf]
  %v137 = vld [vmem:[%s1 + $0xac] sm:$0xf]
  %v138 = vld [vmem:[%s1 + $0xb0] sm:$0xf]
  %v139 = vld [vmem:[%s1 + $0xb4] sm:$0xf]
  %v140 = vld [vmem:[%s1 + $0xb8] sm:$0xf]
  %v141 = vld [vmem:[%s1 + $0xbc] sm:$0xf]
  %v142 = vld [vmem:[%s1 + $0xc0] sm:$0xf]
  %v143 = vld [vmem:[%s1 + $0xc4] sm:$0xf]
  %v144 = vld [vmem:[%s1 + $0xc8] sm:$0xf]
  %v145 = vld [vmem:[%s1 + $0xcc] sm:$0xf]
  %v146 = vld [vmem:[%s1 + $0xd0] sm:$0xf]
  %v147 = vld [vmem:[%s1 + $0xd4] sm:$0xf]
  %v148 = vld [vmem:[%s1 + $0xd8] sm:$0xf]
  %v149 = vld [vmem:[%s1 + $0xdc] sm:$0xf]
  %v150 = vld [vmem:[%s1 + $0xe0] sm:$0xf]
  %v151 = vld [vmem:[%s1 + $0xe4] sm:$0xf]
  %v152 = vld [vmem:[%s1 + $0xe8] sm:$0xf]
  %v153 = vld [vmem:[%s1 + $0xec] sm:$0xf]
  %v154 = vld [vmem:[%s1 + $0xf0] sm:$0xf]
  %v155 = vld [vmem:[%s1 + $0xf4] sm:$0xf]
  %v156 = vld [vmem:[%s1 + $0xf8] sm:$0xf]
  %v157 = vld [vmem:[%s1 + $0xfc] sm:$0xf]
  %v158 = vld [vmem:[%s1 + $0x100] sm:$0xf]
  %v159 = vld [vmem:[%s1 + $0x104] sm:$0xf]
  %v160 = vld [vmem:[%s1 + $0x108] sm:$0xf]
  %v161 = vld [vmem:[%s1 + $0x10c] sm:$0xf]
  %v162 = vld [vmem:[%s1 + $0x110] sm:$0xf]
  %v163 = vld [vmem:[%s1 + $0x114] sm:$0xf]
  %v164 = vld [vmem:[%s1 + $0x118] sm:$0xf]
  %v165 = vld [vmem:[%s1 + $0x11c] sm:$0xf]
  %v166 = vld [vmem:[%s1 + $0x120] sm:$0xf]
  %v167 = vld [vmem:[%s1 + $0x124] sm:$0xf]
  %v168 = vld [vmem:[%s1 + $0x128] sm:$0xf]
  %v169 = vld [vmem:[%s1 + $0x12c] sm:$0xf]
  %v170 = vld [vmem:[%s1 + $0x130] sm:$0xf]
  %v171 = vld [vmem:[%s1 + $0x134] sm:$0xf]
  %v172 = vld [vmem:[%s1 + $0x138] sm:$0xf]
  %v173 = vld [vmem:[%s1 + $0x13c] sm:$0xf]
  %v174 = vld [vmem:[%s1 + $0x140] sm:$0xf]
  %v175 = vld [vmem:[%s1 + $0x144] sm:$0xf]
  %v176 = vld [vmem:[%s1 + $0x148] sm:$0xf]
  %v177 = vld [vmem:[%s1 + $0x14c] sm:$0xf]
  %v178 = vld [vmem:[%s1 + $0x150] sm:$0xf]
  %v179 = vld [vmem:[%s1 + $0x154] sm:$0xf]
  %v180 = vld [vmem:[%s1 + $0x158] sm:$0xf]
  %v181 = vld [vmem:[%s1 + $0x15c] sm:$0xf]
  %v182 = vld [vmem:[%s1 + $0x160] sm:$0xf]
  %v183 = vld [vmem:[%s1 + $0x164] sm:$0xf]
  %v184 = vld [vmem:[%s1 + $0x168] sm:$0xf]
  %v185 = vld [vmem:[%s1 + $0x16c] sm:$0xf]
  %v186 = vld [vmem:[%s1 + $0x170] sm:$0xf]
  %v187 = vld [vmem:[%s1 + $0x174] sm:$0xf]
  %v188 = vld [vmem:[%s1 + $0x178] sm:$0xf]
  %v189 = vld [vmem:[%s1 + $0x17c] sm:$0xf]
  %v190 = vld [vmem:[%s1 + $0x180] sm:$0xf]
  %v191 = vld [vmem:[%s1 + $0x184] sm:$0xf]
  %v192 = vld [vmem:[%s1 + $0x188] sm:$0xf]
  %v193 = vld [vmem:[%s1 + $0x18c] sm:$0xf]
  %v194 = vld [vmem:[%s1 + $0x190] sm:$0xf]
  %v195 = vld [vmem:[%s1 + $0x194] sm:$0xf]
  %v196 = vld [vmem:[%s1 + $0x198] sm:$0xf]
  %v197 = vld [vmem:[%s1 + $0x19c] sm:$0xf]
  %v198 = vld [vmem:[%s1 + $0x1a0] sm:$0xf]
  %v199 = vld [vmem:[%s1 + $0x1a4] sm:$0xf]
  %v200 = vld [vmem:[%s1 + $0x1a8] sm:$0xf]
  %v201 = vld [vmem:[%s1 + $0x1ac] sm:$0xf]
  %v202 = vld [vmem:[%s1 + $0x1b0] sm:$0xf]
  %v203 = vld [vmem:[%s1 + $0x1b4] sm:$0xf]
  %v204 = vld [vmem:[%s1 + $0x1b8] sm:$0xf]
  %v205 = vld [vmem:[%s1 + $0x1bc] sm:$0xf]
  %v206 = vld [vmem:[%s1 + $0x1c0] sm:$0xf]
  %v207 = vld [vmem:[%s1 + $0x1c4] sm:$0xf]
  %v208 = vld [vmem:[%s1 + $0x1c8] sm:$0xf]
  %v209 = vld [vmem:[%s1 + $0x1cc] sm:$0xf]
  %v210 = vld [vmem:[%s1 + $0x1d0] sm:$0xf]
  %v211 = vld [vmem:[%s1 + $0x1d4] sm:$0xf]
  %v212 = vld [vmem:[%s1 + $0x1d8] sm:$0xf]
  %v213 = vld [vmem:[%s1 + $0x1dc] sm:$0xf]
  %v214 = vld [vmem:[%s1 + $0x1e0] sm:$0xf]
  %v215 = vld [vmem:[%s1 + $0x1e4] sm:$0xf]
  %v216 = vld [vmem:[%s1 + $0x1e8] sm:$0xf]
  %v217 = vld [vmem:[%s1 + $0x1ec] sm:$0xf]
  %v218 = vld [vmem:[%s1 + $0x1f0] sm:$0xf]
  %v219 = vld [vmem:[%s1 + $0x1f4] sm:$0xf]
  %v220 = vld [vmem:[%s1 + $0x1f8] sm:$0xf]
  %v221 = vld [vmem:[%s1 + $0x1fc] sm:$0xf]
  %v222 = vld [vmem:[%s1 + $0x200] sm:$0xf]
  %v223 = vld [vmem:[%s1 + $0x204] sm:$0xf]
  %v224 = vld [vmem:[%s1 + $0x208] sm:$0xf]
  %v225 = vld [vmem:[%s1 + $0x20c] sm:$0xf]
  %v226 = vld [vmem:[%s1 + $0x210] sm:$0xf]
  %v227 = vld [vmem:[%s1 + $0x214] sm:$0xf]
  %v228 = vld [vmem:[%s1 + $0x218] sm:$0xf]
  %v229 = vld [vmem:[%s1 + $0x21c] sm:$0xf]
  %v230 = vld [vmem:[%s1 + $0x220] sm:$0xf]
  %v231 = vld [vmem:[%s1 + $0x224] sm:$0xf]
  %v232 = vld [vmem:[%s1 + $0x228] sm:$0xf]
  %v233 = vld [vmem:[%s1 + $0x22c] sm:$0xf]
  %v234 = vld [vmem:[%s1 + $0x230] sm:$0xf]
  %v235 = vld [vmem:[%s1 + $0x234] sm:$0xf]
  %v236 = vld [vmem:[%s1 + $0x238] sm:$0xf]
  %v237 = vld [vmem:[%s1 + $0x23c] sm:$0xf]
  %v238 = vld [vmem:[%s2] sm:$0x1]
  %v240 = vperm.slane %v238, 0
  %v322 = vunpack.c.l.b16 %v14
  %v323 = vunpack.c.h.b16 %v14
  %v324 = vunpack.c.l.b16 %v15
  %v325 = vunpack.c.h.b16 %v15
  %v326 = vunpack.c.l.b16 %v16
  %v327 = vunpack.c.h.b16 %v16
  %v328 = vunpack.c.l.b16 %v17
  %v329 = vunpack.c.h.b16 %v17
  %v330 = vunpack.c.l.b16 %v18
  %v331 = vunpack.c.l.b16 %v19
  %v332 = vunpack.c.h.b16 %v19
  %v333 = vunpack.c.l.b16 %v20
  %v334 = vunpack.c.h.b16 %v20
  %v335 = vunpack.c.l.b16 %v21
  %v336 = vunpack.c.h.b16 %v21
  %v337 = vunpack.c.l.b16 %v22
  %v338 = vunpack.c.h.b16 %v22
  %v339 = vunpack.c.l.b16 %v23
  %v340 = vunpack.c.l.b16 %v24
  %v341 = vunpack.c.h.b16 %v24
  %v342 = vunpack.c.l.b16 %v25
  %v343 = vunpack.c.h.b16 %v25
  %v344 = vunpack.c.l.b16 %v26
  %v345 = vunpack.c.h.b16 %v26
  %v346 = vunpack.c.l.b16 %v27
  %v347 = vunpack.c.h.b16 %v27
  %v348 = vunpack.c.l.b16 %v28
  %v349 = vunpack.c.l.b16 %v29
  %v350 = vunpack.c.h.b16 %v29
  %v351 = vunpack.c.l.b16 %v30
  %v352 = vunpack.c.h.b16 %v30
  %v353 = vunpack.c.l.b16 %v31
  %v354 = vunpack.c.h.b16 %v31
  %v355 = vunpack.c.l.b16 %v32
  %v356 = vunpack.c.h.b16 %v32
  %v357 = vunpack.c.l.b16 %v33
  %v358 = vunpack.c.l.b16 %v34
  %v359 = vunpack.c.h.b16 %v34
  %v360 = vunpack.c.l.b16 %v35
  %v361 = vunpack.c.h.b16 %v35
  %v362 = vunpack.c.l.b16 %v36
  %v363 = vunpack.c.h.b16 %v36
  %v364 = vunpack.c.l.b16 %v37
  %v365 = vunpack.c.h.b16 %v37
  %v366 = vunpack.c.l.b16 %v38
  %v367 = vunpack.c.l.b16 %v39
  %v368 = vunpack.c.h.b16 %v39
  %v369 = vunpack.c.l.b16 %v40
  %v370 = vunpack.c.h.b16 %v40
  %v371 = vunpack.c.l.b16 %v41
  %v372 = vunpack.c.h.b16 %v41
  %v373 = vunpack.c.l.b16 %v42
  %v374 = vunpack.c.h.b16 %v42
  %v375 = vunpack.c.l.b16 %v43
  %v376 = vunpack.c.l.b16 %v44
  %v377 = vunpack.c.h.b16 %v44
  %v378 = vunpack.c.l.b16 %v45
  %v379 = vunpack.c.h.b16 %v45
  %v380 = vunpack.c.l.b16 %v46
  %v381 = vunpack.c.h.b16 %v46
  %v382 = vunpack.c.l.b16 %v47
  %v383 = vunpack.c.h.b16 %v47
  %v384 = vunpack.c.l.b16 %v48
  %v385 = vunpack.c.l.b16 %v49
  %v386 = vunpack.c.h.b16 %v49
  %v387 = vunpack.c.l.b16 %v50
  %v388 = vunpack.c.h.b16 %v50
  %v389 = vunpack.c.l.b16 %v51
  %v390 = vunpack.c.h.b16 %v51
  %v391 = vunpack.c.l.b16 %v52
  %v392 = vunpack.c.h.b16 %v52
  %v393 = vunpack.c.l.b16 %v53
  %v394 = vunpack.c.l.b16 %v54
  %v395 = vunpack.c.h.b16 %v54
  %v396 = vunpack.c.l.b16 %v55
  %v397 = vunpack.c.h.b16 %v55
  %v398 = vunpack.c.l.b16 %v56
  %v399 = vunpack.c.h.b16 %v56
  %v400 = vunpack.c.l.b16 %v57
  %v401 = vunpack.c.h.b16 %v57
  %v402 = vunpack.c.l.b16 %v58
  %v403 = vunpack.c.l.b16 %v59
  %v404 = vunpack.c.h.b16 %v59
  %v405 = vunpack.c.l.b16 %v60
  %v406 = vunpack.c.h.b16 %v60
  %v407 = vunpack.c.l.b16 %v61
  %v408 = vunpack.c.h.b16 %v61
  %v409 = vunpack.c.l.b16 %v62
  %v410 = vunpack.c.h.b16 %v62
  %v411 = vunpack.c.l.b16 %v63
  %v412 = vunpack.c.l.b16 %v64
  %v413 = vunpack.c.h.b16 %v64
  %v414 = vunpack.c.l.b16 %v65
  %v415 = vunpack.c.h.b16 %v65
  %v416 = vunpack.c.l.b16 %v66
  %v417 = vunpack.c.h.b16 %v66
  %v418 = vunpack.c.l.b16 %v67
  %v419 = vunpack.c.h.b16 %v67
  %v420 = vunpack.c.l.b16 %v68
  %v421 = vunpack.c.l.b16 %v69
  %v422 = vunpack.c.h.b16 %v69
  %v423 = vunpack.c.l.b16 %v70
  %v424 = vunpack.c.h.b16 %v70
  %v425 = vunpack.c.l.b16 %v71
  %v426 = vunpack.c.h.b16 %v71
  %v427 = vunpack.c.l.b16 %v72
  %v428 = vunpack.c.h.b16 %v72
  %v429 = vunpack.c.l.b16 %v73
  %v430 = vunpack.c.l.b16 %v74
  %v431 = vunpack.c.h.b16 %v74
  %v432 = vunpack.c.l.b16 %v75
  %v433 = vunpack.c.h.b16 %v75
  %v434 = vunpack.c.l.b16 %v76
  %v435 = vunpack.c.h.b16 %v76
  %v436 = vunpack.c.l.b16 %v77
  %v437 = vunpack.c.h.b16 %v77
  %v438 = vunpack.c.l.b16 %v78
  %v439 = vunpack.c.l.b16 %v79
  %v440 = vunpack.c.h.b16 %v79
  %v441 = vunpack.c.l.b16 %v80
  %v442 = vunpack.c.h.b16 %v80
  %v443 = vunpack.c.l.b16 %v81
  %v444 = vunpack.c.h.b16 %v81
  %v445 = vunpack.c.l.b16 %v82
  %v446 = vunpack.c.h.b16 %v82
  %v447 = vunpack.c.l.b16 %v83
  %v448 = vunpack.c.l.b16 %v84
  %v449 = vunpack.c.h.b16 %v84
  %v450 = vunpack.c.l.b16 %v85
  %v451 = vunpack.c.h.b16 %v85
  %v452 = vunpack.c.l.b16 %v86
  %v453 = vunpack.c.h.b16 %v86
  %v454 = vunpack.c.l.b16 %v87
  %v455 = vunpack.c.h.b16 %v87
  %v456 = vunpack.c.l.b16 %v88
  %v457 = vunpack.c.l.b16 %v89
  %v458 = vunpack.c.h.b16 %v89
  %v459 = vunpack.c.l.b16 %v90
  %v460 = vunpack.c.h.b16 %v90
  %v461 = vunpack.c.l.b16 %v91
  %v462 = vunpack.c.h.b16 %v91
  %v463 = vunpack.c.l.b16 %v92
  %v464 = vunpack.c.h.b16 %v92
  %v465 = vunpack.c.l.b16 %v93
  %v466 = vpack.c.b16 %v331, %v322
  %v467 = vpack.c.b16 %v332, %v323
  %v468 = vpack.c.b16 %v333, %v324
  %v469 = vpack.c.b16 %v334, %v325
  %v470 = vpack.c.b16 %v335, %v326
  %v471 = vpack.c.b16 %v336, %v327
  %v472 = vpack.c.b16 %v337, %v328
  %v473 = vpack.c.b16 %v338, %v329
  %v474 = vpack.c.b16 %v339, %v330
  %v475 = vpack.c.b16 %v349, %v340
  %v476 = vpack.c.b16 %v350, %v341
  %v477 = vpack.c.b16 %v351, %v342
  %v478 = vpack.c.b16 %v352, %v343
  %v479 = vpack.c.b16 %v353, %v344
  %v480 = vpack.c.b16 %v354, %v345
  %v481 = vpack.c.b16 %v355, %v346
  %v482 = vpack.c.b16 %v356, %v347
  %v483 = vpack.c.b16 %v357, %v348
  %v484 = vpack.c.b16 %v367, %v358
  %v485 = vpack.c.b16 %v368, %v359
  %v486 = vpack.c.b16 %v369, %v360
  %v487 = vpack.c.b16 %v370, %v361
  %v488 = vpack.c.b16 %v371, %v362
  %v489 = vpack.c.b16 %v372, %v363
  %v490 = vpack.c.b16 %v373, %v364
  %v491 = vpack.c.b16 %v374, %v365
  %v492 = vpack.c.b16 %v375, %v366
  %v493 = vpack.c.b16 %v385, %v376
  %v494 = vpack.c.b16 %v386, %v377
  %v495 = vpack.c.b16 %v387, %v378
  %v496 = vpack.c.b16 %v388, %v379
  %v497 = vpack.c.b16 %v389, %v380
  %v498 = vpack.c.b16 %v390, %v381
  %v499 = vpack.c.b16 %v391, %v382
  %v500 = vpack.c.b16 %v392, %v383
  %v501 = vpack.c.b16 %v393, %v384
  %v502 = vpack.c.b16 %v403, %v394
  %v503 = vpack.c.b16 %v404, %v395
  %v504 = vpack.c.b16 %v405, %v396
  %v505 = vpack.c.b16 %v406, %v397
  %v506 = vpack.c.b16 %v407, %v398
  %v507 = vpack.c.b16 %v408, %v399
  %v508 = vpack.c.b16 %v409, %v400
  %v509 = vpack.c.b16 %v410, %v401
  %v510 = vpack.c.b16 %v411, %v402
  %v511 = vpack.c.b16 %v421, %v412
  %v512 = vpack.c.b16 %v422, %v413
  %v513 = vpack.c.b16 %v423, %v414
  %v514 = vpack.c.b16 %v424, %v415
  %v515 = vpack.c.b16 %v425, %v416
  %v516 = vpack.c.b16 %v426, %v417
  %v517 = vpack.c.b16 %v427, %v418
  %v518 = vpack.c.b16 %v428, %v419
  %v519 = vpack.c.b16 %v429, %v420
  %v520 = vpack.c.b16 %v439, %v430
  %v521 = vpack.c.b16 %v440, %v431
  %v522 = vpack.c.b16 %v441, %v432
  %v523 = vpack.c.b16 %v442, %v433
  %v524 = vpack.c.b16 %v443, %v434
  %v525 = vpack.c.b16 %v444, %v435
  %v526 = vpack.c.b16 %v445, %v436
  %v527 = vpack.c.b16 %v446, %v437
  %v528 = vpack.c.b16 %v447, %v438
  %v529 = vpack.c.b16 %v457, %v448
  %v530 = vpack.c.b16 %v458, %v449
  %v531 = vpack.c.b16 %v459, %v450
  %v532 = vpack.c.b16 %v460, %v451
  %v533 = vpack.c.b16 %v461, %v452
  %v534 = vpack.c.b16 %v462, %v453
  %v535 = vpack.c.b16 %v463, %v454
  %v536 = vpack.c.b16 %v464, %v455
  %v537 = vpack.c.b16 %v465, %v456
  %v754 = vunpack.c.l.b16 %v94
  %v755 = vunpack.c.l.b16 %v95
  %v756 = vunpack.c.l.b16 %v96
  %v757 = vunpack.c.l.b16 %v97
  %v758 = vunpack.c.l.b16 %v98
  %v759 = vunpack.c.l.b16 %v99
  %v760 = vunpack.c.l.b16 %v100
  %v761 = vunpack.c.l.b16 %v101
  %v762 = vunpack.c.l.b16 %v102
  %v763 = vunpack.c.l.b16 %v103
  %v764 = vunpack.c.l.b16 %v104
  %v765 = vunpack.c.l.b16 %v105
  %v766 = vunpack.c.l.b16 %v106
  %v767 = vunpack.c.l.b16 %v107
  %v768 = vunpack.c.l.b16 %v108
  %v769 = vunpack.c.l.b16 %v109
  %v770 = vunpack.c.l.b16 %v110
  %v771 = vunpack.c.l.b16 %v111
  %v772 = vunpack.c.l.b16 %v112
  %v773 = vunpack.c.l.b16 %v113
  %v774 = vunpack.c.l.b16 %v114
  %v775 = vunpack.c.l.b16 %v115
  %v776 = vunpack.c.l.b16 %v116
  %v777 = vunpack.c.l.b16 %v117
  %v778 = vunpack.c.l.b16 %v118
  %v779 = vunpack.c.l.b16 %v119
  %v780 = vunpack.c.l.b16 %v120
  %v781 = vunpack.c.l.b16 %v121
  %v782 = vunpack.c.l.b16 %v122
  %v783 = vunpack.c.l.b16 %v123
  %v784 = vunpack.c.l.b16 %v124
  %v785 = vunpack.c.l.b16 %v125
  %v786 = vunpack.c.l.b16 %v126
  %v787 = vunpack.c.l.b16 %v127
  %v788 = vunpack.c.l.b16 %v128
  %v789 = vunpack.c.l.b16 %v129
  %v790 = vunpack.c.l.b16 %v130
  %v791 = vunpack.c.l.b16 %v131
  %v792 = vunpack.c.l.b16 %v132
  %v793 = vunpack.c.l.b16 %v133
  %v794 = vunpack.c.l.b16 %v134
  %v795 = vunpack.c.l.b16 %v135
  %v796 = vunpack.c.l.b16 %v136
  %v797 = vunpack.c.l.b16 %v137
  %v798 = vunpack.c.l.b16 %v138
  %v799 = vunpack.c.l.b16 %v139
  %v800 = vunpack.c.l.b16 %v140
  %v801 = vunpack.c.l.b16 %v141
  %v802 = vunpack.c.l.b16 %v142
  %v803 = vunpack.c.l.b16 %v143
  %v804 = vunpack.c.l.b16 %v144
  %v805 = vunpack.c.l.b16 %v145
  %v806 = vunpack.c.l.b16 %v146
  %v807 = vunpack.c.l.b16 %v147
  %v808 = vunpack.c.l.b16 %v148
  %v809 = vunpack.c.l.b16 %v149
  %v810 = vunpack.c.l.b16 %v150
  %v811 = vunpack.c.l.b16 %v151
  %v812 = vunpack.c.l.b16 %v152
  %v813 = vunpack.c.l.b16 %v153
  %v814 = vunpack.c.l.b16 %v154
  %v815 = vunpack.c.l.b16 %v155
  %v816 = vunpack.c.l.b16 %v156
  %v817 = vunpack.c.l.b16 %v157
  %v818 = vunpack.c.l.b16 %v158
  %v819 = vunpack.c.l.b16 %v159
  %v820 = vunpack.c.l.b16 %v160
  %v821 = vunpack.c.l.b16 %v161
  %v822 = vunpack.c.l.b16 %v162
  %v823 = vunpack.c.l.b16 %v163
  %v824 = vunpack.c.l.b16 %v164
  %v825 = vunpack.c.l.b16 %v165
  %v826 = vunpack.c.l.b16 %v166
  %v827 = vunpack.c.l.b16 %v167
  %v828 = vunpack.c.l.b16 %v168
  %v829 = vunpack.c.l.b16 %v169
  %v830 = vunpack.c.l.b16 %v170
  %v831 = vunpack.c.l.b16 %v171
  %v832 = vunpack.c.l.b16 %v172
  %v833 = vunpack.c.l.b16 %v173
  %v834 = vunpack.c.l.b16 %v174
  %v835 = vunpack.c.l.b16 %v175
  %v836 = vunpack.c.l.b16 %v176
  %v837 = vunpack.c.l.b16 %v177
  %v838 = vunpack.c.l.b16 %v178
  %v839 = vunpack.c.l.b16 %v179
  %v840 = vunpack.c.l.b16 %v180
  %v841 = vunpack.c.l.b16 %v181
  %v842 = vunpack.c.l.b16 %v182
  %v843 = vunpack.c.l.b16 %v183
  %v844 = vunpack.c.l.b16 %v184
  %v845 = vunpack.c.l.b16 %v185
  %v846 = vunpack.c.l.b16 %v186
  %v847 = vunpack.c.l.b16 %v187
  %v848 = vunpack.c.l.b16 %v188
  %v849 = vunpack.c.l.b16 %v189
  %v850 = vunpack.c.l.b16 %v190
  %v851 = vunpack.c.l.b16 %v191
  %v852 = vunpack.c.l.b16 %v192
  %v853 = vunpack.c.l.b16 %v193
  %v854 = vunpack.c.l.b16 %v194
  %v855 = vunpack.c.l.b16 %v195
  %v856 = vunpack.c.l.b16 %v196
  %v857 = vunpack.c.l.b16 %v197
  %v858 = vunpack.c.l.b16 %v198
  %v859 = vunpack.c.l.b16 %v199
  %v860 = vunpack.c.l.b16 %v200
  %v861 = vunpack.c.l.b16 %v201
  %v862 = vunpack.c.l.b16 %v202
  %v863 = vunpack.c.l.b16 %v203
  %v864 = vunpack.c.l.b16 %v204
  %v865 = vunpack.c.l.b16 %v205
  %v866 = vunpack.c.l.b16 %v206
  %v867 = vunpack.c.l.b16 %v207
  %v868 = vunpack.c.l.b16 %v208
  %v869 = vunpack.c.l.b16 %v209
  %v870 = vunpack.c.l.b16 %v210
  %v871 = vunpack.c.l.b16 %v211
  %v872 = vunpack.c.l.b16 %v212
  %v873 = vunpack.c.l.b16 %v213
  %v874 = vunpack.c.l.b16 %v214
  %v875 = vunpack.c.l.b16 %v215
  %v876 = vunpack.c.l.b16 %v216
  %v877 = vunpack.c.l.b16 %v217
  %v878 = vunpack.c.l.b16 %v218
  %v879 = vunpack.c.l.b16 %v219
  %v880 = vunpack.c.l.b16 %v220
  %v881 = vunpack.c.l.b16 %v221
  %v882 = vunpack.c.l.b16 %v222
  %v883 = vunpack.c.l.b16 %v223
  %v884 = vunpack.c.l.b16 %v224
  %v885 = vunpack.c.l.b16 %v225
  %v886 = vunpack.c.l.b16 %v226
  %v887 = vunpack.c.l.b16 %v227
  %v888 = vunpack.c.l.b16 %v228
  %v889 = vunpack.c.l.b16 %v229
  %v890 = vunpack.c.l.b16 %v230
  %v891 = vunpack.c.l.b16 %v231
  %v892 = vunpack.c.l.b16 %v232
  %v893 = vunpack.c.l.b16 %v233
  %v894 = vunpack.c.l.b16 %v234
  %v895 = vunpack.c.l.b16 %v235
  %v896 = vunpack.c.l.b16 %v236
  %v897 = vunpack.c.l.b16 %v237
  %v898 = vpack.c.b16 %v755, %v754
  %v899 = vpack.c.b16 %v757, %v756
  %v900 = vpack.c.b16 %v759, %v758
  %v901 = vpack.c.b16 %v761, %v760
  %v902 = vpack.c.b16 %v763, %v762
  %v903 = vpack.c.b16 %v765, %v764
  %v904 = vpack.c.b16 %v767, %v766
  %v905 = vpack.c.b16 %v769, %v768
  %v906 = vpack.c.b16 %v771, %v770
  %v907 = vpack.c.b16 %v773, %v772
  %v908 = vpack.c.b16 %v775, %v774
  %v909 = vpack.c.b16 %v777, %v776
  %v910 = vpack.c.b16 %v779, %v778
  %v911 = vpack.c.b16 %v781, %v780
  %v912 = vpack.c.b16 %v783, %v782
  %v913 = vpack.c.b16 %v785, %v784
  %v914 = vpack.c.b16 %v787, %v786
  %v915 = vpack.c.b16 %v789, %v788
  %v916 = vpack.c.b16 %v791, %v790
  %v917 = vpack.c.b16 %v793, %v792
  %v918 = vpack.c.b16 %v795, %v794
  %v919 = vpack.c.b16 %v797, %v796
  %v920 = vpack.c.b16 %v799, %v798
  %v921 = vpack.c.b16 %v801, %v800
  %v922 = vpack.c.b16 %v803, %v802
  %v923 = vpack.c.b16 %v805, %v804
  %v924 = vpack.c.b16 %v807, %v806
  %v925 = vpack.c.b16 %v809, %v808
  %v926 = vpack.c.b16 %v811, %v810
  %v927 = vpack.c.b16 %v813, %v812
  %v928 = vpack.c.b16 %v815, %v814
  %v929 = vpack.c.b16 %v817, %v816
  %v930 = vpack.c.b16 %v819, %v818
  %v931 = vpack.c.b16 %v821, %v820
  %v932 = vpack.c.b16 %v823, %v822
  %v933 = vpack.c.b16 %v825, %v824
  %v934 = vpack.c.b16 %v827, %v826
  %v935 = vpack.c.b16 %v829, %v828
  %v936 = vpack.c.b16 %v831, %v830
  %v937 = vpack.c.b16 %v833, %v832
  %v938 = vpack.c.b16 %v835, %v834
  %v939 = vpack.c.b16 %v837, %v836
  %v940 = vpack.c.b16 %v839, %v838
  %v941 = vpack.c.b16 %v841, %v840
  %v942 = vpack.c.b16 %v843, %v842
  %v943 = vpack.c.b16 %v845, %v844
  %v944 = vpack.c.b16 %v847, %v846
  %v945 = vpack.c.b16 %v849, %v848
  %v946 = vpack.c.b16 %v851, %v850
  %v947 = vpack.c.b16 %v853, %v852
  %v948 = vpack.c.b16 %v855, %v854
  %v949 = vpack.c.b16 %v857, %v856
  %v950 = vpack.c.b16 %v859, %v858
  %v951 = vpack.c.b16 %v861, %v860
  %v952 = vpack.c.b16 %v863, %v862
  %v953 = vpack.c.b16 %v865, %v864
  %v954 = vpack.c.b16 %v867, %v866
  %v955 = vpack.c.b16 %v869, %v868
  %v956 = vpack.c.b16 %v871, %v870
  %v957 = vpack.c.b16 %v873, %v872
  %v958 = vpack.c.b16 %v875, %v874
  %v959 = vpack.c.b16 %v877, %v876
  %v960 = vpack.c.b16 %v879, %v878
  %v961 = vpack.c.b16 %v881, %v880
  %v962 = vpack.c.b16 %v883, %v882
  %v963 = vpack.c.b16 %v885, %v884
  %v964 = vpack.c.b16 %v887, %v886
  %v965 = vpack.c.b16 %v889, %v888
  %v966 = vpack.c.b16 %v891, %v890
  %v967 = vpack.c.b16 %v893, %v892
  %v968 = vpack.c.b16 %v895, %v894
  %v969 = vpack.c.b16 %v897, %v896
  %1042 = vmatpush.bf16.msra.mxu0 %v905
  %1043 = vmatpush.bf16.msra.mxu0 %v904
  %1044 = vmatpush.bf16.msra.mxu0 %v903
  %1045 = vmatpush.bf16.msra.mxu0 %v902
  %1046 = vmatpush.bf16.msra.mxu0 %v901
  %1047 = vmatpush.bf16.msra.mxu0 %v900
  %1048 = vmatpush.bf16.msra.mxu0 %v899
  %1049 = vmatpush.bf16.msra.mxu0 %v898
  %1050 = vmatmul.bf16.gmra.mxu0 %v466
  %v1051 = vpop.f32.mrf.mxu0
  %v1052 = vadd.f32 %v240, %v1051
  %v1053 = vpop.f32.mrf.mxu0
  %v1054 = vadd.f32 %v240, %v1053
  %1055 = vmatmul.bf16.gmra.mxu0 %v475
  %v1056 = vpop.f32.mrf.mxu0
  %v1057 = vadd.f32 %v240, %v1056
  %v1058 = vpop.f32.mrf.mxu0
  %v1059 = vadd.f32 %v240, %v1058
  %1060 = vmatmul.bf16.gmra.mxu0 %v484
  %v1061 = vpop.f32.mrf.mxu0
  %v1062 = vadd.f32 %v240, %v1061
  %v1063 = vpop.f32.mrf.mxu0
  %v1064 = vadd.f32 %v240, %v1063
  %1065 = vmatmul.bf16.gmra.mxu0 %v493
  %v1066 = vpop.f32.mrf.mxu0
  %v1067 = vadd.f32 %v240, %v1066
  %v1068 = vpop.f32.mrf.mxu0
  %v1069 = vadd.f32 %v240, %v1068
  %1070 = vmatmul.bf16.gmra.mxu0 %v502
  %v1071 = vpop.f32.mrf.mxu0
  %v1072 = vadd.f32 %v240, %v1071
  %v1073 = vpop.f32.mrf.mxu0
  %v1074 = vadd.f32 %v240, %v1073
  %1075 = vmatmul.bf16.gmra.mxu0 %v511
  %v1076 = vpop.f32.mrf.mxu0
  %v1077 = vadd.f32 %v240, %v1076
  %v1078 = vpop.f32.mrf.mxu0
  %v1079 = vadd.f32 %v240, %v1078
  %1080 = vmatmul.bf16.gmra.mxu0 %v520
  %v1081 = vpop.f32.mrf.mxu0
  %v1082 = vadd.f32 %v240, %v1081
  %v1083 = vpop.f32.mrf.mxu0
  %v1084 = vadd.f32 %v240, %v1083
  %1085 = vmatmul.bf16.gmra.mxu0 %v529
  %v1086 = vpop.f32.mrf.mxu0
  %v1087 = vadd.f32 %v240, %v1086
  %v1088 = vpop.f32.mrf.mxu0
  %v1089 = vadd.f32 %v240, %v1088
  %1090 = vdwg.mxu0
  %1091 = vmatpush.bf16.msra.mxu0 %v913
  %1092 = vmatpush.bf16.msra.mxu0 %v912
  %1093 = vmatpush.bf16.msra.mxu0 %v911
  %1094 = vmatpush.bf16.msra.mxu0 %v910
  %1095 = vmatpush.bf16.msra.mxu0 %v909
  %1096 = vmatpush.bf16.msra.mxu0 %v908
  %1097 = vmatpush.bf16.msra.mxu0 %v907
  %1098 = vmatpush.bf16.msra.mxu0 %v906
  %1099 = vmatmul.bf16.gmra.mxu0 %v467
  %v1100 = vpop.f32.mrf.mxu0
  %v1101 = vadd.f32 %v1052, %v1100
  %v1102 = vpop.f32.mrf.mxu0
  %v1103 = vadd.f32 %v1054, %v1102
  %1104 = vmatmul.bf16.gmra.mxu0 %v476
  %v1105 = vpop.f32.mrf.mxu0
  %v1106 = vadd.f32 %v1057, %v1105
  %v1107 = vpop.f32.mrf.mxu0
  %v1108 = vadd.f32 %v1059, %v1107
  %1109 = vmatmul.bf16.gmra.mxu0 %v485
  %v1110 = vpop.f32.mrf.mxu0
  %v1111 = vadd.f32 %v1062, %v1110
  %v1112 = vpop.f32.mrf.mxu0
  %v1113 = vadd.f32 %v1064, %v1112
  %1114 = vmatmul.bf16.gmra.mxu0 %v494
  %v1115 = vpop.f32.mrf.mxu0
  %v1116 = vadd.f32 %v1067, %v1115
  %v1117 = vpop.f32.mrf.mxu0
  %v1118 = vadd.f32 %v1069, %v1117
  %1119 = vmatmul.bf16.gmra.mxu0 %v503
  %v1120 = vpop.f32.mrf.mxu0
  %v1121 = vadd.f32 %v1072, %v1120
  %v1122 = vpop.f32.mrf.mxu0
  %v1123 = vadd.f32 %v1074, %v1122
  %1124 = vmatmul.bf16.gmra.mxu0 %v512
  %v1125 = vpop.f32.mrf.mxu0
  %v1126 = vadd.f32 %v1077, %v1125
  %v1127 = vpop.f32.mrf.mxu0
  %v1128 = vadd.f32 %v1079, %v1127
  %1129 = vmatmul.bf16.gmra.mxu0 %v521
  %v1130 = vpop.f32.mrf.mxu0
  %v1131 = vadd.f32 %v1082, %v1130
  %v1132 = vpop.f32.mrf.mxu0
  %v1133 = vadd.f32 %v1084, %v1132
  %1134 = vmatmul.bf16.gmra.mxu0 %v530
  %v1135 = vpop.f32.mrf.mxu0
  %v1136 = vadd.f32 %v1087, %v1135
  %v1137 = vpop.f32.mrf.mxu0
  %v1138 = vadd.f32 %v1089, %v1137
  %1139 = vdwg.mxu0
  %1140 = vmatpush.bf16.msra.mxu0 %v921
  %1141 = vmatpush.bf16.msra.mxu0 %v920
  %1142 = vmatpush.bf16.msra.mxu0 %v919
  %1143 = vmatpush.bf16.msra.mxu0 %v918
  %1144 = vmatpush.bf16.msra.mxu0 %v917
  %1145 = vmatpush.bf16.msra.mxu0 %v916
  %1146 = vmatpush.bf16.msra.mxu0 %v915
  %1147 = vmatpush.bf16.msra.mxu0 %v914
  %1148 = vmatmul.bf16.gmra.mxu0 %v468
  %v1149 = vpop.f32.mrf.mxu0
  %v1150 = vadd.f32 %v1101, %v1149
  %v1151 = vpop.f32.mrf.mxu0
  %v1152 = vadd.f32 %v1103, %v1151
  %1153 = vmatmul.bf16.gmra.mxu0 %v477
  %v1154 = vpop.f32.mrf.mxu0
  %v1155 = vadd.f32 %v1106, %v1154
  %v1156 = vpop.f32.mrf.mxu0
  %v1157 = vadd.f32 %v1108, %v1156
  %1158 = vmatmul.bf16.gmra.mxu0 %v486
  %v1159 = vpop.f32.mrf.mxu0
  %v1160 = vadd.f32 %v1111, %v1159
  %v1161 = vpop.f32.mrf.mxu0
  %v1162 = vadd.f32 %v1113, %v1161
  %1163 = vmatmul.bf16.gmra.mxu0 %v495
  %v1164 = vpop.f32.mrf.mxu0
  %v1165 = vadd.f32 %v1116, %v1164
  %v1166 = vpop.f32.mrf.mxu0
  %v1167 = vadd.f32 %v1118, %v1166
  %1168 = vmatmul.bf16.gmra.mxu0 %v504
  %v1169 = vpop.f32.mrf.mxu0
  %v1170 = vadd.f32 %v1121, %v1169
  %v1171 = vpop.f32.mrf.mxu0
  %v1172 = vadd.f32 %v1123, %v1171
  %1173 = vmatmul.bf16.gmra.mxu0 %v513
  %v1174 = vpop.f32.mrf.mxu0
  %v1175 = vadd.f32 %v1126, %v1174
  %v1176 = vpop.f32.mrf.mxu0
  %v1177 = vadd.f32 %v1128, %v1176
  %1178 = vmatmul.bf16.gmra.mxu0 %v522
  %v1179 = vpop.f32.mrf.mxu0
  %v1180 = vadd.f32 %v1131, %v1179
  %v1181 = vpop.f32.mrf.mxu0
  %v1182 = vadd.f32 %v1133, %v1181
  %1183 = vmatmul.bf16.gmra.mxu0 %v531
  %v1184 = vpop.f32.mrf.mxu0
  %v1185 = vadd.f32 %v1136, %v1184
  %v1186 = vpop.f32.mrf.mxu0
  %v1187 = vadd.f32 %v1138, %v1186
  %1188 = vdwg.mxu0
  %1189 = vmatpush.bf16.msra.mxu0 %v929
  %1190 = vmatpush.bf16.msra.mxu0 %v928
  %1191 = vmatpush.bf16.msra.mxu0 %v927
  %1192 = vmatpush.bf16.msra.mxu0 %v926
  %1193 = vmatpush.bf16.msra.mxu0 %v925
  %1194 = vmatpush.bf16.msra.mxu0 %v924
  %1195 = vmatpush.bf16.msra.mxu0 %v923
  %1196 = vmatpush.bf16.msra.mxu0 %v922
  %1197 = vmatmul.bf16.gmra.mxu0 %v469
  %v1198 = vpop.f32.mrf.mxu0
  %v1199 = vadd.f32 %v1150, %v1198
  %v1200 = vpop.f32.mrf.mxu0
  %v1201 = vadd.f32 %v1152, %v1200
  %1202 = vmatmul.bf16.gmra.mxu0 %v478
  %v1203 = vpop.f32.mrf.mxu0
  %v1204 = vadd.f32 %v1155, %v1203
  %v1205 = vpop.f32.mrf.mxu0
  %v1206 = vadd.f32 %v1157, %v1205
  %1207 = vmatmul.bf16.gmra.mxu0 %v487
  %v1208 = vpop.f32.mrf.mxu0
  %v1209 = vadd.f32 %v1160, %v1208
  %v1210 = vpop.f32.mrf.mxu0
  %v1211 = vadd.f32 %v1162, %v1210
  %1212 = vmatmul.bf16.gmra.mxu0 %v496
  %v1213 = vpop.f32.mrf.mxu0
  %v1214 = vadd.f32 %v1165, %v1213
  %v1215 = vpop.f32.mrf.mxu0
  %v1216 = vadd.f32 %v1167, %v1215
  %1217 = vmatmul.bf16.gmra.mxu0 %v505
  %v1218 = vpop.f32.mrf.mxu0
  %v1219 = vadd.f32 %v1170, %v1218
  %v1220 = vpop.f32.mrf.mxu0
  %v1221 = vadd.f32 %v1172, %v1220
  %1222 = vmatmul.bf16.gmra.mxu0 %v514
  %v1223 = vpop.f32.mrf.mxu0
  %v1224 = vadd.f32 %v1175, %v1223
  %v1225 = vpop.f32.mrf.mxu0
  %v1226 = vadd.f32 %v1177, %v1225
  %1227 = vmatmul.bf16.gmra.mxu0 %v523
  %v1228 = vpop.f32.mrf.mxu0
  %v1229 = vadd.f32 %v1180, %v1228
  %v1230 = vpop.f32.mrf.mxu0
  %v1231 = vadd.f32 %v1182, %v1230
  %1232 = vmatmul.bf16.gmra.mxu0 %v532
  %v1233 = vpop.f32.mrf.mxu0
  %v1234 = vadd.f32 %v1185, %v1233
  %v1235 = vpop.f32.mrf.mxu0
  %v1236 = vadd.f32 %v1187, %v1235
  %1237 = vdwg.mxu0
  %1238 = vmatpush.bf16.msra.mxu0 %v937
  %1239 = vmatpush.bf16.msra.mxu0 %v936
  %1240 = vmatpush.bf16.msra.mxu0 %v935
  %1241 = vmatpush.bf16.msra.mxu0 %v934
  %1242 = vmatpush.bf16.msra.mxu0 %v933
  %1243 = vmatpush.bf16.msra.mxu0 %v932
  %1244 = vmatpush.bf16.msra.mxu0 %v931
  %1245 = vmatpush.bf16.msra.mxu0 %v930
  %1246 = vmatmul.bf16.gmra.mxu0 %v470
  %v1247 = vpop.f32.mrf.mxu0
  %v1248 = vadd.f32 %v1199, %v1247
  %v1249 = vpop.f32.mrf.mxu0
  %v1250 = vadd.f32 %v1201, %v1249
  %1251 = vmatmul.bf16.gmra.mxu0 %v479
  %v1252 = vpop.f32.mrf.mxu0
  %v1253 = vadd.f32 %v1204, %v1252
  %v1254 = vpop.f32.mrf.mxu0
  %v1255 = vadd.f32 %v1206, %v1254
  %1256 = vmatmul.bf16.gmra.mxu0 %v488
  %v1257 = vpop.f32.mrf.mxu0
  %v1258 = vadd.f32 %v1209, %v1257
  %v1259 = vpop.f32.mrf.mxu0
  %v1260 = vadd.f32 %v1211, %v1259
  %1261 = vmatmul.bf16.gmra.mxu0 %v497
  %v1262 = vpop.f32.mrf.mxu0
  %v1263 = vadd.f32 %v1214, %v1262
  %v1264 = vpop.f32.mrf.mxu0
  %v1265 = vadd.f32 %v1216, %v1264
  %1266 = vmatmul.bf16.gmra.mxu0 %v506
  %v1267 = vpop.f32.mrf.mxu0
  %v1268 = vadd.f32 %v1219, %v1267
  %v1269 = vpop.f32.mrf.mxu0
  %v1270 = vadd.f32 %v1221, %v1269
  %1271 = vmatmul.bf16.gmra.mxu0 %v515
  %v1272 = vpop.f32.mrf.mxu0
  %v1273 = vadd.f32 %v1224, %v1272
  %v1274 = vpop.f32.mrf.mxu0
  %v1275 = vadd.f32 %v1226, %v1274
  %1276 = vmatmul.bf16.gmra.mxu0 %v524
  %v1277 = vpop.f32.mrf.mxu0
  %v1278 = vadd.f32 %v1229, %v1277
  %v1279 = vpop.f32.mrf.mxu0
  %v1280 = vadd.f32 %v1231, %v1279
  %1281 = vmatmul.bf16.gmra.mxu0 %v533
  %v1282 = vpop.f32.mrf.mxu0
  %v1283 = vadd.f32 %v1234, %v1282
  %v1284 = vpop.f32.mrf.mxu0
  %v1285 = vadd.f32 %v1236, %v1284
  %1286 = vdwg.mxu0
  %1287 = vmatpush.bf16.msra.mxu0 %v945
  %1288 = vmatpush.bf16.msra.mxu0 %v944
  %1289 = vmatpush.bf16.msra.mxu0 %v943
  %1290 = vmatpush.bf16.msra.mxu0 %v942
  %1291 = vmatpush.bf16.msra.mxu0 %v941
  %1292 = vmatpush.bf16.msra.mxu0 %v940
  %1293 = vmatpush.bf16.msra.mxu0 %v939
  %1294 = vmatpush.bf16.msra.mxu0 %v938
  %1295 = vmatmul.bf16.gmra.mxu0 %v471
  %v1296 = vpop.f32.mrf.mxu0
  %v1297 = vadd.f32 %v1248, %v1296
  %v1298 = vpop.f32.mrf.mxu0
  %v1299 = vadd.f32 %v1250, %v1298
  %1300 = vmatmul.bf16.gmra.mxu0 %v480
  %v1301 = vpop.f32.mrf.mxu0
  %v1302 = vadd.f32 %v1253, %v1301
  %v1303 = vpop.f32.mrf.mxu0
  %v1304 = vadd.f32 %v1255, %v1303
  %1305 = vmatmul.bf16.gmra.mxu0 %v489
  %v1306 = vpop.f32.mrf.mxu0
  %v1307 = vadd.f32 %v1258, %v1306
  %v1308 = vpop.f32.mrf.mxu0
  %v1309 = vadd.f32 %v1260, %v1308
  %1310 = vmatmul.bf16.gmra.mxu0 %v498
  %v1311 = vpop.f32.mrf.mxu0
  %v1312 = vadd.f32 %v1263, %v1311
  %v1313 = vpop.f32.mrf.mxu0
  %v1314 = vadd.f32 %v1265, %v1313
  %1315 = vmatmul.bf16.gmra.mxu0 %v507
  %v1316 = vpop.f32.mrf.mxu0
  %v1317 = vadd.f32 %v1268, %v1316
  %v1318 = vpop.f32.mrf.mxu0
  %v1319 = vadd.f32 %v1270, %v1318
  %1320 = vmatmul.bf16.gmra.mxu0 %v516
  %v1321 = vpop.f32.mrf.mxu0
  %v1322 = vadd.f32 %v1273, %v1321
  %v1323 = vpop.f32.mrf.mxu0
  %v1324 = vadd.f32 %v1275, %v1323
  %1325 = vmatmul.bf16.gmra.mxu0 %v525
  %v1326 = vpop.f32.mrf.mxu0
  %v1327 = vadd.f32 %v1278, %v1326
  %v1328 = vpop.f32.mrf.mxu0
  %v1329 = vadd.f32 %v1280, %v1328
  %1330 = vmatmul.bf16.gmra.mxu0 %v534
  %v1331 = vpop.f32.mrf.mxu0
  %v1332 = vadd.f32 %v1283, %v1331
  %v1333 = vpop.f32.mrf.mxu0
  %v1334 = vadd.f32 %v1285, %v1333
  %1335 = vdwg.mxu0
  %1336 = vmatpush.bf16.msra.mxu0 %v953
  %1337 = vmatpush.bf16.msra.mxu0 %v952
  %1338 = vmatpush.bf16.msra.mxu0 %v951
  %1339 = vmatpush.bf16.msra.mxu0 %v950
  %1340 = vmatpush.bf16.msra.mxu0 %v949
  %1341 = vmatpush.bf16.msra.mxu0 %v948
  %1342 = vmatpush.bf16.msra.mxu0 %v947
  %1343 = vmatpush.bf16.msra.mxu0 %v946
  %1344 = vmatmul.bf16.gmra.mxu0 %v472
  %v1345 = vpop.f32.mrf.mxu0
  %v1346 = vadd.f32 %v1297, %v1345
  %v1347 = vpop.f32.mrf.mxu0
  %v1348 = vadd.f32 %v1299, %v1347
  %1349 = vmatmul.bf16.gmra.mxu0 %v481
  %v1350 = vpop.f32.mrf.mxu0
  %v1351 = vadd.f32 %v1302, %v1350
  %v1352 = vpop.f32.mrf.mxu0
  %v1353 = vadd.f32 %v1304, %v1352
  %1354 = vmatmul.bf16.gmra.mxu0 %v490
  %v1355 = vpop.f32.mrf.mxu0
  %v1356 = vadd.f32 %v1307, %v1355
  %v1357 = vpop.f32.mrf.mxu0
  %v1358 = vadd.f32 %v1309, %v1357
  %1359 = vmatmul.bf16.gmra.mxu0 %v499
  %v1360 = vpop.f32.mrf.mxu0
  %v1361 = vadd.f32 %v1312, %v1360
  %v1362 = vpop.f32.mrf.mxu0
  %v1363 = vadd.f32 %v1314, %v1362
  %1364 = vmatmul.bf16.gmra.mxu0 %v508
  %v1365 = vpop.f32.mrf.mxu0
  %v1366 = vadd.f32 %v1317, %v1365
  %v1367 = vpop.f32.mrf.mxu0
  %v1368 = vadd.f32 %v1319, %v1367
  %1369 = vmatmul.bf16.gmra.mxu0 %v517
  %v1370 = vpop.f32.mrf.mxu0
  %v1371 = vadd.f32 %v1322, %v1370
  %v1372 = vpop.f32.mrf.mxu0
  %v1373 = vadd.f32 %v1324, %v1372
  %1374 = vmatmul.bf16.gmra.mxu0 %v526
  %v1375 = vpop.f32.mrf.mxu0
  %v1376 = vadd.f32 %v1327, %v1375
  %v1377 = vpop.f32.mrf.mxu0
  %v1378 = vadd.f32 %v1329, %v1377
  %1379 = vmatmul.bf16.gmra.mxu0 %v535
  %v1380 = vpop.f32.mrf.mxu0
  %v1381 = vadd.f32 %v1332, %v1380
  %v1382 = vpop.f32.mrf.mxu0
  %v1383 = vadd.f32 %v1334, %v1382
  %1384 = vdwg.mxu0
  %1385 = vmatpush.bf16.msra.mxu0 %v961
  %1386 = vmatpush.bf16.msra.mxu0 %v960
  %1387 = vmatpush.bf16.msra.mxu0 %v959
  %1388 = vmatpush.bf16.msra.mxu0 %v958
  %1389 = vmatpush.bf16.msra.mxu0 %v957
  %1390 = vmatpush.bf16.msra.mxu0 %v956
  %1391 = vmatpush.bf16.msra.mxu0 %v955
  %1392 = vmatpush.bf16.msra.mxu0 %v954
  %1393 = vmatmul.bf16.gmra.mxu0 %v473
  %v1394 = vpop.f32.mrf.mxu0
  %v1395 = vadd.f32 %v1346, %v1394
  %v1396 = vpop.f32.mrf.mxu0
  %v1397 = vadd.f32 %v1348, %v1396
  %1398 = vmatmul.bf16.gmra.mxu0 %v482
  %v1399 = vpop.f32.mrf.mxu0
  %v1400 = vadd.f32 %v1351, %v1399
  %v1401 = vpop.f32.mrf.mxu0
  %v1402 = vadd.f32 %v1353, %v1401
  %1403 = vmatmul.bf16.gmra.mxu0 %v491
  %v1404 = vpop.f32.mrf.mxu0
  %v1405 = vadd.f32 %v1356, %v1404
  %v1406 = vpop.f32.mrf.mxu0
  %v1407 = vadd.f32 %v1358, %v1406
  %1408 = vmatmul.bf16.gmra.mxu0 %v500
  %v1409 = vpop.f32.mrf.mxu0
  %v1410 = vadd.f32 %v1361, %v1409
  %v1411 = vpop.f32.mrf.mxu0
  %v1412 = vadd.f32 %v1363, %v1411
  %1413 = vmatmul.bf16.gmra.mxu0 %v509
  %v1414 = vpop.f32.mrf.mxu0
  %v1415 = vadd.f32 %v1366, %v1414
  %v1416 = vpop.f32.mrf.mxu0
  %v1417 = vadd.f32 %v1368, %v1416
  %1418 = vmatmul.bf16.gmra.mxu0 %v518
  %v1419 = vpop.f32.mrf.mxu0
  %v1420 = vadd.f32 %v1371, %v1419
  %v1421 = vpop.f32.mrf.mxu0
  %v1422 = vadd.f32 %v1373, %v1421
  %1423 = vmatmul.bf16.gmra.mxu0 %v527
  %v1424 = vpop.f32.mrf.mxu0
  %v1425 = vadd.f32 %v1376, %v1424
  %v1426 = vpop.f32.mrf.mxu0
  %v1427 = vadd.f32 %v1378, %v1426
  %1428 = vmatmul.bf16.gmra.mxu0 %v536
  %v1429 = vpop.f32.mrf.mxu0
  %v1430 = vadd.f32 %v1381, %v1429
  %v1431 = vpop.f32.mrf.mxu0
  %v1432 = vadd.f32 %v1383, %v1431
  %1433 = vdwg.mxu0
  %1434 = vmatpush.bf16.msra.mxu0 %v969
  %1435 = vmatpush.bf16.msra.mxu0 %v968
  %1436 = vmatpush.bf16.msra.mxu0 %v967
  %1437 = vmatpush.bf16.msra.mxu0 %v966
  %1438 = vmatpush.bf16.msra.mxu0 %v965
  %1439 = vmatpush.bf16.msra.mxu0 %v964
  %1440 = vmatpush.bf16.msra.mxu0 %v963
  %1441 = vmatpush.bf16.msra.mxu0 %v962
  %1442 = vmatmul.bf16.gmra.mxu0 %v474
  %v1443 = vpop.f32.mrf.mxu0
  %v1444 = vadd.f32 %v1395, %v1443
  %v1445 = vpop.f32.mrf.mxu0
  %v1446 = vadd.f32 %v1397, %v1445
  %1447 = vmatmul.bf16.gmra.mxu0 %v483
  %v1448 = vpop.f32.mrf.mxu0
  %v1449 = vadd.f32 %v1400, %v1448
  %v1450 = vpop.f32.mrf.mxu0
  %v1451 = vadd.f32 %v1402, %v1450
  %1452 = vmatmul.bf16.gmra.mxu0 %v492
  %v1453 = vpop.f32.mrf.mxu0
  %v1454 = vadd.f32 %v1405, %v1453
  %v1455 = vpop.f32.mrf.mxu0
  %v1456 = vadd.f32 %v1407, %v1455
  %1457 = vmatmul.bf16.gmra.mxu0 %v501
  %v1458 = vpop.f32.mrf.mxu0
  %v1459 = vadd.f32 %v1410, %v1458
  %v1460 = vpop.f32.mrf.mxu0
  %v1461 = vadd.f32 %v1412, %v1460
  %1462 = vmatmul.bf16.gmra.mxu0 %v510
  %v1463 = vpop.f32.mrf.mxu0
  %v1464 = vadd.f32 %v1415, %v1463
  %v1465 = vpop.f32.mrf.mxu0
  %v1466 = vadd.f32 %v1417, %v1465
  %1467 = vmatmul.bf16.gmra.mxu0 %v519
  %v1468 = vpop.f32.mrf.mxu0
  %v1469 = vadd.f32 %v1420, %v1468
  %v1470 = vpop.f32.mrf.mxu0
  %v1471 = vadd.f32 %v1422, %v1470
  %1472 = vmatmul.bf16.gmra.mxu0 %v528
  %v1473 = vpop.f32.mrf.mxu0
  %v1474 = vadd.f32 %v1425, %v1473
  %v1475 = vpop.f32.mrf.mxu0
  %v1476 = vadd.f32 %v1427, %v1475
  %1477 = vmatmul.bf16.gmra.mxu0 %v537
  %v1478 = vpop.f32.mrf.mxu0
  %v1479 = vadd.f32 %v1430, %v1478
  %v1480 = vpop.f32.mrf.mxu0
  %v1481 = vadd.f32 %v1432, %v1480
  %1482 = vdwg.mxu0
  %v1483 = vxor.u32 %v1444, 2147483648
  %v1484 = vxor.u32 %v1446, 2147483648
  %v1485 = vxor.u32 %v1449, 2147483648
  %v1486 = vxor.u32 %v1451, 2147483648
  %v1487 = vxor.u32 %v1454, 2147483648
  %v1488 = vxor.u32 %v1456, 2147483648
  %v1489 = vxor.u32 %v1459, 2147483648
  %v1490 = vxor.u32 %v1461, 2147483648
  %v1491 = vxor.u32 %v1464, 2147483648
  %v1492 = vxor.u32 %v1466, 2147483648
  %v1493 = vxor.u32 %v1469, 2147483648
  %v1494 = vxor.u32 %v1471, 2147483648
  %v1495 = vxor.u32 %v1474, 2147483648
  %v1496 = vxor.u32 %v1476, 2147483648
  %v1497 = vxor.u32 %v1479, 2147483648
  %v1498 = vxor.u32 %v1481, 2147483648
  %v1499 = vmul.f32 %v1483, 1.442695
  %v1500 = vpow.pop %v1499
  %v1501 = vmul.f32 %v1484, 1.442695
  %v1502 = vpow.pop %v1501
  %v1503 = vmul.f32 %v1485, 1.442695
  %v1504 = vpow.pop %v1503
  %v1505 = vmul.f32 %v1486, 1.442695
  %v1506 = vpow.pop %v1505
  %v1507 = vmul.f32 %v1487, 1.442695
  %v1508 = vpow.pop %v1507
  %v1509 = vmul.f32 %v1488, 1.442695
  %v1510 = vpow.pop %v1509
  %v1511 = vmul.f32 %v1489, 1.442695
  %v1512 = vpow.pop %v1511
  %v1513 = vmul.f32 %v1490, 1.442695
  %v1514 = vpow.pop %v1513
  %v1515 = vmul.f32 %v1491, 1.442695
  %v1516 = vpow.pop %v1515
  %v1517 = vmul.f32 %v1492, 1.442695
  %v1518 = vpow.pop %v1517
  %v1519 = vmul.f32 %v1493, 1.442695
  %v1520 = vpow.pop %v1519
  %v1521 = vmul.f32 %v1494, 1.442695
  %v1522 = vpow.pop %v1521
  %v1523 = vmul.f32 %v1495, 1.442695
  %v1524 = vpow.pop %v1523
  %v1525 = vmul.f32 %v1496, 1.442695
  %v1526 = vpow.pop %v1525
  %v1527 = vmul.f32 %v1497, 1.442695
  %v1528 = vpow.pop %v1527
  %v1529 = vmul.f32 %v1498, 1.442695
  %v1530 = vpow.pop %v1529
  %v1531 = vadd.f32 %v1500, 1.0
  %v1532 = vadd.f32 %v1502, 1.0
  %v1533 = vadd.f32 %v1504, 1.0
  %v1534 = vadd.f32 %v1506, 1.0
  %v1535 = vadd.f32 %v1508, 1.0
  %v1536 = vadd.f32 %v1510, 1.0
  %v1537 = vadd.f32 %v1512, 1.0
  %v1538 = vadd.f32 %v1514, 1.0
  %v1539 = vadd.f32 %v1516, 1.0
  %v1540 = vadd.f32 %v1518, 1.0
  %v1541 = vadd.f32 %v1520, 1.0
  %v1542 = vadd.f32 %v1522, 1.0
  %v1543 = vadd.f32 %v1524, 1.0
  %v1544 = vadd.f32 %v1526, 1.0
  %v1545 = vadd.f32 %v1528, 1.0
  %v1546 = vadd.f32 %v1530, 1.0
  %v1547 = vrcp.pop %v1531
  %v1548 = vmul.f32 %v1531, %v1547
  %v1549 = vsub.f32 1.0, %v1548
  %v1550 = vmul.f32 %v1547, %v1549
  %v1551 = vadd.f32 %v1547, %v1550
  %vm1552 = vweird.f32 %v1531
  %vm1553 = vweird.f32 %v1547
  %vm1554 = vmor %vm1552, %vm1553
  %v1555 = vsel %vm1554, %v1547, %v1551
  %v1556 = vand.u32 2147483647, %v1531
  %vm1557 = vcmp.eq.f32.partialorder %v1556, 8.507059e+37
  %v1558 = vand.u32 %v1531, 2147483648
  %v1559 = vor.u32 1.1754944e-38, %v1558
  %v1560 = vsel %vm1557, %v1559, %v1555
  %v1561 = vmul.f32 1.0, %v1560
  %v1562 = vrcp.pop %v1532
  %v1563 = vmul.f32 %v1532, %v1562
  %v1564 = vsub.f32 1.0, %v1563
  %v1565 = vmul.f32 %v1562, %v1564
  %v1566 = vadd.f32 %v1562, %v1565
  %vm1567 = vweird.f32 %v1532
  %vm1568 = vweird.f32 %v1562
  %vm1569 = vmor %vm1567, %vm1568
  %v1570 = vsel %vm1569, %v1562, %v1566
  %v1571 = vand.u32 2147483647, %v1532
  %vm1572 = vcmp.eq.f32.partialorder %v1571, 8.507059e+37
  %v1573 = vand.u32 %v1532, 2147483648
  %v1574 = vor.u32 1.1754944e-38, %v1573
  %v1575 = vsel %vm1572, %v1574, %v1570
  %v1576 = vmul.f32 1.0, %v1575
  %v1577 = vrcp.pop %v1533
  %v1578 = vmul.f32 %v1533, %v1577
  %v1579 = vsub.f32 1.0, %v1578
  %v1580 = vmul.f32 %v1577, %v1579
  %v1581 = vadd.f32 %v1577, %v1580
  %vm1582 = vweird.f32 %v1533
  %vm1583 = vweird.f32 %v1577
  %vm1584 = vmor %vm1582, %vm1583
  %v1585 = vsel %vm1584, %v1577, %v1581
  %v1586 = vand.u32 2147483647, %v1533
  %vm1587 = vcmp.eq.f32.partialorder %v1586, 8.507059e+37
  %v1588 = vand.u32 %v1533, 2147483648
  %v1589 = vor.u32 1.1754944e-38, %v1588
  %v1590 = vsel %vm1587, %v1589, %v1585
  %v1591 = vmul.f32 1.0, %v1590
  %v1592 = vrcp.pop %v1534
  %v1593 = vmul.f32 %v1534, %v1592
  %v1594 = vsub.f32 1.0, %v1593
  %v1595 = vmul.f32 %v1592, %v1594
  %v1596 = vadd.f32 %v1592, %v1595
  %vm1597 = vweird.f32 %v1534
  %vm1598 = vweird.f32 %v1592
  %vm1599 = vmor %vm1597, %vm1598
  %v1600 = vsel %vm1599, %v1592, %v1596
  %v1601 = vand.u32 2147483647, %v1534
  %vm1602 = vcmp.eq.f32.partialorder %v1601, 8.507059e+37
  %v1603 = vand.u32 %v1534, 2147483648
  %v1604 = vor.u32 1.1754944e-38, %v1603
  %v1605 = vsel %vm1602, %v1604, %v1600
  %v1606 = vmul.f32 1.0, %v1605
  %v1607 = vrcp.pop %v1535
  %v1608 = vmul.f32 %v1535, %v1607
  %v1609 = vsub.f32 1.0, %v1608
  %v1610 = vmul.f32 %v1607, %v1609
  %v1611 = vadd.f32 %v1607, %v1610
  %vm1612 = vweird.f32 %v1535
  %vm1613 = vweird.f32 %v1607
  %vm1614 = vmor %vm1612, %vm1613
  %v1615 = vsel %vm1614, %v1607, %v1611
  %v1616 = vand.u32 2147483647, %v1535
  %vm1617 = vcmp.eq.f32.partialorder %v1616, 8.507059e+37
  %v1618 = vand.u32 %v1535, 2147483648
  %v1619 = vor.u32 1.1754944e-38, %v1618
  %v1620 = vsel %vm1617, %v1619, %v1615
  %v1621 = vmul.f32 1.0, %v1620
  %v1622 = vrcp.pop %v1536
  %v1623 = vmul.f32 %v1536, %v1622
  %v1624 = vsub.f32 1.0, %v1623
  %v1625 = vmul.f32 %v1622, %v1624
  %v1626 = vadd.f32 %v1622, %v1625
  %vm1627 = vweird.f32 %v1536
  %vm1628 = vweird.f32 %v1622
  %vm1629 = vmor %vm1627, %vm1628
  %v1630 = vsel %vm1629, %v1622, %v1626
  %v1631 = vand.u32 2147483647, %v1536
  %vm1632 = vcmp.eq.f32.partialorder %v1631, 8.507059e+37
  %v1633 = vand.u32 %v1536, 2147483648
  %v1634 = vor.u32 1.1754944e-38, %v1633
  %v1635 = vsel %vm1632, %v1634, %v1630
  %v1636 = vmul.f32 1.0, %v1635
  %v1637 = vrcp.pop %v1537
  %v1638 = vmul.f32 %v1537, %v1637
  %v1639 = vsub.f32 1.0, %v1638
  %v1640 = vmul.f32 %v1637, %v1639
  %v1641 = vadd.f32 %v1637, %v1640
  %vm1642 = vweird.f32 %v1537
  %vm1643 = vweird.f32 %v1637
  %vm1644 = vmor %vm1642, %vm1643
  %v1645 = vsel %vm1644, %v1637, %v1641
  %v1646 = vand.u32 2147483647, %v1537
  %vm1647 = vcmp.eq.f32.partialorder %v1646, 8.507059e+37
  %v1648 = vand.u32 %v1537, 2147483648
  %v1649 = vor.u32 1.1754944e-38, %v1648
  %v1650 = vsel %vm1647, %v1649, %v1645
  %v1651 = vmul.f32 1.0, %v1650
  %v1652 = vrcp.pop %v1538
  %v1653 = vmul.f32 %v1538, %v1652
  %v1654 = vsub.f32 1.0, %v1653
  %v1655 = vmul.f32 %v1652, %v1654
  %v1656 = vadd.f32 %v1652, %v1655
  %vm1657 = vweird.f32 %v1538
  %vm1658 = vweird.f32 %v1652
  %vm1659 = vmor %vm1657, %vm1658
  %v1660 = vsel %vm1659, %v1652, %v1656
  %v1661 = vand.u32 2147483647, %v1538
  %vm1662 = vcmp.eq.f32.partialorder %v1661, 8.507059e+37
  %v1663 = vand.u32 %v1538, 2147483648
  %v1664 = vor.u32 1.1754944e-38, %v1663
  %v1665 = vsel %vm1662, %v1664, %v1660
  %v1666 = vmul.f32 1.0, %v1665
  %v1667 = vrcp.pop %v1539
  %v1668 = vmul.f32 %v1539, %v1667
  %v1669 = vsub.f32 1.0, %v1668
  %v1670 = vmul.f32 %v1667, %v1669
  %v1671 = vadd.f32 %v1667, %v1670
  %vm1672 = vweird.f32 %v1539
  %vm1673 = vweird.f32 %v1667
  %vm1674 = vmor %vm1672, %vm1673
  %v1675 = vsel %vm1674, %v1667, %v1671
  %v1676 = vand.u32 2147483647, %v1539
  %vm1677 = vcmp.eq.f32.partialorder %v1676, 8.507059e+37
  %v1678 = vand.u32 %v1539, 2147483648
  %v1679 = vor.u32 1.1754944e-38, %v1678
  %v1680 = vsel %vm1677, %v1679, %v1675
  %v1681 = vmul.f32 1.0, %v1680
  %v1682 = vrcp.pop %v1540
  %v1683 = vmul.f32 %v1540, %v1682
  %v1684 = vsub.f32 1.0, %v1683
  %v1685 = vmul.f32 %v1682, %v1684
  %v1686 = vadd.f32 %v1682, %v1685
  %vm1687 = vweird.f32 %v1540
  %vm1688 = vweird.f32 %v1682
  %vm1689 = vmor %vm1687, %vm1688
  %v1690 = vsel %vm1689, %v1682, %v1686
  %v1691 = vand.u32 2147483647, %v1540
  %vm1692 = vcmp.eq.f32.partialorder %v1691, 8.507059e+37
  %v1693 = vand.u32 %v1540, 2147483648
  %v1694 = vor.u32 1.1754944e-38, %v1693
  %v1695 = vsel %vm1692, %v1694, %v1690
  %v1696 = vmul.f32 1.0, %v1695
  %v1697 = vrcp.pop %v1541
  %v1698 = vmul.f32 %v1541, %v1697
  %v1699 = vsub.f32 1.0, %v1698
  %v1700 = vmul.f32 %v1697, %v1699
  %v1701 = vadd.f32 %v1697, %v1700
  %vm1702 = vweird.f32 %v1541
  %vm1703 = vweird.f32 %v1697
  %vm1704 = vmor %vm1702, %vm1703
  %v1705 = vsel %vm1704, %v1697, %v1701
  %v1706 = vand.u32 2147483647, %v1541
  %vm1707 = vcmp.eq.f32.partialorder %v1706, 8.507059e+37
  %v1708 = vand.u32 %v1541, 2147483648
  %v1709 = vor.u32 1.1754944e-38, %v1708
  %v1710 = vsel %vm1707, %v1709, %v1705
  %v1711 = vmul.f32 1.0, %v1710
  %v1712 = vrcp.pop %v1542
  %v1713 = vmul.f32 %v1542, %v1712
  %v1714 = vsub.f32 1.0, %v1713
  %v1715 = vmul.f32 %v1712, %v1714
  %v1716 = vadd.f32 %v1712, %v1715
  %vm1717 = vweird.f32 %v1542
  %vm1718 = vweird.f32 %v1712
  %vm1719 = vmor %vm1717, %vm1718
  %v1720 = vsel %vm1719, %v1712, %v1716
  %v1721 = vand.u32 2147483647, %v1542
  %vm1722 = vcmp.eq.f32.partialorder %v1721, 8.507059e+37
  %v1723 = vand.u32 %v1542, 2147483648
  %v1724 = vor.u32 1.1754944e-38, %v1723
  %v1725 = vsel %vm1722, %v1724, %v1720
  %v1726 = vmul.f32 1.0, %v1725
  %v1727 = vrcp.pop %v1543
  %v1728 = vmul.f32 %v1543, %v1727
  %v1729 = vsub.f32 1.0, %v1728
  %v1730 = vmul.f32 %v1727, %v1729
  %v1731 = vadd.f32 %v1727, %v1730
  %vm1732 = vweird.f32 %v1543
  %vm1733 = vweird.f32 %v1727
  %vm1734 = vmor %vm1732, %vm1733
  %v1735 = vsel %vm1734, %v1727, %v1731
  %v1736 = vand.u32 2147483647, %v1543
  %vm1737 = vcmp.eq.f32.partialorder %v1736, 8.507059e+37
  %v1738 = vand.u32 %v1543, 2147483648
  %v1739 = vor.u32 1.1754944e-38, %v1738
  %v1740 = vsel %vm1737, %v1739, %v1735
  %v1741 = vmul.f32 1.0, %v1740
  %v1742 = vrcp.pop %v1544
  %v1743 = vmul.f32 %v1544, %v1742
  %v1744 = vsub.f32 1.0, %v1743
  %v1745 = vmul.f32 %v1742, %v1744
  %v1746 = vadd.f32 %v1742, %v1745
  %vm1747 = vweird.f32 %v1544
  %vm1748 = vweird.f32 %v1742
  %vm1749 = vmor %vm1747, %vm1748
  %v1750 = vsel %vm1749, %v1742, %v1746
  %v1751 = vand.u32 2147483647, %v1544
  %vm1752 = vcmp.eq.f32.partialorder %v1751, 8.507059e+37
  %v1753 = vand.u32 %v1544, 2147483648
  %v1754 = vor.u32 1.1754944e-38, %v1753
  %v1755 = vsel %vm1752, %v1754, %v1750
  %v1756 = vmul.f32 1.0, %v1755
  %v1757 = vrcp.pop %v1545
  %v1758 = vmul.f32 %v1545, %v1757
  %v1759 = vsub.f32 1.0, %v1758
  %v1760 = vmul.f32 %v1757, %v1759
  %v1761 = vadd.f32 %v1757, %v1760
  %vm1762 = vweird.f32 %v1545
  %vm1763 = vweird.f32 %v1757
  %vm1764 = vmor %vm1762, %vm1763
  %v1765 = vsel %vm1764, %v1757, %v1761
  %v1766 = vand.u32 2147483647, %v1545
  %vm1767 = vcmp.eq.f32.partialorder %v1766, 8.507059e+37
  %v1768 = vand.u32 %v1545, 2147483648
  %v1769 = vor.u32 1.1754944e-38, %v1768
  %v1770 = vsel %vm1767, %v1769, %v1765
  %v1771 = vmul.f32 1.0, %v1770
  %v1772 = vrcp.pop %v1546
  %v1773 = vmul.f32 %v1546, %v1772
  %v1774 = vsub.f32 1.0, %v1773
  %v1775 = vmul.f32 %v1772, %v1774
  %v1776 = vadd.f32 %v1772, %v1775
  %vm1777 = vweird.f32 %v1546
  %vm1778 = vweird.f32 %v1772
  %vm1779 = vmor %vm1777, %vm1778
  %v1780 = vsel %vm1779, %v1772, %v1776
  %v1781 = vand.u32 2147483647, %v1546
  %vm1782 = vcmp.eq.f32.partialorder %v1781, 8.507059e+37
  %v1783 = vand.u32 %v1546, 2147483648
  %v1784 = vor.u32 1.1754944e-38, %v1783
  %v1785 = vsel %vm1782, %v1784, %v1780
  %v1786 = vmul.f32 1.0, %v1785
  %v1787 = vmul.f32 %v1444, %v1561
  %v1788 = vmul.f32 %v1446, %v1576
  %v1789 = vmul.f32 %v1449, %v1591
  %v1790 = vmul.f32 %v1451, %v1606
  %v1791 = vmul.f32 %v1454, %v1621
  %v1792 = vmul.f32 %v1456, %v1636
  %v1793 = vmul.f32 %v1459, %v1651
  %v1794 = vmul.f32 %v1461, %v1666
  %v1795 = vmul.f32 %v1464, %v1681
  %v1796 = vmul.f32 %v1466, %v1696
  %v1797 = vmul.f32 %v1469, %v1711
  %v1798 = vmul.f32 %v1471, %v1726
  %v1799 = vmul.f32 %v1474, %v1741
  %v1800 = vmul.f32 %v1476, %v1756
  %v1801 = vmul.f32 %v1479, %v1771
  %v1802 = vmul.f32 %v1481, %v1786
  %v1803 = vpack.c.bf16 %v1787, %v1787
  %v1804 = vpack.c.bf16 %v1788, %v1788
  %v1805 = vpack.c.bf16 %v1789, %v1789
  %v1806 = vpack.c.bf16 %v1790, %v1790
  %v1807 = vpack.c.bf16 %v1791, %v1791
  %v1808 = vpack.c.bf16 %v1792, %v1792
  %v1809 = vpack.c.bf16 %v1793, %v1793
  %v1810 = vpack.c.bf16 %v1794, %v1794
  %v1811 = vpack.c.bf16 %v1795, %v1795
  %v1812 = vpack.c.bf16 %v1796, %v1796
  %v1813 = vpack.c.bf16 %v1797, %v1797
  %v1814 = vpack.c.bf16 %v1798, %v1798
  %v1815 = vpack.c.bf16 %v1799, %v1799
  %v1816 = vpack.c.bf16 %v1800, %v1800
  %v1817 = vpack.c.bf16 %v1801, %v1801
  %v1818 = vpack.c.bf16 %v1802, %v1802
  %1819 = vst [vmem:[%s3] sm:$0xf] %v1803
  %1820 = vst [vmem:[%s3 + $0x4] sm:$0xf] %v1804
  %1821 = vst [vmem:[%s3 + $0x8] sm:$0xf] %v1805
  %1822 = vst [vmem:[%s3 + $0xc] sm:$0xf] %v1806
  %1823 = vst [vmem:[%s3 + $0x10] sm:$0xf] %v1807
  %1824 = vst [vmem:[%s3 + $0x14] sm:$0xf] %v1808
  %1825 = vst [vmem:[%s3 + $0x18] sm:$0xf] %v1809
  %1826 = vst [vmem:[%s3 + $0x1c] sm:$0xf] %v1810
  %1827 = vst [vmem:[%s3 + $0x20] sm:$0xf] %v1811
  %1828 = vst [vmem:[%s3 + $0x24] sm:$0xf] %v1812
  %1829 = vst [vmem:[%s3 + $0x28] sm:$0xf] %v1813
  %1830 = vst [vmem:[%s3 + $0x2c] sm:$0xf] %v1814
  %1831 = vst [vmem:[%s3 + $0x30] sm:$0xf] %v1815
  %1832 = vst [vmem:[%s3 + $0x34] sm:$0xf] %v1816
  %1833 = vst [vmem:[%s3 + $0x38] sm:$0xf] %v1817
  %1834 = vst [vmem:[%s3 + $0x3c] sm:$0xf] %v1818
  // Predicated region
  $region14: #{forward.14} parent=0 // pred_check
    _
  $region15: #{forward.14} parent=0 // pred_check_branch
    %1836 = sbr.rel (0) target = $region17
  $region16: #{forward.14} parent=0 // pred_region
    _
  $region17: #{forward.14} parent=0 // pred_fallthru
    _
  // Predicated region
  $region18: #{forward.14} parent=0 // pred_check
    _
  $region19: #{forward.14} parent=0 // pred_check_branch
    %1838 = sbr.rel (0) target = $region21
  $region20: #{forward.14} parent=0 // pred_region
    _
  $region21: #{forward.14} parent=0 // pred_fallthru
    _

// kernel: forward.16
$region0: #{forward.16}
  #allocation0 [shape = 'u32[]', space=smem, size = 0x4, offset = 0x4, fixed_abs, tag = 'smem constant byte address 0x4 - core index']
  #allocation1 [shape = 'u32[72,128]{1,0:T(1,128)}', space=vmem, size = 0x9000, scoped, tag = 'internal scratch']
  %s0 = inlined_call_operand.vmem [shape: bf16[32,1152], index: 0, kind: input, shape index: {}]
  %s1 = inlined_call_operand.vmem [shape: bf16[1152,128], index: 1, kind: input, shape index: {}]
  %s2 = inlined_call_operand.vmem [shape: f32[1,128], index: 2, kind: input, shape index: {}]
  %s3 = inlined_call_operand.vmem [shape: bf16[32,128], index: 3, kind: output, shape index: {}]
  %s4 = sld [smem:[#allocation0]]
  $region22: #{forward.16} parent=0
    _
  %s6 = ssub.s32 1, %s4
  %s7 = scalar_select 0, %s6, %s4
  // Predicated region
  $region2: #{forward.16} parent=0 // pred_check
    _
  $region3: #{forward.16} parent=0 // pred_check_branch
    %9 = sbr.rel (0) target = $region5
  $region4: #{forward.16} parent=0 // pred_region
    _
  $region5: #{forward.16} parent=0 // pred_fallthru
    _
  // Predicated region
  $region6: #{forward.16} parent=0 // pred_check
    _
  $region7: #{forward.16} parent=0 // pred_check_branch
    %11 = sbr.rel (0) target = $region9
  $region8: #{forward.16} parent=0 // pred_region
    _
  $region9: #{forward.16} parent=0 // pred_fallthru
    _
  // Predicated region
  $region10: #{forward.16} parent=0 // pred_check
    _
  $region11: #{forward.16} parent=0 // pred_check_branch
    %13 = sbr.rel (0) target = $region13
  $region12: #{forward.16} parent=0 // pred_region
    _
  $region13: #{forward.16} parent=0 // pred_fallthru
    _
  %v14 = vld [vmem:[%s0] sm:$0xff]
  %v15 = vld [vmem:[%s0 + $0x8] sm:$0xff]
  %v16 = vld [vmem:[%s0 + $0x10] sm:$0xff]
  %v17 = vld [vmem:[%s0 + $0x18] sm:$0xff]
  %v18 = vld [vmem:[%s0 + $0x20] sm:$0xf]
  %v19 = vld [vmem:[%s0 + $0x24] sm:$0xff]
  %v20 = vld [vmem:[%s0 + $0x2c] sm:$0xff]
  %v21 = vld [vmem:[%s0 + $0x34] sm:$0xff]
  %v22 = vld [vmem:[%s0 + $0x3c] sm:$0xff]
  %v23 = vld [vmem:[%s0 + $0x44] sm:$0xf]
  %v24 = vld [vmem:[%s0 + $0x48] sm:$0xff]
  %v25 = vld [vmem:[%s0 + $0x50] sm:$0xff]
  %v26 = vld [vmem:[%s0 + $0x58] sm:$0xff]
  %v27 = vld [vmem:[%s0 + $0x60] sm:$0xff]
  %v28 = vld [vmem:[%s0 + $0x68] sm:$0xf]
  %v29 = vld [vmem:[%s0 + $0x6c] sm:$0xff]
  %v30 = vld [vmem:[%s0 + $0x74] sm:$0xff]
  %v31 = vld [vmem:[%s0 + $0x7c] sm:$0xff]
  %v32 = vld [vmem:[%s0 + $0x84] sm:$0xff]
  %v33 = vld [vmem:[%s0 + $0x8c] sm:$0xf]
  %v34 = vld [vmem:[%s1] sm:$0xf]
  %v35 = vld [vmem:[%s1 + $0x4] sm:$0xf]
  %v36 = vld [vmem:[%s1 + $0x8] sm:$0xf]
  %v37 = vld [vmem:[%s1 + $0xc] sm:$0xf]
  %v38 = vld [vmem:[%s1 + $0x10] sm:$0xf]
  %v39 = vld [vmem:[%s1 + $0x14] sm:$0xf]
  %v40 = vld [vmem:[%s1 + $0x18] sm:$0xf]
  %v41 = vld [vmem:[%s1 + $0x1c] sm:$0xf]
  %v42 = vld [vmem:[%s1 + $0x20] sm:$0xf]
  %v43 = vld [vmem:[%s1 + $0x24] sm:$0xf]
  %v44 = vld [vmem:[%s1 + $0x28] sm:$0xf]
  %v45 = vld [vmem:[%s1 + $0x2c] sm:$0xf]
  %v46 = vld [vmem:[%s1 + $0x30] sm:$0xf]
  %v47 = vld [vmem:[%s1 + $0x34] sm:$0xf]
  %v48 = vld [vmem:[%s1 + $0x38] sm:$0xf]
  %v49 = vld [vmem:[%s1 + $0x3c] sm:$0xf]
  %v50 = vld [vmem:[%s1 + $0x40] sm:$0xf]
  %v51 = vld [vmem:[%s1 + $0x44] sm:$0xf]
  %v52 = vld [vmem:[%s1 + $0x48] sm:$0xf]
  %v53 = vld [vmem:[%s1 + $0x4c] sm:$0xf]
  %v54 = vld [vmem:[%s1 + $0x50] sm:$0xf]
  %v55 = vld [vmem:[%s1 + $0x54] sm:$0xf]
  %v56 = vld [vmem:[%s1 + $0x58] sm:$0xf]
  %v57 = vld [vmem:[%s1 + $0x5c] sm:$0xf]
  %v58 = vld [vmem:[%s1 + $0x60] sm:$0xf]
  %v59 = vld [vmem:[%s1 + $0x64] sm:$0xf]
  %v60 = vld [vmem:[%s1 + $0x68] sm:$0xf]
  %v61 = vld [vmem:[%s1 + $0x6c] sm:$0xf]
  %v62 = vld [vmem:[%s1 + $0x70] sm:$0xf]
  %v63 = vld [vmem:[%s1 + $0x74] sm:$0xf]
  %v64 = vld [vmem:[%s1 + $0x78] sm:$0xf]
  %v65 = vld [vmem:[%s1 + $0x7c] sm:$0xf]
  %v66 = vld [vmem:[%s1 + $0x80] sm:$0xf]
  %v67 = vld [vmem:[%s1 + $0x84] sm:$0xf]
  %v68 = vld [vmem:[%s1 + $0x88] sm:$0xf]
  %v69 = vld [vmem:[%s1 + $0x8c] sm:$0xf]
  %v70 = vld [vmem:[%s1 + $0x90] sm:$0xf]
  %v71 = vld [vmem:[%s1 + $0x94] sm:$0xf]
  %v72 = vld [vmem:[%s1 + $0x98] sm:$0xf]
  %v73 = vld [vmem:[%s1 + $0x9c] sm:$0xf]
  %v74 = vld [vmem:[%s1 + $0xa0] sm:$0xf]
  %v75 = vld [vmem:[%s1 + $0xa4] sm:$0xf]
  %v76 = vld [vmem:[%s1 + $0xa8] sm:$0xf]
  %v77 = vld [vmem:[%s1 + $0xac] sm:$0xf]
  %v78 = vld [vmem:[%s1 + $0xb0] sm:$0xf]
  %v79 = vld [vmem:[%s1 + $0xb4] sm:$0xf]
  %v80 = vld [vmem:[%s1 + $0xb8] sm:$0xf]
  %v81 = vld [vmem:[%s1 + $0xbc] sm:$0xf]
  %v82 = vld [vmem:[%s1 + $0xc0] sm:$0xf]
  %v83 = vld [vmem:[%s1 + $0xc4] sm:$0xf]
  %v84 = vld [vmem:[%s1 + $0xc8] sm:$0xf]
  %v85 = vld [vmem:[%s1 + $0xcc] sm:$0xf]
  %v86 = vld [vmem:[%s1 + $0xd0] sm:$0xf]
  %v87 = vld [vmem:[%s1 + $0xd4] sm:$0xf]
  %v88 = vld [vmem:[%s1 + $0xd8] sm:$0xf]
  %v89 = vld [vmem:[%s1 + $0xdc] sm:$0xf]
  %v90 = vld [vmem:[%s1 + $0xe0] sm:$0xf]
  %v91 = vld [vmem:[%s1 + $0xe4] sm:$0xf]
  %v92 = vld [vmem:[%s1 + $0xe8] sm:$0xf]
  %v93 = vld [vmem:[%s1 + $0xec] sm:$0xf]
  %v94 = vld [vmem:[%s1 + $0xf0] sm:$0xf]
  %v95 = vld [vmem:[%s1 + $0xf4] sm:$0xf]
  %v96 = vld [vmem:[%s1 + $0xf8] sm:$0xf]
  %v97 = vld [vmem:[%s1 + $0xfc] sm:$0xf]
  %v98 = vld [vmem:[%s1 + $0x100] sm:$0xf]
  %v99 = vld [vmem:[%s1 + $0x104] sm:$0xf]
  %v100 = vld [vmem:[%s1 + $0x108] sm:$0xf]
  %v101 = vld [vmem:[%s1 + $0x10c] sm:$0xf]
  %v102 = vld [vmem:[%s1 + $0x110] sm:$0xf]
  %v103 = vld [vmem:[%s1 + $0x114] sm:$0xf]
  %v104 = vld [vmem:[%s1 + $0x118] sm:$0xf]
  %v105 = vld [vmem:[%s1 + $0x11c] sm:$0xf]
  %v106 = vld [vmem:[%s1 + $0x120] sm:$0xf]
  %v107 = vld [vmem:[%s1 + $0x124] sm:$0xf]
  %v108 = vld [vmem:[%s1 + $0x128] sm:$0xf]
  %v109 = vld [vmem:[%s1 + $0x12c] sm:$0xf]
  %v110 = vld [vmem:[%s1 + $0x130] sm:$0xf]
  %v111 = vld [vmem:[%s1 + $0x134] sm:$0xf]
  %v112 = vld [vmem:[%s1 + $0x138] sm:$0xf]
  %v113 = vld [vmem:[%s1 + $0x13c] sm:$0xf]
  %v114 = vld [vmem:[%s1 + $0x140] sm:$0xf]
  %v115 = vld [vmem:[%s1 + $0x144] sm:$0xf]
  %v116 = vld [vmem:[%s1 + $0x148] sm:$0xf]
  %v117 = vld [vmem:[%s1 + $0x14c] sm:$0xf]
  %v118 = vld [vmem:[%s1 + $0x150] sm:$0xf]
  %v119 = vld [vmem:[%s1 + $0x154] sm:$0xf]
  %v120 = vld [vmem:[%s1 + $0x158] sm:$0xf]
  %v121 = vld [vmem:[%s1 + $0x15c] sm:$0xf]
  %v122 = vld [vmem:[%s1 + $0x160] sm:$0xf]
  %v123 = vld [vmem:[%s1 + $0x164] sm:$0xf]
  %v124 = vld [vmem:[%s1 + $0x168] sm:$0xf]
  %v125 = vld [vmem:[%s1 + $0x16c] sm:$0xf]
  %v126 = vld [vmem:[%s1 + $0x170] sm:$0xf]
  %v127 = vld [vmem:[%s1 + $0x174] sm:$0xf]
  %v128 = vld [vmem:[%s1 + $0x178] sm:$0xf]
  %v129 = vld [vmem:[%s1 + $0x17c] sm:$0xf]
  %v130 = vld [vmem:[%s1 + $0x180] sm:$0xf]
  %v131 = vld [vmem:[%s1 + $0x184] sm:$0xf]
  %v132 = vld [vmem:[%s1 + $0x188] sm:$0xf]
  %v133 = vld [vmem:[%s1 + $0x18c] sm:$0xf]
  %v134 = vld [vmem:[%s1 + $0x190] sm:$0xf]
  %v135 = vld [vmem:[%s1 + $0x194] sm:$0xf]
  %v136 = vld [vmem:[%s1 + $0x198] sm:$0xf]
  %v137 = vld [vmem:[%s1 + $0x19c] sm:$0xf]
  %v138 = vld [vmem:[%s1 + $0x1a0] sm:$0xf]
  %v139 = vld [vmem:[%s1 + $0x1a4] sm:$0xf]
  %v140 = vld [vmem:[%s1 + $0x1a8] sm:$0xf]
  %v141 = vld [vmem:[%s1 + $0x1ac] sm:$0xf]
  %v142 = vld [vmem:[%s1 + $0x1b0] sm:$0xf]
  %v143 = vld [vmem:[%s1 + $0x1b4] sm:$0xf]
  %v144 = vld [vmem:[%s1 + $0x1b8] sm:$0xf]
  %v145 = vld [vmem:[%s1 + $0x1bc] sm:$0xf]
  %v146 = vld [vmem:[%s1 + $0x1c0] sm:$0xf]
  %v147 = vld [vmem:[%s1 + $0x1c4] sm:$0xf]
  %v148 = vld [vmem:[%s1 + $0x1c8] sm:$0xf]
  %v149 = vld [vmem:[%s1 + $0x1cc] sm:$0xf]
  %v150 = vld [vmem:[%s1 + $0x1d0] sm:$0xf]
  %v151 = vld [vmem:[%s1 + $0x1d4] sm:$0xf]
  %v152 = vld [vmem:[%s1 + $0x1d8] sm:$0xf]
  %v153 = vld [vmem:[%s1 + $0x1dc] sm:$0xf]
  %v154 = vld [vmem:[%s1 + $0x1e0] sm:$0xf]
  %v155 = vld [vmem:[%s1 + $0x1e4] sm:$0xf]
  %v156 = vld [vmem:[%s1 + $0x1e8] sm:$0xf]
  %v157 = vld [vmem:[%s1 + $0x1ec] sm:$0xf]
  %v158 = vld [vmem:[%s1 + $0x1f0] sm:$0xf]
  %v159 = vld [vmem:[%s1 + $0x1f4] sm:$0xf]
  %v160 = vld [vmem:[%s1 + $0x1f8] sm:$0xf]
  %v161 = vld [vmem:[%s1 + $0x1fc] sm:$0xf]
  %v162 = vld [vmem:[%s1 + $0x200] sm:$0xf]
  %v163 = vld [vmem:[%s1 + $0x204] sm:$0xf]
  %v164 = vld [vmem:[%s1 + $0x208] sm:$0xf]
  %v165 = vld [vmem:[%s1 + $0x20c] sm:$0xf]
  %v166 = vld [vmem:[%s1 + $0x210] sm:$0xf]
  %v167 = vld [vmem:[%s1 + $0x214] sm:$0xf]
  %v168 = vld [vmem:[%s1 + $0x218] sm:$0xf]
  %v169 = vld [vmem:[%s1 + $0x21c] sm:$0xf]
  %v170 = vld [vmem:[%s1 + $0x220] sm:$0xf]
  %v171 = vld [vmem:[%s1 + $0x224] sm:$0xf]
  %v172 = vld [vmem:[%s1 + $0x228] sm:$0xf]
  %v173 = vld [vmem:[%s1 + $0x22c] sm:$0xf]
  %v174 = vld [vmem:[%s1 + $0x230] sm:$0xf]
  %v175 = vld [vmem:[%s1 + $0x234] sm:$0xf]
  %v176 = vld [vmem:[%s1 + $0x238] sm:$0xf]
  %v177 = vld [vmem:[%s1 + $0x23c] sm:$0xf]
  %v178 = vld [vmem:[%s2] sm:$0x1]
  %v180 = vperm.slane %v178, 0
  %v202 = vunpack.c.l.b16 %v14
  %v203 = vunpack.c.h.b16 %v14
  %v204 = vunpack.c.l.b16 %v15
  %v205 = vunpack.c.h.b16 %v15
  %v206 = vunpack.c.l.b16 %v16
  %v207 = vunpack.c.h.b16 %v16
  %v208 = vunpack.c.l.b16 %v17
  %v209 = vunpack.c.h.b16 %v17
  %v210 = vunpack.c.l.b16 %v18
  %v211 = vunpack.c.l.b16 %v19
  %v212 = vunpack.c.h.b16 %v19
  %v213 = vunpack.c.l.b16 %v20
  %v214 = vunpack.c.h.b16 %v20
  %v215 = vunpack.c.l.b16 %v21
  %v216 = vunpack.c.h.b16 %v21
  %v217 = vunpack.c.l.b16 %v22
  %v218 = vunpack.c.h.b16 %v22
  %v219 = vunpack.c.l.b16 %v23
  %v220 = vunpack.c.l.b16 %v24
  %v221 = vunpack.c.h.b16 %v24
  %v222 = vunpack.c.l.b16 %v25
  %v223 = vunpack.c.h.b16 %v25
  %v224 = vunpack.c.l.b16 %v26
  %v225 = vunpack.c.h.b16 %v26
  %v226 = vunpack.c.l.b16 %v27
  %v227 = vunpack.c.h.b16 %v27
  %v228 = vunpack.c.l.b16 %v28
  %v229 = vunpack.c.l.b16 %v29
  %v230 = vunpack.c.h.b16 %v29
  %v231 = vunpack.c.l.b16 %v30
  %v232 = vunpack.c.h.b16 %v30
  %v233 = vunpack.c.l.b16 %v31
  %v234 = vunpack.c.h.b16 %v31
  %v235 = vunpack.c.l.b16 %v32
  %v236 = vunpack.c.h.b16 %v32
  %v237 = vunpack.c.l.b16 %v33
  %v238 = vpack.c.b16 %v211, %v202
  %v239 = vpack.c.b16 %v212, %v203
  %v240 = vpack.c.b16 %v213, %v204
  %v241 = vpack.c.b16 %v214, %v205
  %v242 = vpack.c.b16 %v215, %v206
  %v243 = vpack.c.b16 %v216, %v207
  %v244 = vpack.c.b16 %v217, %v208
  %v245 = vpack.c.b16 %v218, %v209
  %v246 = vpack.c.b16 %v219, %v210
  %v247 = vpack.c.b16 %v229, %v220
  %v248 = vpack.c.b16 %v230, %v221
  %v249 = vpack.c.b16 %v231, %v222
  %v250 = vpack.c.b16 %v232, %v223
  %v251 = vpack.c.b16 %v233, %v224
  %v252 = vpack.c.b16 %v234, %v225
  %v253 = vpack.c.b16 %v235, %v226
  %v254 = vpack.c.b16 %v236, %v227
  %v255 = vpack.c.b16 %v237, %v228
  %v418 = vunpack.c.l.b16 %v34
  %v419 = vunpack.c.l.b16 %v35
  %v420 = vunpack.c.l.b16 %v36
  %v421 = vunpack.c.l.b16 %v37
  %v422 = vunpack.c.l.b16 %v38
  %v423 = vunpack.c.l.b16 %v39
  %v424 = vunpack.c.l.b16 %v40
  %v425 = vunpack.c.l.b16 %v41
  %v426 = vunpack.c.l.b16 %v42
  %v427 = vunpack.c.l.b16 %v43
  %v428 = vunpack.c.l.b16 %v44
  %v429 = vunpack.c.l.b16 %v45
  %v430 = vunpack.c.l.b16 %v46
  %v431 = vunpack.c.l.b16 %v47
  %v432 = vunpack.c.l.b16 %v48
  %v433 = vunpack.c.l.b16 %v49
  %v434 = vunpack.c.l.b16 %v50
  %v435 = vunpack.c.l.b16 %v51
  %v436 = vunpack.c.l.b16 %v52
  %v437 = vunpack.c.l.b16 %v53
  %v438 = vunpack.c.l.b16 %v54
  %v439 = vunpack.c.l.b16 %v55
  %v440 = vunpack.c.l.b16 %v56
  %v441 = vunpack.c.l.b16 %v57
  %v442 = vunpack.c.l.b16 %v58
  %v443 = vunpack.c.l.b16 %v59
  %v444 = vunpack.c.l.b16 %v60
  %v445 = vunpack.c.l.b16 %v61
  %v446 = vunpack.c.l.b16 %v62
  %v447 = vunpack.c.l.b16 %v63
  %v448 = vunpack.c.l.b16 %v64
  %v449 = vunpack.c.l.b16 %v65
  %v450 = vunpack.c.l.b16 %v66
  %v451 = vunpack.c.l.b16 %v67
  %v452 = vunpack.c.l.b16 %v68
  %v453 = vunpack.c.l.b16 %v69
  %v454 = vunpack.c.l.b16 %v70
  %v455 = vunpack.c.l.b16 %v71
  %v456 = vunpack.c.l.b16 %v72
  %v457 = vunpack.c.l.b16 %v73
  %v458 = vunpack.c.l.b16 %v74
  %v459 = vunpack.c.l.b16 %v75
  %v460 = vunpack.c.l.b16 %v76
  %v461 = vunpack.c.l.b16 %v77
  %v462 = vunpack.c.l.b16 %v78
  %v463 = vunpack.c.l.b16 %v79
  %v464 = vunpack.c.l.b16 %v80
  %v465 = vunpack.c.l.b16 %v81
  %v466 = vunpack.c.l.b16 %v82
  %v467 = vunpack.c.l.b16 %v83
  %v468 = vunpack.c.l.b16 %v84
  %v469 = vunpack.c.l.b16 %v85
  %v470 = vunpack.c.l.b16 %v86
  %v471 = vunpack.c.l.b16 %v87
  %v472 = vunpack.c.l.b16 %v88
  %v473 = vunpack.c.l.b16 %v89
  %v474 = vunpack.c.l.b16 %v90
  %v475 = vunpack.c.l.b16 %v91
  %v476 = vunpack.c.l.b16 %v92
  %v477 = vunpack.c.l.b16 %v93
  %v478 = vunpack.c.l.b16 %v94
  %v479 = vunpack.c.l.b16 %v95
  %v480 = vunpack.c.l.b16 %v96
  %v481 = vunpack.c.l.b16 %v97
  %v482 = vunpack.c.l.b16 %v98
  %v483 = vunpack.c.l.b16 %v99
  %v484 = vunpack.c.l.b16 %v100
  %v485 = vunpack.c.l.b16 %v101
  %v486 = vunpack.c.l.b16 %v102
  %v487 = vunpack.c.l.b16 %v103
  %v488 = vunpack.c.l.b16 %v104
  %v489 = vunpack.c.l.b16 %v105
  %v490 = vunpack.c.l.b16 %v106
  %v491 = vunpack.c.l.b16 %v107
  %v492 = vunpack.c.l.b16 %v108
  %v493 = vunpack.c.l.b16 %v109
  %v494 = vunpack.c.l.b16 %v110
  %v495 = vunpack.c.l.b16 %v111
  %v496 = vunpack.c.l.b16 %v112
  %v497 = vunpack.c.l.b16 %v113
  %v498 = vunpack.c.l.b16 %v114
  %v499 = vunpack.c.l.b16 %v115
  %v500 = vunpack.c.l.b16 %v116
  %v501 = vunpack.c.l.b16 %v117
  %v502 = vunpack.c.l.b16 %v118
  %v503 = vunpack.c.l.b16 %v119
  %v504 = vunpack.c.l.b16 %v120
  %v505 = vunpack.c.l.b16 %v121
  %v506 = vunpack.c.l.b16 %v122
  %v507 = vunpack.c.l.b16 %v123
  %v508 = vunpack.c.l.b16 %v124
  %v509 = vunpack.c.l.b16 %v125
  %v510 = vunpack.c.l.b16 %v126
  %v511 = vunpack.c.l.b16 %v127
  %v512 = vunpack.c.l.b16 %v128
  %v513 = vunpack.c.l.b16 %v129
  %v514 = vunpack.c.l.b16 %v130
  %v515 = vunpack.c.l.b16 %v131
  %v516 = vunpack.c.l.b16 %v132
  %v517 = vunpack.c.l.b16 %v133
  %v518 = vunpack.c.l.b16 %v134
  %v519 = vunpack.c.l.b16 %v135
  %v520 = vunpack.c.l.b16 %v136
  %v521 = vunpack.c.l.b16 %v137
  %v522 = vunpack.c.l.b16 %v138
  %v523 = vunpack.c.l.b16 %v139
  %v524 = vunpack.c.l.b16 %v140
  %v525 = vunpack.c.l.b16 %v141
  %v526 = vunpack.c.l.b16 %v142
  %v527 = vunpack.c.l.b16 %v143
  %v528 = vunpack.c.l.b16 %v144
  %v529 = vunpack.c.l.b16 %v145
  %v530 = vunpack.c.l.b16 %v146
  %v531 = vunpack.c.l.b16 %v147
  %v532 = vunpack.c.l.b16 %v148
  %v533 = vunpack.c.l.b16 %v149
  %v534 = vunpack.c.l.b16 %v150
  %v535 = vunpack.c.l.b16 %v151
  %v536 = vunpack.c.l.b16 %v152
  %v537 = vunpack.c.l.b16 %v153
  %v538 = vunpack.c.l.b16 %v154
  %v539 = vunpack.c.l.b16 %v155
  %v540 = vunpack.c.l.b16 %v156
  %v541 = vunpack.c.l.b16 %v157
  %v542 = vunpack.c.l.b16 %v158
  %v543 = vunpack.c.l.b16 %v159
  %v544 = vunpack.c.l.b16 %v160
  %v545 = vunpack.c.l.b16 %v161
  %v546 = vunpack.c.l.b16 %v162
  %v547 = vunpack.c.l.b16 %v163
  %v548 = vunpack.c.l.b16 %v164
  %v549 = vunpack.c.l.b16 %v165
  %v550 = vunpack.c.l.b16 %v166
  %v551 = vunpack.c.l.b16 %v167
  %v552 = vunpack.c.l.b16 %v168
  %v553 = vunpack.c.l.b16 %v169
  %v554 = vunpack.c.l.b16 %v170
  %v555 = vunpack.c.l.b16 %v171
  %v556 = vunpack.c.l.b16 %v172
  %v557 = vunpack.c.l.b16 %v173
  %v558 = vunpack.c.l.b16 %v174
  %v559 = vunpack.c.l.b16 %v175
  %v560 = vunpack.c.l.b16 %v176
  %v561 = vunpack.c.l.b16 %v177
  %v562 = vpack.c.b16 %v419, %v418
  %v563 = vpack.c.b16 %v421, %v420
  %v564 = vpack.c.b16 %v423, %v422
  %v565 = vpack.c.b16 %v425, %v424
  %v566 = vpack.c.b16 %v427, %v426
  %v567 = vpack.c.b16 %v429, %v428
  %v568 = vpack.c.b16 %v431, %v430
  %v569 = vpack.c.b16 %v433, %v432
  %v570 = vpack.c.b16 %v435, %v434
  %v571 = vpack.c.b16 %v437, %v436
  %v572 = vpack.c.b16 %v439, %v438
  %v573 = vpack.c.b16 %v441, %v440
  %v574 = vpack.c.b16 %v443, %v442
  %v575 = vpack.c.b16 %v445, %v444
  %v576 = vpack.c.b16 %v447, %v446
  %v577 = vpack.c.b16 %v449, %v448
  %v578 = vpack.c.b16 %v451, %v450
  %v579 = vpack.c.b16 %v453, %v452
  %v580 = vpack.c.b16 %v455, %v454
  %v581 = vpack.c.b16 %v457, %v456
  %v582 = vpack.c.b16 %v459, %v458
  %v583 = vpack.c.b16 %v461, %v460
  %v584 = vpack.c.b16 %v463, %v462
  %v585 = vpack.c.b16 %v465, %v464
  %v586 = vpack.c.b16 %v467, %v466
  %v587 = vpack.c.b16 %v469, %v468
  %v588 = vpack.c.b16 %v471, %v470
  %v589 = vpack.c.b16 %v473, %v472
  %v590 = vpack.c.b16 %v475, %v474
  %v591 = vpack.c.b16 %v477, %v476
  %v592 = vpack.c.b16 %v479, %v478
  %v593 = vpack.c.b16 %v481, %v480
  %v594 = vpack.c.b16 %v483, %v482
  %v595 = vpack.c.b16 %v485, %v484
  %v596 = vpack.c.b16 %v487, %v486
  %v597 = vpack.c.b16 %v489, %v488
  %v598 = vpack.c.b16 %v491, %v490
  %v599 = vpack.c.b16 %v493, %v492
  %v600 = vpack.c.b16 %v495, %v494
  %v601 = vpack.c.b16 %v497, %v496
  %v602 = vpack.c.b16 %v499, %v498
  %v603 = vpack.c.b16 %v501, %v500
  %v604 = vpack.c.b16 %v503, %v502
  %v605 = vpack.c.b16 %v505, %v504
  %v606 = vpack.c.b16 %v507, %v506
  %v607 = vpack.c.b16 %v509, %v508
  %v608 = vpack.c.b16 %v511, %v510
  %v609 = vpack.c.b16 %v513, %v512
  %v610 = vpack.c.b16 %v515, %v514
  %v611 = vpack.c.b16 %v517, %v516
  %v612 = vpack.c.b16 %v519, %v518
  %v613 = vpack.c.b16 %v521, %v520
  %v614 = vpack.c.b16 %v523, %v522
  %v615 = vpack.c.b16 %v525, %v524
  %v616 = vpack.c.b16 %v527, %v526
  %v617 = vpack.c.b16 %v529, %v528
  %v618 = vpack.c.b16 %v531, %v530
  %v619 = vpack.c.b16 %v533, %v532
  %v620 = vpack.c.b16 %v535, %v534
  %v621 = vpack.c.b16 %v537, %v536
  %v622 = vpack.c.b16 %v539, %v538
  %v623 = vpack.c.b16 %v541, %v540
  %v624 = vpack.c.b16 %v543, %v542
  %v625 = vpack.c.b16 %v545, %v544
  %v626 = vpack.c.b16 %v547, %v546
  %v627 = vpack.c.b16 %v549, %v548
  %v628 = vpack.c.b16 %v551, %v550
  %v629 = vpack.c.b16 %v553, %v552
  %v630 = vpack.c.b16 %v555, %v554
  %v631 = vpack.c.b16 %v557, %v556
  %v632 = vpack.c.b16 %v559, %v558
  %v633 = vpack.c.b16 %v561, %v560
  %706 = vmatpush.bf16.msra.mxu0 %v569
  %707 = vmatpush.bf16.msra.mxu0 %v568
  %708 = vmatpush.bf16.msra.mxu0 %v567
  %709 = vmatpush.bf16.msra.mxu0 %v566
  %710 = vmatpush.bf16.msra.mxu0 %v565
  %711 = vmatpush.bf16.msra.mxu0 %v564
  %712 = vmatpush.bf16.msra.mxu0 %v563
  %713 = vmatpush.bf16.msra.mxu0 %v562
  %714 = vmatmul.bf16.gmra.mxu0 %v238
  %v715 = vpop.f32.mrf.mxu0
  %v716 = vadd.f32 %v180, %v715
  %v717 = vpop.f32.mrf.mxu0
  %v718 = vadd.f32 %v180, %v717
  %719 = vmatmul.bf16.gmra.mxu0 %v247
  %v720 = vpop.f32.mrf.mxu0
  %v721 = vadd.f32 %v180, %v720
  %v722 = vpop.f32.mrf.mxu0
  %v723 = vadd.f32 %v180, %v722
  %724 = vdwg.mxu0
  %725 = vmatpush.bf16.msra.mxu0 %v577
  %726 = vmatpush.bf16.msra.mxu0 %v576
  %727 = vmatpush.bf16.msra.mxu0 %v575
  %728 = vmatpush.bf16.msra.mxu0 %v574
  %729 = vmatpush.bf16.msra.mxu0 %v573
  %730 = vmatpush.bf16.msra.mxu0 %v572
  %731 = vmatpush.bf16.msra.mxu0 %v571
  %732 = vmatpush.bf16.msra.mxu0 %v570
  %733 = vmatmul.bf16.gmra.mxu0 %v239
  %v734 = vpop.f32.mrf.mxu0
  %v735 = vadd.f32 %v716, %v734
  %v736 = vpop.f32.mrf.mxu0
  %v737 = vadd.f32 %v718, %v736
  %738 = vmatmul.bf16.gmra.mxu0 %v248
  %v739 = vpop.f32.mrf.mxu0
  %v740 = vadd.f32 %v721, %v739
  %v741 = vpop.f32.mrf.mxu0
  %v742 = vadd.f32 %v723, %v741
  %743 = vdwg.mxu0
  %744 = vmatpush.bf16.msra.mxu0 %v585
  %745 = vmatpush.bf16.msra.mxu0 %v584
  %746 = vmatpush.bf16.msra.mxu0 %v583
  %747 = vmatpush.bf16.msra.mxu0 %v582
  %748 = vmatpush.bf16.msra.mxu0 %v581
  %749 = vmatpush.bf16.msra.mxu0 %v580
  %750 = vmatpush.bf16.msra.mxu0 %v579
  %751 = vmatpush.bf16.msra.mxu0 %v578
  %752 = vmatmul.bf16.gmra.mxu0 %v240
  %v753 = vpop.f32.mrf.mxu0
  %v754 = vadd.f32 %v735, %v753
  %v755 = vpop.f32.mrf.mxu0
  %v756 = vadd.f32 %v737, %v755
  %757 = vmatmul.bf16.gmra.mxu0 %v249
  %v758 = vpop.f32.mrf.mxu0
  %v759 = vadd.f32 %v740, %v758
  %v760 = vpop.f32.mrf.mxu0
  %v761 = vadd.f32 %v742, %v760
  %762 = vdwg.mxu0
  %763 = vmatpush.bf16.msra.mxu0 %v593
  %764 = vmatpush.bf16.msra.mxu0 %v592
  %765 = vmatpush.bf16.msra.mxu0 %v591
  %766 = vmatpush.bf16.msra.mxu0 %v590
  %767 = vmatpush.bf16.msra.mxu0 %v589
  %768 = vmatpush.bf16.msra.mxu0 %v588
  %769 = vmatpush.bf16.msra.mxu0 %v587
  %770 = vmatpush.bf16.msra.mxu0 %v586
  %771 = vmatmul.bf16.gmra.mxu0 %v241
  %v772 = vpop.f32.mrf.mxu0
  %v773 = vadd.f32 %v754, %v772
  %v774 = vpop.f32.mrf.mxu0
  %v775 = vadd.f32 %v756, %v774
  %776 = vmatmul.bf16.gmra.mxu0 %v250
  %v777 = vpop.f32.mrf.mxu0
  %v778 = vadd.f32 %v759, %v777
  %v779 = vpop.f32.mrf.mxu0
  %v780 = vadd.f32 %v761, %v779
  %781 = vdwg.mxu0
  %782 = vmatpush.bf16.msra.mxu0 %v601
  %783 = vmatpush.bf16.msra.mxu0 %v600
  %784 = vmatpush.bf16.msra.mxu0 %v599
  %785 = vmatpush.bf16.msra.mxu0 %v598
  %786 = vmatpush.bf16.msra.mxu0 %v597
  %787 = vmatpush.bf16.msra.mxu0 %v596
  %788 = vmatpush.bf16.msra.mxu0 %v595
  %789 = vmatpush.bf16.msra.mxu0 %v594
  %790 = vmatmul.bf16.gmra.mxu0 %v242
  %v791 = vpop.f32.mrf.mxu0
  %v792 = vadd.f32 %v773, %v791
  %v793 = vpop.f32.mrf.mxu0
  %v794 = vadd.f32 %v775, %v793
  %795 = vmatmul.bf16.gmra.mxu0 %v251
  %v796 = vpop.f32.mrf.mxu0
  %v797 = vadd.f32 %v778, %v796
  %v798 = vpop.f32.mrf.mxu0
  %v799 = vadd.f32 %v780, %v798
  %800 = vdwg.mxu0
  %801 = vmatpush.bf16.msra.mxu0 %v609
  %802 = vmatpush.bf16.msra.mxu0 %v608
  %803 = vmatpush.bf16.msra.mxu0 %v607
  %804 = vmatpush.bf16.msra.mxu0 %v606
  %805 = vmatpush.bf16.msra.mxu0 %v605
  %806 = vmatpush.bf16.msra.mxu0 %v604
  %807 = vmatpush.bf16.msra.mxu0 %v603
  %808 = vmatpush.bf16.msra.mxu0 %v602
  %809 = vmatmul.bf16.gmra.mxu0 %v243
  %v810 = vpop.f32.mrf.mxu0
  %v811 = vadd.f32 %v792, %v810
  %v812 = vpop.f32.mrf.mxu0
  %v813 = vadd.f32 %v794, %v812
  %814 = vmatmul.bf16.gmra.mxu0 %v252
  %v815 = vpop.f32.mrf.mxu0
  %v816 = vadd.f32 %v797, %v815
  %v817 = vpop.f32.mrf.mxu0
  %v818 = vadd.f32 %v799, %v817
  %819 = vdwg.mxu0
  %820 = vmatpush.bf16.msra.mxu0 %v617
  %821 = vmatpush.bf16.msra.mxu0 %v616
  %822 = vmatpush.bf16.msra.mxu0 %v615
  %823 = vmatpush.bf16.msra.mxu0 %v614
  %824 = vmatpush.bf16.msra.mxu0 %v613
  %825 = vmatpush.bf16.msra.mxu0 %v612
  %826 = vmatpush.bf16.msra.mxu0 %v611
  %827 = vmatpush.bf16.msra.mxu0 %v610
  %828 = vmatmul.bf16.gmra.mxu0 %v244
  %v829 = vpop.f32.mrf.mxu0
  %v830 = vadd.f32 %v811, %v829
  %v831 = vpop.f32.mrf.mxu0
  %v832 = vadd.f32 %v813, %v831
  %833 = vmatmul.bf16.gmra.mxu0 %v253
  %v834 = vpop.f32.mrf.mxu0
  %v835 = vadd.f32 %v816, %v834
  %v836 = vpop.f32.mrf.mxu0
  %v837 = vadd.f32 %v818, %v836
  %838 = vdwg.mxu0
  %839 = vmatpush.bf16.msra.mxu0 %v625
  %840 = vmatpush.bf16.msra.mxu0 %v624
  %841 = vmatpush.bf16.msra.mxu0 %v623
  %842 = vmatpush.bf16.msra.mxu0 %v622
  %843 = vmatpush.bf16.msra.mxu0 %v621
  %844 = vmatpush.bf16.msra.mxu0 %v620
  %845 = vmatpush.bf16.msra.mxu0 %v619
  %846 = vmatpush.bf16.msra.mxu0 %v618
  %847 = vmatmul.bf16.gmra.mxu0 %v245
  %v848 = vpop.f32.mrf.mxu0
  %v849 = vadd.f32 %v830, %v848
  %v850 = vpop.f32.mrf.mxu0
  %v851 = vadd.f32 %v832, %v850
  %852 = vmatmul.bf16.gmra.mxu0 %v254
  %v853 = vpop.f32.mrf.mxu0
  %v854 = vadd.f32 %v835, %v853
  %v855 = vpop.f32.mrf.mxu0
  %v856 = vadd.f32 %v837, %v855
  %857 = vdwg.mxu0
  %858 = vmatpush.bf16.msra.mxu0 %v633
  %859 = vmatpush.bf16.msra.mxu0 %v632
  %860 = vmatpush.bf16.msra.mxu0 %v631
  %861 = vmatpush.bf16.msra.mxu0 %v630
  %862 = vmatpush.bf16.msra.mxu0 %v629
  %863 = vmatpush.bf16.msra.mxu0 %v628
  %864 = vmatpush.bf16.msra.mxu0 %v627
  %865 = vmatpush.bf16.msra.mxu0 %v626
  %866 = vmatmul.bf16.gmra.mxu0 %v246
  %v867 = vpop.f32.mrf.mxu0
  %v868 = vadd.f32 %v849, %v867
  %v869 = vpop.f32.mrf.mxu0
  %v870 = vadd.f32 %v851, %v869
  %871 = vmatmul.bf16.gmra.mxu0 %v255
  %v872 = vpop.f32.mrf.mxu0
  %v873 = vadd.f32 %v854, %v872
  %v874 = vpop.f32.mrf.mxu0
  %v875 = vadd.f32 %v856, %v874
  %876 = vdwg.mxu0
  %v877 = vxor.u32 %v868, 2147483648
  %v878 = vxor.u32 %v870, 2147483648
  %v879 = vxor.u32 %v873, 2147483648
  %v880 = vxor.u32 %v875, 2147483648
  %v881 = vmul.f32 %v877, 1.442695
  %v882 = vpow.pop %v881
  %v883 = vmul.f32 %v878, 1.442695
  %v884 = vpow.pop %v883
  %v885 = vmul.f32 %v879, 1.442695
  %v886 = vpow.pop %v885
  %v887 = vmul.f32 %v880, 1.442695
  %v888 = vpow.pop %v887
  %v889 = vadd.f32 %v882, 1.0
  %v890 = vadd.f32 %v884, 1.0
  %v891 = vadd.f32 %v886, 1.0
  %v892 = vadd.f32 %v888, 1.0
  %v893 = vrcp.pop %v889
  %v894 = vmul.f32 %v889, %v893
  %v895 = vsub.f32 1.0, %v894
  %v896 = vmul.f32 %v893, %v895
  %v897 = vadd.f32 %v893, %v896
  %vm898 = vweird.f32 %v889
  %vm899 = vweird.f32 %v893
  %vm900 = vmor %vm898, %vm899
  %v901 = vsel %vm900, %v893, %v897
  %v902 = vand.u32 2147483647, %v889
  %vm903 = vcmp.eq.f32.partialorder %v902, 8.507059e+37
  %v904 = vand.u32 %v889, 2147483648
  %v905 = vor.u32 1.1754944e-38, %v904
  %v906 = vsel %vm903, %v905, %v901
  %v907 = vmul.f32 1.0, %v906
  %v908 = vrcp.pop %v890
  %v909 = vmul.f32 %v890, %v908
  %v910 = vsub.f32 1.0, %v909
  %v911 = vmul.f32 %v908, %v910
  %v912 = vadd.f32 %v908, %v911
  %vm913 = vweird.f32 %v890
  %vm914 = vweird.f32 %v908
  %vm915 = vmor %vm913, %vm914
  %v916 = vsel %vm915, %v908, %v912
  %v917 = vand.u32 2147483647, %v890
  %vm918 = vcmp.eq.f32.partialorder %v917, 8.507059e+37
  %v919 = vand.u32 %v890, 2147483648
  %v920 = vor.u32 1.1754944e-38, %v919
  %v921 = vsel %vm918, %v920, %v916
  %v922 = vmul.f32 1.0, %v921
  %v923 = vrcp.pop %v891
  %v924 = vmul.f32 %v891, %v923
  %v925 = vsub.f32 1.0, %v924
  %v926 = vmul.f32 %v923, %v925
  %v927 = vadd.f32 %v923, %v926
  %vm928 = vweird.f32 %v891
  %vm929 = vweird.f32 %v923
  %vm930 = vmor %vm928, %vm929
  %v931 = vsel %vm930, %v923, %v927
  %v932 = vand.u32 2147483647, %v891
  %vm933 = vcmp.eq.f32.partialorder %v932, 8.507059e+37
  %v934 = vand.u32 %v891, 2147483648
  %v935 = vor.u32 1.1754944e-38, %v934
  %v936 = vsel %vm933, %v935, %v931
  %v937 = vmul.f32 1.0, %v936
  %v938 = vrcp.pop %v892
  %v939 = vmul.f32 %v892, %v938
  %v940 = vsub.f32 1.0, %v939
  %v941 = vmul.f32 %v938, %v940
  %v942 = vadd.f32 %v938, %v941
  %vm943 = vweird.f32 %v892
  %vm944 = vweird.f32 %v938
  %vm945 = vmor %vm943, %vm944
  %v946 = vsel %vm945, %v938, %v942
  %v947 = vand.u32 2147483647, %v892
  %vm948 = vcmp.eq.f32.partialorder %v947, 8.507059e+37
  %v949 = vand.u32 %v892, 2147483648
  %v950 = vor.u32 1.1754944e-38, %v949
  %v951 = vsel %vm948, %v950, %v946
  %v952 = vmul.f32 1.0, %v951
  %v953 = vmul.f32 %v868, %v907
  %v954 = vmul.f32 %v870, %v922
  %v955 = vmul.f32 %v873, %v937
  %v956 = vmul.f32 %v875, %v952
  %v957 = vpack.c.bf16 %v953, %v953
  %v958 = vpack.c.bf16 %v954, %v954
  %v959 = vpack.c.bf16 %v955, %v955
  %v960 = vpack.c.bf16 %v956, %v956
  %961 = vst [vmem:[%s3] sm:$0xf] %v957
  %962 = vst [vmem:[%s3 + $0x4] sm:$0xf] %v958
  %963 = vst [vmem:[%s3 + $0x8] sm:$0xf] %v959
  %964 = vst [vmem:[%s3 + $0xc] sm:$0xf] %v960
  // Predicated region
  $region14: #{forward.16} parent=0 // pred_check
    _
  $region15: #{forward.16} parent=0 // pred_check_branch
    %966 = sbr.rel (0) target = $region17
  $region16: #{forward.16} parent=0 // pred_region
    _
  $region17: #{forward.16} parent=0 // pred_fallthru
    _
  // Predicated region
  $region18: #{forward.16} parent=0 // pred_check
    _
  $region19: #{forward.16} parent=0 // pred_check_branch
    %968 = sbr.rel (0) target = $region21
  $region20: #{forward.16} parent=0 // pred_region
    _
  $region21: #{forward.16} parent=0 // pred_fallthru
    _

// kernel: forward.17
$region0: #{forward.17}
  #allocation0 [shape = 'u32[]', space=smem, size = 0x4, offset = 0x4, fixed_abs, tag = 'smem constant byte address 0x4 - core index']
  #allocation1 [shape = 'u32[72,128]{1,0:T(1,128)}', space=vmem, size = 0x9000, scoped, tag = 'internal scratch']
  %s0 = inlined_call_operand.vmem [shape: bf16[8,128], index: 0, kind: input, shape index: {}]
  %s1 = inlined_call_operand.vmem [shape: bf16[128,128], index: 1, kind: input, shape index: {}]
  %s2 = inlined_call_operand.vmem [shape: f32[1,128], index: 2, kind: input, shape index: {}]
  %s3 = inlined_call_operand.vmem [shape: bf16[8,128], index: 3, kind: output, shape index: {}]
  %s4 = sld [smem:[#allocation0]]
  $region22: #{forward.17} parent=0
    _
  %s6 = ssub.s32 1, %s4
  %s7 = scalar_select 0, %s6, %s4
  // Predicated region
  $region2: #{forward.17} parent=0 // pred_check
    _
  $region3: #{forward.17} parent=0 // pred_check_branch
    %9 = sbr.rel (0) target = $region5
  $region4: #{forward.17} parent=0 // pred_region
    _
  $region5: #{forward.17} parent=0 // pred_fallthru
    _
  // Predicated region
  $region6: #{forward.17} parent=0 // pred_check
    _
  $region7: #{forward.17} parent=0 // pred_check_branch
    %11 = sbr.rel (0) target = $region9
  $region8: #{forward.17} parent=0 // pred_region
    _
  $region9: #{forward.17} parent=0 // pred_fallthru
    _
  // Predicated region
  $region10: #{forward.17} parent=0 // pred_check
    _
  $region11: #{forward.17} parent=0 // pred_check_branch
    %13 = sbr.rel (0) target = $region13
  $region12: #{forward.17} parent=0 // pred_region
    _
  $region13: #{forward.17} parent=0 // pred_fallthru
    _
  %v14 = vld [vmem:[%s0] sm:$0xf]
  %v15 = vld [vmem:[%s1] sm:$0xf]
  %v16 = vld [vmem:[%s1 + $0x4] sm:$0xf]
  %v17 = vld [vmem:[%s1 + $0x8] sm:$0xf]
  %v18 = vld [vmem:[%s1 + $0xc] sm:$0xf]
  %v19 = vld [vmem:[%s1 + $0x10] sm:$0xf]
  %v20 = vld [vmem:[%s1 + $0x14] sm:$0xf]
  %v21 = vld [vmem:[%s1 + $0x18] sm:$0xf]
  %v22 = vld [vmem:[%s1 + $0x1c] sm:$0xf]
  %v23 = vld [vmem:[%s1 + $0x20] sm:$0xf]
  %v24 = vld [vmem:[%s1 + $0x24] sm:$0xf]
  %v25 = vld [vmem:[%s1 + $0x28] sm:$0xf]
  %v26 = vld [vmem:[%s1 + $0x2c] sm:$0xf]
  %v27 = vld [vmem:[%s1 + $0x30] sm:$0xf]
  %v28 = vld [vmem:[%s1 + $0x34] sm:$0xf]
  %v29 = vld [vmem:[%s1 + $0x38] sm:$0xf]
  %v30 = vld [vmem:[%s1 + $0x3c] sm:$0xf]
  %v31 = vld [vmem:[%s2] sm:$0x1]
  %v33 = vperm.slane %v31, 0
  %v51 = vunpack.c.l.b16 %v15
  %v52 = vunpack.c.l.b16 %v16
  %v53 = vunpack.c.l.b16 %v17
  %v54 = vunpack.c.l.b16 %v18
  %v55 = vunpack.c.l.b16 %v19
  %v56 = vunpack.c.l.b16 %v20
  %v57 = vunpack.c.l.b16 %v21
  %v58 = vunpack.c.l.b16 %v22
  %v59 = vunpack.c.l.b16 %v23
  %v60 = vunpack.c.l.b16 %v24
  %v61 = vunpack.c.l.b16 %v25
  %v62 = vunpack.c.l.b16 %v26
  %v63 = vunpack.c.l.b16 %v27
  %v64 = vunpack.c.l.b16 %v28
  %v65 = vunpack.c.l.b16 %v29
  %v66 = vunpack.c.l.b16 %v30
  %v67 = vpack.c.b16 %v52, %v51
  %v68 = vpack.c.b16 %v54, %v53
  %v69 = vpack.c.b16 %v56, %v55
  %v70 = vpack.c.b16 %v58, %v57
  %v71 = vpack.c.b16 %v60, %v59
  %v72 = vpack.c.b16 %v62, %v61
  %v73 = vpack.c.b16 %v64, %v63
  %v74 = vpack.c.b16 %v66, %v65
  %83 = vmatpush.bf16.msra.mxu0 %v74
  %84 = vmatpush.bf16.msra.mxu0 %v73
  %85 = vmatpush.bf16.msra.mxu0 %v72
  %86 = vmatpush.bf16.msra.mxu0 %v71
  %87 = vmatpush.bf16.msra.mxu0 %v70
  %88 = vmatpush.bf16.msra.mxu0 %v69
  %89 = vmatpush.bf16.msra.mxu0 %v68
  %90 = vmatpush.bf16.msra.mxu0 %v67
  %91 = vmatmul.bf16.gmra.mxu0 %v14
  %v92 = vpop.f32.mrf.mxu0
  %v93 = vadd.f32 %v33, %v92
  %v94 = vpop.f32.mrf.mxu0
  %95 = vdwg.mxu0
  %v96 = vxor.u32 %v93, 2147483648
  %v97 = vmul.f32 %v96, 1.442695
  %v98 = vpow.pop %v97
  %v99 = vadd.f32 %v98, 1.0
  %v100 = vrcp.pop %v99
  %v101 = vmul.f32 %v99, %v100
  %v102 = vsub.f32 1.0, %v101
  %v103 = vmul.f32 %v100, %v102
  %v104 = vadd.f32 %v100, %v103
  %vm105 = vweird.f32 %v99
  %vm106 = vweird.f32 %v100
  %vm107 = vmor %vm105, %vm106
  %v108 = vsel %vm107, %v100, %v104
  %v109 = vand.u32 2147483647, %v99
  %vm110 = vcmp.eq.f32.partialorder %v109, 8.507059e+37
  %v111 = vand.u32 %v99, 2147483648
  %v112 = vor.u32 1.1754944e-38, %v111
  %v113 = vsel %vm110, %v112, %v108
  %v114 = vmul.f32 1.0, %v113
  %v115 = vmul.f32 %v93, %v114
  %v116 = vpack.c.bf16 %v115, %v115
  %117 = vst [vmem:[%s3] sm:$0xf] %v116
  // Predicated region
  $region14: #{forward.17} parent=0 // pred_check
    _
  $region15: #{forward.17} parent=0 // pred_check_branch
    %119 = sbr.rel (0) target = $region17
  $region16: #{forward.17} parent=0 // pred_region
    _
  $region17: #{forward.17} parent=0 // pred_fallthru
    _
  // Predicated region
  $region18: #{forward.17} parent=0 // pred_check
    _
  $region19: #{forward.17} parent=0 // pred_check_branch
    %121 = sbr.rel (0) target = $region21
  $region20: #{forward.17} parent=0 // pred_region
    _
  $region21: #{forward.17} parent=0 // pred_fallthru
    _

// kernel: forward.18
$region0: #{forward.18}
  #allocation0 [shape = 'u32[]', space=smem, size = 0x4, offset = 0x4, fixed_abs, tag = 'smem constant byte address 0x4 - core index']
  #allocation1 [shape = 'u32[72,128]{1,0:T(1,128)}', space=vmem, size = 0x9000, scoped, tag = 'internal scratch']
  %s0 = inlined_call_operand.vmem [shape: bf16[8,1152], index: 0, kind: input, shape index: {}]
  %s1 = inlined_call_operand.vmem [shape: bf16[1152,128], index: 1, kind: input, shape index: {}]
  %s2 = inlined_call_operand.vmem [shape: f32[1,128], index: 2, kind: input, shape index: {}]
  %s3 = inlined_call_operand.vmem [shape: bf16[8,128], index: 3, kind: output, shape index: {}]
  %s4 = sld [smem:[#allocation0]]
  $region22: #{forward.18} parent=0
    _
  %s6 = ssub.s32 1, %s4
  %s7 = scalar_select 0, %s6, %s4
  // Predicated region
  $region2: #{forward.18} parent=0 // pred_check
    _
  $region3: #{forward.18} parent=0 // pred_check_branch
    %9 = sbr.rel (0) target = $region5
  $region4: #{forward.18} parent=0 // pred_region
    _
  $region5: #{forward.18} parent=0 // pred_fallthru
    _
  // Predicated region
  $region6: #{forward.18} parent=0 // pred_check
    _
  $region7: #{forward.18} parent=0 // pred_check_branch
    %11 = sbr.rel (0) target = $region9
  $region8: #{forward.18} parent=0 // pred_region
    _
  $region9: #{forward.18} parent=0 // pred_fallthru
    _
  // Predicated region
  $region10: #{forward.18} parent=0 // pred_check
    _
  $region11: #{forward.18} parent=0 // pred_check_branch
    %13 = sbr.rel (0) target = $region13
  $region12: #{forward.18} parent=0 // pred_region
    _
  $region13: #{forward.18} parent=0 // pred_fallthru
    _
  %v14 = vld [vmem:[%s0] sm:$0xff]
  %v15 = vld [vmem:[%s0 + $0x8] sm:$0xff]
  %v16 = vld [vmem:[%s0 + $0x10] sm:$0xff]
  %v17 = vld [vmem:[%s0 + $0x18] sm:$0xff]
  %v18 = vld [vmem:[%s0 + $0x20] sm:$0xf]
  %v19 = vld [vmem:[%s1] sm:$0xf]
  %v20 = vld [vmem:[%s1 + $0x4] sm:$0xf]
  %v21 = vld [vmem:[%s1 + $0x8] sm:$0xf]
  %v22 = vld [vmem:[%s1 + $0xc] sm:$0xf]
  %v23 = vld [vmem:[%s1 + $0x10] sm:$0xf]
  %v24 = vld [vmem:[%s1 + $0x14] sm:$0xf]
  %v25 = vld [vmem:[%s1 + $0x18] sm:$0xf]
  %v26 = vld [vmem:[%s1 + $0x1c] sm:$0xf]
  %v27 = vld [vmem:[%s1 + $0x20] sm:$0xf]
  %v28 = vld [vmem:[%s1 + $0x24] sm:$0xf]
  %v29 = vld [vmem:[%s1 + $0x28] sm:$0xf]
  %v30 = vld [vmem:[%s1 + $0x2c] sm:$0xf]
  %v31 = vld [vmem:[%s1 + $0x30] sm:$0xf]
  %v32 = vld [vmem:[%s1 + $0x34] sm:$0xf]
  %v33 = vld [vmem:[%s1 + $0x38] sm:$0xf]
  %v34 = vld [vmem:[%s1 + $0x3c] sm:$0xf]
  %v35 = vld [vmem:[%s1 + $0x40] sm:$0xf]
  %v36 = vld [vmem:[%s1 + $0x44] sm:$0xf]
  %v37 = vld [vmem:[%s1 + $0x48] sm:$0xf]
  %v38 = vld [vmem:[%s1 + $0x4c] sm:$0xf]
  %v39 = vld [vmem:[%s1 + $0x50] sm:$0xf]
  %v40 = vld [vmem:[%s1 + $0x54] sm:$0xf]
  %v41 = vld [vmem:[%s1 + $0x58] sm:$0xf]
  %v42 = vld [vmem:[%s1 + $0x5c] sm:$0xf]
  %v43 = vld [vmem:[%s1 + $0x60] sm:$0xf]
  %v44 = vld [vmem:[%s1 + $0x64] sm:$0xf]
  %v45 = vld [vmem:[%s1 + $0x68] sm:$0xf]
  %v46 = vld [vmem:[%s1 + $0x6c] sm:$0xf]
  %v47 = vld [vmem:[%s1 + $0x70] sm:$0xf]
  %v48 = vld [vmem:[%s1 + $0x74] sm:$0xf]
  %v49 = vld [vmem:[%s1 + $0x78] sm:$0xf]
  %v50 = vld [vmem:[%s1 + $0x7c] sm:$0xf]
  %v51 = vld [vmem:[%s1 + $0x80] sm:$0xf]
  %v52 = vld [vmem:[%s1 + $0x84] sm:$0xf]
  %v53 = vld [vmem:[%s1 + $0x88] sm:$0xf]
  %v54 = vld [vmem:[%s1 + $0x8c] sm:$0xf]
  %v55 = vld [vmem:[%s1 + $0x90] sm:$0xf]
  %v56 = vld [vmem:[%s1 + $0x94] sm:$0xf]
  %v57 = vld [vmem:[%s1 + $0x98] sm:$0xf]
  %v58 = vld [vmem:[%s1 + $0x9c] sm:$0xf]
  %v59 = vld [vmem:[%s1 + $0xa0] sm:$0xf]
  %v60 = vld [vmem:[%s1 + $0xa4] sm:$0xf]
  %v61 = vld [vmem:[%s1 + $0xa8] sm:$0xf]
  %v62 = vld [vmem:[%s1 + $0xac] sm:$0xf]
  %v63 = vld [vmem:[%s1 + $0xb0] sm:$0xf]
  %v64 = vld [vmem:[%s1 + $0xb4] sm:$0xf]
  %v65 = vld [vmem:[%s1 + $0xb8] sm:$0xf]
  %v66 = vld [vmem:[%s1 + $0xbc] sm:$0xf]
  %v67 = vld [vmem:[%s1 + $0xc0] sm:$0xf]
  %v68 = vld [vmem:[%s1 + $0xc4] sm:$0xf]
  %v69 = vld [vmem:[%s1 + $0xc8] sm:$0xf]
  %v70 = vld [vmem:[%s1 + $0xcc] sm:$0xf]
  %v71 = vld [vmem:[%s1 + $0xd0] sm:$0xf]
  %v72 = vld [vmem:[%s1 + $0xd4] sm:$0xf]
  %v73 = vld [vmem:[%s1 + $0xd8] sm:$0xf]
  %v74 = vld [vmem:[%s1 + $0xdc] sm:$0xf]
  %v75 = vld [vmem:[%s1 + $0xe0] sm:$0xf]
  %v76 = vld [vmem:[%s1 + $0xe4] sm:$0xf]
  %v77 = vld [vmem:[%s1 + $0xe8] sm:$0xf]
  %v78 = vld [vmem:[%s1 + $0xec] sm:$0xf]
  %v79 = vld [vmem:[%s1 + $0xf0] sm:$0xf]
  %v80 = vld [vmem:[%s1 + $0xf4] sm:$0xf]
  %v81 = vld [vmem:[%s1 + $0xf8] sm:$0xf]
  %v82 = vld [vmem:[%s1 + $0xfc] sm:$0xf]
  %v83 = vld [vmem:[%s1 + $0x100] sm:$0xf]
  %v84 = vld [vmem:[%s1 + $0x104] sm:$0xf]
  %v85 = vld [vmem:[%s1 + $0x108] sm:$0xf]
  %v86 = vld [vmem:[%s1 + $0x10c] sm:$0xf]
  %v87 = vld [vmem:[%s1 + $0x110] sm:$0xf]
  %v88 = vld [vmem:[%s1 + $0x114] sm:$0xf]
  %v89 = vld [vmem:[%s1 + $0x118] sm:$0xf]
  %v90 = vld [vmem:[%s1 + $0x11c] sm:$0xf]
  %v91 = vld [vmem:[%s1 + $0x120] sm:$0xf]
  %v92 = vld [vmem:[%s1 + $0x124] sm:$0xf]
  %v93 = vld [vmem:[%s1 + $0x128] sm:$0xf]
  %v94 = vld [vmem:[%s1 + $0x12c] sm:$0xf]
  %v95 = vld [vmem:[%s1 + $0x130] sm:$0xf]
  %v96 = vld [vmem:[%s1 + $0x134] sm:$0xf]
  %v97 = vld [vmem:[%s1 + $0x138] sm:$0xf]
  %v98 = vld [vmem:[%s1 + $0x13c] sm:$0xf]
  %v99 = vld [vmem:[%s1 + $0x140] sm:$0xf]
  %v100 = vld [vmem:[%s1 + $0x144] sm:$0xf]
  %v101 = vld [vmem:[%s1 + $0x148] sm:$0xf]
  %v102 = vld [vmem:[%s1 + $0x14c] sm:$0xf]
  %v103 = vld [vmem:[%s1 + $0x150] sm:$0xf]
  %v104 = vld [vmem:[%s1 + $0x154] sm:$0xf]
  %v105 = vld [vmem:[%s1 + $0x158] sm:$0xf]
  %v106 = vld [vmem:[%s1 + $0x15c] sm:$0xf]
  %v107 = vld [vmem:[%s1 + $0x160] sm:$0xf]
  %v108 = vld [vmem:[%s1 + $0x164] sm:$0xf]
  %v109 = vld [vmem:[%s1 + $0x168] sm:$0xf]
  %v110 = vld [vmem:[%s1 + $0x16c] sm:$0xf]
  %v111 = vld [vmem:[%s1 + $0x170] sm:$0xf]
  %v112 = vld [vmem:[%s1 + $0x174] sm:$0xf]
  %v113 = vld [vmem:[%s1 + $0x178] sm:$0xf]
  %v114 = vld [vmem:[%s1 + $0x17c] sm:$0xf]
  %v115 = vld [vmem:[%s1 + $0x180] sm:$0xf]
  %v116 = vld [vmem:[%s1 + $0x184] sm:$0xf]
  %v117 = vld [vmem:[%s1 + $0x188] sm:$0xf]
  %v118 = vld [vmem:[%s1 + $0x18c] sm:$0xf]
  %v119 = vld [vmem:[%s1 + $0x190] sm:$0xf]
  %v120 = vld [vmem:[%s1 + $0x194] sm:$0xf]
  %v121 = vld [vmem:[%s1 + $0x198] sm:$0xf]
  %v122 = vld [vmem:[%s1 + $0x19c] sm:$0xf]
  %v123 = vld [vmem:[%s1 + $0x1a0] sm:$0xf]
  %v124 = vld [vmem:[%s1 + $0x1a4] sm:$0xf]
  %v125 = vld [vmem:[%s1 + $0x1a8] sm:$0xf]
  %v126 = vld [vmem:[%s1 + $0x1ac] sm:$0xf]
  %v127 = vld [vmem:[%s1 + $0x1b0] sm:$0xf]
  %v128 = vld [vmem:[%s1 + $0x1b4] sm:$0xf]
  %v129 = vld [vmem:[%s1 + $0x1b8] sm:$0xf]
  %v130 = vld [vmem:[%s1 + $0x1bc] sm:$0xf]
  %v131 = vld [vmem:[%s1 + $0x1c0] sm:$0xf]
  %v132 = vld [vmem:[%s1 + $0x1c4] sm:$0xf]
  %v133 = vld [vmem:[%s1 + $0x1c8] sm:$0xf]
  %v134 = vld [vmem:[%s1 + $0x1cc] sm:$0xf]
  %v135 = vld [vmem:[%s1 + $0x1d0] sm:$0xf]
  %v136 = vld [vmem:[%s1 + $0x1d4] sm:$0xf]
  %v137 = vld [vmem:[%s1 + $0x1d8] sm:$0xf]
  %v138 = vld [vmem:[%s1 + $0x1dc] sm:$0xf]
  %v139 = vld [vmem:[%s1 + $0x1e0] sm:$0xf]
  %v140 = vld [vmem:[%s1 + $0x1e4] sm:$0xf]
  %v141 = vld [vmem:[%s1 + $0x1e8] sm:$0xf]
  %v142 = vld [vmem:[%s1 + $0x1ec] sm:$0xf]
  %v143 = vld [vmem:[%s1 + $0x1f0] sm:$0xf]
  %v144 = vld [vmem:[%s1 + $0x1f4] sm:$0xf]
  %v145 = vld [vmem:[%s1 + $0x1f8] sm:$0xf]
  %v146 = vld [vmem:[%s1 + $0x1fc] sm:$0xf]
  %v147 = vld [vmem:[%s1 + $0x200] sm:$0xf]
  %v148 = vld [vmem:[%s1 + $0x204] sm:$0xf]
  %v149 = vld [vmem:[%s1 + $0x208] sm:$0xf]
  %v150 = vld [vmem:[%s1 + $0x20c] sm:$0xf]
  %v151 = vld [vmem:[%s1 + $0x210] sm:$0xf]
  %v152 = vld [vmem:[%s1 + $0x214] sm:$0xf]
  %v153 = vld [vmem:[%s1 + $0x218] sm:$0xf]
  %v154 = vld [vmem:[%s1 + $0x21c] sm:$0xf]
  %v155 = vld [vmem:[%s1 + $0x220] sm:$0xf]
  %v156 = vld [vmem:[%s1 + $0x224] sm:$0xf]
  %v157 = vld [vmem:[%s1 + $0x228] sm:$0xf]
  %v158 = vld [vmem:[%s1 + $0x22c] sm:$0xf]
  %v159 = vld [vmem:[%s1 + $0x230] sm:$0xf]
  %v160 = vld [vmem:[%s1 + $0x234] sm:$0xf]
  %v161 = vld [vmem:[%s1 + $0x238] sm:$0xf]
  %v162 = vld [vmem:[%s1 + $0x23c] sm:$0xf]
  %v163 = vld [vmem:[%s2] sm:$0x1]
  %v165 = vperm.slane %v163, 0
  %v172 = vunpack.c.l.b16 %v14
  %v173 = vunpack.c.h.b16 %v14
  %v174 = vunpack.c.l.b16 %v15
  %v175 = vunpack.c.h.b16 %v15
  %v176 = vunpack.c.l.b16 %v16
  %v177 = vunpack.c.h.b16 %v16
  %v178 = vunpack.c.l.b16 %v17
  %v179 = vunpack.c.h.b16 %v17
  %v180 = vunpack.c.l.b16 %v18
  %v181 = vpack.c.b16 %v172, %v172
  %v182 = vpack.c.b16 %v173, %v173
  %v183 = vpack.c.b16 %v174, %v174
  %v184 = vpack.c.b16 %v175, %v175
  %v185 = vpack.c.b16 %v176, %v176
  %v186 = vpack.c.b16 %v177, %v177
  %v187 = vpack.c.b16 %v178, %v178
  %v188 = vpack.c.b16 %v179, %v179
  %v189 = vpack.c.b16 %v180, %v180
  %v343 = vunpack.c.l.b16 %v19
  %v344 = vunpack.c.l.b16 %v20
  %v345 = vunpack.c.l.b16 %v21
  %v346 = vunpack.c.l.b16 %v22
  %v347 = vunpack.c.l.b16 %v23
  %v348 = vunpack.c.l.b16 %v24
  %v349 = vunpack.c.l.b16 %v25
  %v350 = vunpack.c.l.b16 %v26
  %v351 = vunpack.c.l.b16 %v27
  %v352 = vunpack.c.l.b16 %v28
  %v353 = vunpack.c.l.b16 %v29
  %v354 = vunpack.c.l.b16 %v30
  %v355 = vunpack.c.l.b16 %v31
  %v356 = vunpack.c.l.b16 %v32
  %v357 = vunpack.c.l.b16 %v33
  %v358 = vunpack.c.l.b16 %v34
  %v359 = vunpack.c.l.b16 %v35
  %v360 = vunpack.c.l.b16 %v36
  %v361 = vunpack.c.l.b16 %v37
  %v362 = vunpack.c.l.b16 %v38
  %v363 = vunpack.c.l.b16 %v39
  %v364 = vunpack.c.l.b16 %v40
  %v365 = vunpack.c.l.b16 %v41
  %v366 = vunpack.c.l.b16 %v42
  %v367 = vunpack.c.l.b16 %v43
  %v368 = vunpack.c.l.b16 %v44
  %v369 = vunpack.c.l.b16 %v45
  %v370 = vunpack.c.l.b16 %v46
  %v371 = vunpack.c.l.b16 %v47
  %v372 = vunpack.c.l.b16 %v48
  %v373 = vunpack.c.l.b16 %v49
  %v374 = vunpack.c.l.b16 %v50
  %v375 = vunpack.c.l.b16 %v51
  %v376 = vunpack.c.l.b16 %v52
  %v377 = vunpack.c.l.b16 %v53
  %v378 = vunpack.c.l.b16 %v54
  %v379 = vunpack.c.l.b16 %v55
  %v380 = vunpack.c.l.b16 %v56
  %v381 = vunpack.c.l.b16 %v57
  %v382 = vunpack.c.l.b16 %v58
  %v383 = vunpack.c.l.b16 %v59
  %v384 = vunpack.c.l.b16 %v60
  %v385 = vunpack.c.l.b16 %v61
  %v386 = vunpack.c.l.b16 %v62
  %v387 = vunpack.c.l.b16 %v63
  %v388 = vunpack.c.l.b16 %v64
  %v389 = vunpack.c.l.b16 %v65
  %v390 = vunpack.c.l.b16 %v66
  %v391 = vunpack.c.l.b16 %v67
  %v392 = vunpack.c.l.b16 %v68
  %v393 = vunpack.c.l.b16 %v69
  %v394 = vunpack.c.l.b16 %v70
  %v395 = vunpack.c.l.b16 %v71
  %v396 = vunpack.c.l.b16 %v72
  %v397 = vunpack.c.l.b16 %v73
  %v398 = vunpack.c.l.b16 %v74
  %v399 = vunpack.c.l.b16 %v75
  %v400 = vunpack.c.l.b16 %v76
  %v401 = vunpack.c.l.b16 %v77
  %v402 = vunpack.c.l.b16 %v78
  %v403 = vunpack.c.l.b16 %v79
  %v404 = vunpack.c.l.b16 %v80
  %v405 = vunpack.c.l.b16 %v81
  %v406 = vunpack.c.l.b16 %v82
  %v407 = vunpack.c.l.b16 %v83
  %v408 = vunpack.c.l.b16 %v84
  %v409 = vunpack.c.l.b16 %v85
  %v410 = vunpack.c.l.b16 %v86
  %v411 = vunpack.c.l.b16 %v87
  %v412 = vunpack.c.l.b16 %v88
  %v413 = vunpack.c.l.b16 %v89
  %v414 = vunpack.c.l.b16 %v90
  %v415 = vunpack.c.l.b16 %v91
  %v416 = vunpack.c.l.b16 %v92
  %v417 = vunpack.c.l.b16 %v93
  %v418 = vunpack.c.l.b16 %v94
  %v419 = vunpack.c.l.b16 %v95
  %v420 = vunpack.c.l.b16 %v96
  %v421 = vunpack.c.l.b16 %v97
  %v422 = vunpack.c.l.b16 %v98
  %v423 = vunpack.c.l.b16 %v99
  %v424 = vunpack.c.l.b16 %v100
  %v425 = vunpack.c.l.b16 %v101
  %v426 = vunpack.c.l.b16 %v102
  %v427 = vunpack.c.l.b16 %v103
  %v428 = vunpack.c.l.b16 %v104
  %v429 = vunpack.c.l.b16 %v105
  %v430 = vunpack.c.l.b16 %v106
  %v431 = vunpack.c.l.b16 %v107
  %v432 = vunpack.c.l.b16 %v108
  %v433 = vunpack.c.l.b16 %v109
  %v434 = vunpack.c.l.b16 %v110
  %v435 = vunpack.c.l.b16 %v111
  %v436 = vunpack.c.l.b16 %v112
  %v437 = vunpack.c.l.b16 %v113
  %v438 = vunpack.c.l.b16 %v114
  %v439 = vunpack.c.l.b16 %v115
  %v440 = vunpack.c.l.b16 %v116
  %v441 = vunpack.c.l.b16 %v117
  %v442 = vunpack.c.l.b16 %v118
  %v443 = vunpack.c.l.b16 %v119
  %v444 = vunpack.c.l.b16 %v120
  %v445 = vunpack.c.l.b16 %v121
  %v446 = vunpack.c.l.b16 %v122
  %v447 = vunpack.c.l.b16 %v123
  %v448 = vunpack.c.l.b16 %v124
  %v449 = vunpack.c.l.b16 %v125
  %v450 = vunpack.c.l.b16 %v126
  %v451 = vunpack.c.l.b16 %v127
  %v452 = vunpack.c.l.b16 %v128
  %v453 = vunpack.c.l.b16 %v129
  %v454 = vunpack.c.l.b16 %v130
  %v455 = vunpack.c.l.b16 %v131
  %v456 = vunpack.c.l.b16 %v132
  %v457 = vunpack.c.l.b16 %v133
  %v458 = vunpack.c.l.b16 %v134
  %v459 = vunpack.c.l.b16 %v135
  %v460 = vunpack.c.l.b16 %v136
  %v461 = vunpack.c.l.b16 %v137
  %v462 = vunpack.c.l.b16 %v138
  %v463 = vunpack.c.l.b16 %v139
  %v464 = vunpack.c.l.b16 %v140
  %v465 = vunpack.c.l.b16 %v141
  %v466 = vunpack.c.l.b16 %v142
  %v467 = vunpack.c.l.b16 %v143
  %v468 = vunpack.c.l.b16 %v144
  %v469 = vunpack.c.l.b16 %v145
  %v470 = vunpack.c.l.b16 %v146
  %v471 = vunpack.c.l.b16 %v147
  %v472 = vunpack.c.l.b16 %v148
  %v473 = vunpack.c.l.b16 %v149
  %v474 = vunpack.c.l.b16 %v150
  %v475 = vunpack.c.l.b16 %v151
  %v476 = vunpack.c.l.b16 %v152
  %v477 = vunpack.c.l.b16 %v153
  %v478 = vunpack.c.l.b16 %v154
  %v479 = vunpack.c.l.b16 %v155
  %v480 = vunpack.c.l.b16 %v156
  %v481 = vunpack.c.l.b16 %v157
  %v482 = vunpack.c.l.b16 %v158
  %v483 = vunpack.c.l.b16 %v159
  %v484 = vunpack.c.l.b16 %v160
  %v485 = vunpack.c.l.b16 %v161
  %v486 = vunpack.c.l.b16 %v162
  %v487 = vpack.c.b16 %v344, %v343
  %v488 = vpack.c.b16 %v346, %v345
  %v489 = vpack.c.b16 %v348, %v347
  %v490 = vpack.c.b16 %v350, %v349
  %v491 = vpack.c.b16 %v352, %v351
  %v492 = vpack.c.b16 %v354, %v353
  %v493 = vpack.c.b16 %v356, %v355
  %v494 = vpack.c.b16 %v358, %v357
  %v495 = vpack.c.b16 %v360, %v359
  %v496 = vpack.c.b16 %v362, %v361
  %v497 = vpack.c.b16 %v364, %v363
  %v498 = vpack.c.b16 %v366, %v365
  %v499 = vpack.c.b16 %v368, %v367
  %v500 = vpack.c.b16 %v370, %v369
  %v501 = vpack.c.b16 %v372, %v371
  %v502 = vpack.c.b16 %v374, %v373
  %v503 = vpack.c.b16 %v376, %v375
  %v504 = vpack.c.b16 %v378, %v377
  %v505 = vpack.c.b16 %v380, %v379
  %v506 = vpack.c.b16 %v382, %v381
  %v507 = vpack.c.b16 %v384, %v383
  %v508 = vpack.c.b16 %v386, %v385
  %v509 = vpack.c.b16 %v388, %v387
  %v510 = vpack.c.b16 %v390, %v389
  %v511 = vpack.c.b16 %v392, %v391
  %v512 = vpack.c.b16 %v394, %v393
  %v513 = vpack.c.b16 %v396, %v395
  %v514 = vpack.c.b16 %v398, %v397
  %v515 = vpack.c.b16 %v400, %v399
  %v516 = vpack.c.b16 %v402, %v401
  %v517 = vpack.c.b16 %v404, %v403
  %v518 = vpack.c.b16 %v406, %v405
  %v519 = vpack.c.b16 %v408, %v407
  %v520 = vpack.c.b16 %v410, %v409
  %v521 = vpack.c.b16 %v412, %v411
  %v522 = vpack.c.b16 %v414, %v413
  %v523 = vpack.c.b16 %v416, %v415
  %v524 = vpack.c.b16 %v418, %v417
  %v525 = vpack.c.b16 %v420, %v419
  %v526 = vpack.c.b16 %v422, %v421
  %v527 = vpack.c.b16 %v424, %v423
  %v528 = vpack.c.b16 %v426, %v425
  %v529 = vpack.c.b16 %v428, %v427
  %v530 = vpack.c.b16 %v430, %v429
  %v531 = vpack.c.b16 %v432, %v431
  %v532 = vpack.c.b16 %v434, %v433
  %v533 = vpack.c.b16 %v436, %v435
  %v534 = vpack.c.b16 %v438, %v437
  %v535 = vpack.c.b16 %v440, %v439
  %v536 = vpack.c.b16 %v442, %v441
  %v537 = vpack.c.b16 %v444, %v443
  %v538 = vpack.c.b16 %v446, %v445
  %v539 = vpack.c.b16 %v448, %v447
  %v540 = vpack.c.b16 %v450, %v449
  %v541 = vpack.c.b16 %v452, %v451
  %v542 = vpack.c.b16 %v454, %v453
  %v543 = vpack.c.b16 %v456, %v455
  %v544 = vpack.c.b16 %v458, %v457
  %v545 = vpack.c.b16 %v460, %v459
  %v546 = vpack.c.b16 %v462, %v461
  %v547 = vpack.c.b16 %v464, %v463
  %v548 = vpack.c.b16 %v466, %v465
  %v549 = vpack.c.b16 %v468, %v467
  %v550 = vpack.c.b16 %v470, %v469
  %v551 = vpack.c.b16 %v472, %v471
  %v552 = vpack.c.b16 %v474, %v473
  %v553 = vpack.c.b16 %v476, %v475
  %v554 = vpack.c.b16 %v478, %v477
  %v555 = vpack.c.b16 %v480, %v479
  %v556 = vpack.c.b16 %v482, %v481
  %v557 = vpack.c.b16 %v484, %v483
  %v558 = vpack.c.b16 %v486, %v485
  %631 = vmatpush.bf16.msra.mxu0 %v494
  %632 = vmatpush.bf16.msra.mxu0 %v493
  %633 = vmatpush.bf16.msra.mxu0 %v492
  %634 = vmatpush.bf16.msra.mxu0 %v491
  %635 = vmatpush.bf16.msra.mxu0 %v490
  %636 = vmatpush.bf16.msra.mxu0 %v489
  %637 = vmatpush.bf16.msra.mxu0 %v488
  %638 = vmatpush.bf16.msra.mxu0 %v487
  %639 = vmatmul.bf16.gmra.mxu0 %v181
  %v640 = vpop.f32.mrf.mxu0
  %v641 = vadd.f32 %v165, %v640
  %v642 = vpop.f32.mrf.mxu0
  %643 = vdwg.mxu0
  %644 = vmatpush.bf16.msra.mxu0 %v502
  %645 = vmatpush.bf16.msra.mxu0 %v501
  %646 = vmatpush.bf16.msra.mxu0 %v500
  %647 = vmatpush.bf16.msra.mxu0 %v499
  %648 = vmatpush.bf16.msra.mxu0 %v498
  %649 = vmatpush.bf16.msra.mxu0 %v497
  %650 = vmatpush.bf16.msra.mxu0 %v496
  %651 = vmatpush.bf16.msra.mxu0 %v495
  %652 = vmatmul.bf16.gmra.mxu0 %v182
  %v653 = vpop.f32.mrf.mxu0
  %v654 = vadd.f32 %v641, %v653
  %v655 = vpop.f32.mrf.mxu0
  %656 = vdwg.mxu0
  %657 = vmatpush.bf16.msra.mxu0 %v510
  %658 = vmatpush.bf16.msra.mxu0 %v509
  %659 = vmatpush.bf16.msra.mxu0 %v508
  %660 = vmatpush.bf16.msra.mxu0 %v507
  %661 = vmatpush.bf16.msra.mxu0 %v506
  %662 = vmatpush.bf16.msra.mxu0 %v505
  %663 = vmatpush.bf16.msra.mxu0 %v504
  %664 = vmatpush.bf16.msra.mxu0 %v503
  %665 = vmatmul.bf16.gmra.mxu0 %v183
  %v666 = vpop.f32.mrf.mxu0
  %v667 = vadd.f32 %v654, %v666
  %v668 = vpop.f32.mrf.mxu0
  %669 = vdwg.mxu0
  %670 = vmatpush.bf16.msra.mxu0 %v518
  %671 = vmatpush.bf16.msra.mxu0 %v517
  %672 = vmatpush.bf16.msra.mxu0 %v516
  %673 = vmatpush.bf16.msra.mxu0 %v515
  %674 = vmatpush.bf16.msra.mxu0 %v514
  %675 = vmatpush.bf16.msra.mxu0 %v513
  %676 = vmatpush.bf16.msra.mxu0 %v512
  %677 = vmatpush.bf16.msra.mxu0 %v511
  %678 = vmatmul.bf16.gmra.mxu0 %v184
  %v679 = vpop.f32.mrf.mxu0
  %v680 = vadd.f32 %v667, %v679
  %v681 = vpop.f32.mrf.mxu0
  %682 = vdwg.mxu0
  %683 = vmatpush.bf16.msra.mxu0 %v526
  %684 = vmatpush.bf16.msra.mxu0 %v525
  %685 = vmatpush.bf16.msra.mxu0 %v524
  %686 = vmatpush.bf16.msra.mxu0 %v523
  %687 = vmatpush.bf16.msra.mxu0 %v522
  %688 = vmatpush.bf16.msra.mxu0 %v521
  %689 = vmatpush.bf16.msra.mxu0 %v520
  %690 = vmatpush.bf16.msra.mxu0 %v519
  %691 = vmatmul.bf16.gmra.mxu0 %v185
  %v692 = vpop.f32.mrf.mxu0
  %v693 = vadd.f32 %v680, %v692
  %v694 = vpop.f32.mrf.mxu0
  %695 = vdwg.mxu0
  %696 = vmatpush.bf16.msra.mxu0 %v534
  %697 = vmatpush.bf16.msra.mxu0 %v533
  %698 = vmatpush.bf16.msra.mxu0 %v532
  %699 = vmatpush.bf16.msra.mxu0 %v531
  %700 = vmatpush.bf16.msra.mxu0 %v530
  %701 = vmatpush.bf16.msra.mxu0 %v529
  %702 = vmatpush.bf16.msra.mxu0 %v528
  %703 = vmatpush.bf16.msra.mxu0 %v527
  %704 = vmatmul.bf16.gmra.mxu0 %v186
  %v705 = vpop.f32.mrf.mxu0
  %v706 = vadd.f32 %v693, %v705
  %v707 = vpop.f32.mrf.mxu0
  %708 = vdwg.mxu0
  %709 = vmatpush.bf16.msra.mxu0 %v542
  %710 = vmatpush.bf16.msra.mxu0 %v541
  %711 = vmatpush.bf16.msra.mxu0 %v540
  %712 = vmatpush.bf16.msra.mxu0 %v539
  %713 = vmatpush.bf16.msra.mxu0 %v538
  %714 = vmatpush.bf16.msra.mxu0 %v537
  %715 = vmatpush.bf16.msra.mxu0 %v536
  %716 = vmatpush.bf16.msra.mxu0 %v535
  %717 = vmatmul.bf16.gmra.mxu0 %v187
  %v718 = vpop.f32.mrf.mxu0
  %v719 = vadd.f32 %v706, %v718
  %v720 = vpop.f32.mrf.mxu0
  %721 = vdwg.mxu0
  %722 = vmatpush.bf16.msra.mxu0 %v550
  %723 = vmatpush.bf16.msra.mxu0 %v549
  %724 = vmatpush.bf16.msra.mxu0 %v548
  %725 = vmatpush.bf16.msra.mxu0 %v547
  %726 = vmatpush.bf16.msra.mxu0 %v546
  %727 = vmatpush.bf16.msra.mxu0 %v545
  %728 = vmatpush.bf16.msra.mxu0 %v544
  %729 = vmatpush.bf16.msra.mxu0 %v543
  %730 = vmatmul.bf16.gmra.mxu0 %v188
  %v731 = vpop.f32.mrf.mxu0
  %v732 = vadd.f32 %v719, %v731
  %v733 = vpop.f32.mrf.mxu0
  %734 = vdwg.mxu0
  %735 = vmatpush.bf16.msra.mxu0 %v558
  %736 = vmatpush.bf16.msra.mxu0 %v557
  %737 = vmatpush.bf16.msra.mxu0 %v556
  %738 = vmatpush.bf16.msra.mxu0 %v555
  %739 = vmatpush.bf16.msra.mxu0 %v554
  %740 = vmatpush.bf16.msra.mxu0 %v553
  %741 = vmatpush.bf16.msra.mxu0 %v552
  %742 = vmatpush.bf16.msra.mxu0 %v551
  %743 = vmatmul.bf16.gmra.mxu0 %v189
  %v744 = vpop.f32.mrf.mxu0
  %v745 = vadd.f32 %v732, %v744
  %v746 = vpop.f32.mrf.mxu0
  %747 = vdwg.mxu0
  %v748 = vxor.u32 %v745, 2147483648
  %v749 = vmul.f32 %v748, 1.442695
  %v750 = vpow.pop %v749
  %v751 = vadd.f32 %v750, 1.0
  %v752 = vrcp.pop %v751
  %v753 = vmul.f32 %v751, %v752
  %v754 = vsub.f32 1.0, %v753
  %v755 = vmul.f32 %v752, %v754
  %v756 = vadd.f32 %v752, %v755
  %vm757 = vweird.f32 %v751
  %vm758 = vweird.f32 %v752
  %vm759 = vmor %vm757, %vm758
  %v760 = vsel %vm759, %v752, %v756
  %v761 = vand.u32 2147483647, %v751
  %vm762 = vcmp.eq.f32.partialorder %v761, 8.507059e+37
  %v763 = vand.u32 %v751, 2147483648
  %v764 = vor.u32 1.1754944e-38, %v763
  %v765 = vsel %vm762, %v764, %v760
  %v766 = vmul.f32 1.0, %v765
  %v767 = vmul.f32 %v745, %v766
  %v768 = vpack.c.bf16 %v767, %v767
  %769 = vst [vmem:[%s3] sm:$0xf] %v768
  // Predicated region
  $region14: #{forward.18} parent=0 // pred_check
    _
  $region15: #{forward.18} parent=0 // pred_check_branch
    %771 = sbr.rel (0) target = $region17
  $region16: #{forward.18} parent=0 // pred_region
    _
  $region17: #{forward.18} parent=0 // pred_fallthru
    _
  // Predicated region
  $region18: #{forward.18} parent=0 // pred_check
    _
  $region19: #{forward.18} parent=0 // pred_check_branch
    %773 = sbr.rel (0) target = $region21
  $region20: #{forward.18} parent=0 // pred_region
    _
  $region21: #{forward.18} parent=0 // pred_fallthru
    _

// kernel: forward.22
$region0: #{forward.22}
  #allocation0 [shape = 'u32[]', space=smem, size = 0x4, offset = 0x4, fixed_abs, tag = 'smem constant byte address 0x4 - core index']
  #allocation1 [shape = 'u32[72,128]{1,0:T(1,128)}', space=vmem, size = 0x9000, scoped, tag = 'internal scratch']
  %s0 = inlined_call_operand.vmem [shape: bf16[8,128], index: 0, kind: input, shape index: {}]
  %s1 = inlined_call_operand.vmem [shape: bf16[128,128], index: 1, kind: input, shape index: {}]
  %s2 = inlined_call_operand.vmem [shape: f32[1,128], index: 2, kind: input, shape index: {}]
  %s3 = inlined_call_operand.vmem [shape: f32[8,128], index: 3, kind: input, shape index: {}]
  %s4 = inlined_call_operand.vmem [shape: f32[8,128], index: 4, kind: output, shape index: {}]
  %s5 = sld [smem:[#allocation0]]
  $region26: #{forward.22} parent=0
    _
  %s7 = ssub.s32 1, %s5
  %s8 = scalar_select 0, %s7, %s5
  // Predicated region
  $region2: #{forward.22} parent=0 // pred_check
    _
  $region3: #{forward.22} parent=0 // pred_check_branch
    %10 = sbr.rel (0) target = $region5
  $region4: #{forward.22} parent=0 // pred_region
    _
  $region5: #{forward.22} parent=0 // pred_fallthru
    _
  // Predicated region
  $region6: #{forward.22} parent=0 // pred_check
    _
  $region7: #{forward.22} parent=0 // pred_check_branch
    %12 = sbr.rel (0) target = $region9
  $region8: #{forward.22} parent=0 // pred_region
    _
  $region9: #{forward.22} parent=0 // pred_fallthru
    _
  // Predicated region
  $region10: #{forward.22} parent=0 // pred_check
    _
  $region11: #{forward.22} parent=0 // pred_check_branch
    %14 = sbr.rel (0) target = $region13
  $region12: #{forward.22} parent=0 // pred_region
    _
  $region13: #{forward.22} parent=0 // pred_fallthru
    _
  // Predicated region
  $region14: #{forward.22} parent=0 // pred_check
    _
  $region15: #{forward.22} parent=0 // pred_check_branch
    %16 = sbr.rel (0) target = $region17
  $region16: #{forward.22} parent=0 // pred_region
    _
  $region17: #{forward.22} parent=0 // pred_fallthru
    _
  %v17 = vld [vmem:[%s0] sm:$0xf]
  %v18 = vld [vmem:[%s1] sm:$0xf]
  %v19 = vld [vmem:[%s1 + $0x4] sm:$0xf]
  %v20 = vld [vmem:[%s1 + $0x8] sm:$0xf]
  %v21 = vld [vmem:[%s1 + $0xc] sm:$0xf]
  %v22 = vld [vmem:[%s1 + $0x10] sm:$0xf]
  %v23 = vld [vmem:[%s1 + $0x14] sm:$0xf]
  %v24 = vld [vmem:[%s1 + $0x18] sm:$0xf]
  %v25 = vld [vmem:[%s1 + $0x1c] sm:$0xf]
  %v26 = vld [vmem:[%s1 + $0x20] sm:$0xf]
  %v27 = vld [vmem:[%s1 + $0x24] sm:$0xf]
  %v28 = vld [vmem:[%s1 + $0x28] sm:$0xf]
  %v29 = vld [vmem:[%s1 + $0x2c] sm:$0xf]
  %v30 = vld [vmem:[%s1 + $0x30] sm:$0xf]
  %v31 = vld [vmem:[%s1 + $0x34] sm:$0xf]
  %v32 = vld [vmem:[%s1 + $0x38] sm:$0xf]
  %v33 = vld [vmem:[%s1 + $0x3c] sm:$0xf]
  %v34 = vld [vmem:[%s2] sm:$0x1]
  %v36 = vperm.slane %v34, 0
  %v54 = vunpack.c.l.b16 %v18
  %v55 = vunpack.c.l.b16 %v19
  %v56 = vunpack.c.l.b16 %v20
  %v57 = vunpack.c.l.b16 %v21
  %v58 = vunpack.c.l.b16 %v22
  %v59 = vunpack.c.l.b16 %v23
  %v60 = vunpack.c.l.b16 %v24
  %v61 = vunpack.c.l.b16 %v25
  %v62 = vunpack.c.l.b16 %v26
  %v63 = vunpack.c.l.b16 %v27
  %v64 = vunpack.c.l.b16 %v28
  %v65 = vunpack.c.l.b16 %v29
  %v66 = vunpack.c.l.b16 %v30
  %v67 = vunpack.c.l.b16 %v31
  %v68 = vunpack.c.l.b16 %v32
  %v69 = vunpack.c.l.b16 %v33
  %v70 = vpack.c.b16 %v55, %v54
  %v71 = vpack.c.b16 %v57, %v56
  %v72 = vpack.c.b16 %v59, %v58
  %v73 = vpack.c.b16 %v61, %v60
  %v74 = vpack.c.b16 %v63, %v62
  %v75 = vpack.c.b16 %v65, %v64
  %v76 = vpack.c.b16 %v67, %v66
  %v77 = vpack.c.b16 %v69, %v68
  %86 = vmatpush.bf16.msra.mxu0 %v77
  %87 = vmatpush.bf16.msra.mxu0 %v76
  %88 = vmatpush.bf16.msra.mxu0 %v75
  %89 = vmatpush.bf16.msra.mxu0 %v74
  %90 = vmatpush.bf16.msra.mxu0 %v73
  %91 = vmatpush.bf16.msra.mxu0 %v72
  %92 = vmatpush.bf16.msra.mxu0 %v71
  %93 = vmatpush.bf16.msra.mxu0 %v70
  %94 = vmatmul.bf16.gmra.mxu0 %v17
  %v95 = vpop.f32.mrf.mxu0
  %v96 = vadd.f32 %v36, %v95
  %v97 = vpop.f32.mrf.mxu0
  %98 = vdwg.mxu0
  %v99 = vxor.u32 %v96, 2147483648
  %v100 = vmul.f32 %v99, 1.442695
  %v101 = vpow.pop %v100
  %v102 = vadd.f32 %v101, 1.0
  %v103 = vrcp.pop %v102
  %v104 = vmul.f32 %v102, %v103
  %v105 = vsub.f32 1.0, %v104
  %v106 = vmul.f32 %v103, %v105
  %v107 = vadd.f32 %v103, %v106
  %vm108 = vweird.f32 %v102
  %vm109 = vweird.f32 %v103
  %vm110 = vmor %vm108, %vm109
  %v111 = vsel %vm110, %v103, %v107
  %v112 = vand.u32 2147483647, %v102
  %vm113 = vcmp.eq.f32.partialorder %v112, 8.507059e+37
  %v114 = vand.u32 %v102, 2147483648
  %v115 = vor.u32 1.1754944e-38, %v114
  %v116 = vsel %vm113, %v115, %v111
  %v117 = vmul.f32 1.0, %v116
  %v118 = vlaneseq
  %v119 = vshrl.u32 %v118, 7
  %s120 = smul.u32 0, 8
  %v121 = vstv %s120
  %v122 = vadd.s32 %v119, %v121
  %v123 = vand.u32 %v122, 3
  %v124 = vand.u32 %v123, 1
  %v125 = vcvt.s32.f32 %v124
  %v126 = vshra.s32 %v123, 1
  %v127 = vcvt.s32.f32 %v126
  %v128 = vld [vmem:[%s3] sm:$0x1]
  %v129 = vld [vmem:[%s3 + $0x1] sm:$0x1]
  %v130 = vld [vmem:[%s3 + $0x2] sm:$0x1]
  %v131 = vld [vmem:[%s3 + $0x3] sm:$0x1]
  %v132 = vperm.slane %v128, 0
  %v133 = vmul.f32 %v125, %v132
  %v134 = vperm.slane %v129, 0
  %v135 = vmul.f32 %v127, %v134
  %v136 = vadd.f32 %v133, %v135
  %v137 = vmul.f32 %v117, 2.0
  %v138 = vsub.f32 %v137, 0.5
  %v139 = vadd.f32 %v138, %v136
  %v140 = vmul.f32 %v139, 16.0
  %v141 = vmul.f32 %v137, %v137
  %v142 = vperm.slane %v131, 0
  %v143 = vmul.f32 %v141, %v142
  %v144 = vadd.f32 %v128, %v129
  %v145 = vperm.slane %v144, 0
  %v146 = vmul.f32 %v145, %v140
  %v147 = vperm.slane %v130, 0
  %v148 = vmul.f32 %v147, %v143
  %v149 = vadd.f32 %v146, %v148
  %v150 = vsub.f32 1.0, %v144
  %v151 = vsub.f32 %v150, %v130
  %v152 = vperm.slane %v151, 0
  %v153 = vmul.f32 %v152, %v117
  %v154 = vadd.f32 %v149, %v153
  %155 = vst [vmem:[%s4] sm:$0xff] %v154
  // Predicated region
  $region18: #{forward.22} parent=0 // pred_check
    _
  $region19: #{forward.22} parent=0 // pred_check_branch
    %157 = sbr.rel (0) target = $region21
  $region20: #{forward.22} parent=0 // pred_region
    _
  $region21: #{forward.22} parent=0 // pred_fallthru
    _
  // Predicated region
  $region22: #{forward.22} parent=0 // pred_check
    _
  $region23: #{forward.22} parent=0 // pred_check_branch
    %159 = sbr.rel (0) target = $region25
  $region24: #{forward.22} parent=0 // pred_region
    _
  $region25: #{forward.22} parent=0 // pred_fallthru
    _

// kernel: forward.23
$region0: #{forward.23}
  #allocation0 [shape = 'u32[]', space=smem, size = 0x4, offset = 0x4, fixed_abs, tag = 'smem constant byte address 0x4 - core index']
  #allocation1 [shape = 'u32[72,128]{1,0:T(1,128)}', space=vmem, size = 0x9000, scoped, tag = 'internal scratch']
  %s0 = inlined_call_operand.vmem [shape: bf16[8,128], index: 0, kind: input, shape index: {}]
  %s1 = inlined_call_operand.vmem [shape: bf16[128,128], index: 1, kind: input, shape index: {}]
  %s2 = inlined_call_operand.vmem [shape: f32[1,128], index: 2, kind: input, shape index: {}]
  %s3 = inlined_call_operand.vmem [shape: f32[8,128], index: 3, kind: input, shape index: {}]
  %s4 = inlined_call_operand.vmem [shape: f32[8,128], index: 4, kind: output, shape index: {}]
  %s5 = sld [smem:[#allocation0]]
  $region26: #{forward.23} parent=0
    _
  %s7 = ssub.s32 1, %s5
  %s8 = scalar_select 0, %s7, %s5
  // Predicated region
  $region2: #{forward.23} parent=0 // pred_check
    _
  $region3: #{forward.23} parent=0 // pred_check_branch
    %10 = sbr.rel (0) target = $region5
  $region4: #{forward.23} parent=0 // pred_region
    _
  $region5: #{forward.23} parent=0 // pred_fallthru
    _
  // Predicated region
  $region6: #{forward.23} parent=0 // pred_check
    _
  $region7: #{forward.23} parent=0 // pred_check_branch
    %12 = sbr.rel (0) target = $region9
  $region8: #{forward.23} parent=0 // pred_region
    _
  $region9: #{forward.23} parent=0 // pred_fallthru
    _
  // Predicated region
  $region10: #{forward.23} parent=0 // pred_check
    _
  $region11: #{forward.23} parent=0 // pred_check_branch
    %14 = sbr.rel (0) target = $region13
  $region12: #{forward.23} parent=0 // pred_region
    _
  $region13: #{forward.23} parent=0 // pred_fallthru
    _
  // Predicated region
  $region14: #{forward.23} parent=0 // pred_check
    _
  $region15: #{forward.23} parent=0 // pred_check_branch
    %16 = sbr.rel (0) target = $region17
  $region16: #{forward.23} parent=0 // pred_region
    _
  $region17: #{forward.23} parent=0 // pred_fallthru
    _
  %v17 = vld [vmem:[%s0] sm:$0xf]
  %v18 = vld [vmem:[%s1] sm:$0xf]
  %v19 = vld [vmem:[%s1 + $0x4] sm:$0xf]
  %v20 = vld [vmem:[%s1 + $0x8] sm:$0xf]
  %v21 = vld [vmem:[%s1 + $0xc] sm:$0xf]
  %v22 = vld [vmem:[%s1 + $0x10] sm:$0xf]
  %v23 = vld [vmem:[%s1 + $0x14] sm:$0xf]
  %v24 = vld [vmem:[%s1 + $0x18] sm:$0xf]
  %v25 = vld [vmem:[%s1 + $0x1c] sm:$0xf]
  %v26 = vld [vmem:[%s1 + $0x20] sm:$0xf]
  %v27 = vld [vmem:[%s1 + $0x24] sm:$0xf]
  %v28 = vld [vmem:[%s1 + $0x28] sm:$0xf]
  %v29 = vld [vmem:[%s1 + $0x2c] sm:$0xf]
  %v30 = vld [vmem:[%s1 + $0x30] sm:$0xf]
  %v31 = vld [vmem:[%s1 + $0x34] sm:$0xf]
  %v32 = vld [vmem:[%s1 + $0x38] sm:$0xf]
  %v33 = vld [vmem:[%s1 + $0x3c] sm:$0xf]
  %v34 = vld [vmem:[%s2] sm:$0x1]
  %v36 = vperm.slane %v34, 0
  %v54 = vunpack.c.l.b16 %v18
  %v55 = vunpack.c.l.b16 %v19
  %v56 = vunpack.c.l.b16 %v20
  %v57 = vunpack.c.l.b16 %v21
  %v58 = vunpack.c.l.b16 %v22
  %v59 = vunpack.c.l.b16 %v23
  %v60 = vunpack.c.l.b16 %v24
  %v61 = vunpack.c.l.b16 %v25
  %v62 = vunpack.c.l.b16 %v26
  %v63 = vunpack.c.l.b16 %v27
  %v64 = vunpack.c.l.b16 %v28
  %v65 = vunpack.c.l.b16 %v29
  %v66 = vunpack.c.l.b16 %v30
  %v67 = vunpack.c.l.b16 %v31
  %v68 = vunpack.c.l.b16 %v32
  %v69 = vunpack.c.l.b16 %v33
  %v70 = vpack.c.b16 %v55, %v54
  %v71 = vpack.c.b16 %v57, %v56
  %v72 = vpack.c.b16 %v59, %v58
  %v73 = vpack.c.b16 %v61, %v60
  %v74 = vpack.c.b16 %v63, %v62
  %v75 = vpack.c.b16 %v65, %v64
  %v76 = vpack.c.b16 %v67, %v66
  %v77 = vpack.c.b16 %v69, %v68
  %86 = vmatpush.bf16.msra.mxu0 %v77
  %87 = vmatpush.bf16.msra.mxu0 %v76
  %88 = vmatpush.bf16.msra.mxu0 %v75
  %89 = vmatpush.bf16.msra.mxu0 %v74
  %90 = vmatpush.bf16.msra.mxu0 %v73
  %91 = vmatpush.bf16.msra.mxu0 %v72
  %92 = vmatpush.bf16.msra.mxu0 %v71
  %93 = vmatpush.bf16.msra.mxu0 %v70
  %94 = vmatmul.bf16.gmra.mxu0 %v17
  %v95 = vpop.f32.mrf.mxu0
  %v96 = vadd.f32 %v36, %v95
  %v97 = vpop.f32.mrf.mxu0
  %98 = vdwg.mxu0
  %v99 = vxor.u32 %v96, 2147483648
  %v100 = vmul.f32 %v99, 1.442695
  %v101 = vpow.pop %v100
  %v102 = vadd.f32 %v101, 1.0
  %v103 = vrcp.pop %v102
  %v104 = vmul.f32 %v102, %v103
  %v105 = vsub.f32 1.0, %v104
  %v106 = vmul.f32 %v103, %v105
  %v107 = vadd.f32 %v103, %v106
  %vm108 = vweird.f32 %v102
  %vm109 = vweird.f32 %v103
  %vm110 = vmor %vm108, %vm109
  %v111 = vsel %vm110, %v103, %v107
  %v112 = vand.u32 2147483647, %v102
  %vm113 = vcmp.eq.f32.partialorder %v112, 8.507059e+37
  %v114 = vand.u32 %v102, 2147483648
  %v115 = vor.u32 1.1754944e-38, %v114
  %v116 = vsel %vm113, %v115, %v111
  %v117 = vmul.f32 1.0, %v116
  %v118 = vld [vmem:[%s3] sm:$0x1]
  %v119 = vld [vmem:[%s3 + $0x1] sm:$0x1]
  %v120 = vld [vmem:[%s3 + $0x2] sm:$0x1]
  %v121 = vld [vmem:[%s3 + $0x3] sm:$0x1]
  %v122 = vperm.slane %v118, 0
  %v123 = vmul.f32 %v122, 0.0
  %v124 = vperm.slane %v119, 0
  %v125 = vmul.f32 %v124, 0.0
  %v126 = vadd.f32 %v123, %v125
  %v127 = vmul.f32 %v117, 2.0
  %v128 = vsub.f32 %v127, 0.5
  %v129 = vadd.f32 %v128, %v126
  %v130 = vmul.f32 %v129, 32.0
  %v131 = vmul.f32 %v127, %v127
  %v132 = vperm.slane %v121, 0
  %v133 = vmul.f32 %v131, %v132
  %v134 = vadd.f32 %v118, %v119
  %v135 = vperm.slane %v134, 0
  %v136 = vmul.f32 %v135, %v130
  %v137 = vperm.slane %v120, 0
  %v138 = vmul.f32 %v137, %v133
  %v139 = vadd.f32 %v136, %v138
  %v140 = vsub.f32 1.0, %v134
  %v141 = vsub.f32 %v140, %v120
  %v142 = vperm.slane %v141, 0
  %v143 = vmul.f32 %v142, %v117
  %v144 = vadd.f32 %v139, %v143
  %145 = vst [vmem:[%s4] sm:$0xff] %v144
  // Predicated region
  $region18: #{forward.23} parent=0 // pred_check
    _
  $region19: #{forward.23} parent=0 // pred_check_branch
    %147 = sbr.rel (0) target = $region21
  $region20: #{forward.23} parent=0 // pred_region
    _
  $region21: #{forward.23} parent=0 // pred_fallthru
    _
  // Predicated region
  $region22: #{forward.23} parent=0 // pred_check
    _
  $region23: #{forward.23} parent=0 // pred_check_branch
    %149 = sbr.rel (0) target = $region25
  $region24: #{forward.23} parent=0 // pred_region
    _
  $region25: #{forward.23} parent=0 // pred_fallthru
    _

// kernel: forward.21
$region0: #{forward.21}
  #allocation0 [shape = 'u32[]', space=smem, size = 0x4, offset = 0x4, fixed_abs, tag = 'smem constant byte address 0x4 - core index']
  #allocation1 [shape = 'u32[72,128]{1,0:T(1,128)}', space=vmem, size = 0x9000, scoped, tag = 'internal scratch']
  %s0 = inlined_call_operand.vmem [shape: bf16[32,128], index: 0, kind: input, shape index: {}]
  %s1 = inlined_call_operand.vmem [shape: bf16[128,128], index: 1, kind: input, shape index: {}]
  %s2 = inlined_call_operand.vmem [shape: f32[1,128], index: 2, kind: input, shape index: {}]
  %s3 = inlined_call_operand.vmem [shape: f32[8,128], index: 3, kind: input, shape index: {}]
  %s4 = inlined_call_operand.vmem [shape: f32[32,128], index: 4, kind: output, shape index: {}]
  %s5 = sld [smem:[#allocation0]]
  $region26: #{forward.21} parent=0
    _
  %s7 = ssub.s32 1, %s5
  %s8 = scalar_select 0, %s7, %s5
  // Predicated region
  $region2: #{forward.21} parent=0 // pred_check
    _
  $region3: #{forward.21} parent=0 // pred_check_branch
    %10 = sbr.rel (0) target = $region5
  $region4: #{forward.21} parent=0 // pred_region
    _
  $region5: #{forward.21} parent=0 // pred_fallthru
    _
  // Predicated region
  $region6: #{forward.21} parent=0 // pred_check
    _
  $region7: #{forward.21} parent=0 // pred_check_branch
    %12 = sbr.rel (0) target = $region9
  $region8: #{forward.21} parent=0 // pred_region
    _
  $region9: #{forward.21} parent=0 // pred_fallthru
    _
  // Predicated region
  $region10: #{forward.21} parent=0 // pred_check
    _
  $region11: #{forward.21} parent=0 // pred_check_branch
    %14 = sbr.rel (0) target = $region13
  $region12: #{forward.21} parent=0 // pred_region
    _
  $region13: #{forward.21} parent=0 // pred_fallthru
    _
  // Predicated region
  $region14: #{forward.21} parent=0 // pred_check
    _
  $region15: #{forward.21} parent=0 // pred_check_branch
    %16 = sbr.rel (0) target = $region17
  $region16: #{forward.21} parent=0 // pred_region
    _
  $region17: #{forward.21} parent=0 // pred_fallthru
    _
  %v17 = vld [vmem:[%s0] sm:$0xf]
  %v18 = vld [vmem:[%s0 + $0x4] sm:$0xf]
  %v19 = vld [vmem:[%s0 + $0x8] sm:$0xf]
  %v20 = vld [vmem:[%s0 + $0xc] sm:$0xf]
  %v21 = vld [vmem:[%s1] sm:$0xf]
  %v22 = vld [vmem:[%s1 + $0x4] sm:$0xf]
  %v23 = vld [vmem:[%s1 + $0x8] sm:$0xf]
  %v24 = vld [vmem:[%s1 + $0xc] sm:$0xf]
  %v25 = vld [vmem:[%s1 + $0x10] sm:$0xf]
  %v26 = vld [vmem:[%s1 + $0x14] sm:$0xf]
  %v27 = vld [vmem:[%s1 + $0x18] sm:$0xf]
  %v28 = vld [vmem:[%s1 + $0x1c] sm:$0xf]
  %v29 = vld [vmem:[%s1 + $0x20] sm:$0xf]
  %v30 = vld [vmem:[%s1 + $0x24] sm:$0xf]
  %v31 = vld [vmem:[%s1 + $0x28] sm:$0xf]
  %v32 = vld [vmem:[%s1 + $0x2c] sm:$0xf]
  %v33 = vld [vmem:[%s1 + $0x30] sm:$0xf]
  %v34 = vld [vmem:[%s1 + $0x34] sm:$0xf]
  %v35 = vld [vmem:[%s1 + $0x38] sm:$0xf]
  %v36 = vld [vmem:[%s1 + $0x3c] sm:$0xf]
  %v37 = vld [vmem:[%s2] sm:$0x1]
  %v39 = vperm.slane %v37, 0
  %v45 = vunpack.c.l.b16 %v17
  %v46 = vunpack.c.l.b16 %v18
  %v47 = vunpack.c.l.b16 %v19
  %v48 = vunpack.c.l.b16 %v20
  %v49 = vpack.c.b16 %v46, %v45
  %v50 = vpack.c.b16 %v48, %v47
  %v69 = vunpack.c.l.b16 %v21
  %v70 = vunpack.c.l.b16 %v22
  %v71 = vunpack.c.l.b16 %v23
  %v72 = vunpack.c.l.b16 %v24
  %v73 = vunpack.c.l.b16 %v25
  %v74 = vunpack.c.l.b16 %v26
  %v75 = vunpack.c.l.b16 %v27
  %v76 = vunpack.c.l.b16 %v28
  %v77 = vunpack.c.l.b16 %v29
  %v78 = vunpack.c.l.b16 %v30
  %v79 = vunpack.c.l.b16 %v31
  %v80 = vunpack.c.l.b16 %v32
  %v81 = vunpack.c.l.b16 %v33
  %v82 = vunpack.c.l.b16 %v34
  %v83 = vunpack.c.l.b16 %v35
  %v84 = vunpack.c.l.b16 %v36
  %v85 = vpack.c.b16 %v70, %v69
  %v86 = vpack.c.b16 %v72, %v71
  %v87 = vpack.c.b16 %v74, %v73
  %v88 = vpack.c.b16 %v76, %v75
  %v89 = vpack.c.b16 %v78, %v77
  %v90 = vpack.c.b16 %v80, %v79
  %v91 = vpack.c.b16 %v82, %v81
  %v92 = vpack.c.b16 %v84, %v83
  %101 = vmatpush.bf16.msra.mxu0 %v92
  %102 = vmatpush.bf16.msra.mxu0 %v91
  %103 = vmatpush.bf16.msra.mxu0 %v90
  %104 = vmatpush.bf16.msra.mxu0 %v89
  %105 = vmatpush.bf16.msra.mxu0 %v88
  %106 = vmatpush.bf16.msra.mxu0 %v87
  %107 = vmatpush.bf16.msra.mxu0 %v86
  %108 = vmatpush.bf16.msra.mxu0 %v85
  %109 = vmatmul.bf16.gmra.mxu0 %v49
  %v110 = vpop.f32.mrf.mxu0
  %v111 = vadd.f32 %v39, %v110
  %v112 = vpop.f32.mrf.mxu0
  %v113 = vadd.f32 %v39, %v112
  %114 = vmatmul.bf16.gmra.mxu0 %v50
  %v115 = vpop.f32.mrf.mxu0
  %v116 = vadd.f32 %v39, %v115
  %v117 = vpop.f32.mrf.mxu0
  %v118 = vadd.f32 %v39, %v117
  %119 = vdwg.mxu0
  %v120 = vxor.u32 %v111, 2147483648
  %v121 = vxor.u32 %v113, 2147483648
  %v122 = vxor.u32 %v116, 2147483648
  %v123 = vxor.u32 %v118, 2147483648
  %v124 = vmul.f32 %v120, 1.442695
  %v125 = vpow.pop %v124
  %v126 = vmul.f32 %v121, 1.442695
  %v127 = vpow.pop %v126
  %v128 = vmul.f32 %v122, 1.442695
  %v129 = vpow.pop %v128
  %v130 = vmul.f32 %v123, 1.442695
  %v131 = vpow.pop %v130
  %v132 = vadd.f32 %v125, 1.0
  %v133 = vadd.f32 %v127, 1.0
  %v134 = vadd.f32 %v129, 1.0
  %v135 = vadd.f32 %v131, 1.0
  %v136 = vrcp.pop %v132
  %v137 = vmul.f32 %v132, %v136
  %v138 = vsub.f32 1.0, %v137
  %v139 = vmul.f32 %v136, %v138
  %v140 = vadd.f32 %v136, %v139
  %vm141 = vweird.f32 %v132
  %vm142 = vweird.f32 %v136
  %vm143 = vmor %vm141, %vm142
  %v144 = vsel %vm143, %v136, %v140
  %v145 = vand.u32 2147483647, %v132
  %vm146 = vcmp.eq.f32.partialorder %v145, 8.507059e+37
  %v147 = vand.u32 %v132, 2147483648
  %v148 = vor.u32 1.1754944e-38, %v147
  %v149 = vsel %vm146, %v148, %v144
  %v150 = vmul.f32 1.0, %v149
  %v151 = vrcp.pop %v133
  %v152 = vmul.f32 %v133, %v151
  %v153 = vsub.f32 1.0, %v152
  %v154 = vmul.f32 %v151, %v153
  %v155 = vadd.f32 %v151, %v154
  %vm156 = vweird.f32 %v133
  %vm157 = vweird.f32 %v151
  %vm158 = vmor %vm156, %vm157
  %v159 = vsel %vm158, %v151, %v155
  %v160 = vand.u32 2147483647, %v133
  %vm161 = vcmp.eq.f32.partialorder %v160, 8.507059e+37
  %v162 = vand.u32 %v133, 2147483648
  %v163 = vor.u32 1.1754944e-38, %v162
  %v164 = vsel %vm161, %v163, %v159
  %v165 = vmul.f32 1.0, %v164
  %v166 = vrcp.pop %v134
  %v167 = vmul.f32 %v134, %v166
  %v168 = vsub.f32 1.0, %v167
  %v169 = vmul.f32 %v166, %v168
  %v170 = vadd.f32 %v166, %v169
  %vm171 = vweird.f32 %v134
  %vm172 = vweird.f32 %v166
  %vm173 = vmor %vm171, %vm172
  %v174 = vsel %vm173, %v166, %v170
  %v175 = vand.u32 2147483647, %v134
  %vm176 = vcmp.eq.f32.partialorder %v175, 8.507059e+37
  %v177 = vand.u32 %v134, 2147483648
  %v178 = vor.u32 1.1754944e-38, %v177
  %v179 = vsel %vm176, %v178, %v174
  %v180 = vmul.f32 1.0, %v179
  %v181 = vrcp.pop %v135
  %v182 = vmul.f32 %v135, %v181
  %v183 = vsub.f32 1.0, %v182
  %v184 = vmul.f32 %v181, %v183
  %v185 = vadd.f32 %v181, %v184
  %vm186 = vweird.f32 %v135
  %vm187 = vweird.f32 %v181
  %vm188 = vmor %vm186, %vm187
  %v189 = vsel %vm188, %v181, %v185
  %v190 = vand.u32 2147483647, %v135
  %vm191 = vcmp.eq.f32.partialorder %v190, 8.507059e+37
  %v192 = vand.u32 %v135, 2147483648
  %v193 = vor.u32 1.1754944e-38, %v192
  %v194 = vsel %vm191, %v193, %v189
  %v195 = vmul.f32 1.0, %v194
  %v196 = vlaneseq
  %v197 = vshrl.u32 %v196, 7
  %v198 = vadd.s32 %v197, 8
  %v199 = vadd.s32 %v197, 16
  %v200 = vadd.s32 %v197, 24
  %s201 = smul.u32 0, 32
  %v202 = vstv %s201
  %v203 = vadd.s32 %v197, %v202
  %v204 = vadd.s32 %v198, %v202
  %v205 = vadd.s32 %v199, %v202
  %v206 = vadd.s32 %v200, %v202
  %v207 = vand.u32 %v203, 15
  %v208 = vand.u32 %v204, 15
  %v209 = vand.u32 %v205, 15
  %v210 = vand.u32 %v206, 15
  %v211 = vand.u32 %v207, 3
  %v212 = vand.u32 %v208, 3
  %v213 = vand.u32 %v209, 3
  %v214 = vand.u32 %v210, 3
  %v215 = vcvt.s32.f32 %v211
  %v216 = vcvt.s32.f32 %v212
  %v217 = vcvt.s32.f32 %v213
  %v218 = vcvt.s32.f32 %v214
  %v219 = vshra.s32 %v207, 2
  %v220 = vshra.s32 %v208, 2
  %v221 = vshra.s32 %v209, 2
  %v222 = vshra.s32 %v210, 2
  %v223 = vcvt.s32.f32 %v219
  %v224 = vcvt.s32.f32 %v220
  %v225 = vcvt.s32.f32 %v221
  %v226 = vcvt.s32.f32 %v222
  %v227 = vld [vmem:[%s3] sm:$0x1]
  %v228 = vld [vmem:[%s3 + $0x1] sm:$0x1]
  %v229 = vld [vmem:[%s3 + $0x2] sm:$0x1]
  %v230 = vld [vmem:[%s3 + $0x3] sm:$0x1]
  %v231 = vperm.slane %v227, 0
  %v232 = vmul.f32 %v215, %v231
  %v233 = vmul.f32 %v216, %v231
  %v234 = vmul.f32 %v217, %v231
  %v235 = vmul.f32 %v218, %v231
  %v236 = vperm.slane %v228, 0
  %v237 = vmul.f32 %v223, %v236
  %v238 = vmul.f32 %v224, %v236
  %v239 = vmul.f32 %v225, %v236
  %v240 = vmul.f32 %v226, %v236
  %v241 = vadd.f32 %v232, %v237
  %v242 = vadd.f32 %v233, %v238
  %v243 = vadd.f32 %v234, %v239
  %v244 = vadd.f32 %v235, %v240
  %v245 = vmul.f32 %v150, 2.0
  %v246 = vmul.f32 %v165, 2.0
  %v247 = vmul.f32 %v180, 2.0
  %v248 = vmul.f32 %v195, 2.0
  %v249 = vsub.f32 %v245, 0.5
  %v250 = vsub.f32 %v246, 0.5
  %v251 = vsub.f32 %v247, 0.5
  %v252 = vsub.f32 %v248, 0.5
  %v253 = vadd.f32 %v249, %v241
  %v254 = vadd.f32 %v250, %v242
  %v255 = vadd.f32 %v251, %v243
  %v256 = vadd.f32 %v252, %v244
  %v257 = vmul.f32 %v253, 8.0
  %v258 = vmul.f32 %v254, 8.0
  %v259 = vmul.f32 %v255, 8.0
  %v260 = vmul.f32 %v256, 8.0
  %v261 = vmul.f32 %v245, %v245
  %v262 = vmul.f32 %v246, %v246
  %v263 = vmul.f32 %v247, %v247
  %v264 = vmul.f32 %v248, %v248
  %v265 = vperm.slane %v230, 0
  %v266 = vmul.f32 %v261, %v265
  %v267 = vmul.f32 %v262, %v265
  %v268 = vmul.f32 %v263, %v265
  %v269 = vmul.f32 %v264, %v265
  %v270 = vadd.f32 %v227, %v228
  %v271 = vperm.slane %v270, 0
  %v272 = vmul.f32 %v271, %v257
  %v273 = vmul.f32 %v271, %v258
  %v274 = vmul.f32 %v271, %v259
  %v275 = vmul.f32 %v271, %v260
  %v276 = vperm.slane %v229, 0
  %v277 = vmul.f32 %v276, %v266
  %v278 = vmul.f32 %v276, %v267
  %v279 = vmul.f32 %v276, %v268
  %v280 = vmul.f32 %v276, %v269
  %v281 = vadd.f32 %v272, %v277
  %v282 = vadd.f32 %v273, %v278
  %v283 = vadd.f32 %v274, %v279
  %v284 = vadd.f32 %v275, %v280
  %v285 = vsub.f32 1.0, %v270
  %v286 = vsub.f32 %v285, %v229
  %v287 = vperm.slane %v286, 0
  %v288 = vmul.f32 %v287, %v150
  %v289 = vmul.f32 %v287, %v165
  %v290 = vmul.f32 %v287, %v180
  %v291 = vmul.f32 %v287, %v195
  %v292 = vadd.f32 %v281, %v288
  %v293 = vadd.f32 %v282, %v289
  %v294 = vadd.f32 %v283, %v290
  %v295 = vadd.f32 %v284, %v291
  %296 = vst [vmem:[%s4] sm:$0xff] %v292
  %297 = vst [vmem:[%s4 + $0x8] sm:$0xff] %v293
  %298 = vst [vmem:[%s4 + $0x10] sm:$0xff] %v294
  %299 = vst [vmem:[%s4 + $0x18] sm:$0xff] %v295
  // Predicated region
  $region18: #{forward.21} parent=0 // pred_check
    _
  $region19: #{forward.21} parent=0 // pred_check_branch
    %301 = sbr.rel (0) target = $region21
  $region20: #{forward.21} parent=0 // pred_region
    _
  $region21: #{forward.21} parent=0 // pred_fallthru
    _
  // Predicated region
  $region22: #{forward.21} parent=0 // pred_check
    _
  $region23: #{forward.21} parent=0 // pred_check_branch
    %303 = sbr.rel (0) target = $region25
  $region24: #{forward.21} parent=0 // pred_region
    _
  $region25: #{forward.21} parent=0 // pred_fallthru
    _

// kernel: forward.20
$region0: #{forward.20}
  #allocation0 [shape = 'u32[]', space=smem, size = 0x4, offset = 0x4, fixed_abs, tag = 'smem constant byte address 0x4 - core index']
  #allocation1 [shape = 'u32[72,128]{1,0:T(1,128)}', space=vmem, size = 0x9000, scoped, tag = 'internal scratch']
  %s0 = inlined_call_operand.vmem [shape: bf16[8,2304], index: 0, kind: input, shape index: {}]
  %s1 = inlined_call_operand.vmem [shape: bf16[2304,128], index: 1, kind: input, shape index: {}]
  %s2 = inlined_call_operand.vmem [shape: f32[1,128], index: 2, kind: input, shape index: {}]
  %s3 = inlined_call_operand.vmem [shape: bf16[8,128], index: 3, kind: output, shape index: {}]
  %s4 = sld [smem:[#allocation0]]
  $region22: #{forward.20} parent=0
    _
  %s6 = ssub.s32 1, %s4
  %s7 = scalar_select 0, %s6, %s4
  // Predicated region
  $region2: #{forward.20} parent=0 // pred_check
    _
  $region3: #{forward.20} parent=0 // pred_check_branch
    %9 = sbr.rel (0) target = $region5
  $region4: #{forward.20} parent=0 // pred_region
    _
  $region5: #{forward.20} parent=0 // pred_fallthru
    _
  // Predicated region
  $region6: #{forward.20} parent=0 // pred_check
    _
  $region7: #{forward.20} parent=0 // pred_check_branch
    %11 = sbr.rel (0) target = $region9
  $region8: #{forward.20} parent=0 // pred_region
    _
  $region9: #{forward.20} parent=0 // pred_fallthru
    _
  // Predicated region
  $region10: #{forward.20} parent=0 // pred_check
    _
  $region11: #{forward.20} parent=0 // pred_check_branch
    %13 = sbr.rel (0) target = $region13
  $region12: #{forward.20} parent=0 // pred_region
    _
  $region13: #{forward.20} parent=0 // pred_fallthru
    _
  %v14 = vld [vmem:[%s0] sm:$0xff]
  %v15 = vld [vmem:[%s0 + $0x8] sm:$0xff]
  %v16 = vld [vmem:[%s0 + $0x10] sm:$0xff]
  %v17 = vld [vmem:[%s0 + $0x18] sm:$0xff]
  %v18 = vld [vmem:[%s0 + $0x20] sm:$0xff]
  %v19 = vld [vmem:[%s0 + $0x28] sm:$0xff]
  %v20 = vld [vmem:[%s0 + $0x30] sm:$0xff]
  %v21 = vld [vmem:[%s0 + $0x38] sm:$0xff]
  %v22 = vld [vmem:[%s0 + $0x40] sm:$0xff]
  %v23 = vld [vmem:[%s1] sm:$0xf]
  %v24 = vld [vmem:[%s1 + $0x4] sm:$0xf]
  %v25 = vld [vmem:[%s1 + $0x8] sm:$0xf]
  %v26 = vld [vmem:[%s1 + $0xc] sm:$0xf]
  %v27 = vld [vmem:[%s1 + $0x10] sm:$0xf]
  %v28 = vld [vmem:[%s1 + $0x14] sm:$0xf]
  %v29 = vld [vmem:[%s1 + $0x18] sm:$0xf]
  %v30 = vld [vmem:[%s1 + $0x1c] sm:$0xf]
  %v31 = vld [vmem:[%s1 + $0x20] sm:$0xf]
  %v32 = vld [vmem:[%s1 + $0x24] sm:$0xf]
  %v33 = vld [vmem:[%s1 + $0x28] sm:$0xf]
  %v34 = vld [vmem:[%s1 + $0x2c] sm:$0xf]
  %v35 = vld [vmem:[%s1 + $0x30] sm:$0xf]
  %v36 = vld [vmem:[%s1 + $0x34] sm:$0xf]
  %v37 = vld [vmem:[%s1 + $0x38] sm:$0xf]
  %v38 = vld [vmem:[%s1 + $0x3c] sm:$0xf]
  %v39 = vld [vmem:[%s1 + $0x40] sm:$0xf]
  %v40 = vld [vmem:[%s1 + $0x44] sm:$0xf]
  %v41 = vld [vmem:[%s1 + $0x48] sm:$0xf]
  %v42 = vld [vmem:[%s1 + $0x4c] sm:$0xf]
  %v43 = vld [vmem:[%s1 + $0x50] sm:$0xf]
  %v44 = vld [vmem:[%s1 + $0x54] sm:$0xf]
  %v45 = vld [vmem:[%s1 + $0x58] sm:$0xf]
  %v46 = vld [vmem:[%s1 + $0x5c] sm:$0xf]
  %v47 = vld [vmem:[%s1 + $0x60] sm:$0xf]
  %v48 = vld [vmem:[%s1 + $0x64] sm:$0xf]
  %v49 = vld [vmem:[%s1 + $0x68] sm:$0xf]
  %v50 = vld [vmem:[%s1 + $0x6c] sm:$0xf]
  %v51 = vld [vmem:[%s1 + $0x70] sm:$0xf]
  %v52 = vld [vmem:[%s1 + $0x74] sm:$0xf]
  %v53 = vld [vmem:[%s1 + $0x78] sm:$0xf]
  %v54 = vld [vmem:[%s1 + $0x7c] sm:$0xf]
  %v55 = vld [vmem:[%s1 + $0x80] sm:$0xf]
  %v56 = vld [vmem:[%s1 + $0x84] sm:$0xf]
  %v57 = vld [vmem:[%s1 + $0x88] sm:$0xf]
  %v58 = vld [vmem:[%s1 + $0x8c] sm:$0xf]
  %v59 = vld [vmem:[%s1 + $0x90] sm:$0xf]
  %v60 = vld [vmem:[%s1 + $0x94] sm:$0xf]
  %v61 = vld [vmem:[%s1 + $0x98] sm:$0xf]
  %v62 = vld [vmem:[%s1 + $0x9c] sm:$0xf]
  %v63 = vld [vmem:[%s1 + $0xa0] sm:$0xf]
  %v64 = vld [vmem:[%s1 + $0xa4] sm:$0xf]
  %v65 = vld [vmem:[%s1 + $0xa8] sm:$0xf]
  %v66 = vld [vmem:[%s1 + $0xac] sm:$0xf]
  %v67 = vld [vmem:[%s1 + $0xb0] sm:$0xf]
  %v68 = vld [vmem:[%s1 + $0xb4] sm:$0xf]
  %v69 = vld [vmem:[%s1 + $0xb8] sm:$0xf]
  %v70 = vld [vmem:[%s1 + $0xbc] sm:$0xf]
  %v71 = vld [vmem:[%s1 + $0xc0] sm:$0xf]
  %v72 = vld [vmem:[%s1 + $0xc4] sm:$0xf]
  %v73 = vld [vmem:[%s1 + $0xc8] sm:$0xf]
  %v74 = vld [vmem:[%s1 + $0xcc] sm:$0xf]
  %v75 = vld [vmem:[%s1 + $0xd0] sm:$0xf]
  %v76 = vld [vmem:[%s1 + $0xd4] sm:$0xf]
  %v77 = vld [vmem:[%s1 + $0xd8] sm:$0xf]
  %v78 = vld [vmem:[%s1 + $0xdc] sm:$0xf]
  %v79 = vld [vmem:[%s1 + $0xe0] sm:$0xf]
  %v80 = vld [vmem:[%s1 + $0xe4] sm:$0xf]
  %v81 = vld [vmem:[%s1 + $0xe8] sm:$0xf]
  %v82 = vld [vmem:[%s1 + $0xec] sm:$0xf]
  %v83 = vld [vmem:[%s1 + $0xf0] sm:$0xf]
  %v84 = vld [vmem:[%s1 + $0xf4] sm:$0xf]
  %v85 = vld [vmem:[%s1 + $0xf8] sm:$0xf]
  %v86 = vld [vmem:[%s1 + $0xfc] sm:$0xf]
  %v87 = vld [vmem:[%s1 + $0x100] sm:$0xf]
  %v88 = vld [vmem:[%s1 + $0x104] sm:$0xf]
  %v89 = vld [vmem:[%s1 + $0x108] sm:$0xf]
  %v90 = vld [vmem:[%s1 + $0x10c] sm:$0xf]
  %v91 = vld [vmem:[%s1 + $0x110] sm:$0xf]
  %v92 = vld [vmem:[%s1 + $0x114] sm:$0xf]
  %v93 = vld [vmem:[%s1 + $0x118] sm:$0xf]
  %v94 = vld [vmem:[%s1 + $0x11c] sm:$0xf]
  %v95 = vld [vmem:[%s1 + $0x120] sm:$0xf]
  %v96 = vld [vmem:[%s1 + $0x124] sm:$0xf]
  %v97 = vld [vmem:[%s1 + $0x128] sm:$0xf]
  %v98 = vld [vmem:[%s1 + $0x12c] sm:$0xf]
  %v99 = vld [vmem:[%s1 + $0x130] sm:$0xf]
  %v100 = vld [vmem:[%s1 + $0x134] sm:$0xf]
  %v101 = vld [vmem:[%s1 + $0x138] sm:$0xf]
  %v102 = vld [vmem:[%s1 + $0x13c] sm:$0xf]
  %v103 = vld [vmem:[%s1 + $0x140] sm:$0xf]
  %v104 = vld [vmem:[%s1 + $0x144] sm:$0xf]
  %v105 = vld [vmem:[%s1 + $0x148] sm:$0xf]
  %v106 = vld [vmem:[%s1 + $0x14c] sm:$0xf]
  %v107 = vld [vmem:[%s1 + $0x150] sm:$0xf]
  %v108 = vld [vmem:[%s1 + $0x154] sm:$0xf]
  %v109 = vld [vmem:[%s1 + $0x158] sm:$0xf]
  %v110 = vld [vmem:[%s1 + $0x15c] sm:$0xf]
  %v111 = vld [vmem:[%s1 + $0x160] sm:$0xf]
  %v112 = vld [vmem:[%s1 + $0x164] sm:$0xf]
  %v113 = vld [vmem:[%s1 + $0x168] sm:$0xf]
  %v114 = vld [vmem:[%s1 + $0x16c] sm:$0xf]
  %v115 = vld [vmem:[%s1 + $0x170] sm:$0xf]
  %v116 = vld [vmem:[%s1 + $0x174] sm:$0xf]
  %v117 = vld [vmem:[%s1 + $0x178] sm:$0xf]
  %v118 = vld [vmem:[%s1 + $0x17c] sm:$0xf]
  %v119 = vld [vmem:[%s1 + $0x180] sm:$0xf]
  %v120 = vld [vmem:[%s1 + $0x184] sm:$0xf]
  %v121 = vld [vmem:[%s1 + $0x188] sm:$0xf]
  %v122 = vld [vmem:[%s1 + $0x18c] sm:$0xf]
  %v123 = vld [vmem:[%s1 + $0x190] sm:$0xf]
  %v124 = vld [vmem:[%s1 + $0x194] sm:$0xf]
  %v125 = vld [vmem:[%s1 + $0x198] sm:$0xf]
  %v126 = vld [vmem:[%s1 + $0x19c] sm:$0xf]
  %v127 = vld [vmem:[%s1 + $0x1a0] sm:$0xf]
  %v128 = vld [vmem:[%s1 + $0x1a4] sm:$0xf]
  %v129 = vld [vmem:[%s1 + $0x1a8] sm:$0xf]
  %v130 = vld [vmem:[%s1 + $0x1ac] sm:$0xf]
  %v131 = vld [vmem:[%s1 + $0x1b0] sm:$0xf]
  %v132 = vld [vmem:[%s1 + $0x1b4] sm:$0xf]
  %v133 = vld [vmem:[%s1 + $0x1b8] sm:$0xf]
  %v134 = vld [vmem:[%s1 + $0x1bc] sm:$0xf]
  %v135 = vld [vmem:[%s1 + $0x1c0] sm:$0xf]
  %v136 = vld [vmem:[%s1 + $0x1c4] sm:$0xf]
  %v137 = vld [vmem:[%s1 + $0x1c8] sm:$0xf]
  %v138 = vld [vmem:[%s1 + $0x1cc] sm:$0xf]
  %v139 = vld [vmem:[%s1 + $0x1d0] sm:$0xf]
  %v140 = vld [vmem:[%s1 + $0x1d4] sm:$0xf]
  %v141 = vld [vmem:[%s1 + $0x1d8] sm:$0xf]
  %v142 = vld [vmem:[%s1 + $0x1dc] sm:$0xf]
  %v143 = vld [vmem:[%s1 + $0x1e0] sm:$0xf]
  %v144 = vld [vmem:[%s1 + $0x1e4] sm:$0xf]
  %v145 = vld [vmem:[%s1 + $0x1e8] sm:$0xf]
  %v146 = vld [vmem:[%s1 + $0x1ec] sm:$0xf]
  %v147 = vld [vmem:[%s1 + $0x1f0] sm:$0xf]
  %v148 = vld [vmem:[%s1 + $0x1f4] sm:$0xf]
  %v149 = vld [vmem:[%s1 + $0x1f8] sm:$0xf]
  %v150 = vld [vmem:[%s1 + $0x1fc] sm:$0xf]
  %v151 = vld [vmem:[%s1 + $0x200] sm:$0xf]
  %v152 = vld [vmem:[%s1 + $0x204] sm:$0xf]
  %v153 = vld [vmem:[%s1 + $0x208] sm:$0xf]
  %v154 = vld [vmem:[%s1 + $0x20c] sm:$0xf]
  %v155 = vld [vmem:[%s1 + $0x210] sm:$0xf]
  %v156 = vld [vmem:[%s1 + $0x214] sm:$0xf]
  %v157 = vld [vmem:[%s1 + $0x218] sm:$0xf]
  %v158 = vld [vmem:[%s1 + $0x21c] sm:$0xf]
  %v159 = vld [vmem:[%s1 + $0x220] sm:$0xf]
  %v160 = vld [vmem:[%s1 + $0x224] sm:$0xf]
  %v161 = vld [vmem:[%s1 + $0x228] sm:$0xf]
  %v162 = vld [vmem:[%s1 + $0x22c] sm:$0xf]
  %v163 = vld [vmem:[%s1 + $0x230] sm:$0xf]
  %v164 = vld [vmem:[%s1 + $0x234] sm:$0xf]
  %v165 = vld [vmem:[%s1 + $0x238] sm:$0xf]
  %v166 = vld [vmem:[%s1 + $0x23c] sm:$0xf]
  %v167 = vld [vmem:[%s1 + $0x240] sm:$0xf]
  %v168 = vld [vmem:[%s1 + $0x244] sm:$0xf]
  %v169 = vld [vmem:[%s1 + $0x248] sm:$0xf]
  %v170 = vld [vmem:[%s1 + $0x24c] sm:$0xf]
  %v171 = vld [vmem:[%s1 + $0x250] sm:$0xf]
  %v172 = vld [vmem:[%s1 + $0x254] sm:$0xf]
  %v173 = vld [vmem:[%s1 + $0x258] sm:$0xf]
  %v174 = vld [vmem:[%s1 + $0x25c] sm:$0xf]
  %v175 = vld [vmem:[%s1 + $0x260] sm:$0xf]
  %v176 = vld [vmem:[%s1 + $0x264] sm:$0xf]
  %v177 = vld [vmem:[%s1 + $0x268] sm:$0xf]
  %v178 = vld [vmem:[%s1 + $0x26c] sm:$0xf]
  %v179 = vld [vmem:[%s1 + $0x270] sm:$0xf]
  %v180 = vld [vmem:[%s1 + $0x274] sm:$0xf]
  %v181 = vld [vmem:[%s1 + $0x278] sm:$0xf]
  %v182 = vld [vmem:[%s1 + $0x27c] sm:$0xf]
  %v183 = vld [vmem:[%s1 + $0x280] sm:$0xf]
  %v184 = vld [vmem:[%s1 + $0x284] sm:$0xf]
  %v185 = vld [vmem:[%s1 + $0x288] sm:$0xf]
  %v186 = vld [vmem:[%s1 + $0x28c] sm:$0xf]
  %v187 = vld [vmem:[%s1 + $0x290] sm:$0xf]
  %v188 = vld [vmem:[%s1 + $0x294] sm:$0xf]
  %v189 = vld [vmem:[%s1 + $0x298] sm:$0xf]
  %v190 = vld [vmem:[%s1 + $0x29c] sm:$0xf]
  %v191 = vld [vmem:[%s1 + $0x2a0] sm:$0xf]
  %v192 = vld [vmem:[%s1 + $0x2a4] sm:$0xf]
  %v193 = vld [vmem:[%s1 + $0x2a8] sm:$0xf]
  %v194 = vld [vmem:[%s1 + $0x2ac] sm:$0xf]
  %v195 = vld [vmem:[%s1 + $0x2b0] sm:$0xf]
  %v196 = vld [vmem:[%s1 + $0x2b4] sm:$0xf]
  %v197 = vld [vmem:[%s1 + $0x2b8] sm:$0xf]
  %v198 = vld [vmem:[%s1 + $0x2bc] sm:$0xf]
  %v199 = vld [vmem:[%s1 + $0x2c0] sm:$0xf]
  %v200 = vld [vmem:[%s1 + $0x2c4] sm:$0xf]
  %v201 = vld [vmem:[%s1 + $0x2c8] sm:$0xf]
  %v202 = vld [vmem:[%s1 + $0x2cc] sm:$0xf]
  %v203 = vld [vmem:[%s1 + $0x2d0] sm:$0xf]
  %v204 = vld [vmem:[%s1 + $0x2d4] sm:$0xf]
  %v205 = vld [vmem:[%s1 + $0x2d8] sm:$0xf]
  %v206 = vld [vmem:[%s1 + $0x2dc] sm:$0xf]
  %v207 = vld [vmem:[%s1 + $0x2e0] sm:$0xf]
  %v208 = vld [vmem:[%s1 + $0x2e4] sm:$0xf]
  %v209 = vld [vmem:[%s1 + $0x2e8] sm:$0xf]
  %v210 = vld [vmem:[%s1 + $0x2ec] sm:$0xf]
  %v211 = vld [vmem:[%s1 + $0x2f0] sm:$0xf]
  %v212 = vld [vmem:[%s1 + $0x2f4] sm:$0xf]
  %v213 = vld [vmem:[%s1 + $0x2f8] sm:$0xf]
  %v214 = vld [vmem:[%s1 + $0x2fc] sm:$0xf]
  %v215 = vld [vmem:[%s1 + $0x300] sm:$0xf]
  %v216 = vld [vmem:[%s1 + $0x304] sm:$0xf]
  %v217 = vld [vmem:[%s1 + $0x308] sm:$0xf]
  %v218 = vld [vmem:[%s1 + $0x30c] sm:$0xf]
  %v219 = vld [vmem:[%s1 + $0x310] sm:$0xf]
  %v220 = vld [vmem:[%s1 + $0x314] sm:$0xf]
  %v221 = vld [vmem:[%s1 + $0x318] sm:$0xf]
  %v222 = vld [vmem:[%s1 + $0x31c] sm:$0xf]
  %v223 = vld [vmem:[%s1 + $0x320] sm:$0xf]
  %v224 = vld [vmem:[%s1 + $0x324] sm:$0xf]
  %v225 = vld [vmem:[%s1 + $0x328] sm:$0xf]
  %v226 = vld [vmem:[%s1 + $0x32c] sm:$0xf]
  %v227 = vld [vmem:[%s1 + $0x330] sm:$0xf]
  %v228 = vld [vmem:[%s1 + $0x334] sm:$0xf]
  %v229 = vld [vmem:[%s1 + $0x338] sm:$0xf]
  %v230 = vld [vmem:[%s1 + $0x33c] sm:$0xf]
  %v231 = vld [vmem:[%s1 + $0x340] sm:$0xf]
  %v232 = vld [vmem:[%s1 + $0x344] sm:$0xf]
  %v233 = vld [vmem:[%s1 + $0x348] sm:$0xf]
  %v234 = vld [vmem:[%s1 + $0x34c] sm:$0xf]
  %v235 = vld [vmem:[%s1 + $0x350] sm:$0xf]
  %v236 = vld [vmem:[%s1 + $0x354] sm:$0xf]
  %v237 = vld [vmem:[%s1 + $0x358] sm:$0xf]
  %v238 = vld [vmem:[%s1 + $0x35c] sm:$0xf]
  %v239 = vld [vmem:[%s1 + $0x360] sm:$0xf]
  %v240 = vld [vmem:[%s1 + $0x364] sm:$0xf]
  %v241 = vld [vmem:[%s1 + $0x368] sm:$0xf]
  %v242 = vld [vmem:[%s1 + $0x36c] sm:$0xf]
  %v243 = vld [vmem:[%s1 + $0x370] sm:$0xf]
  %v244 = vld [vmem:[%s1 + $0x374] sm:$0xf]
  %v245 = vld [vmem:[%s1 + $0x378] sm:$0xf]
  %v246 = vld [vmem:[%s1 + $0x37c] sm:$0xf]
  %v247 = vld [vmem:[%s1 + $0x380] sm:$0xf]
  %v248 = vld [vmem:[%s1 + $0x384] sm:$0xf]
  %v249 = vld [vmem:[%s1 + $0x388] sm:$0xf]
  %v250 = vld [vmem:[%s1 + $0x38c] sm:$0xf]
  %v251 = vld [vmem:[%s1 + $0x390] sm:$0xf]
  %v252 = vld [vmem:[%s1 + $0x394] sm:$0xf]
  %v253 = vld [vmem:[%s1 + $0x398] sm:$0xf]
  %v254 = vld [vmem:[%s1 + $0x39c] sm:$0xf]
  %v255 = vld [vmem:[%s1 + $0x3a0] sm:$0xf]
  %v256 = vld [vmem:[%s1 + $0x3a4] sm:$0xf]
  %v257 = vld [vmem:[%s1 + $0x3a8] sm:$0xf]
  %v258 = vld [vmem:[%s1 + $0x3ac] sm:$0xf]
  %v259 = vld [vmem:[%s1 + $0x3b0] sm:$0xf]
  %v260 = vld [vmem:[%s1 + $0x3b4] sm:$0xf]
  %v261 = vld [vmem:[%s1 + $0x3b8] sm:$0xf]
  %v262 = vld [vmem:[%s1 + $0x3bc] sm:$0xf]
  %v263 = vld [vmem:[%s1 + $0x3c0] sm:$0xf]
  %v264 = vld [vmem:[%s1 + $0x3c4] sm:$0xf]
  %v265 = vld [vmem:[%s1 + $0x3c8] sm:$0xf]
  %v266 = vld [vmem:[%s1 + $0x3cc] sm:$0xf]
  %v267 = vld [vmem:[%s1 + $0x3d0] sm:$0xf]
  %v268 = vld [vmem:[%s1 + $0x3d4] sm:$0xf]
  %v269 = vld [vmem:[%s1 + $0x3d8] sm:$0xf]
  %v270 = vld [vmem:[%s1 + $0x3dc] sm:$0xf]
  %v271 = vld [vmem:[%s1 + $0x3e0] sm:$0xf]
  %v272 = vld [vmem:[%s1 + $0x3e4] sm:$0xf]
  %v273 = vld [vmem:[%s1 + $0x3e8] sm:$0xf]
  %v274 = vld [vmem:[%s1 + $0x3ec] sm:$0xf]
  %v275 = vld [vmem:[%s1 + $0x3f0] sm:$0xf]
  %v276 = vld [vmem:[%s1 + $0x3f4] sm:$0xf]
  %v277 = vld [vmem:[%s1 + $0x3f8] sm:$0xf]
  %v278 = vld [vmem:[%s1 + $0x3fc] sm:$0xf]
  %v279 = vld [vmem:[%s1 + $0x400] sm:$0xf]
  %v280 = vld [vmem:[%s1 + $0x404] sm:$0xf]
  %v281 = vld [vmem:[%s1 + $0x408] sm:$0xf]
  %v282 = vld [vmem:[%s1 + $0x40c] sm:$0xf]
  %v283 = vld [vmem:[%s1 + $0x410] sm:$0xf]
  %v284 = vld [vmem:[%s1 + $0x414] sm:$0xf]
  %v285 = vld [vmem:[%s1 + $0x418] sm:$0xf]
  %v286 = vld [vmem:[%s1 + $0x41c] sm:$0xf]
  %v287 = vld [vmem:[%s1 + $0x420] sm:$0xf]
  %v288 = vld [vmem:[%s1 + $0x424] sm:$0xf]
  %v289 = vld [vmem:[%s1 + $0x428] sm:$0xf]
  %v290 = vld [vmem:[%s1 + $0x42c] sm:$0xf]
  %v291 = vld [vmem:[%s1 + $0x430] sm:$0xf]
  %v292 = vld [vmem:[%s1 + $0x434] sm:$0xf]
  %v293 = vld [vmem:[%s1 + $0x438] sm:$0xf]
  %v294 = vld [vmem:[%s1 + $0x43c] sm:$0xf]
  %v295 = vld [vmem:[%s1 + $0x440] sm:$0xf]
  %v296 = vld [vmem:[%s1 + $0x444] sm:$0xf]
  %v297 = vld [vmem:[%s1 + $0x448] sm:$0xf]
  %v298 = vld [vmem:[%s1 + $0x44c] sm:$0xf]
  %v299 = vld [vmem:[%s1 + $0x450] sm:$0xf]
  %v300 = vld [vmem:[%s1 + $0x454] sm:$0xf]
  %v301 = vld [vmem:[%s1 + $0x458] sm:$0xf]
  %v302 = vld [vmem:[%s1 + $0x45c] sm:$0xf]
  %v303 = vld [vmem:[%s1 + $0x460] sm:$0xf]
  %v304 = vld [vmem:[%s1 + $0x464] sm:$0xf]
  %v305 = vld [vmem:[%s1 + $0x468] sm:$0xf]
  %v306 = vld [vmem:[%s1 + $0x46c] sm:$0xf]
  %v307 = vld [vmem:[%s1 + $0x470] sm:$0xf]
  %v308 = vld [vmem:[%s1 + $0x474] sm:$0xf]
  %v309 = vld [vmem:[%s1 + $0x478] sm:$0xf]
  %v310 = vld [vmem:[%s1 + $0x47c] sm:$0xf]
  %v311 = vld [vmem:[%s2] sm:$0x1]
  %v313 = vperm.slane %v311, 0
  %v324 = vunpack.c.l.b16 %v14
  %v325 = vunpack.c.h.b16 %v14
  %v326 = vunpack.c.l.b16 %v15
  %v327 = vunpack.c.h.b16 %v15
  %v328 = vunpack.c.l.b16 %v16
  %v329 = vunpack.c.h.b16 %v16
  %v330 = vunpack.c.l.b16 %v17
  %v331 = vunpack.c.h.b16 %v17
  %v332 = vunpack.c.l.b16 %v18
  %v333 = vunpack.c.h.b16 %v18
  %v334 = vunpack.c.l.b16 %v19
  %v335 = vunpack.c.h.b16 %v19
  %v336 = vunpack.c.l.b16 %v20
  %v337 = vunpack.c.h.b16 %v20
  %v338 = vunpack.c.l.b16 %v21
  %v339 = vunpack.c.h.b16 %v21
  %v340 = vunpack.c.l.b16 %v22
  %v341 = vunpack.c.h.b16 %v22
  %v342 = vpack.c.b16 %v324, %v324
  %v343 = vpack.c.b16 %v325, %v325
  %v344 = vpack.c.b16 %v326, %v326
  %v345 = vpack.c.b16 %v327, %v327
  %v346 = vpack.c.b16 %v328, %v328
  %v347 = vpack.c.b16 %v329, %v329
  %v348 = vpack.c.b16 %v330, %v330
  %v349 = vpack.c.b16 %v331, %v331
  %v350 = vpack.c.b16 %v332, %v332
  %v351 = vpack.c.b16 %v333, %v333
  %v352 = vpack.c.b16 %v334, %v334
  %v353 = vpack.c.b16 %v335, %v335
  %v354 = vpack.c.b16 %v336, %v336
  %v355 = vpack.c.b16 %v337, %v337
  %v356 = vpack.c.b16 %v338, %v338
  %v357 = vpack.c.b16 %v339, %v339
  %v358 = vpack.c.b16 %v340, %v340
  %v359 = vpack.c.b16 %v341, %v341
  %v666 = vunpack.c.l.b16 %v23
  %v667 = vunpack.c.l.b16 %v24
  %v668 = vunpack.c.l.b16 %v25
  %v669 = vunpack.c.l.b16 %v26
  %v670 = vunpack.c.l.b16 %v27
  %v671 = vunpack.c.l.b16 %v28
  %v672 = vunpack.c.l.b16 %v29
  %v673 = vunpack.c.l.b16 %v30
  %v674 = vunpack.c.l.b16 %v31
  %v675 = vunpack.c.l.b16 %v32
  %v676 = vunpack.c.l.b16 %v33
  %v677 = vunpack.c.l.b16 %v34
  %v678 = vunpack.c.l.b16 %v35
  %v679 = vunpack.c.l.b16 %v36
  %v680 = vunpack.c.l.b16 %v37
  %v681 = vunpack.c.l.b16 %v38
  %v682 = vunpack.c.l.b16 %v39
  %v683 = vunpack.c.l.b16 %v40
  %v684 = vunpack.c.l.b16 %v41
  %v685 = vunpack.c.l.b16 %v42
  %v686 = vunpack.c.l.b16 %v43
  %v687 = vunpack.c.l.b16 %v44
  %v688 = vunpack.c.l.b16 %v45
  %v689 = vunpack.c.l.b16 %v46
  %v690 = vunpack.c.l.b16 %v47
  %v691 = vunpack.c.l.b16 %v48
  %v692 = vunpack.c.l.b16 %v49
  %v693 = vunpack.c.l.b16 %v50
  %v694 = vunpack.c.l.b16 %v51
  %v695 = vunpack.c.l.b16 %v52
  %v696 = vunpack.c.l.b16 %v53
  %v697 = vunpack.c.l.b16 %v54
  %v698 = vunpack.c.l.b16 %v55
  %v699 = vunpack.c.l.b16 %v56
  %v700 = vunpack.c.l.b16 %v57
  %v701 = vunpack.c.l.b16 %v58
  %v702 = vunpack.c.l.b16 %v59
  %v703 = vunpack.c.l.b16 %v60
  %v704 = vunpack.c.l.b16 %v61
  %v705 = vunpack.c.l.b16 %v62
  %v706 = vunpack.c.l.b16 %v63
  %v707 = vunpack.c.l.b16 %v64
  %v708 = vunpack.c.l.b16 %v65
  %v709 = vunpack.c.l.b16 %v66
  %v710 = vunpack.c.l.b16 %v67
  %v711 = vunpack.c.l.b16 %v68
  %v712 = vunpack.c.l.b16 %v69
  %v713 = vunpack.c.l.b16 %v70
  %v714 = vunpack.c.l.b16 %v71
  %v715 = vunpack.c.l.b16 %v72
  %v716 = vunpack.c.l.b16 %v73
  %v717 = vunpack.c.l.b16 %v74
  %v718 = vunpack.c.l.b16 %v75
  %v719 = vunpack.c.l.b16 %v76
  %v720 = vunpack.c.l.b16 %v77
  %v721 = vunpack.c.l.b16 %v78
  %v722 = vunpack.c.l.b16 %v79
  %v723 = vunpack.c.l.b16 %v80
  %v724 = vunpack.c.l.b16 %v81
  %v725 = vunpack.c.l.b16 %v82
  %v726 = vunpack.c.l.b16 %v83
  %v727 = vunpack.c.l.b16 %v84
  %v728 = vunpack.c.l.b16 %v85
  %v729 = vunpack.c.l.b16 %v86
  %v730 = vunpack.c.l.b16 %v87
  %v731 = vunpack.c.l.b16 %v88
  %v732 = vunpack.c.l.b16 %v89
  %v733 = vunpack.c.l.b16 %v90
  %v734 = vunpack.c.l.b16 %v91
  %v735 = vunpack.c.l.b16 %v92
  %v736 = vunpack.c.l.b16 %v93
  %v737 = vunpack.c.l.b16 %v94
  %v738 = vunpack.c.l.b16 %v95
  %v739 = vunpack.c.l.b16 %v96
  %v740 = vunpack.c.l.b16 %v97
  %v741 = vunpack.c.l.b16 %v98
  %v742 = vunpack.c.l.b16 %v99
  %v743 = vunpack.c.l.b16 %v100
  %v744 = vunpack.c.l.b16 %v101
  %v745 = vunpack.c.l.b16 %v102
  %v746 = vunpack.c.l.b16 %v103
  %v747 = vunpack.c.l.b16 %v104
  %v748 = vunpack.c.l.b16 %v105
  %v749 = vunpack.c.l.b16 %v106
  %v750 = vunpack.c.l.b16 %v107
  %v751 = vunpack.c.l.b16 %v108
  %v752 = vunpack.c.l.b16 %v109
  %v753 = vunpack.c.l.b16 %v110
  %v754 = vunpack.c.l.b16 %v111
  %v755 = vunpack.c.l.b16 %v112
  %v756 = vunpack.c.l.b16 %v113
  %v757 = vunpack.c.l.b16 %v114
  %v758 = vunpack.c.l.b16 %v115
  %v759 = vunpack.c.l.b16 %v116
  %v760 = vunpack.c.l.b16 %v117
  %v761 = vunpack.c.l.b16 %v118
  %v762 = vunpack.c.l.b16 %v119
  %v763 = vunpack.c.l.b16 %v120
  %v764 = vunpack.c.l.b16 %v121
  %v765 = vunpack.c.l.b16 %v122
  %v766 = vunpack.c.l.b16 %v123
  %v767 = vunpack.c.l.b16 %v124
  %v768 = vunpack.c.l.b16 %v125
  %v769 = vunpack.c.l.b16 %v126
  %v770 = vunpack.c.l.b16 %v127
  %v771 = vunpack.c.l.b16 %v128
  %v772 = vunpack.c.l.b16 %v129
  %v773 = vunpack.c.l.b16 %v130
  %v774 = vunpack.c.l.b16 %v131
  %v775 = vunpack.c.l.b16 %v132
  %v776 = vunpack.c.l.b16 %v133
  %v777 = vunpack.c.l.b16 %v134
  %v778 = vunpack.c.l.b16 %v135
  %v779 = vunpack.c.l.b16 %v136
  %v780 = vunpack.c.l.b16 %v137
  %v781 = vunpack.c.l.b16 %v138
  %v782 = vunpack.c.l.b16 %v139
  %v783 = vunpack.c.l.b16 %v140
  %v784 = vunpack.c.l.b16 %v141
  %v785 = vunpack.c.l.b16 %v142
  %v786 = vunpack.c.l.b16 %v143
  %v787 = vunpack.c.l.b16 %v144
  %v788 = vunpack.c.l.b16 %v145
  %v789 = vunpack.c.l.b16 %v146
  %v790 = vunpack.c.l.b16 %v147
  %v791 = vunpack.c.l.b16 %v148
  %v792 = vunpack.c.l.b16 %v149
  %v793 = vunpack.c.l.b16 %v150
  %v794 = vunpack.c.l.b16 %v151
  %v795 = vunpack.c.l.b16 %v152
  %v796 = vunpack.c.l.b16 %v153
  %v797 = vunpack.c.l.b16 %v154
  %v798 = vunpack.c.l.b16 %v155
  %v799 = vunpack.c.l.b16 %v156
  %v800 = vunpack.c.l.b16 %v157
  %v801 = vunpack.c.l.b16 %v158
  %v802 = vunpack.c.l.b16 %v159
  %v803 = vunpack.c.l.b16 %v160
  %v804 = vunpack.c.l.b16 %v161
  %v805 = vunpack.c.l.b16 %v162
  %v806 = vunpack.c.l.b16 %v163
  %v807 = vunpack.c.l.b16 %v164
  %v808 = vunpack.c.l.b16 %v165
  %v809 = vunpack.c.l.b16 %v166
  %v810 = vunpack.c.l.b16 %v167
  %v811 = vunpack.c.l.b16 %v168
  %v812 = vunpack.c.l.b16 %v169
  %v813 = vunpack.c.l.b16 %v170
  %v814 = vunpack.c.l.b16 %v171
  %v815 = vunpack.c.l.b16 %v172
  %v816 = vunpack.c.l.b16 %v173
  %v817 = vunpack.c.l.b16 %v174
  %v818 = vunpack.c.l.b16 %v175
  %v819 = vunpack.c.l.b16 %v176
  %v820 = vunpack.c.l.b16 %v177
  %v821 = vunpack.c.l.b16 %v178
  %v822 = vunpack.c.l.b16 %v179
  %v823 = vunpack.c.l.b16 %v180
  %v824 = vunpack.c.l.b16 %v181
  %v825 = vunpack.c.l.b16 %v182
  %v826 = vunpack.c.l.b16 %v183
  %v827 = vunpack.c.l.b16 %v184
  %v828 = vunpack.c.l.b16 %v185
  %v829 = vunpack.c.l.b16 %v186
  %v830 = vunpack.c.l.b16 %v187
  %v831 = vunpack.c.l.b16 %v188
  %v832 = vunpack.c.l.b16 %v189
  %v833 = vunpack.c.l.b16 %v190
  %v834 = vunpack.c.l.b16 %v191
  %v835 = vunpack.c.l.b16 %v192
  %v836 = vunpack.c.l.b16 %v193
  %v837 = vunpack.c.l.b16 %v194
  %v838 = vunpack.c.l.b16 %v195
  %v839 = vunpack.c.l.b16 %v196
  %v840 = vunpack.c.l.b16 %v197
  %v841 = vunpack.c.l.b16 %v198
  %v842 = vunpack.c.l.b16 %v199
  %v843 = vunpack.c.l.b16 %v200
  %v844 = vunpack.c.l.b16 %v201
  %v845 = vunpack.c.l.b16 %v202
  %v846 = vunpack.c.l.b16 %v203
  %v847 = vunpack.c.l.b16 %v204
  %v848 = vunpack.c.l.b16 %v205
  %v849 = vunpack.c.l.b16 %v206
  %v850 = vunpack.c.l.b16 %v207
  %v851 = vunpack.c.l.b16 %v208
  %v852 = vunpack.c.l.b16 %v209
  %v853 = vunpack.c.l.b16 %v210
  %v854 = vunpack.c.l.b16 %v211
  %v855 = vunpack.c.l.b16 %v212
  %v856 = vunpack.c.l.b16 %v213
  %v857 = vunpack.c.l.b16 %v214
  %v858 = vunpack.c.l.b16 %v215
  %v859 = vunpack.c.l.b16 %v216
  %v860 = vunpack.c.l.b16 %v217
  %v861 = vunpack.c.l.b16 %v218
  %v862 = vunpack.c.l.b16 %v219
  %v863 = vunpack.c.l.b16 %v220
  %v864 = vunpack.c.l.b16 %v221
  %v865 = vunpack.c.l.b16 %v222
  %v866 = vunpack.c.l.b16 %v223
  %v867 = vunpack.c.l.b16 %v224
  %v868 = vunpack.c.l.b16 %v225
  %v869 = vunpack.c.l.b16 %v226
  %v870 = vunpack.c.l.b16 %v227
  %v871 = vunpack.c.l.b16 %v228
  %v872 = vunpack.c.l.b16 %v229
  %v873 = vunpack.c.l.b16 %v230
  %v874 = vunpack.c.l.b16 %v231
  %v875 = vunpack.c.l.b16 %v232
  %v876 = vunpack.c.l.b16 %v233
  %v877 = vunpack.c.l.b16 %v234
  %v878 = vunpack.c.l.b16 %v235
  %v879 = vunpack.c.l.b16 %v236
  %v880 = vunpack.c.l.b16 %v237
  %v881 = vunpack.c.l.b16 %v238
  %v882 = vunpack.c.l.b16 %v239
  %v883 = vunpack.c.l.b16 %v240
  %v884 = vunpack.c.l.b16 %v241
  %v885 = vunpack.c.l.b16 %v242
  %v886 = vunpack.c.l.b16 %v243
  %v887 = vunpack.c.l.b16 %v244
  %v888 = vunpack.c.l.b16 %v245
  %v889 = vunpack.c.l.b16 %v246
  %v890 = vunpack.c.l.b16 %v247
  %v891 = vunpack.c.l.b16 %v248
  %v892 = vunpack.c.l.b16 %v249
  %v893 = vunpack.c.l.b16 %v250
  %v894 = vunpack.c.l.b16 %v251
  %v895 = vunpack.c.l.b16 %v252
  %v896 = vunpack.c.l.b16 %v253
  %v897 = vunpack.c.l.b16 %v254
  %v898 = vunpack.c.l.b16 %v255
  %v899 = vunpack.c.l.b16 %v256
  %v900 = vunpack.c.l.b16 %v257
  %v901 = vunpack.c.l.b16 %v258
  %v902 = vunpack.c.l.b16 %v259
  %v903 = vunpack.c.l.b16 %v260
  %v904 = vunpack.c.l.b16 %v261
  %v905 = vunpack.c.l.b16 %v262
  %v906 = vunpack.c.l.b16 %v263
  %v907 = vunpack.c.l.b16 %v264
  %v908 = vunpack.c.l.b16 %v265
  %v909 = vunpack.c.l.b16 %v266
  %v910 = vunpack.c.l.b16 %v267
  %v911 = vunpack.c.l.b16 %v268
  %v912 = vunpack.c.l.b16 %v269
  %v913 = vunpack.c.l.b16 %v270
  %v914 = vunpack.c.l.b16 %v271
  %v915 = vunpack.c.l.b16 %v272
  %v916 = vunpack.c.l.b16 %v273
  %v917 = vunpack.c.l.b16 %v274
  %v918 = vunpack.c.l.b16 %v275
  %v919 = vunpack.c.l.b16 %v276
  %v920 = vunpack.c.l.b16 %v277
  %v921 = vunpack.c.l.b16 %v278
  %v922 = vunpack.c.l.b16 %v279
  %v923 = vunpack.c.l.b16 %v280
  %v924 = vunpack.c.l.b16 %v281
  %v925 = vunpack.c.l.b16 %v282
  %v926 = vunpack.c.l.b16 %v283
  %v927 = vunpack.c.l.b16 %v284
  %v928 = vunpack.c.l.b16 %v285
  %v929 = vunpack.c.l.b16 %v286
  %v930 = vunpack.c.l.b16 %v287
  %v931 = vunpack.c.l.b16 %v288
  %v932 = vunpack.c.l.b16 %v289
  %v933 = vunpack.c.l.b16 %v290
  %v934 = vunpack.c.l.b16 %v291
  %v935 = vunpack.c.l.b16 %v292
  %v936 = vunpack.c.l.b16 %v293
  %v937 = vunpack.c.l.b16 %v294
  %v938 = vunpack.c.l.b16 %v295
  %v939 = vunpack.c.l.b16 %v296
  %v940 = vunpack.c.l.b16 %v297
  %v941 = vunpack.c.l.b16 %v298
  %v942 = vunpack.c.l.b16 %v299
  %v943 = vunpack.c.l.b16 %v300
  %v944 = vunpack.c.l.b16 %v301
  %v945 = vunpack.c.l.b16 %v302
  %v946 = vunpack.c.l.b16 %v303
  %v947 = vunpack.c.l.b16 %v304
  %v948 = vunpack.c.l.b16 %v305
  %v949 = vunpack.c.l.b16 %v306
  %v950 = vunpack.c.l.b16 %v307
  %v951 = vunpack.c.l.b16 %v308
  %v952 = vunpack.c.l.b16 %v309
  %v953 = vunpack.c.l.b16 %v310
  %v954 = vpack.c.b16 %v667, %v666
  %v955 = vpack.c.b16 %v669, %v668
  %v956 = vpack.c.b16 %v671, %v670
  %v957 = vpack.c.b16 %v673, %v672
  %v958 = vpack.c.b16 %v675, %v674
  %v959 = vpack.c.b16 %v677, %v676
  %v960 = vpack.c.b16 %v679, %v678
  %v961 = vpack.c.b16 %v681, %v680
  %v962 = vpack.c.b16 %v683, %v682
  %v963 = vpack.c.b16 %v685, %v684
  %v964 = vpack.c.b16 %v687, %v686
  %v965 = vpack.c.b16 %v689, %v688
  %v966 = vpack.c.b16 %v691, %v690
  %v967 = vpack.c.b16 %v693, %v692
  %v968 = vpack.c.b16 %v695, %v694
  %v969 = vpack.c.b16 %v697, %v696
  %v970 = vpack.c.b16 %v699, %v698
  %v971 = vpack.c.b16 %v701, %v700
  %v972 = vpack.c.b16 %v703, %v702
  %v973 = vpack.c.b16 %v705, %v704
  %v974 = vpack.c.b16 %v707, %v706
  %v975 = vpack.c.b16 %v709, %v708
  %v976 = vpack.c.b16 %v711, %v710
  %v977 = vpack.c.b16 %v713, %v712
  %v978 = vpack.c.b16 %v715, %v714
  %v979 = vpack.c.b16 %v717, %v716
  %v980 = vpack.c.b16 %v719, %v718
  %v981 = vpack.c.b16 %v721, %v720
  %v982 = vpack.c.b16 %v723, %v722
  %v983 = vpack.c.b16 %v725, %v724
  %v984 = vpack.c.b16 %v727, %v726
  %v985 = vpack.c.b16 %v729, %v728
  %v986 = vpack.c.b16 %v731, %v730
  %v987 = vpack.c.b16 %v733, %v732
  %v988 = vpack.c.b16 %v735, %v734
  %v989 = vpack.c.b16 %v737, %v736
  %v990 = vpack.c.b16 %v739, %v738
  %v991 = vpack.c.b16 %v741, %v740
  %v992 = vpack.c.b16 %v743, %v742
  %v993 = vpack.c.b16 %v745, %v744
  %v994 = vpack.c.b16 %v747, %v746
  %v995 = vpack.c.b16 %v749, %v748
  %v996 = vpack.c.b16 %v751, %v750
  %v997 = vpack.c.b16 %v753, %v752
  %v998 = vpack.c.b16 %v755, %v754
  %v999 = vpack.c.b16 %v757, %v756
  %v1000 = vpack.c.b16 %v759, %v758
  %v1001 = vpack.c.b16 %v761, %v760
  %v1002 = vpack.c.b16 %v763, %v762
  %v1003 = vpack.c.b16 %v765, %v764
  %v1004 = vpack.c.b16 %v767, %v766
  %v1005 = vpack.c.b16 %v769, %v768
  %v1006 = vpack.c.b16 %v771, %v770
  %v1007 = vpack.c.b16 %v773, %v772
  %v1008 = vpack.c.b16 %v775, %v774
  %v1009 = vpack.c.b16 %v777, %v776
  %v1010 = vpack.c.b16 %v779, %v778
  %v1011 = vpack.c.b16 %v781, %v780
  %v1012 = vpack.c.b16 %v783, %v782
  %v1013 = vpack.c.b16 %v785, %v784
  %v1014 = vpack.c.b16 %v787, %v786
  %v1015 = vpack.c.b16 %v789, %v788
  %v1016 = vpack.c.b16 %v791, %v790
  %v1017 = vpack.c.b16 %v793, %v792
  %v1018 = vpack.c.b16 %v795, %v794
  %v1019 = vpack.c.b16 %v797, %v796
  %v1020 = vpack.c.b16 %v799, %v798
  %v1021 = vpack.c.b16 %v801, %v800
  %v1022 = vpack.c.b16 %v803, %v802
  %v1023 = vpack.c.b16 %v805, %v804
  %v1024 = vpack.c.b16 %v807, %v806
  %v1025 = vpack.c.b16 %v809, %v808
  %v1026 = vpack.c.b16 %v811, %v810
  %v1027 = vpack.c.b16 %v813, %v812
  %v1028 = vpack.c.b16 %v815, %v814
  %v1029 = vpack.c.b16 %v817, %v816
  %v1030 = vpack.c.b16 %v819, %v818
  %v1031 = vpack.c.b16 %v821, %v820
  %v1032 = vpack.c.b16 %v823, %v822
  %v1033 = vpack.c.b16 %v825, %v824
  %v1034 = vpack.c.b16 %v827, %v826
  %v1035 = vpack.c.b16 %v829, %v828
  %v1036 = vpack.c.b16 %v831, %v830
  %v1037 = vpack.c.b16 %v833, %v832
  %v1038 = vpack.c.b16 %v835, %v834
  %v1039 = vpack.c.b16 %v837, %v836
  %v1040 = vpack.c.b16 %v839, %v838
  %v1041 = vpack.c.b16 %v841, %v840
  %v1042 = vpack.c.b16 %v843, %v842
  %v1043 = vpack.c.b16 %v845, %v844
  %v1044 = vpack.c.b16 %v847, %v846
  %v1045 = vpack.c.b16 %v849, %v848
  %v1046 = vpack.c.b16 %v851, %v850
  %v1047 = vpack.c.b16 %v853, %v852
  %v1048 = vpack.c.b16 %v855, %v854
  %v1049 = vpack.c.b16 %v857, %v856
  %v1050 = vpack.c.b16 %v859, %v858
  %v1051 = vpack.c.b16 %v861, %v860
  %v1052 = vpack.c.b16 %v863, %v862
  %v1053 = vpack.c.b16 %v865, %v864
  %v1054 = vpack.c.b16 %v867, %v866
  %v1055 = vpack.c.b16 %v869, %v868
  %v1056 = vpack.c.b16 %v871, %v870
  %v1057 = vpack.c.b16 %v873, %v872
  %v1058 = vpack.c.b16 %v875, %v874
  %v1059 = vpack.c.b16 %v877, %v876
  %v1060 = vpack.c.b16 %v879, %v878
  %v1061 = vpack.c.b16 %v881, %v880
  %v1062 = vpack.c.b16 %v883, %v882
  %v1063 = vpack.c.b16 %v885, %v884
  %v1064 = vpack.c.b16 %v887, %v886
  %v1065 = vpack.c.b16 %v889, %v888
  %v1066 = vpack.c.b16 %v891, %v890
  %v1067 = vpack.c.b16 %v893, %v892
  %v1068 = vpack.c.b16 %v895, %v894
  %v1069 = vpack.c.b16 %v897, %v896
  %v1070 = vpack.c.b16 %v899, %v898
  %v1071 = vpack.c.b16 %v901, %v900
  %v1072 = vpack.c.b16 %v903, %v902
  %v1073 = vpack.c.b16 %v905, %v904
  %v1074 = vpack.c.b16 %v907, %v906
  %v1075 = vpack.c.b16 %v909, %v908
  %v1076 = vpack.c.b16 %v911, %v910
  %v1077 = vpack.c.b16 %v913, %v912
  %v1078 = vpack.c.b16 %v915, %v914
  %v1079 = vpack.c.b16 %v917, %v916
  %v1080 = vpack.c.b16 %v919, %v918
  %v1081 = vpack.c.b16 %v921, %v920
  %v1082 = vpack.c.b16 %v923, %v922
  %v1083 = vpack.c.b16 %v925, %v924
  %v1084 = vpack.c.b16 %v927, %v926
  %v1085 = vpack.c.b16 %v929, %v928
  %v1086 = vpack.c.b16 %v931, %v930
  %v1087 = vpack.c.b16 %v933, %v932
  %v1088 = vpack.c.b16 %v935, %v934
  %v1089 = vpack.c.b16 %v937, %v936
  %v1090 = vpack.c.b16 %v939, %v938
  %v1091 = vpack.c.b16 %v941, %v940
  %v1092 = vpack.c.b16 %v943, %v942
  %v1093 = vpack.c.b16 %v945, %v944
  %v1094 = vpack.c.b16 %v947, %v946
  %v1095 = vpack.c.b16 %v949, %v948
  %v1096 = vpack.c.b16 %v951, %v950
  %v1097 = vpack.c.b16 %v953, %v952
  %1242 = vmatpush.bf16.msra.mxu0 %v961
  %1243 = vmatpush.bf16.msra.mxu0 %v960
  %1244 = vmatpush.bf16.msra.mxu0 %v959
  %1245 = vmatpush.bf16.msra.mxu0 %v958
  %1246 = vmatpush.bf16.msra.mxu0 %v957
  %1247 = vmatpush.bf16.msra.mxu0 %v956
  %1248 = vmatpush.bf16.msra.mxu0 %v955
  %1249 = vmatpush.bf16.msra.mxu0 %v954
  %1250 = vmatmul.bf16.gmra.mxu0 %v342
  %v1251 = vpop.f32.mrf.mxu0
  %v1252 = vadd.f32 %v313, %v1251
  %v1253 = vpop.f32.mrf.mxu0
  %1254 = vdwg.mxu0
  %1255 = vmatpush.bf16.msra.mxu0 %v969
  %1256 = vmatpush.bf16.msra.mxu0 %v968
  %1257 = vmatpush.bf16.msra.mxu0 %v967
  %1258 = vmatpush.bf16.msra.mxu0 %v966
  %1259 = vmatpush.bf16.msra.mxu0 %v965
  %1260 = vmatpush.bf16.msra.mxu0 %v964
  %1261 = vmatpush.bf16.msra.mxu0 %v963
  %1262 = vmatpush.bf16.msra.mxu0 %v962
  %1263 = vmatmul.bf16.gmra.mxu0 %v343
  %v1264 = vpop.f32.mrf.mxu0
  %v1265 = vadd.f32 %v1252, %v1264
  %v1266 = vpop.f32.mrf.mxu0
  %1267 = vdwg.mxu0
  %1268 = vmatpush.bf16.msra.mxu0 %v977
  %1269 = vmatpush.bf16.msra.mxu0 %v976
  %1270 = vmatpush.bf16.msra.mxu0 %v975
  %1271 = vmatpush.bf16.msra.mxu0 %v974
  %1272 = vmatpush.bf16.msra.mxu0 %v973
  %1273 = vmatpush.bf16.msra.mxu0 %v972
  %1274 = vmatpush.bf16.msra.mxu0 %v971
  %1275 = vmatpush.bf16.msra.mxu0 %v970
  %1276 = vmatmul.bf16.gmra.mxu0 %v344
  %v1277 = vpop.f32.mrf.mxu0
  %v1278 = vadd.f32 %v1265, %v1277
  %v1279 = vpop.f32.mrf.mxu0
  %1280 = vdwg.mxu0
  %1281 = vmatpush.bf16.msra.mxu0 %v985
  %1282 = vmatpush.bf16.msra.mxu0 %v984
  %1283 = vmatpush.bf16.msra.mxu0 %v983
  %1284 = vmatpush.bf16.msra.mxu0 %v982
  %1285 = vmatpush.bf16.msra.mxu0 %v981
  %1286 = vmatpush.bf16.msra.mxu0 %v980
  %1287 = vmatpush.bf16.msra.mxu0 %v979
  %1288 = vmatpush.bf16.msra.mxu0 %v978
  %1289 = vmatmul.bf16.gmra.mxu0 %v345
  %v1290 = vpop.f32.mrf.mxu0
  %v1291 = vadd.f32 %v1278, %v1290
  %v1292 = vpop.f32.mrf.mxu0
  %1293 = vdwg.mxu0
  %1294 = vmatpush.bf16.msra.mxu0 %v993
  %1295 = vmatpush.bf16.msra.mxu0 %v992
  %1296 = vmatpush.bf16.msra.mxu0 %v991
  %1297 = vmatpush.bf16.msra.mxu0 %v990
  %1298 = vmatpush.bf16.msra.mxu0 %v989
  %1299 = vmatpush.bf16.msra.mxu0 %v988
  %1300 = vmatpush.bf16.msra.mxu0 %v987
  %1301 = vmatpush.bf16.msra.mxu0 %v986
  %1302 = vmatmul.bf16.gmra.mxu0 %v346
  %v1303 = vpop.f32.mrf.mxu0
  %v1304 = vadd.f32 %v1291, %v1303
  %v1305 = vpop.f32.mrf.mxu0
  %1306 = vdwg.mxu0
  %1307 = vmatpush.bf16.msra.mxu0 %v1001
  %1308 = vmatpush.bf16.msra.mxu0 %v1000
  %1309 = vmatpush.bf16.msra.mxu0 %v999
  %1310 = vmatpush.bf16.msra.mxu0 %v998
  %1311 = vmatpush.bf16.msra.mxu0 %v997
  %1312 = vmatpush.bf16.msra.mxu0 %v996
  %1313 = vmatpush.bf16.msra.mxu0 %v995
  %1314 = vmatpush.bf16.msra.mxu0 %v994
  %1315 = vmatmul.bf16.gmra.mxu0 %v347
  %v1316 = vpop.f32.mrf.mxu0
  %v1317 = vadd.f32 %v1304, %v1316
  %v1318 = vpop.f32.mrf.mxu0
  %1319 = vdwg.mxu0
  %1320 = vmatpush.bf16.msra.mxu0 %v1009
  %1321 = vmatpush.bf16.msra.mxu0 %v1008
  %1322 = vmatpush.bf16.msra.mxu0 %v1007
  %1323 = vmatpush.bf16.msra.mxu0 %v1006
  %1324 = vmatpush.bf16.msra.mxu0 %v1005
  %1325 = vmatpush.bf16.msra.mxu0 %v1004
  %1326 = vmatpush.bf16.msra.mxu0 %v1003
  %1327 = vmatpush.bf16.msra.mxu0 %v1002
  %1328 = vmatmul.bf16.gmra.mxu0 %v348
  %v1329 = vpop.f32.mrf.mxu0
  %v1330 = vadd.f32 %v1317, %v1329
  %v1331 = vpop.f32.mrf.mxu0
  %1332 = vdwg.mxu0
  %1333 = vmatpush.bf16.msra.mxu0 %v1017
  %1334 = vmatpush.bf16.msra.mxu0 %v1016
  %1335 = vmatpush.bf16.msra.mxu0 %v1015
  %1336 = vmatpush.bf16.msra.mxu0 %v1014
  %1337 = vmatpush.bf16.msra.mxu0 %v1013
  %1338 = vmatpush.bf16.msra.mxu0 %v1012
  %1339 = vmatpush.bf16.msra.mxu0 %v1011
  %1340 = vmatpush.bf16.msra.mxu0 %v1010
  %1341 = vmatmul.bf16.gmra.mxu0 %v349
  %v1342 = vpop.f32.mrf.mxu0
  %v1343 = vadd.f32 %v1330, %v1342
  %v1344 = vpop.f32.mrf.mxu0
  %1345 = vdwg.mxu0
  %1346 = vmatpush.bf16.msra.mxu0 %v1025
  %1347 = vmatpush.bf16.msra.mxu0 %v1024
  %1348 = vmatpush.bf16.msra.mxu0 %v1023
  %1349 = vmatpush.bf16.msra.mxu0 %v1022
  %1350 = vmatpush.bf16.msra.mxu0 %v1021
  %1351 = vmatpush.bf16.msra.mxu0 %v1020
  %1352 = vmatpush.bf16.msra.mxu0 %v1019
  %1353 = vmatpush.bf16.msra.mxu0 %v1018
  %1354 = vmatmul.bf16.gmra.mxu0 %v350
  %v1355 = vpop.f32.mrf.mxu0
  %v1356 = vadd.f32 %v1343, %v1355
  %v1357 = vpop.f32.mrf.mxu0
  %1358 = vdwg.mxu0
  %1359 = vmatpush.bf16.msra.mxu0 %v1033
  %1360 = vmatpush.bf16.msra.mxu0 %v1032
  %1361 = vmatpush.bf16.msra.mxu0 %v1031
  %1362 = vmatpush.bf16.msra.mxu0 %v1030
  %1363 = vmatpush.bf16.msra.mxu0 %v1029
  %1364 = vmatpush.bf16.msra.mxu0 %v1028
  %1365 = vmatpush.bf16.msra.mxu0 %v1027
  %1366 = vmatpush.bf16.msra.mxu0 %v1026
  %1367 = vmatmul.bf16.gmra.mxu0 %v351
  %v1368 = vpop.f32.mrf.mxu0
  %v1369 = vadd.f32 %v1356, %v1368
  %v1370 = vpop.f32.mrf.mxu0
  %1371 = vdwg.mxu0
  %1372 = vmatpush.bf16.msra.mxu0 %v1041
  %1373 = vmatpush.bf16.msra.mxu0 %v1040
  %1374 = vmatpush.bf16.msra.mxu0 %v1039
  %1375 = vmatpush.bf16.msra.mxu0 %v1038
  %1376 = vmatpush.bf16.msra.mxu0 %v1037
  %1377 = vmatpush.bf16.msra.mxu0 %v1036
  %1378 = vmatpush.bf16.msra.mxu0 %v1035
  %1379 = vmatpush.bf16.msra.mxu0 %v1034
  %1380 = vmatmul.bf16.gmra.mxu0 %v352
  %v1381 = vpop.f32.mrf.mxu0
  %v1382 = vadd.f32 %v1369, %v1381
  %v1383 = vpop.f32.mrf.mxu0
  %1384 = vdwg.mxu0
  %1385 = vmatpush.bf16.msra.mxu0 %v1049
  %1386 = vmatpush.bf16.msra.mxu0 %v1048
  %1387 = vmatpush.bf16.msra.mxu0 %v1047
  %1388 = vmatpush.bf16.msra.mxu0 %v1046
  %1389 = vmatpush.bf16.msra.mxu0 %v1045
  %1390 = vmatpush.bf16.msra.mxu0 %v1044
  %1391 = vmatpush.bf16.msra.mxu0 %v1043
  %1392 = vmatpush.bf16.msra.mxu0 %v1042
  %1393 = vmatmul.bf16.gmra.mxu0 %v353
  %v1394 = vpop.f32.mrf.mxu0
  %v1395 = vadd.f32 %v1382, %v1394
  %v1396 = vpop.f32.mrf.mxu0
  %1397 = vdwg.mxu0
  %1398 = vmatpush.bf16.msra.mxu0 %v1057
  %1399 = vmatpush.bf16.msra.mxu0 %v1056
  %1400 = vmatpush.bf16.msra.mxu0 %v1055
  %1401 = vmatpush.bf16.msra.mxu0 %v1054
  %1402 = vmatpush.bf16.msra.mxu0 %v1053
  %1403 = vmatpush.bf16.msra.mxu0 %v1052
  %1404 = vmatpush.bf16.msra.mxu0 %v1051
  %1405 = vmatpush.bf16.msra.mxu0 %v1050
  %1406 = vmatmul.bf16.gmra.mxu0 %v354
  %v1407 = vpop.f32.mrf.mxu0
  %v1408 = vadd.f32 %v1395, %v1407
  %v1409 = vpop.f32.mrf.mxu0
  %1410 = vdwg.mxu0
  %1411 = vmatpush.bf16.msra.mxu0 %v1065
  %1412 = vmatpush.bf16.msra.mxu0 %v1064
  %1413 = vmatpush.bf16.msra.mxu0 %v1063
  %1414 = vmatpush.bf16.msra.mxu0 %v1062
  %1415 = vmatpush.bf16.msra.mxu0 %v1061
  %1416 = vmatpush.bf16.msra.mxu0 %v1060
  %1417 = vmatpush.bf16.msra.mxu0 %v1059
  %1418 = vmatpush.bf16.msra.mxu0 %v1058
  %1419 = vmatmul.bf16.gmra.mxu0 %v355
  %v1420 = vpop.f32.mrf.mxu0
  %v1421 = vadd.f32 %v1408, %v1420
  %v1422 = vpop.f32.mrf.mxu0
  %1423 = vdwg.mxu0
  %1424 = vmatpush.bf16.msra.mxu0 %v1073
  %1425 = vmatpush.bf16.msra.mxu0 %v1072
  %1426 = vmatpush.bf16.msra.mxu0 %v1071
  %1427 = vmatpush.bf16.msra.mxu0 %v1070
  %1428 = vmatpush.bf16.msra.mxu0 %v1069
  %1429 = vmatpush.bf16.msra.mxu0 %v1068
  %1430 = vmatpush.bf16.msra.mxu0 %v1067
  %1431 = vmatpush.bf16.msra.mxu0 %v1066
  %1432 = vmatmul.bf16.gmra.mxu0 %v356
  %v1433 = vpop.f32.mrf.mxu0
  %v1434 = vadd.f32 %v1421, %v1433
  %v1435 = vpop.f32.mrf.mxu0
  %1436 = vdwg.mxu0
  %1437 = vmatpush.bf16.msra.mxu0 %v1081
  %1438 = vmatpush.bf16.msra.mxu0 %v1080
  %1439 = vmatpush.bf16.msra.mxu0 %v1079
  %1440 = vmatpush.bf16.msra.mxu0 %v1078
  %1441 = vmatpush.bf16.msra.mxu0 %v1077
  %1442 = vmatpush.bf16.msra.mxu0 %v1076
  %1443 = vmatpush.bf16.msra.mxu0 %v1075
  %1444 = vmatpush.bf16.msra.mxu0 %v1074
  %1445 = vmatmul.bf16.gmra.mxu0 %v357
  %v1446 = vpop.f32.mrf.mxu0
  %v1447 = vadd.f32 %v1434, %v1446
  %v1448 = vpop.f32.mrf.mxu0
  %1449 = vdwg.mxu0
  %1450 = vmatpush.bf16.msra.mxu0 %v1089
  %1451 = vmatpush.bf16.msra.mxu0 %v1088
  %1452 = vmatpush.bf16.msra.mxu0 %v1087
  %1453 = vmatpush.bf16.msra.mxu0 %v1086
  %1454 = vmatpush.bf16.msra.mxu0 %v1085
  %1455 = vmatpush.bf16.msra.mxu0 %v1084
  %1456 = vmatpush.bf16.msra.mxu0 %v1083
  %1457 = vmatpush.bf16.msra.mxu0 %v1082
  %1458 = vmatmul.bf16.gmra.mxu0 %v358
  %v1459 = vpop.f32.mrf.mxu0
  %v1460 = vadd.f32 %v1447, %v1459
  %v1461 = vpop.f32.mrf.mxu0
  %1462 = vdwg.mxu0
  %1463 = vmatpush.bf16.msra.mxu0 %v1097
  %1464 = vmatpush.bf16.msra.mxu0 %v1096
  %1465 = vmatpush.bf16.msra.mxu0 %v1095
  %1466 = vmatpush.bf16.msra.mxu0 %v1094
  %1467 = vmatpush.bf16.msra.mxu0 %v1093
  %1468 = vmatpush.bf16.msra.mxu0 %v1092
  %1469 = vmatpush.bf16.msra.mxu0 %v1091
  %1470 = vmatpush.bf16.msra.mxu0 %v1090
  %1471 = vmatmul.bf16.gmra.mxu0 %v359
  %v1472 = vpop.f32.mrf.mxu0
  %v1473 = vadd.f32 %v1460, %v1472
  %v1474 = vpop.f32.mrf.mxu0
  %1475 = vdwg.mxu0
  %v1476 = vxor.u32 %v1473, 2147483648
  %v1477 = vmul.f32 %v1476, 1.442695
  %v1478 = vpow.pop %v1477
  %v1479 = vadd.f32 %v1478, 1.0
  %v1480 = vrcp.pop %v1479
  %v1481 = vmul.f32 %v1479, %v1480
  %v1482 = vsub.f32 1.0, %v1481
  %v1483 = vmul.f32 %v1480, %v1482
  %v1484 = vadd.f32 %v1480, %v1483
  %vm1485 = vweird.f32 %v1479
  %vm1486 = vweird.f32 %v1480
  %vm1487 = vmor %vm1485, %vm1486
  %v1488 = vsel %vm1487, %v1480, %v1484
  %v1489 = vand.u32 2147483647, %v1479
  %vm1490 = vcmp.eq.f32.partialorder %v1489, 8.507059e+37
  %v1491 = vand.u32 %v1479, 2147483648
  %v1492 = vor.u32 1.1754944e-38, %v1491
  %v1493 = vsel %vm1490, %v1492, %v1488
  %v1494 = vmul.f32 1.0, %v1493
  %v1495 = vmul.f32 %v1473, %v1494
  %v1496 = vpack.c.bf16 %v1495, %v1495
  %1497 = vst [vmem:[%s3] sm:$0xf] %v1496
  // Predicated region
  $region14: #{forward.20} parent=0 // pred_check
    _
  $region15: #{forward.20} parent=0 // pred_check_branch
    %1499 = sbr.rel (0) target = $region17
  $region16: #{forward.20} parent=0 // pred_region
    _
  $region17: #{forward.20} parent=0 // pred_fallthru
    _
  // Predicated region
  $region18: #{forward.20} parent=0 // pred_check
    _
  $region19: #{forward.20} parent=0 // pred_check_branch
    %1501 = sbr.rel (0) target = $region21
  $region20: #{forward.20} parent=0 // pred_region
    _
  $region21: #{forward.20} parent=0 // pred_fallthru
    _

</llo_original>
